<compile_context>
chip_gen: v6e
topology: v6e:2x2x1
jax: 0.10.0
libtpu: 0.0.40
codegen_flags: <defaults>
</compile_context>

<pallas_src>
import numpy as np
import jax
import jax.numpy as jnp
from jax.experimental import pallas as pl
from jax.experimental.pallas import tpu as pltpu

# ----------------------------- model dimensions -----------------------------
B = 4                 # batch_size
T = 8                 # target_seq_len
INPUT_DIM = 8         # input_dim
HUMAN_SIZE = 16       # output_dim
ENC = 32              # rnn_encoder_size
DEC = 32              # rnn_decoder_size
K = 8                 # latent size k
N_PSI_HIDDEN = 24
N_PSI_LOWRANK = 12
RESIDUAL = True       # residual_output=True; this script assumes INPUT_DIM < HUMAN_SIZE
# TODO(synk): non-residual path / INPUT_DIM >= HUMAN_SIZE variants not wired up.

_PSI_SHAPES = [
    (DEC, DEC),                              # Whh
    (DEC,),                                  # bh
    (INPUT_DIM, DEC),                        # Wih
    (DEC, HUMAN_SIZE),                       # C
    (INPUT_DIM, HUMAN_SIZE - INPUT_DIM),     # D (residual case)
]
_PSI_SIZES = [int(np.prod(s)) for s in _PSI_SHAPES]
N_PSI_PARS = sum(_PSI_SIZES)
_PSI_OFFS = np.concatenate([[0], np.cumsum(_PSI_SIZES)]).tolist()

# Block-diagonal selection masks: (h tiled along lanes) * mask @ stacked
# weights == per-sample matvec, done as ONE (B, B*DEC) @ (B*DEC, N) MXU op.
MASK_H = jnp.asarray(
    (np.arange(B * DEC)[None, :] // DEC) == np.arange(B)[:, None], jnp.float32)
MASK_X = jnp.asarray(
    (np.arange(B * INPUT_DIM)[None, :] // INPUT_DIM) == np.arange(B)[:, None],
    jnp.float32)


def _fullspec(shape):
    """Whole-array-in-VMEM BlockSpec for a single-step grid."""
    zeros = (0,) * len(shape)
    return pl.BlockSpec(shape, lambda i, _z=zeros: _z)


# ------------------------------ Pallas kernels -------------------------------
def _encoder_psi_kernel(y_ref, eps_ref,
                        Wih_ref, Whh_ref, bih_ref, bhh_ref,
                        to_mu_ref, to_ls_ref, ls_b_ref,
                        W1_ref, b1_ref, W2_ref, b2_ref, W3_ref, b3_ref,
                        out_ref):
    """Fused: GRUCell recurrence over T + mu/logstd + reparam + psi MLP."""
    E = ENC
    Wih = Wih_ref[...]                        # (HUMAN_SIZE, 3E)
    Whh = Whh_ref[...]                        # (E, 3E)
    bih = bih_ref[...]                        # (1, 3E)
    bhh = bhh_ref[...]                        # (1, 3E)

    h = jnp.zeros((B, E), jnp.float32)
    for t in range(T):                        # fully unrolled, T = 8
        x_t = y_ref[t]                        # (B, HUMAN_SIZE), time-major input
        gi = jnp.dot(x_t, Wih, preferred_element_type=jnp.float32) + bih
        gh = jnp.dot(h, Whh, preferred_element_type=jnp.float32) + bhh
        r = jax.nn.sigmoid(gi[:, :E] + gh[:, :E])
        z = jax.nn.sigmoid(gi[:, E:2 * E] + gh[:, E:2 * E])
        n = jnp.tanh(gi[:, 2 * E:] + r * gh[:, 2 * E:])
        h = (1.0 - z) * n + z * h

    mu = jnp.dot(h, to_mu_ref[...], preferred_element_type=jnp.float32)
    logstd = (jnp.dot(h, to_ls_ref[...], preferred_element_type=jnp.float32)
              + ls_b_ref[...])

    # reparameterization + psi decoder MLP (Linear -> Tanh -> Linear -> Linear)
    zlat = mu + eps_ref[...] * jnp.exp(logstd)
    h1 = jnp.tanh(jnp.dot(zlat, W1_ref[...],
                          preferred_element_type=jnp.float32) + b1_ref[...])
    h2 = jnp.dot(h1, W2_ref[...], preferred_element_type=jnp.float32) + b2_ref[...]
    psi = jnp.dot(h2, W3_ref[...], preferred_element_type=jnp.float32) + b3_ref[...]

    # single packed, lane-dense output: [mu | logstd | psi]
    out_ref[...] = jnp.concatenate([mu, logstd, psi], axis=-1)


def _decoder_kernel(x_ref, state_ref, mask_h_ref, mask_x_ref,
                    Wg_ih_ref, Wg_hh_ref, bg_ref,
                    Whh_ref, bh_ref, Wih_ref, C_ref, D_ref,
                    out_ref):
    """Batch-vectorized, time-outer partial-GRU + output projection.

    Per-sample psi weights arrive row-stacked: e.g. Whh_ref is (B*DEC, DEC)
    with rows [b*DEC : (b+1)*DEC] = Whh[b]; masked lane-tiled activations turn
    the per-sample matvecs into one wide 2D matmul.
    """
    HS = DEC
    Wg_ih = Wg_ih_ref[...]                    # (INPUT_DIM, 2*DEC) shared
    Wg_hh = Wg_hh_ref[...]                    # (DEC, 2*DEC) shared
    bg = bg_ref[...]                          # (1, 2*DEC)
    mask_h = mask_h_ref[...]                  # (B, B*DEC)
    mask_x = mask_x_ref[...]                  # (B, B*INPUT_DIM)
    Whh_s = Whh_ref[...]                      # (B*DEC, DEC)
    Wih_s = Wih_ref[...]                      # (B*INPUT_DIM, DEC)
    C_s = C_ref[...]                          # (B*DEC, HUMAN_SIZE)
    D_s = D_ref[...]                          # (B*INPUT_DIM, HUMAN_SIZE-INPUT_DIM)
    bh = bh_ref[...]                          # (B, DEC)

    h = state_ref[...]                        # (B, DEC)
    yhat_pieces = []
    for t in range(T):                        # fully unrolled, T = 8
        x_t = x_ref[t]                        # (B, INPUT_DIM), time-major input
        x_rep = jnp.concatenate([x_t] * B, axis=-1) * mask_x      # (B, B*I)

        gx = jnp.dot(x_t, Wg_ih, preferred_element_type=jnp.float32)
        gh = jnp.dot(h, Wg_hh, preferred_element_type=jnp.float32)
        g = gx + gh + bg                                          # (B, 2*DEC)
        r = jax.nn.sigmoid(g[:, :HS])
        z = jax.nn.sigmoid(g[:, HS:])

        h_rep = jnp.concatenate([h] * B, axis=-1) * mask_h        # (B, B*DEC)
        hWhh = jnp.dot(h_rep, Whh_s, preferred_element_type=jnp.float32)
        etax = jnp.dot(x_rep, Wih_s, preferred_element_type=jnp.float32)
        eta = jnp.tanh(etax + r * hWhh + bh)
        h = z * h + (1.0 - z) * eta                               # (B, DEC)

        # per-step output projection (uses the *updated* hidden state)
        hout_rep = jnp.concatenate([h] * B, axis=-1) * mask_h
        proj = jnp.dot(hout_rep, C_s, preferred_element_type=jnp.float32)
        xD = jnp.dot(x_rep, D_s, preferred_element_type=jnp.float32)
        yhat_pieces.append(proj + jnp.concatenate([x_t, xD], axis=-1))

    # lane-dense packed output: [yhat(t=0) | ... | yhat(t=T-1) | h_last]
    out_ref[...] = jnp.concatenate(yhat_pieces + [h], axis=-1)


# ------------------------------ Pallas wrappers ------------------------------
def encode_and_psi_pallas(params, outputs, eps):
    y_tm = jnp.transpose(outputs, (1, 0, 2))          # (T, B, HUMAN_SIZE)
    args = (
        y_tm, eps,
        params['enc_Wih'], params['enc_Whh'], params['enc_bih'], params['enc_bhh'],
        params['to_mu'], params['to_lsigma'], params['to_lsigma_bias'],
        params['psi_W1'], params['psi_b1'].reshape(1, N_PSI_HIDDEN),
        params['psi_W2'], params['psi_b2'].reshape(1, N_PSI_LOWRANK),
        params['psi_W3'], params['psi_b3'].reshape(1, N_PSI_PARS),
    )
    out = pl.pallas_call(
        _encoder_psi_kernel,
        out_shape=jax.ShapeDtypeStruct((B, 2 * K + N_PSI_PARS), jnp.float32),
        grid_spec=pltpu.PrefetchScalarGridSpec(
            num_scalar_prefetch=0,
            grid=(1,),                                 # single invocation
            in_specs=[_fullspec(a.shape) for a in args],
            out_specs=_fullspec((B, 2 * K + N_PSI_PARS)),
        ),
        compiler_params=pltpu.CompilerParams(dimension_semantics=("arbitrary",)),
    )(*args)
    mu = out[:, :K]
    logstd = out[:, K:2 * K]
    psi = out[:, 2 * K:]
    return mu, logstd, psi


def decode_pallas(params, inputs, state, psi_parts):
    Whh_all, bh_all, Wih_all, C_all, D_all = psi_parts
    x_tm = jnp.transpose(inputs, (1, 0, 2))            # (T, B, INPUT_DIM)
    args = (
        x_tm, state, MASK_H, MASK_X,
        params['gru_Wih'], params['gru_Whh'],
        params['gru_bias'].reshape(1, 2 * DEC),
        Whh_all.reshape(B * DEC, DEC),                  # row-stacked per-sample
        bh_all,                                         # (B, DEC)
        Wih_all.reshape(B * INPUT_DIM, DEC),
        C_all.reshape(B * DEC, HUMAN_SIZE),
        D_all.reshape(B * INPUT_DIM, HUMAN_SIZE - INPUT_DIM),
    )
    out = pl.pallas_call(
        _decoder_kernel,
        out_shape=jax.ShapeDtypeStruct((B, T * HUMAN_SIZE + DEC), jnp.float32),
        grid_spec=pltpu.PrefetchScalarGridSpec(
            num_scalar_prefetch=0,
            grid=(1,),                                  # single invocation
            in_specs=[_fullspec(a.shape) for a in args],
            out_specs=_fullspec((B, T * HUMAN_SIZE + DEC)),
        ),
        compiler_params=pltpu.CompilerParams(dimension_semantics=("arbitrary",)),
    )(*args)
    yhats = out[:, :T * HUMAN_SIZE].reshape(B, T, HUMAN_SIZE)
    states = out[:, T * HUMAN_SIZE:]
    return yhats, states


# ------------------------------- plain-JAX glue -------------------------------
def psi_decode(params, z):
    """psi_decoder Sequential: Linear -> Tanh -> Linear -> Linear (ref only)."""
    h1 = jnp.tanh(z @ params['psi_W1'] + params['psi_b1'])
    h2 = h1 @ params['psi_W2'] + params['psi_b2']
    psi = h2 @ params['psi_W3'] + params['psi_b3']
    return psi


def split_psi(psi):
    o = _PSI_OFFS
    Whh = psi[:, o[0]:o[1]].reshape(B, DEC, DEC)
    bh = psi[:, o[1]:o[2]].reshape(B, DEC)
    Wih = psi[:, o[2]:o[3]].reshape(B, INPUT_DIM, DEC)
    C = psi[:, o[3]:o[4]].reshape(B, DEC, HUMAN_SIZE)
    D = psi[:, o[4]:o[5]].reshape(B, INPUT_DIM, HUMAN_SIZE - INPUT_DIM)
    return Whh, bh, Wih, C, D


@jax.jit
def mtgru_forward(params, inputs, outputs, eps):
    mu, logstd, psi = encode_and_psi_pallas(params, outputs, eps)
    psi_parts = split_psi(psi)
    state = jnp.zeros((B, DEC), jnp.float32)            # init_state_noise=False
    yhats, states = decode_pallas(params, inputs, state, psi_parts)
    return yhats, mu, logstd, states


# ------------------------------- pure-JAX reference --------------------------
def mtgru_forward_ref(params, inputs, outputs, eps):
    h = jnp.zeros((B, ENC), jnp.float32)
    y_t = jnp.transpose(outputs, (1, 0, 2))
    for t in range(T):
        x = y_t[t]
        gi = x @ params['enc_Wih'] + params['enc_bih'][0]
        gh = h @ params['enc_Whh'] + params['enc_bhh'][0]
        r = jax.nn.sigmoid(gi[:, :ENC] + gh[:, :ENC])
        zz = jax.nn.sigmoid(gi[:, ENC:2 * ENC] + gh[:, ENC:2 * ENC])
        n = jnp.tanh(gi[:, 2 * ENC:] + r * gh[:, 2 * ENC:])
        h = (1.0 - zz) * n + zz * h
    mu = h @ params['to_mu']
    logstd = h @ params['to_lsigma'] + params['to_lsigma_bias'][0]
    z = mu + eps * jnp.exp(logstd)
    psi = psi_decode(params, z)
    Whh_all, bh_all, Wih_all, C_all, D_all = split_psi(psi)

    yhats, states = [], []
    for bb in range(B):
        h_t = jnp.zeros((DEC,), jnp.float32)
        hs = []
        for t in range(T):
            x_t = inputs[bb, t, :]
            gx = x_t @ params['gru_Wih']
            gh = h_t @ params['gru_Whh']
            g = gx + gh + params['gru_bias']
            r = jax.nn.sigmoid(g[:DEC])
            zz = jax.nn.sigmoid(g[DEC:])
            eta = jnp.tanh(x_t @ Wih_all[bb] + r * (h_t @ Whh_all[bb]) + bh_all[bb])
            h_t = zz * h_t + (1.0 - zz) * eta
            hs.append(h_t)
        dec = jnp.stack(hs, axis=0)
        resid = jnp.concatenate(
            [inputs[bb, :, :HUMAN_SIZE], inputs[bb] @ D_all[bb]], axis=1)
        yhats.append(dec @ C_all[bb] + resid)
        states.append(dec[-1])
    return jnp.stack(yhats), mu, logstd, jnp.stack(states)


# ------------------------------- parameter init -------------------------------
def init_params(key):
    ks = jax.random.split(key, 12)

    def u(k, shape, scale):
        return jax.random.uniform(k, shape, jnp.float32, -scale, scale)

    def xav(k, shape):
        return u(k, shape, float(np.sqrt(6.0 / (shape[0] + shape[1]))))

    enc_s = float(1.0 / np.sqrt(ENC))
    return dict(
        # encoder GRUCell (stored transposed for x @ W convenience)
        enc_Wih=u(ks[0], (HUMAN_SIZE, 3 * ENC), enc_s),
        enc_Whh=u(ks[1], (ENC, 3 * ENC), enc_s),
        enc_bih=u(ks[2], (1, 3 * ENC), enc_s),
        enc_bhh=u(ks[3], (1, 3 * ENC), enc_s),
        # latent projections
        to_mu=xav(ks[4], (ENC, K)),
        to_lsigma=xav(ks[5], (ENC, K)),
        to_lsigma_bias=jnp.full((1, K), -0.5, jnp.float32),
        # shared decoder gate weights
        gru_Wih=xav(ks[6], (INPUT_DIM, 2 * DEC)),
        gru_Whh=xav(ks[7], (DEC, 2 * DEC)),
        gru_bias=jnp.concatenate(
            [jnp.zeros((DEC,), jnp.float32), jnp.ones((DEC,), jnp.float32)]),
        # psi decoder MLP
        psi_W1=xav(ks[8], (K, N_PSI_HIDDEN)),
        psi_b1=jnp.zeros((N_PSI_HIDDEN,), jnp.float32),
        psi_W2=xav(ks[9], (N_PSI_HIDDEN, N_PSI_LOWRANK)),
        psi_b2=jnp.zeros((N_PSI_LOWRANK,), jnp.float32),
        psi_W3=u(ks[10], (N_PSI_LOWRANK, N_PSI_PARS), 0.1),
        psi_b3=jnp.zeros((N_PSI_PARS,), jnp.float32),
    )


# ------------------------------------ main ------------------------------------
if __name__ == "__main__":
    root = jax.random.PRNGKey(0)
    k_par, k_in, k_out, k_eps = jax.random.split(root, 4)

    params = init_params(k_par)
    inputs = jax.random.normal(k_in, (B, T, INPUT_DIM), jnp.float32)
    outputs = jax.random.normal(k_out, (B, T, HUMAN_SIZE), jnp.float32)
    eps = jax.random.normal(k_eps, (B, K), jnp.float32)

    yhats, mu, logstd, states = mtgru_forward(params, inputs, outputs, eps)
    jax.block_until_ready((yhats, mu, logstd, states))

    # sanity-check against a pure-JAX reference of the PyTorch forward pass
    yr, mr, lr, sr = mtgru_forward_ref(params, inputs, outputs, eps)
    assert yhats.shape == (B, T, HUMAN_SIZE) and states.shape == (B, DEC)
    assert mu.shape == (B, K) and logstd.shape == (B, K)
    np.testing.assert_allclose(np.asarray(mu), np.asarray(mr), rtol=2e-3, atol=2e-3)
    np.testing.assert_allclose(np.asarray(logstd), np.asarray(lr), rtol=2e-3, atol=2e-3)
    np.testing.assert_allclose(np.asarray(yhats), np.asarray(yr), rtol=2e-3, atol=2e-3)
    np.testing.assert_allclose(np.asarray(states), np.asarray(sr), rtol=2e-3, atol=2e-3)

    print("KERNEL_OK")
</pallas_src>

<mosaic_0001>
module attributes {stable_mosaic.version = 11 : i64} {
  func.func @_encoder_psi_kernel(%arg0: i32, %arg1: memref<8x4x16xf32, #tpu.memory_space<vmem>>, %arg2: memref<4x8xf32, #tpu.memory_space<vmem>>, %arg3: memref<16x96xf32, #tpu.memory_space<vmem>>, %arg4: memref<32x96xf32, #tpu.memory_space<vmem>>, %arg5: memref<1x96xf32, #tpu.memory_space<vmem>>, %arg6: memref<1x96xf32, #tpu.memory_space<vmem>>, %arg7: memref<32x8xf32, #tpu.memory_space<vmem>>, %arg8: memref<32x8xf32, #tpu.memory_space<vmem>>, %arg9: memref<1x8xf32, #tpu.memory_space<vmem>>, %arg10: memref<8x24xf32, #tpu.memory_space<vmem>>, %arg11: memref<1x24xf32, #tpu.memory_space<vmem>>, %arg12: memref<24x12xf32, #tpu.memory_space<vmem>>, %arg13: memref<1x12xf32, #tpu.memory_space<vmem>>, %arg14: memref<12x1888xf32, #tpu.memory_space<vmem>>, %arg15: memref<1x1888xf32, #tpu.memory_space<vmem>>, %arg16: memref<4x1904xf32, #tpu.memory_space<vmem>>) attributes {dimension_semantics = [#tpu.dimension_semantics<arbitrary>], iteration_bounds = array<i64: 1>, scalar_prefetch = 0 : i64, scratch_operands = 0 : i64, tpu.core_type = #tpu.core_type<tc>, window_params = [{pipeline_mode = #tpu.pipeline_mode<synchronous>, transform_indices = @transform_0, window_bounds = array<i64: 8, 4, 16>}, {pipeline_mode = #tpu.pipeline_mode<synchronous>, transform_indices = @transform_1, window_bounds = array<i64: 4, 8>}, {pipeline_mode = #tpu.pipeline_mode<synchronous>, transform_indices = @transform_2, window_bounds = array<i64: 16, 96>}, {pipeline_mode = #tpu.pipeline_mode<synchronous>, transform_indices = @transform_3, window_bounds = array<i64: 32, 96>}, {pipeline_mode = #tpu.pipeline_mode<synchronous>, transform_indices = @transform_4, window_bounds = array<i64: 1, 96>}, {pipeline_mode = #tpu.pipeline_mode<synchronous>, transform_indices = @transform_5, window_bounds = array<i64: 1, 96>}, {pipeline_mode = #tpu.pipeline_mode<synchronous>, transform_indices = @transform_6, window_bounds = array<i64: 32, 8>}, {pipeline_mode = #tpu.pipeline_mode<synchronous>, transform_indices = @transform_7, window_bounds = array<i64: 32, 8>}, {pipeline_mode = #tpu.pipeline_mode<synchronous>, transform_indices = @transform_8, window_bounds = array<i64: 1, 8>}, {pipeline_mode = #tpu.pipeline_mode<synchronous>, transform_indices = @transform_9, window_bounds = array<i64: 8, 24>}, {pipeline_mode = #tpu.pipeline_mode<synchronous>, transform_indices = @transform_10, window_bounds = array<i64: 1, 24>}, {pipeline_mode = #tpu.pipeline_mode<synchronous>, transform_indices = @transform_11, window_bounds = array<i64: 24, 12>}, {pipeline_mode = #tpu.pipeline_mode<synchronous>, transform_indices = @transform_12, window_bounds = array<i64: 1, 12>}, {pipeline_mode = #tpu.pipeline_mode<synchronous>, transform_indices = @transform_13, window_bounds = array<i64: 12, 1888>}, {pipeline_mode = #tpu.pipeline_mode<synchronous>, transform_indices = @transform_14, window_bounds = array<i64: 1, 1888>}, {pipeline_mode = #tpu.pipeline_mode<synchronous>, transform_indices = @transform_15, window_bounds = array<i64: 4, 1904>}]} {
    %c0 = arith.constant 0 : index
    %c0_0 = arith.constant 0 : index
    %0 = vector.load %arg3[%c0, %c0_0] : memref<16x96xf32, #tpu.memory_space<vmem>>, vector<16x96xf32>
    %c0_1 = arith.constant 0 : index
    %c0_2 = arith.constant 0 : index
    %1 = vector.load %arg4[%c0_1, %c0_2] : memref<32x96xf32, #tpu.memory_space<vmem>>, vector<32x96xf32>
    %c0_3 = arith.constant 0 : index
    %c0_4 = arith.constant 0 : index
    %2 = vector.load %arg5[%c0_3, %c0_4] : memref<1x96xf32, #tpu.memory_space<vmem>>, vector<1x96xf32>
    %c0_5 = arith.constant 0 : index
    %c0_6 = arith.constant 0 : index
    %3 = vector.load %arg6[%c0_5, %c0_6] : memref<1x96xf32, #tpu.memory_space<vmem>>, vector<1x96xf32>
    %cst = arith.constant 0.000000e+00 : f32
    %4 = vector.broadcast %cst : f32 to vector<4x32xf32>
    %c0_7 = arith.constant 0 : index
    %c0_8 = arith.constant 0 : index
    %c0_9 = arith.constant 0 : index
    %5 = vector.load %arg1[%c0_7, %c0_8, %c0_9] : memref<8x4x16xf32, #tpu.memory_space<vmem>>, vector<1x4x16xf32>
    %6 = vector.shape_cast %5 : vector<1x4x16xf32> to vector<4x16xf32>
    %cst_10 = arith.constant dense<0.000000e+00> : vector<4x96xf32>
    %7 = tpu.matmul %6, %0, %cst_10 {dimension_numbers = #tpu.dot_dimension_numbers<[1], [0], [0], [1], [0, 0, 1, 1], [], []>} : vector<4x16xf32>, vector<16x96xf32>, vector<4x96xf32> -> vector<4x96xf32>
    %8 = vector.broadcast %2 : vector<1x96xf32> to vector<4x96xf32>
    %9 = arith.addf %7, %8 : vector<4x96xf32>
    %cst_11 = arith.constant dense<0.000000e+00> : vector<4x96xf32>
    %10 = tpu.matmul %4, %1, %cst_11 {dimension_numbers = #tpu.dot_dimension_numbers<[1], [0], [0], [1], [0, 0, 1, 1], [], []>} : vector<4x32xf32>, vector<32x96xf32>, vector<4x96xf32> -> vector<4x96xf32>
    %11 = vector.broadcast %3 : vector<1x96xf32> to vector<4x96xf32>
    %12 = arith.addf %10, %11 : vector<4x96xf32>
    %13 = vector.extract_strided_slice %9 {offsets = [0, 0], sizes = [4, 32], strides = [1, 1]} : vector<4x96xf32> to vector<4x32xf32>
    %14 = vector.extract_strided_slice %12 {offsets = [0, 0], sizes = [4, 32], strides = [1, 1]} : vector<4x96xf32> to vector<4x32xf32>
    %15 = arith.addf %13, %14 : vector<4x32xf32>
    %16 = arith.negf %15 : vector<4x32xf32>
    %17 = math.exp %16 : vector<4x32xf32>
    %cst_12 = arith.constant 1.000000e+00 : f32
    %18 = vector.broadcast %cst_12 : f32 to vector<4x32xf32>
    %19 = arith.addf %18, %17 : vector<4x32xf32>
    %20 = arith.divf %18, %19 : vector<4x32xf32>
    %21 = vector.extract_strided_slice %9 {offsets = [0, 32], sizes = [4, 32], strides = [1, 1]} : vector<4x96xf32> to vector<4x32xf32>
    %22 = vector.extract_strided_slice %12 {offsets = [0, 32], sizes = [4, 32], strides = [1, 1]} : vector<4x96xf32> to vector<4x32xf32>
    %23 = arith.addf %21, %22 : vector<4x32xf32>
    %24 = arith.negf %23 : vector<4x32xf32>
    %25 = math.exp %24 : vector<4x32xf32>
    %cst_13 = arith.constant 1.000000e+00 : f32
    %26 = vector.broadcast %cst_13 : f32 to vector<4x32xf32>
    %27 = arith.addf %26, %25 : vector<4x32xf32>
    %28 = arith.divf %26, %27 : vector<4x32xf32>
    %29 = vector.extract_strided_slice %9 {offsets = [0, 64], sizes = [4, 32], strides = [1, 1]} : vector<4x96xf32> to vector<4x32xf32>
    %30 = vector.extract_strided_slice %12 {offsets = [0, 64], sizes = [4, 32], strides = [1, 1]} : vector<4x96xf32> to vector<4x32xf32>
    %31 = arith.mulf %20, %30 : vector<4x32xf32>
    %32 = arith.addf %29, %31 : vector<4x32xf32>
    %33 = math.tanh %32 : vector<4x32xf32>
    %cst_14 = arith.constant 1.000000e+00 : f32
    %34 = vector.broadcast %cst_14 : f32 to vector<4x32xf32>
    %35 = arith.subf %34, %28 : vector<4x32xf32>
    %36 = arith.mulf %35, %33 : vector<4x32xf32>
    %37 = arith.mulf %28, %4 : vector<4x32xf32>
    %38 = arith.addf %36, %37 : vector<4x32xf32>
    %c1 = arith.constant 1 : index
    %c0_15 = arith.constant 0 : index
    %c0_16 = arith.constant 0 : index
    %39 = vector.load %arg1[%c1, %c0_15, %c0_16] : memref<8x4x16xf32, #tpu.memory_space<vmem>>, vector<1x4x16xf32>
    %40 = vector.shape_cast %39 : vector<1x4x16xf32> to vector<4x16xf32>
    %cst_17 = arith.constant dense<0.000000e+00> : vector<4x96xf32>
    %41 = tpu.matmul %40, %0, %cst_17 {dimension_numbers = #tpu.dot_dimension_numbers<[1], [0], [0], [1], [0, 0, 1, 1], [], []>} : vector<4x16xf32>, vector<16x96xf32>, vector<4x96xf32> -> vector<4x96xf32>
    %42 = vector.broadcast %2 : vector<1x96xf32> to vector<4x96xf32>
    %43 = arith.addf %41, %42 : vector<4x96xf32>
    %cst_18 = arith.constant dense<0.000000e+00> : vector<4x96xf32>
    %44 = tpu.matmul %38, %1, %cst_18 {dimension_numbers = #tpu.dot_dimension_numbers<[1], [0], [0], [1], [0, 0, 1, 1], [], []>} : vector<4x32xf32>, vector<32x96xf32>, vector<4x96xf32> -> vector<4x96xf32>
    %45 = vector.broadcast %3 : vector<1x96xf32> to vector<4x96xf32>
    %46 = arith.addf %44, %45 : vector<4x96xf32>
    %47 = vector.extract_strided_slice %43 {offsets = [0, 0], sizes = [4, 32], strides = [1, 1]} : vector<4x96xf32> to vector<4x32xf32>
    %48 = vector.extract_strided_slice %46 {offsets = [0, 0], sizes = [4, 32], strides = [1, 1]} : vector<4x96xf32> to vector<4x32xf32>
    %49 = arith.addf %47, %48 : vector<4x32xf32>
    %50 = arith.negf %49 : vector<4x32xf32>
    %51 = math.exp %50 : vector<4x32xf32>
    %cst_19 = arith.constant 1.000000e+00 : f32
    %52 = vector.broadcast %cst_19 : f32 to vector<4x32xf32>
    %53 = arith.addf %52, %51 : vector<4x32xf32>
    %54 = arith.divf %52, %53 : vector<4x32xf32>
    %55 = vector.extract_strided_slice %43 {offsets = [0, 32], sizes = [4, 32], strides = [1, 1]} : vector<4x96xf32> to vector<4x32xf32>
    %56 = vector.extract_strided_slice %46 {offsets = [0, 32], sizes = [4, 32], strides = [1, 1]} : vector<4x96xf32> to vector<4x32xf32>
    %57 = arith.addf %55, %56 : vector<4x32xf32>
    %58 = arith.negf %57 : vector<4x32xf32>
    %59 = math.exp %58 : vector<4x32xf32>
    %cst_20 = arith.constant 1.000000e+00 : f32
    %60 = vector.broadcast %cst_20 : f32 to vector<4x32xf32>
    %61 = arith.addf %60, %59 : vector<4x32xf32>
    %62 = arith.divf %60, %61 : vector<4x32xf32>
    %63 = vector.extract_strided_slice %43 {offsets = [0, 64], sizes = [4, 32], strides = [1, 1]} : vector<4x96xf32> to vector<4x32xf32>
    %64 = vector.extract_strided_slice %46 {offsets = [0, 64], sizes = [4, 32], strides = [1, 1]} : vector<4x96xf32> to vector<4x32xf32>
    %65 = arith.mulf %54, %64 : vector<4x32xf32>
    %66 = arith.addf %63, %65 : vector<4x32xf32>
    %67 = math.tanh %66 : vector<4x32xf32>
    %cst_21 = arith.constant 1.000000e+00 : f32
    %68 = vector.broadcast %cst_21 : f32 to vector<4x32xf32>
    %69 = arith.subf %68, %62 : vector<4x32xf32>
    %70 = arith.mulf %69, %67 : vector<4x32xf32>
    %71 = arith.mulf %62, %38 : vector<4x32xf32>
    %72 = arith.addf %70, %71 : vector<4x32xf32>
    %c2 = arith.constant 2 : index
    %c0_22 = arith.constant 0 : index
    %c0_23 = arith.constant 0 : index
    %73 = vector.load %arg1[%c2, %c0_22, %c0_23] : memref<8x4x16xf32, #tpu.memory_space<vmem>>, vector<1x4x16xf32>
    %74 = vector.shape_cast %73 : vector<1x4x16xf32> to vector<4x16xf32>
    %cst_24 = arith.constant dense<0.000000e+00> : vector<4x96xf32>
    %75 = tpu.matmul %74, %0, %cst_24 {dimension_numbers = #tpu.dot_dimension_numbers<[1], [0], [0], [1], [0, 0, 1, 1], [], []>} : vector<4x16xf32>, vector<16x96xf32>, vector<4x96xf32> -> vector<4x96xf32>
    %76 = vector.broadcast %2 : vector<1x96xf32> to vector<4x96xf32>
    %77 = arith.addf %75, %76 : vector<4x96xf32>
    %cst_25 = arith.constant dense<0.000000e+00> : vector<4x96xf32>
    %78 = tpu.matmul %72, %1, %cst_25 {dimension_numbers = #tpu.dot_dimension_numbers<[1], [0], [0], [1], [0, 0, 1, 1], [], []>} : vector<4x32xf32>, vector<32x96xf32>, vector<4x96xf32> -> vector<4x96xf32>
    %79 = vector.broadcast %3 : vector<1x96xf32> to vector<4x96xf32>
    %80 = arith.addf %78, %79 : vector<4x96xf32>
    %81 = vector.extract_strided_slice %77 {offsets = [0, 0], sizes = [4, 32], strides = [1, 1]} : vector<4x96xf32> to vector<4x32xf32>
    %82 = vector.extract_strided_slice %80 {offsets = [0, 0], sizes = [4, 32], strides = [1, 1]} : vector<4x96xf32> to vector<4x32xf32>
    %83 = arith.addf %81, %82 : vector<4x32xf32>
    %84 = arith.negf %83 : vector<4x32xf32>
    %85 = math.exp %84 : vector<4x32xf32>
    %cst_26 = arith.constant 1.000000e+00 : f32
    %86 = vector.broadcast %cst_26 : f32 to vector<4x32xf32>
    %87 = arith.addf %86, %85 : vector<4x32xf32>
    %88 = arith.divf %86, %87 : vector<4x32xf32>
    %89 = vector.extract_strided_slice %77 {offsets = [0, 32], sizes = [4, 32], strides = [1, 1]} : vector<4x96xf32> to vector<4x32xf32>
    %90 = vector.extract_strided_slice %80 {offsets = [0, 32], sizes = [4, 32], strides = [1, 1]} : vector<4x96xf32> to vector<4x32xf32>
    %91 = arith.addf %89, %90 : vector<4x32xf32>
    %92 = arith.negf %91 : vector<4x32xf32>
    %93 = math.exp %92 : vector<4x32xf32>
    %cst_27 = arith.constant 1.000000e+00 : f32
    %94 = vector.broadcast %cst_27 : f32 to vector<4x32xf32>
    %95 = arith.addf %94, %93 : vector<4x32xf32>
    %96 = arith.divf %94, %95 : vector<4x32xf32>
    %97 = vector.extract_strided_slice %77 {offsets = [0, 64], sizes = [4, 32], strides = [1, 1]} : vector<4x96xf32> to vector<4x32xf32>
    %98 = vector.extract_strided_slice %80 {offsets = [0, 64], sizes = [4, 32], strides = [1, 1]} : vector<4x96xf32> to vector<4x32xf32>
    %99 = arith.mulf %88, %98 : vector<4x32xf32>
    %100 = arith.addf %97, %99 : vector<4x32xf32>
    %101 = math.tanh %100 : vector<4x32xf32>
    %cst_28 = arith.constant 1.000000e+00 : f32
    %102 = vector.broadcast %cst_28 : f32 to vector<4x32xf32>
    %103 = arith.subf %102, %96 : vector<4x32xf32>
    %104 = arith.mulf %103, %101 : vector<4x32xf32>
    %105 = arith.mulf %96, %72 : vector<4x32xf32>
    %106 = arith.addf %104, %105 : vector<4x32xf32>
    %c3 = arith.constant 3 : index
    %c0_29 = arith.constant 0 : index
    %c0_30 = arith.constant 0 : index
    %107 = vector.load %arg1[%c3, %c0_29, %c0_30] : memref<8x4x16xf32, #tpu.memory_space<vmem>>, vector<1x4x16xf32>
    %108 = vector.shape_cast %107 : vector<1x4x16xf32> to vector<4x16xf32>
    %cst_31 = arith.constant dense<0.000000e+00> : vector<4x96xf32>
    %109 = tpu.matmul %108, %0, %cst_31 {dimension_numbers = #tpu.dot_dimension_numbers<[1], [0], [0], [1], [0, 0, 1, 1], [], []>} : vector<4x16xf32>, vector<16x96xf32>, vector<4x96xf32> -> vector<4x96xf32>
    %110 = vector.broadcast %2 : vector<1x96xf32> to vector<4x96xf32>
    %111 = arith.addf %109, %110 : vector<4x96xf32>
    %cst_32 = arith.constant dense<0.000000e+00> : vector<4x96xf32>
    %112 = tpu.matmul %106, %1, %cst_32 {dimension_numbers = #tpu.dot_dimension_numbers<[1], [0], [0], [1], [0, 0, 1, 1], [], []>} : vector<4x32xf32>, vector<32x96xf32>, vector<4x96xf32> -> vector<4x96xf32>
    %113 = vector.broadcast %3 : vector<1x96xf32> to vector<4x96xf32>
    %114 = arith.addf %112, %113 : vector<4x96xf32>
    %115 = vector.extract_strided_slice %111 {offsets = [0, 0], sizes = [4, 32], strides = [1, 1]} : vector<4x96xf32> to vector<4x32xf32>
    %116 = vector.extract_strided_slice %114 {offsets = [0, 0], sizes = [4, 32], strides = [1, 1]} : vector<4x96xf32> to vector<4x32xf32>
    %117 = arith.addf %115, %116 : vector<4x32xf32>
    %118 = arith.negf %117 : vector<4x32xf32>
    %119 = math.exp %118 : vector<4x32xf32>
    %cst_33 = arith.constant 1.000000e+00 : f32
    %120 = vector.broadcast %cst_33 : f32 to vector<4x32xf32>
    %121 = arith.addf %120, %119 : vector<4x32xf32>
    %122 = arith.divf %120, %121 : vector<4x32xf32>
    %123 = vector.extract_strided_slice %111 {offsets = [0, 32], sizes = [4, 32], strides = [1, 1]} : vector<4x96xf32> to vector<4x32xf32>
    %124 = vector.extract_strided_slice %114 {offsets = [0, 32], sizes = [4, 32], strides = [1, 1]} : vector<4x96xf32> to vector<4x32xf32>
    %125 = arith.addf %123, %124 : vector<4x32xf32>
    %126 = arith.negf %125 : vector<4x32xf32>
    %127 = math.exp %126 : vector<4x32xf32>
    %cst_34 = arith.constant 1.000000e+00 : f32
    %128 = vector.broadcast %cst_34 : f32 to vector<4x32xf32>
    %129 = arith.addf %128, %127 : vector<4x32xf32>
    %130 = arith.divf %128, %129 : vector<4x32xf32>
    %131 = vector.extract_strided_slice %111 {offsets = [0, 64], sizes = [4, 32], strides = [1, 1]} : vector<4x96xf32> to vector<4x32xf32>
    %132 = vector.extract_strided_slice %114 {offsets = [0, 64], sizes = [4, 32], strides = [1, 1]} : vector<4x96xf32> to vector<4x32xf32>
    %133 = arith.mulf %122, %132 : vector<4x32xf32>
    %134 = arith.addf %131, %133 : vector<4x32xf32>
    %135 = math.tanh %134 : vector<4x32xf32>
    %cst_35 = arith.constant 1.000000e+00 : f32
    %136 = vector.broadcast %cst_35 : f32 to vector<4x32xf32>
    %137 = arith.subf %136, %130 : vector<4x32xf32>
    %138 = arith.mulf %137, %135 : vector<4x32xf32>
    %139 = arith.mulf %130, %106 : vector<4x32xf32>
    %140 = arith.addf %138, %139 : vector<4x32xf32>
    %c4 = arith.constant 4 : index
    %c0_36 = arith.constant 0 : index
    %c0_37 = arith.constant 0 : index
    %141 = vector.load %arg1[%c4, %c0_36, %c0_37] : memref<8x4x16xf32, #tpu.memory_space<vmem>>, vector<1x4x16xf32>
    %142 = vector.shape_cast %141 : vector<1x4x16xf32> to vector<4x16xf32>
    %cst_38 = arith.constant dense<0.000000e+00> : vector<4x96xf32>
    %143 = tpu.matmul %142, %0, %cst_38 {dimension_numbers = #tpu.dot_dimension_numbers<[1], [0], [0], [1], [0, 0, 1, 1], [], []>} : vector<4x16xf32>, vector<16x96xf32>, vector<4x96xf32> -> vector<4x96xf32>
    %144 = vector.broadcast %2 : vector<1x96xf32> to vector<4x96xf32>
    %145 = arith.addf %143, %144 : vector<4x96xf32>
    %cst_39 = arith.constant dense<0.000000e+00> : vector<4x96xf32>
    %146 = tpu.matmul %140, %1, %cst_39 {dimension_numbers = #tpu.dot_dimension_numbers<[1], [0], [0], [1], [0, 0, 1, 1], [], []>} : vector<4x32xf32>, vector<32x96xf32>, vector<4x96xf32> -> vector<4x96xf32>
    %147 = vector.broadcast %3 : vector<1x96xf32> to vector<4x96xf32>
    %148 = arith.addf %146, %147 : vector<4x96xf32>
    %149 = vector.extract_strided_slice %145 {offsets = [0, 0], sizes = [4, 32], strides = [1, 1]} : vector<4x96xf32> to vector<4x32xf32>
    %150 = vector.extract_strided_slice %148 {offsets = [0, 0], sizes = [4, 32], strides = [1, 1]} : vector<4x96xf32> to vector<4x32xf32>
    %151 = arith.addf %149, %150 : vector<4x32xf32>
    %152 = arith.negf %151 : vector<4x32xf32>
    %153 = math.exp %152 : vector<4x32xf32>
    %cst_40 = arith.constant 1.000000e+00 : f32
    %154 = vector.broadcast %cst_40 : f32 to vector<4x32xf32>
    %155 = arith.addf %154, %153 : vector<4x32xf32>
    %156 = arith.divf %154, %155 : vector<4x32xf32>
    %157 = vector.extract_strided_slice %145 {offsets = [0, 32], sizes = [4, 32], strides = [1, 1]} : vector<4x96xf32> to vector<4x32xf32>
    %158 = vector.extract_strided_slice %148 {offsets = [0, 32], sizes = [4, 32], strides = [1, 1]} : vector<4x96xf32> to vector<4x32xf32>
    %159 = arith.addf %157, %158 : vector<4x32xf32>
    %160 = arith.negf %159 : vector<4x32xf32>
    %161 = math.exp %160 : vector<4x32xf32>
    %cst_41 = arith.constant 1.000000e+00 : f32
    %162 = vector.broadcast %cst_41 : f32 to vector<4x32xf32>
    %163 = arith.addf %162, %161 : vector<4x32xf32>
    %164 = arith.divf %162, %163 : vector<4x32xf32>
    %165 = vector.extract_strided_slice %145 {offsets = [0, 64], sizes = [4, 32], strides = [1, 1]} : vector<4x96xf32> to vector<4x32xf32>
    %166 = vector.extract_strided_slice %148 {offsets = [0, 64], sizes = [4, 32], strides = [1, 1]} : vector<4x96xf32> to vector<4x32xf32>
    %167 = arith.mulf %156, %166 : vector<4x32xf32>
    %168 = arith.addf %165, %167 : vector<4x32xf32>
    %169 = math.tanh %168 : vector<4x32xf32>
    %cst_42 = arith.constant 1.000000e+00 : f32
    %170 = vector.broadcast %cst_42 : f32 to vector<4x32xf32>
    %171 = arith.subf %170, %164 : vector<4x32xf32>
    %172 = arith.mulf %171, %169 : vector<4x32xf32>
    %173 = arith.mulf %164, %140 : vector<4x32xf32>
    %174 = arith.addf %172, %173 : vector<4x32xf32>
    %c5 = arith.constant 5 : index
    %c0_43 = arith.constant 0 : index
    %c0_44 = arith.constant 0 : index
    %175 = vector.load %arg1[%c5, %c0_43, %c0_44] : memref<8x4x16xf32, #tpu.memory_space<vmem>>, vector<1x4x16xf32>
    %176 = vector.shape_cast %175 : vector<1x4x16xf32> to vector<4x16xf32>
    %cst_45 = arith.constant dense<0.000000e+00> : vector<4x96xf32>
    %177 = tpu.matmul %176, %0, %cst_45 {dimension_numbers = #tpu.dot_dimension_numbers<[1], [0], [0], [1], [0, 0, 1, 1], [], []>} : vector<4x16xf32>, vector<16x96xf32>, vector<4x96xf32> -> vector<4x96xf32>
    %178 = vector.broadcast %2 : vector<1x96xf32> to vector<4x96xf32>
    %179 = arith.addf %177, %178 : vector<4x96xf32>
    %cst_46 = arith.constant dense<0.000000e+00> : vector<4x96xf32>
    %180 = tpu.matmul %174, %1, %cst_46 {dimension_numbers = #tpu.dot_dimension_numbers<[1], [0], [0], [1], [0, 0, 1, 1], [], []>} : vector<4x32xf32>, vector<32x96xf32>, vector<4x96xf32> -> vector<4x96xf32>
    %181 = vector.broadcast %3 : vector<1x96xf32> to vector<4x96xf32>
    %182 = arith.addf %180, %181 : vector<4x96xf32>
    %183 = vector.extract_strided_slice %179 {offsets = [0, 0], sizes = [4, 32], strides = [1, 1]} : vector<4x96xf32> to vector<4x32xf32>
    %184 = vector.extract_strided_slice %182 {offsets = [0, 0], sizes = [4, 32], strides = [1, 1]} : vector<4x96xf32> to vector<4x32xf32>
    %185 = arith.addf %183, %184 : vector<4x32xf32>
    %186 = arith.negf %185 : vector<4x32xf32>
    %187 = math.exp %186 : vector<4x32xf32>
    %cst_47 = arith.constant 1.000000e+00 : f32
    %188 = vector.broadcast %cst_47 : f32 to vector<4x32xf32>
    %189 = arith.addf %188, %187 : vector<4x32xf32>
    %190 = arith.divf %188, %189 : vector<4x32xf32>
    %191 = vector.extract_strided_slice %179 {offsets = [0, 32], sizes = [4, 32], strides = [1, 1]} : vector<4x96xf32> to vector<4x32xf32>
    %192 = vector.extract_strided_slice %182 {offsets = [0, 32], sizes = [4, 32], strides = [1, 1]} : vector<4x96xf32> to vector<4x32xf32>
    %193 = arith.addf %191, %192 : vector<4x32xf32>
    %194 = arith.negf %193 : vector<4x32xf32>
    %195 = math.exp %194 : vector<4x32xf32>
    %cst_48 = arith.constant 1.000000e+00 : f32
    %196 = vector.broadcast %cst_48 : f32 to vector<4x32xf32>
    %197 = arith.addf %196, %195 : vector<4x32xf32>
    %198 = arith.divf %196, %197 : vector<4x32xf32>
    %199 = vector.extract_strided_slice %179 {offsets = [0, 64], sizes = [4, 32], strides = [1, 1]} : vector<4x96xf32> to vector<4x32xf32>
    %200 = vector.extract_strided_slice %182 {offsets = [0, 64], sizes = [4, 32], strides = [1, 1]} : vector<4x96xf32> to vector<4x32xf32>
    %201 = arith.mulf %190, %200 : vector<4x32xf32>
    %202 = arith.addf %199, %201 : vector<4x32xf32>
    %203 = math.tanh %202 : vector<4x32xf32>
    %cst_49 = arith.constant 1.000000e+00 : f32
    %204 = vector.broadcast %cst_49 : f32 to vector<4x32xf32>
    %205 = arith.subf %204, %198 : vector<4x32xf32>
    %206 = arith.mulf %205, %203 : vector<4x32xf32>
    %207 = arith.mulf %198, %174 : vector<4x32xf32>
    %208 = arith.addf %206, %207 : vector<4x32xf32>
    %c6 = arith.constant 6 : index
    %c0_50 = arith.constant 0 : index
    %c0_51 = arith.constant 0 : index
    %209 = vector.load %arg1[%c6, %c0_50, %c0_51] : memref<8x4x16xf32, #tpu.memory_space<vmem>>, vector<1x4x16xf32>
    %210 = vector.shape_cast %209 : vector<1x4x16xf32> to vector<4x16xf32>
    %cst_52 = arith.constant dense<0.000000e+00> : vector<4x96xf32>
    %211 = tpu.matmul %210, %0, %cst_52 {dimension_numbers = #tpu.dot_dimension_numbers<[1], [0], [0], [1], [0, 0, 1, 1], [], []>} : vector<4x16xf32>, vector<16x96xf32>, vector<4x96xf32> -> vector<4x96xf32>
    %212 = vector.broadcast %2 : vector<1x96xf32> to vector<4x96xf32>
    %213 = arith.addf %211, %212 : vector<4x96xf32>
    %cst_53 = arith.constant dense<0.000000e+00> : vector<4x96xf32>
    %214 = tpu.matmul %208, %1, %cst_53 {dimension_numbers = #tpu.dot_dimension_numbers<[1], [0], [0], [1], [0, 0, 1, 1], [], []>} : vector<4x32xf32>, vector<32x96xf32>, vector<4x96xf32> -> vector<4x96xf32>
    %215 = vector.broadcast %3 : vector<1x96xf32> to vector<4x96xf32>
    %216 = arith.addf %214, %215 : vector<4x96xf32>
    %217 = vector.extract_strided_slice %213 {offsets = [0, 0], sizes = [4, 32], strides = [1, 1]} : vector<4x96xf32> to vector<4x32xf32>
    %218 = vector.extract_strided_slice %216 {offsets = [0, 0], sizes = [4, 32], strides = [1, 1]} : vector<4x96xf32> to vector<4x32xf32>
    %219 = arith.addf %217, %218 : vector<4x32xf32>
    %220 = arith.negf %219 : vector<4x32xf32>
    %221 = math.exp %220 : vector<4x32xf32>
    %cst_54 = arith.constant 1.000000e+00 : f32
    %222 = vector.broadcast %cst_54 : f32 to vector<4x32xf32>
    %223 = arith.addf %222, %221 : vector<4x32xf32>
    %224 = arith.divf %222, %223 : vector<4x32xf32>
    %225 = vector.extract_strided_slice %213 {offsets = [0, 32], sizes = [4, 32], strides = [1, 1]} : vector<4x96xf32> to vector<4x32xf32>
    %226 = vector.extract_strided_slice %216 {offsets = [0, 32], sizes = [4, 32], strides = [1, 1]} : vector<4x96xf32> to vector<4x32xf32>
    %227 = arith.addf %225, %226 : vector<4x32xf32>
    %228 = arith.negf %227 : vector<4x32xf32>
    %229 = math.exp %228 : vector<4x32xf32>
    %cst_55 = arith.constant 1.000000e+00 : f32
    %230 = vector.broadcast %cst_55 : f32 to vector<4x32xf32>
    %231 = arith.addf %230, %229 : vector<4x32xf32>
    %232 = arith.divf %230, %231 : vector<4x32xf32>
    %233 = vector.extract_strided_slice %213 {offsets = [0, 64], sizes = [4, 32], strides = [1, 1]} : vector<4x96xf32> to vector<4x32xf32>
    %234 = vector.extract_strided_slice %216 {offsets = [0, 64], sizes = [4, 32], strides = [1, 1]} : vector<4x96xf32> to vector<4x32xf32>
    %235 = arith.mulf %224, %234 : vector<4x32xf32>
    %236 = arith.addf %233, %235 : vector<4x32xf32>
    %237 = math.tanh %236 : vector<4x32xf32>
    %cst_56 = arith.constant 1.000000e+00 : f32
    %238 = vector.broadcast %cst_56 : f32 to vector<4x32xf32>
    %239 = arith.subf %238, %232 : vector<4x32xf32>
    %240 = arith.mulf %239, %237 : vector<4x32xf32>
    %241 = arith.mulf %232, %208 : vector<4x32xf32>
    %242 = arith.addf %240, %241 : vector<4x32xf32>
    %c7 = arith.constant 7 : index
    %c0_57 = arith.constant 0 : index
    %c0_58 = arith.constant 0 : index
    %243 = vector.load %arg1[%c7, %c0_57, %c0_58] : memref<8x4x16xf32, #tpu.memory_space<vmem>>, vector<1x4x16xf32>
    %244 = vector.shape_cast %243 : vector<1x4x16xf32> to vector<4x16xf32>
    %cst_59 = arith.constant dense<0.000000e+00> : vector<4x96xf32>
    %245 = tpu.matmul %244, %0, %cst_59 {dimension_numbers = #tpu.dot_dimension_numbers<[1], [0], [0], [1], [0, 0, 1, 1], [], []>} : vector<4x16xf32>, vector<16x96xf32>, vector<4x96xf32> -> vector<4x96xf32>
    %246 = vector.broadcast %2 : vector<1x96xf32> to vector<4x96xf32>
    %247 = arith.addf %245, %246 : vector<4x96xf32>
    %cst_60 = arith.constant dense<0.000000e+00> : vector<4x96xf32>
    %248 = tpu.matmul %242, %1, %cst_60 {dimension_numbers = #tpu.dot_dimension_numbers<[1], [0], [0], [1], [0, 0, 1, 1], [], []>} : vector<4x32xf32>, vector<32x96xf32>, vector<4x96xf32> -> vector<4x96xf32>
    %249 = vector.broadcast %3 : vector<1x96xf32> to vector<4x96xf32>
    %250 = arith.addf %248, %249 : vector<4x96xf32>
    %251 = vector.extract_strided_slice %247 {offsets = [0, 0], sizes = [4, 32], strides = [1, 1]} : vector<4x96xf32> to vector<4x32xf32>
    %252 = vector.extract_strided_slice %250 {offsets = [0, 0], sizes = [4, 32], strides = [1, 1]} : vector<4x96xf32> to vector<4x32xf32>
    %253 = arith.addf %251, %252 : vector<4x32xf32>
    %254 = arith.negf %253 : vector<4x32xf32>
    %255 = math.exp %254 : vector<4x32xf32>
    %cst_61 = arith.constant 1.000000e+00 : f32
    %256 = vector.broadcast %cst_61 : f32 to vector<4x32xf32>
    %257 = arith.addf %256, %255 : vector<4x32xf32>
    %258 = arith.divf %256, %257 : vector<4x32xf32>
    %259 = vector.extract_strided_slice %247 {offsets = [0, 32], sizes = [4, 32], strides = [1, 1]} : vector<4x96xf32> to vector<4x32xf32>
    %260 = vector.extract_strided_slice %250 {offsets = [0, 32], sizes = [4, 32], strides = [1, 1]} : vector<4x96xf32> to vector<4x32xf32>
    %261 = arith.addf %259, %260 : vector<4x32xf32>
    %262 = arith.negf %261 : vector<4x32xf32>
    %263 = math.exp %262 : vector<4x32xf32>
    %cst_62 = arith.constant 1.000000e+00 : f32
    %264 = vector.broadcast %cst_62 : f32 to vector<4x32xf32>
    %265 = arith.addf %264, %263 : vector<4x32xf32>
    %266 = arith.divf %264, %265 : vector<4x32xf32>
    %267 = vector.extract_strided_slice %247 {offsets = [0, 64], sizes = [4, 32], strides = [1, 1]} : vector<4x96xf32> to vector<4x32xf32>
    %268 = vector.extract_strided_slice %250 {offsets = [0, 64], sizes = [4, 32], strides = [1, 1]} : vector<4x96xf32> to vector<4x32xf32>
    %269 = arith.mulf %258, %268 : vector<4x32xf32>
    %270 = arith.addf %267, %269 : vector<4x32xf32>
    %271 = math.tanh %270 : vector<4x32xf32>
    %cst_63 = arith.constant 1.000000e+00 : f32
    %272 = vector.broadcast %cst_63 : f32 to vector<4x32xf32>
    %273 = arith.subf %272, %266 : vector<4x32xf32>
    %274 = arith.mulf %273, %271 : vector<4x32xf32>
    %275 = arith.mulf %266, %242 : vector<4x32xf32>
    %276 = arith.addf %274, %275 : vector<4x32xf32>
    %c0_64 = arith.constant 0 : index
    %c0_65 = arith.constant 0 : index
    %277 = vector.load %arg7[%c0_64, %c0_65] : memref<32x8xf32, #tpu.memory_space<vmem>>, vector<32x8xf32>
    %cst_66 = arith.constant dense<0.000000e+00> : vector<4x8xf32>
    %278 = tpu.matmul %276, %277, %cst_66 {dimension_numbers = #tpu.dot_dimension_numbers<[1], [0], [0], [1], [0, 0, 1, 1], [], []>} : vector<4x32xf32>, vector<32x8xf32>, vector<4x8xf32> -> vector<4x8xf32>
    %c0_67 = arith.constant 0 : index
    %c0_68 = arith.constant 0 : index
    %279 = vector.load %arg8[%c0_67, %c0_68] : memref<32x8xf32, #tpu.memory_space<vmem>>, vector<32x8xf32>
    %cst_69 = arith.constant dense<0.000000e+00> : vector<4x8xf32>
    %280 = tpu.matmul %276, %279, %cst_69 {dimension_numbers = #tpu.dot_dimension_numbers<[1], [0], [0], [1], [0, 0, 1, 1], [], []>} : vector<4x32xf32>, vector<32x8xf32>, vector<4x8xf32> -> vector<4x8xf32>
    %c0_70 = arith.constant 0 : index
    %c0_71 = arith.constant 0 : index
    %281 = vector.load %arg9[%c0_70, %c0_71] : memref<1x8xf32, #tpu.memory_space<vmem>>, vector<1x8xf32>
    %282 = vector.broadcast %281 : vector<1x8xf32> to vector<4x8xf32>
    %283 = arith.addf %280, %282 : vector<4x8xf32>
    %c0_72 = arith.constant 0 : index
    %c0_73 = arith.constant 0 : index
    %284 = vector.load %arg2[%c0_72, %c0_73] : memref<4x8xf32, #tpu.memory_space<vmem>>, vector<4x8xf32>
    %285 = math.exp %283 : vector<4x8xf32>
    %286 = arith.mulf %284, %285 : vector<4x8xf32>
    %287 = arith.addf %278, %286 : vector<4x8xf32>
    %c0_74 = arith.constant 0 : index
    %c0_75 = arith.constant 0 : index
    %288 = vector.load %arg10[%c0_74, %c0_75] : memref<8x24xf32, #tpu.memory_space<vmem>>, vector<8x24xf32>
    %cst_76 = arith.constant dense<0.000000e+00> : vector<4x24xf32>
    %289 = tpu.matmul %287, %288, %cst_76 {dimension_numbers = #tpu.dot_dimension_numbers<[1], [0], [0], [1], [0, 0, 1, 1], [], []>} : vector<4x8xf32>, vector<8x24xf32>, vector<4x24xf32> -> vector<4x24xf32>
    %c0_77 = arith.constant 0 : index
    %c0_78 = arith.constant 0 : index
    %290 = vector.load %arg11[%c0_77, %c0_78] : memref<1x24xf32, #tpu.memory_space<vmem>>, vector<1x24xf32>
    %291 = vector.broadcast %290 : vector<1x24xf32> to vector<4x24xf32>
    %292 = arith.addf %289, %291 : vector<4x24xf32>
    %293 = math.tanh %292 : vector<4x24xf32>
    %c0_79 = arith.constant 0 : index
    %c0_80 = arith.constant 0 : index
    %294 = vector.load %arg12[%c0_79, %c0_80] : memref<24x12xf32, #tpu.memory_space<vmem>>, vector<24x12xf32>
    %cst_81 = arith.constant dense<0.000000e+00> : vector<4x12xf32>
    %295 = tpu.matmul %293, %294, %cst_81 {dimension_numbers = #tpu.dot_dimension_numbers<[1], [0], [0], [1], [0, 0, 1, 1], [], []>} : vector<4x24xf32>, vector<24x12xf32>, vector<4x12xf32> -> vector<4x12xf32>
    %c0_82 = arith.constant 0 : index
    %c0_83 = arith.constant 0 : index
    %296 = vector.load %arg13[%c0_82, %c0_83] : memref<1x12xf32, #tpu.memory_space<vmem>>, vector<1x12xf32>
    %297 = vector.broadcast %296 : vector<1x12xf32> to vector<4x12xf32>
    %298 = arith.addf %295, %297 : vector<4x12xf32>
    %c0_84 = arith.constant 0 : index
    %c0_85 = arith.constant 0 : index
    %299 = vector.load %arg14[%c0_84, %c0_85] : memref<12x1888xf32, #tpu.memory_space<vmem>>, vector<12x1888xf32>
    %cst_86 = arith.constant dense<0.000000e+00> : vector<4x1888xf32>
    %300 = tpu.matmul %298, %299, %cst_86 {dimension_numbers = #tpu.dot_dimension_numbers<[1], [0], [0], [1], [0, 0, 1, 1], [], []>} : vector<4x12xf32>, vector<12x1888xf32>, vector<4x1888xf32> -> vector<4x1888xf32>
    %c0_87 = arith.constant 0 : index
    %c0_88 = arith.constant 0 : index
    %301 = vector.load %arg15[%c0_87, %c0_88] : memref<1x1888xf32, #tpu.memory_space<vmem>>, vector<1x1888xf32>
    %302 = vector.broadcast %301 : vector<1x1888xf32> to vector<4x1888xf32>
    %303 = arith.addf %300, %302 : vector<4x1888xf32>
    %304 = tpu.concatenate %278, %283, %303 in 1 : vector<4x8xf32>, vector<4x8xf32>, vector<4x1888xf32> -> vector<4x1904xf32>
    %c0_89 = arith.constant 0 : index
    %c0_90 = arith.constant 0 : index
    %305 = vector.load %arg16[%c0_89, %c0_90] : memref<4x1904xf32, #tpu.memory_space<vmem>>, vector<4x1904xf32>
    tpu.vector_store %arg16[%c0_89, %c0_90], %304 {strides = array<i32>} : memref<4x1904xf32, #tpu.memory_space<vmem>>, vector<4x1904xf32>,
    return
  }
  func.func @transform_0(%arg0: i32) -> (i32, i32, i32) {
    %c0_i32 = arith.constant 0 : i32
    %c0_i32_0 = arith.constant 0 : i32
    %c0_i32_1 = arith.constant 0 : i32
    %c0_i32_2 = arith.constant 0 : i32
    return %c0_i32, %c0_i32_0, %c0_i32_1 : i32, i32, i32
  }
  func.func @transform_1(%arg0: i32) -> (i32, i32) {
    %c0_i32 = arith.constant 0 : i32
    %c0_i32_0 = arith.constant 0 : i32
    %c0_i32_1 = arith.constant 0 : i32
    return %c0_i32, %c0_i32_0 : i32, i32
  }
  func.func @transform_2(%arg0: i32) -> (i32, i32) {
    %c0_i32 = arith.constant 0 : i32
    %c0_i32_0 = arith.constant 0 : i32
    %c0_i32_1 = arith.constant 0 : i32
    return %c0_i32, %c0_i32_0 : i32, i32
  }
  func.func @transform_3(%arg0: i32) -> (i32, i32) {
    %c0_i32 = arith.constant 0 : i32
    %c0_i32_0 = arith.constant 0 : i32
    %c0_i32_1 = arith.constant 0 : i32
    return %c0_i32, %c0_i32_0 : i32, i32
  }
  func.func @transform_4(%arg0: i32) -> (i32, i32) {
    %c0_i32 = arith.constant 0 : i32
    %c0_i32_0 = arith.constant 0 : i32
    %c0_i32_1 = arith.constant 0 : i32
    return %c0_i32, %c0_i32_0 : i32, i32
  }
  func.func @transform_5(%arg0: i32) -> (i32, i32) {
    %c0_i32 = arith.constant 0 : i32
    %c0_i32_0 = arith.constant 0 : i32
    %c0_i32_1 = arith.constant 0 : i32
    return %c0_i32, %c0_i32_0 : i32, i32
  }
  func.func @transform_6(%arg0: i32) -> (i32, i32) {
    %c0_i32 = arith.constant 0 : i32
    %c0_i32_0 = arith.constant 0 : i32
    %c0_i32_1 = arith.constant 0 : i32
    return %c0_i32, %c0_i32_0 : i32, i32
  }
  func.func @transform_7(%arg0: i32) -> (i32, i32) {
    %c0_i32 = arith.constant 0 : i32
    %c0_i32_0 = arith.constant 0 : i32
    %c0_i32_1 = arith.constant 0 : i32
    return %c0_i32, %c0_i32_0 : i32, i32
  }
  func.func @transform_8(%arg0: i32) -> (i32, i32) {
    %c0_i32 = arith.constant 0 : i32
    %c0_i32_0 = arith.constant 0 : i32
    %c0_i32_1 = arith.constant 0 : i32
    return %c0_i32, %c0_i32_0 : i32, i32
  }
  func.func @transform_9(%arg0: i32) -> (i32, i32) {
    %c0_i32 = arith.constant 0 : i32
    %c0_i32_0 = arith.constant 0 : i32
    %c0_i32_1 = arith.constant 0 : i32
    return %c0_i32, %c0_i32_0 : i32, i32
  }
  func.func @transform_10(%arg0: i32) -> (i32, i32) {
    %c0_i32 = arith.constant 0 : i32
    %c0_i32_0 = arith.constant 0 : i32
    %c0_i32_1 = arith.constant 0 : i32
    return %c0_i32, %c0_i32_0 : i32, i32
  }
  func.func @transform_11(%arg0: i32) -> (i32, i32) {
    %c0_i32 = arith.constant 0 : i32
    %c0_i32_0 = arith.constant 0 : i32
    %c0_i32_1 = arith.constant 0 : i32
    return %c0_i32, %c0_i32_0 : i32, i32
  }
  func.func @transform_12(%arg0: i32) -> (i32, i32) {
    %c0_i32 = arith.constant 0 : i32
    %c0_i32_0 = arith.constant 0 : i32
    %c0_i32_1 = arith.constant 0 : i32
    return %c0_i32, %c0_i32_0 : i32, i32
  }
  func.func @transform_13(%arg0: i32) -> (i32, i32) {
    %c0_i32 = arith.constant 0 : i32
    %c0_i32_0 = arith.constant 0 : i32
    %c0_i32_1 = arith.constant 0 : i32
    return %c0_i32, %c0_i32_0 : i32, i32
  }
  func.func @transform_14(%arg0: i32) -> (i32, i32) {
    %c0_i32 = arith.constant 0 : i32
    %c0_i32_0 = arith.constant 0 : i32
    %c0_i32_1 = arith.constant 0 : i32
    return %c0_i32, %c0_i32_0 : i32, i32
  }
  func.func @transform_15(%arg0: i32) -> (i32, i32) {
    %c0_i32 = arith.constant 0 : i32
    %c0_i32_0 = arith.constant 0 : i32
    %c0_i32_1 = arith.constant 0 : i32
    return %c0_i32, %c0_i32_0 : i32, i32
  }
}

module attributes {stable_mosaic.version = 11 : i64} {
  func.func @_decoder_kernel(%arg0: i32, %arg1: memref<8x4x8xf32, #tpu.memory_space<vmem>>, %arg2: memref<4x32xf32, #tpu.memory_space<vmem>>, %arg3: memref<4x128xf32, #tpu.memory_space<vmem>>, %arg4: memref<4x32xf32, #tpu.memory_space<vmem>>, %arg5: memref<8x64xf32, #tpu.memory_space<vmem>>, %arg6: memref<32x64xf32, #tpu.memory_space<vmem>>, %arg7: memref<1x64xf32, #tpu.memory_space<vmem>>, %arg8: memref<128x32xf32, #tpu.memory_space<vmem>>, %arg9: memref<4x32xf32, #tpu.memory_space<vmem>>, %arg10: memref<32x32xf32, #tpu.memory_space<vmem>>, %arg11: memref<128x16xf32, #tpu.memory_space<vmem>>, %arg12: memref<32x8xf32, #tpu.memory_space<vmem>>, %arg13: memref<4x160xf32, #tpu.memory_space<vmem>>) attributes {dimension_semantics = [#tpu.dimension_semantics<arbitrary>], iteration_bounds = array<i64: 1>, scalar_prefetch = 0 : i64, scratch_operands = 0 : i64, tpu.core_type = #tpu.core_type<tc>, window_params = [{pipeline_mode = #tpu.pipeline_mode<synchronous>, transform_indices = @transform_0, window_bounds = array<i64: 8, 4, 8>}, {pipeline_mode = #tpu.pipeline_mode<synchronous>, transform_indices = @transform_1, window_bounds = array<i64: 4, 32>}, {pipeline_mode = #tpu.pipeline_mode<synchronous>, transform_indices = @transform_2, window_bounds = array<i64: 4, 128>}, {pipeline_mode = #tpu.pipeline_mode<synchronous>, transform_indices = @transform_3, window_bounds = array<i64: 4, 32>}, {pipeline_mode = #tpu.pipeline_mode<synchronous>, transform_indices = @transform_4, window_bounds = array<i64: 8, 64>}, {pipeline_mode = #tpu.pipeline_mode<synchronous>, transform_indices = @transform_5, window_bounds = array<i64: 32, 64>}, {pipeline_mode = #tpu.pipeline_mode<synchronous>, transform_indices = @transform_6, window_bounds = array<i64: 1, 64>}, {pipeline_mode = #tpu.pipeline_mode<synchronous>, transform_indices = @transform_7, window_bounds = array<i64: 128, 32>}, {pipeline_mode = #tpu.pipeline_mode<synchronous>, transform_indices = @transform_8, window_bounds = array<i64: 4, 32>}, {pipeline_mode = #tpu.pipeline_mode<synchronous>, transform_indices = @transform_9, window_bounds = array<i64: 32, 32>}, {pipeline_mode = #tpu.pipeline_mode<synchronous>, transform_indices = @transform_10, window_bounds = array<i64: 128, 16>}, {pipeline_mode = #tpu.pipeline_mode<synchronous>, transform_indices = @transform_11, window_bounds = array<i64: 32, 8>}, {pipeline_mode = #tpu.pipeline_mode<synchronous>, transform_indices = @transform_12, window_bounds = array<i64: 4, 160>}]} {
    %c0 = arith.constant 0 : index
    %c0_0 = arith.constant 0 : index
    %0 = vector.load %arg5[%c0, %c0_0] : memref<8x64xf32, #tpu.memory_space<vmem>>, vector<8x64xf32>
    %c0_1 = arith.constant 0 : index
    %c0_2 = arith.constant 0 : index
    %1 = vector.load %arg6[%c0_1, %c0_2] : memref<32x64xf32, #tpu.memory_space<vmem>>, vector<32x64xf32>
    %c0_3 = arith.constant 0 : index
    %c0_4 = arith.constant 0 : index
    %2 = vector.load %arg7[%c0_3, %c0_4] : memref<1x64xf32, #tpu.memory_space<vmem>>, vector<1x64xf32>
    %c0_5 = arith.constant 0 : index
    %c0_6 = arith.constant 0 : index
    %3 = vector.load %arg3[%c0_5, %c0_6] : memref<4x128xf32, #tpu.memory_space<vmem>>, vector<4x128xf32>
    %c0_7 = arith.constant 0 : index
    %c0_8 = arith.constant 0 : index
    %4 = vector.load %arg4[%c0_7, %c0_8] : memref<4x32xf32, #tpu.memory_space<vmem>>, vector<4x32xf32>
    %c0_9 = arith.constant 0 : index
    %c0_10 = arith.constant 0 : index
    %5 = vector.load %arg8[%c0_9, %c0_10] : memref<128x32xf32, #tpu.memory_space<vmem>>, vector<128x32xf32>
    %c0_11 = arith.constant 0 : index
    %c0_12 = arith.constant 0 : index
    %6 = vector.load %arg10[%c0_11, %c0_12] : memref<32x32xf32, #tpu.memory_space<vmem>>, vector<32x32xf32>
    %c0_13 = arith.constant 0 : index
    %c0_14 = arith.constant 0 : index
    %7 = vector.load %arg11[%c0_13, %c0_14] : memref<128x16xf32, #tpu.memory_space<vmem>>, vector<128x16xf32>
    %c0_15 = arith.constant 0 : index
    %c0_16 = arith.constant 0 : index
    %8 = vector.load %arg12[%c0_15, %c0_16] : memref<32x8xf32, #tpu.memory_space<vmem>>, vector<32x8xf32>
    %c0_17 = arith.constant 0 : index
    %c0_18 = arith.constant 0 : index
    %9 = vector.load %arg9[%c0_17, %c0_18] : memref<4x32xf32, #tpu.memory_space<vmem>>, vector<4x32xf32>
    %c0_19 = arith.constant 0 : index
    %c0_20 = arith.constant 0 : index
    %10 = vector.load %arg2[%c0_19, %c0_20] : memref<4x32xf32, #tpu.memory_space<vmem>>, vector<4x32xf32>
    %c0_21 = arith.constant 0 : index
    %c0_22 = arith.constant 0 : index
    %c0_23 = arith.constant 0 : index
    %11 = vector.load %arg1[%c0_21, %c0_22, %c0_23] : memref<8x4x8xf32, #tpu.memory_space<vmem>>, vector<1x4x8xf32>
    %12 = vector.shape_cast %11 : vector<1x4x8xf32> to vector<4x8xf32>
    %13 = tpu.concatenate %12, %12, %12, %12 in 1 : vector<4x8xf32>, vector<4x8xf32>, vector<4x8xf32>, vector<4x8xf32> -> vector<4x32xf32>
    %14 = arith.mulf %13, %4 : vector<4x32xf32>
    %cst = arith.constant dense<0.000000e+00> : vector<4x64xf32>
    %15 = tpu.matmul %12, %0, %cst {dimension_numbers = #tpu.dot_dimension_numbers<[1], [0], [0], [1], [0, 0, 1, 1], [], []>} : vector<4x8xf32>, vector<8x64xf32>, vector<4x64xf32> -> vector<4x64xf32>
    %cst_24 = arith.constant dense<0.000000e+00> : vector<4x64xf32>
    %16 = tpu.matmul %10, %1, %cst_24 {dimension_numbers = #tpu.dot_dimension_numbers<[1], [0], [0], [1], [0, 0, 1, 1], [], []>} : vector<4x32xf32>, vector<32x64xf32>, vector<4x64xf32> -> vector<4x64xf32>
    %17 = arith.addf %15, %16 : vector<4x64xf32>
    %18 = vector.broadcast %2 : vector<1x64xf32> to vector<4x64xf32>
    %19 = arith.addf %17, %18 : vector<4x64xf32>
    %20 = vector.extract_strided_slice %19 {offsets = [0, 0], sizes = [4, 32], strides = [1, 1]} : vector<4x64xf32> to vector<4x32xf32>
    %21 = arith.negf %20 : vector<4x32xf32>
    %22 = math.exp %21 : vector<4x32xf32>
    %cst_25 = arith.constant 1.000000e+00 : f32
    %23 = vector.broadcast %cst_25 : f32 to vector<4x32xf32>
    %24 = arith.addf %23, %22 : vector<4x32xf32>
    %25 = arith.divf %23, %24 : vector<4x32xf32>
    %26 = vector.extract_strided_slice %19 {offsets = [0, 32], sizes = [4, 32], strides = [1, 1]} : vector<4x64xf32> to vector<4x32xf32>
    %27 = arith.negf %26 : vector<4x32xf32>
    %28 = math.exp %27 : vector<4x32xf32>
    %cst_26 = arith.constant 1.000000e+00 : f32
    %29 = vector.broadcast %cst_26 : f32 to vector<4x32xf32>
    %30 = arith.addf %29, %28 : vector<4x32xf32>
    %31 = arith.divf %29, %30 : vector<4x32xf32>
    %32 = tpu.concatenate %10, %10, %10, %10 in 1 : vector<4x32xf32>, vector<4x32xf32>, vector<4x32xf32>, vector<4x32xf32> -> vector<4x128xf32>
    %33 = arith.mulf %32, %3 : vector<4x128xf32>
    %cst_27 = arith.constant dense<0.000000e+00> : vector<4x32xf32>
    %34 = tpu.matmul %33, %5, %cst_27 {dimension_numbers = #tpu.dot_dimension_numbers<[1], [0], [0], [1], [0, 0, 1, 1], [], []>} : vector<4x128xf32>, vector<128x32xf32>, vector<4x32xf32> -> vector<4x32xf32>
    %cst_28 = arith.constant dense<0.000000e+00> : vector<4x32xf32>
    %35 = tpu.matmul %14, %6, %cst_28 {dimension_numbers = #tpu.dot_dimension_numbers<[1], [0], [0], [1], [0, 0, 1, 1], [], []>} : vector<4x32xf32>, vector<32x32xf32>, vector<4x32xf32> -> vector<4x32xf32>
    %36 = arith.mulf %25, %34 : vector<4x32xf32>
    %37 = arith.addf %35, %36 : vector<4x32xf32>
    %38 = arith.addf %37, %9 : vector<4x32xf32>
    %39 = math.tanh %38 : vector<4x32xf32>
    %40 = arith.mulf %31, %10 : vector<4x32xf32>
    %cst_29 = arith.constant 1.000000e+00 : f32
    %41 = vector.broadcast %cst_29 : f32 to vector<4x32xf32>
    %42 = arith.subf %41, %31 : vector<4x32xf32>
    %43 = arith.mulf %42, %39 : vector<4x32xf32>
    %44 = arith.addf %40, %43 : vector<4x32xf32>
    %45 = tpu.concatenate %44, %44, %44, %44 in 1 : vector<4x32xf32>, vector<4x32xf32>, vector<4x32xf32>, vector<4x32xf32> -> vector<4x128xf32>
    %46 = arith.mulf %45, %3 : vector<4x128xf32>
    %cst_30 = arith.constant dense<0.000000e+00> : vector<4x16xf32>
    %47 = tpu.matmul %46, %7, %cst_30 {dimension_numbers = #tpu.dot_dimension_numbers<[1], [0], [0], [1], [0, 0, 1, 1], [], []>} : vector<4x128xf32>, vector<128x16xf32>, vector<4x16xf32> -> vector<4x16xf32>
    %cst_31 = arith.constant dense<0.000000e+00> : vector<4x8xf32>
    %48 = tpu.matmul %14, %8, %cst_31 {dimension_numbers = #tpu.dot_dimension_numbers<[1], [0], [0], [1], [0, 0, 1, 1], [], []>} : vector<4x32xf32>, vector<32x8xf32>, vector<4x8xf32> -> vector<4x8xf32>
    %49 = tpu.concatenate %12, %48 in 1 : vector<4x8xf32>, vector<4x8xf32> -> vector<4x16xf32>
    %50 = arith.addf %47, %49 : vector<4x16xf32>
    %c1 = arith.constant 1 : index
    %c0_32 = arith.constant 0 : index
    %c0_33 = arith.constant 0 : index
    %51 = vector.load %arg1[%c1, %c0_32, %c0_33] : memref<8x4x8xf32, #tpu.memory_space<vmem>>, vector<1x4x8xf32>
    %52 = vector.shape_cast %51 : vector<1x4x8xf32> to vector<4x8xf32>
    %53 = tpu.concatenate %52, %52, %52, %52 in 1 : vector<4x8xf32>, vector<4x8xf32>, vector<4x8xf32>, vector<4x8xf32> -> vector<4x32xf32>
    %54 = arith.mulf %53, %4 : vector<4x32xf32>
    %cst_34 = arith.constant dense<0.000000e+00> : vector<4x64xf32>
    %55 = tpu.matmul %52, %0, %cst_34 {dimension_numbers = #tpu.dot_dimension_numbers<[1], [0], [0], [1], [0, 0, 1, 1], [], []>} : vector<4x8xf32>, vector<8x64xf32>, vector<4x64xf32> -> vector<4x64xf32>
    %cst_35 = arith.constant dense<0.000000e+00> : vector<4x64xf32>
    %56 = tpu.matmul %44, %1, %cst_35 {dimension_numbers = #tpu.dot_dimension_numbers<[1], [0], [0], [1], [0, 0, 1, 1], [], []>} : vector<4x32xf32>, vector<32x64xf32>, vector<4x64xf32> -> vector<4x64xf32>
    %57 = arith.addf %55, %56 : vector<4x64xf32>
    %58 = vector.broadcast %2 : vector<1x64xf32> to vector<4x64xf32>
    %59 = arith.addf %57, %58 : vector<4x64xf32>
    %60 = vector.extract_strided_slice %59 {offsets = [0, 0], sizes = [4, 32], strides = [1, 1]} : vector<4x64xf32> to vector<4x32xf32>
    %61 = arith.negf %60 : vector<4x32xf32>
    %62 = math.exp %61 : vector<4x32xf32>
    %cst_36 = arith.constant 1.000000e+00 : f32
    %63 = vector.broadcast %cst_36 : f32 to vector<4x32xf32>
    %64 = arith.addf %63, %62 : vector<4x32xf32>
    %65 = arith.divf %63, %64 : vector<4x32xf32>
    %66 = vector.extract_strided_slice %59 {offsets = [0, 32], sizes = [4, 32], strides = [1, 1]} : vector<4x64xf32> to vector<4x32xf32>
    %67 = arith.negf %66 : vector<4x32xf32>
    %68 = math.exp %67 : vector<4x32xf32>
    %cst_37 = arith.constant 1.000000e+00 : f32
    %69 = vector.broadcast %cst_37 : f32 to vector<4x32xf32>
    %70 = arith.addf %69, %68 : vector<4x32xf32>
    %71 = arith.divf %69, %70 : vector<4x32xf32>
    %72 = tpu.concatenate %44, %44, %44, %44 in 1 : vector<4x32xf32>, vector<4x32xf32>, vector<4x32xf32>, vector<4x32xf32> -> vector<4x128xf32>
    %73 = arith.mulf %72, %3 : vector<4x128xf32>
    %cst_38 = arith.constant dense<0.000000e+00> : vector<4x32xf32>
    %74 = tpu.matmul %73, %5, %cst_38 {dimension_numbers = #tpu.dot_dimension_numbers<[1], [0], [0], [1], [0, 0, 1, 1], [], []>} : vector<4x128xf32>, vector<128x32xf32>, vector<4x32xf32> -> vector<4x32xf32>
    %cst_39 = arith.constant dense<0.000000e+00> : vector<4x32xf32>
    %75 = tpu.matmul %54, %6, %cst_39 {dimension_numbers = #tpu.dot_dimension_numbers<[1], [0], [0], [1], [0, 0, 1, 1], [], []>} : vector<4x32xf32>, vector<32x32xf32>, vector<4x32xf32> -> vector<4x32xf32>
    %76 = arith.mulf %65, %74 : vector<4x32xf32>
    %77 = arith.addf %75, %76 : vector<4x32xf32>
    %78 = arith.addf %77, %9 : vector<4x32xf32>
    %79 = math.tanh %78 : vector<4x32xf32>
    %80 = arith.mulf %71, %44 : vector<4x32xf32>
    %cst_40 = arith.constant 1.000000e+00 : f32
    %81 = vector.broadcast %cst_40 : f32 to vector<4x32xf32>
    %82 = arith.subf %81, %71 : vector<4x32xf32>
    %83 = arith.mulf %82, %79 : vector<4x32xf32>
    %84 = arith.addf %80, %83 : vector<4x32xf32>
    %85 = tpu.concatenate %84, %84, %84, %84 in 1 : vector<4x32xf32>, vector<4x32xf32>, vector<4x32xf32>, vector<4x32xf32> -> vector<4x128xf32>
    %86 = arith.mulf %85, %3 : vector<4x128xf32>
    %cst_41 = arith.constant dense<0.000000e+00> : vector<4x16xf32>
    %87 = tpu.matmul %86, %7, %cst_41 {dimension_numbers = #tpu.dot_dimension_numbers<[1], [0], [0], [1], [0, 0, 1, 1], [], []>} : vector<4x128xf32>, vector<128x16xf32>, vector<4x16xf32> -> vector<4x16xf32>
    %cst_42 = arith.constant dense<0.000000e+00> : vector<4x8xf32>
    %88 = tpu.matmul %54, %8, %cst_42 {dimension_numbers = #tpu.dot_dimension_numbers<[1], [0], [0], [1], [0, 0, 1, 1], [], []>} : vector<4x32xf32>, vector<32x8xf32>, vector<4x8xf32> -> vector<4x8xf32>
    %89 = tpu.concatenate %52, %88 in 1 : vector<4x8xf32>, vector<4x8xf32> -> vector<4x16xf32>
    %90 = arith.addf %87, %89 : vector<4x16xf32>
    %c2 = arith.constant 2 : index
    %c0_43 = arith.constant 0 : index
    %c0_44 = arith.constant 0 : index
    %91 = vector.load %arg1[%c2, %c0_43, %c0_44] : memref<8x4x8xf32, #tpu.memory_space<vmem>>, vector<1x4x8xf32>
    %92 = vector.shape_cast %91 : vector<1x4x8xf32> to vector<4x8xf32>
    %93 = tpu.concatenate %92, %92, %92, %92 in 1 : vector<4x8xf32>, vector<4x8xf32>, vector<4x8xf32>, vector<4x8xf32> -> vector<4x32xf32>
    %94 = arith.mulf %93, %4 : vector<4x32xf32>
    %cst_45 = arith.constant dense<0.000000e+00> : vector<4x64xf32>
    %95 = tpu.matmul %92, %0, %cst_45 {dimension_numbers = #tpu.dot_dimension_numbers<[1], [0], [0], [1], [0, 0, 1, 1], [], []>} : vector<4x8xf32>, vector<8x64xf32>, vector<4x64xf32> -> vector<4x64xf32>
    %cst_46 = arith.constant dense<0.000000e+00> : vector<4x64xf32>
    %96 = tpu.matmul %84, %1, %cst_46 {dimension_numbers = #tpu.dot_dimension_numbers<[1], [0], [0], [1], [0, 0, 1, 1], [], []>} : vector<4x32xf32>, vector<32x64xf32>, vector<4x64xf32> -> vector<4x64xf32>
    %97 = arith.addf %95, %96 : vector<4x64xf32>
    %98 = vector.broadcast %2 : vector<1x64xf32> to vector<4x64xf32>
    %99 = arith.addf %97, %98 : vector<4x64xf32>
    %100 = vector.extract_strided_slice %99 {offsets = [0, 0], sizes = [4, 32], strides = [1, 1]} : vector<4x64xf32> to vector<4x32xf32>
    %101 = arith.negf %100 : vector<4x32xf32>
    %102 = math.exp %101 : vector<4x32xf32>
    %cst_47 = arith.constant 1.000000e+00 : f32
    %103 = vector.broadcast %cst_47 : f32 to vector<4x32xf32>
    %104 = arith.addf %103, %102 : vector<4x32xf32>
    %105 = arith.divf %103, %104 : vector<4x32xf32>
    %106 = vector.extract_strided_slice %99 {offsets = [0, 32], sizes = [4, 32], strides = [1, 1]} : vector<4x64xf32> to vector<4x32xf32>
    %107 = arith.negf %106 : vector<4x32xf32>
    %108 = math.exp %107 : vector<4x32xf32>
    %cst_48 = arith.constant 1.000000e+00 : f32
    %109 = vector.broadcast %cst_48 : f32 to vector<4x32xf32>
    %110 = arith.addf %109, %108 : vector<4x32xf32>
    %111 = arith.divf %109, %110 : vector<4x32xf32>
    %112 = tpu.concatenate %84, %84, %84, %84 in 1 : vector<4x32xf32>, vector<4x32xf32>, vector<4x32xf32>, vector<4x32xf32> -> vector<4x128xf32>
    %113 = arith.mulf %112, %3 : vector<4x128xf32>
    %cst_49 = arith.constant dense<0.000000e+00> : vector<4x32xf32>
    %114 = tpu.matmul %113, %5, %cst_49 {dimension_numbers = #tpu.dot_dimension_numbers<[1], [0], [0], [1], [0, 0, 1, 1], [], []>} : vector<4x128xf32>, vector<128x32xf32>, vector<4x32xf32> -> vector<4x32xf32>
    %cst_50 = arith.constant dense<0.000000e+00> : vector<4x32xf32>
    %115 = tpu.matmul %94, %6, %cst_50 {dimension_numbers = #tpu.dot_dimension_numbers<[1], [0], [0], [1], [0, 0, 1, 1], [], []>} : vector<4x32xf32>, vector<32x32xf32>, vector<4x32xf32> -> vector<4x32xf32>
    %116 = arith.mulf %105, %114 : vector<4x32xf32>
    %117 = arith.addf %115, %116 : vector<4x32xf32>
    %118 = arith.addf %117, %9 : vector<4x32xf32>
    %119 = math.tanh %118 : vector<4x32xf32>
    %120 = arith.mulf %111, %84 : vector<4x32xf32>
    %cst_51 = arith.constant 1.000000e+00 : f32
    %121 = vector.broadcast %cst_51 : f32 to vector<4x32xf32>
    %122 = arith.subf %121, %111 : vector<4x32xf32>
    %123 = arith.mulf %122, %119 : vector<4x32xf32>
    %124 = arith.addf %120, %123 : vector<4x32xf32>
    %125 = tpu.concatenate %124, %124, %124, %124 in 1 : vector<4x32xf32>, vector<4x32xf32>, vector<4x32xf32>, vector<4x32xf32> -> vector<4x128xf32>
    %126 = arith.mulf %125, %3 : vector<4x128xf32>
    %cst_52 = arith.constant dense<0.000000e+00> : vector<4x16xf32>
    %127 = tpu.matmul %126, %7, %cst_52 {dimension_numbers = #tpu.dot_dimension_numbers<[1], [0], [0], [1], [0, 0, 1, 1], [], []>} : vector<4x128xf32>, vector<128x16xf32>, vector<4x16xf32> -> vector<4x16xf32>
    %cst_53 = arith.constant dense<0.000000e+00> : vector<4x8xf32>
    %128 = tpu.matmul %94, %8, %cst_53 {dimension_numbers = #tpu.dot_dimension_numbers<[1], [0], [0], [1], [0, 0, 1, 1], [], []>} : vector<4x32xf32>, vector<32x8xf32>, vector<4x8xf32> -> vector<4x8xf32>
    %129 = tpu.concatenate %92, %128 in 1 : vector<4x8xf32>, vector<4x8xf32> -> vector<4x16xf32>
    %130 = arith.addf %127, %129 : vector<4x16xf32>
    %c3 = arith.constant 3 : index
    %c0_54 = arith.constant 0 : index
    %c0_55 = arith.constant 0 : index
    %131 = vector.load %arg1[%c3, %c0_54, %c0_55] : memref<8x4x8xf32, #tpu.memory_space<vmem>>, vector<1x4x8xf32>
    %132 = vector.shape_cast %131 : vector<1x4x8xf32> to vector<4x8xf32>
    %133 = tpu.concatenate %132, %132, %132, %132 in 1 : vector<4x8xf32>, vector<4x8xf32>, vector<4x8xf32>, vector<4x8xf32> -> vector<4x32xf32>
    %134 = arith.mulf %133, %4 : vector<4x32xf32>
    %cst_56 = arith.constant dense<0.000000e+00> : vector<4x64xf32>
    %135 = tpu.matmul %132, %0, %cst_56 {dimension_numbers = #tpu.dot_dimension_numbers<[1], [0], [0], [1], [0, 0, 1, 1], [], []>} : vector<4x8xf32>, vector<8x64xf32>, vector<4x64xf32> -> vector<4x64xf32>
    %cst_57 = arith.constant dense<0.000000e+00> : vector<4x64xf32>
    %136 = tpu.matmul %124, %1, %cst_57 {dimension_numbers = #tpu.dot_dimension_numbers<[1], [0], [0], [1], [0, 0, 1, 1], [], []>} : vector<4x32xf32>, vector<32x64xf32>, vector<4x64xf32> -> vector<4x64xf32>
    %137 = arith.addf %135, %136 : vector<4x64xf32>
    %138 = vector.broadcast %2 : vector<1x64xf32> to vector<4x64xf32>
    %139 = arith.addf %137, %138 : vector<4x64xf32>
    %140 = vector.extract_strided_slice %139 {offsets = [0, 0], sizes = [4, 32], strides = [1, 1]} : vector<4x64xf32> to vector<4x32xf32>
    %141 = arith.negf %140 : vector<4x32xf32>
    %142 = math.exp %141 : vector<4x32xf32>
    %cst_58 = arith.constant 1.000000e+00 : f32
    %143 = vector.broadcast %cst_58 : f32 to vector<4x32xf32>
    %144 = arith.addf %143, %142 : vector<4x32xf32>
    %145 = arith.divf %143, %144 : vector<4x32xf32>
    %146 = vector.extract_strided_slice %139 {offsets = [0, 32], sizes = [4, 32], strides = [1, 1]} : vector<4x64xf32> to vector<4x32xf32>
    %147 = arith.negf %146 : vector<4x32xf32>
    %148 = math.exp %147 : vector<4x32xf32>
    %cst_59 = arith.constant 1.000000e+00 : f32
    %149 = vector.broadcast %cst_59 : f32 to vector<4x32xf32>
    %150 = arith.addf %149, %148 : vector<4x32xf32>
    %151 = arith.divf %149, %150 : vector<4x32xf32>
    %152 = tpu.concatenate %124, %124, %124, %124 in 1 : vector<4x32xf32>, vector<4x32xf32>, vector<4x32xf32>, vector<4x32xf32> -> vector<4x128xf32>
    %153 = arith.mulf %152, %3 : vector<4x128xf32>
    %cst_60 = arith.constant dense<0.000000e+00> : vector<4x32xf32>
    %154 = tpu.matmul %153, %5, %cst_60 {dimension_numbers = #tpu.dot_dimension_numbers<[1], [0], [0], [1], [0, 0, 1, 1], [], []>} : vector<4x128xf32>, vector<128x32xf32>, vector<4x32xf32> -> vector<4x32xf32>
    %cst_61 = arith.constant dense<0.000000e+00> : vector<4x32xf32>
    %155 = tpu.matmul %134, %6, %cst_61 {dimension_numbers = #tpu.dot_dimension_numbers<[1], [0], [0], [1], [0, 0, 1, 1], [], []>} : vector<4x32xf32>, vector<32x32xf32>, vector<4x32xf32> -> vector<4x32xf32>
    %156 = arith.mulf %145, %154 : vector<4x32xf32>
    %157 = arith.addf %155, %156 : vector<4x32xf32>
    %158 = arith.addf %157, %9 : vector<4x32xf32>
    %159 = math.tanh %158 : vector<4x32xf32>
    %160 = arith.mulf %151, %124 : vector<4x32xf32>
    %cst_62 = arith.constant 1.000000e+00 : f32
    %161 = vector.broadcast %cst_62 : f32 to vector<4x32xf32>
    %162 = arith.subf %161, %151 : vector<4x32xf32>
    %163 = arith.mulf %162, %159 : vector<4x32xf32>
    %164 = arith.addf %160, %163 : vector<4x32xf32>
    %165 = tpu.concatenate %164, %164, %164, %164 in 1 : vector<4x32xf32>, vector<4x32xf32>, vector<4x32xf32>, vector<4x32xf32> -> vector<4x128xf32>
    %166 = arith.mulf %165, %3 : vector<4x128xf32>
    %cst_63 = arith.constant dense<0.000000e+00> : vector<4x16xf32>
    %167 = tpu.matmul %166, %7, %cst_63 {dimension_numbers = #tpu.dot_dimension_numbers<[1], [0], [0], [1], [0, 0, 1, 1], [], []>} : vector<4x128xf32>, vector<128x16xf32>, vector<4x16xf32> -> vector<4x16xf32>
    %cst_64 = arith.constant dense<0.000000e+00> : vector<4x8xf32>
    %168 = tpu.matmul %134, %8, %cst_64 {dimension_numbers = #tpu.dot_dimension_numbers<[1], [0], [0], [1], [0, 0, 1, 1], [], []>} : vector<4x32xf32>, vector<32x8xf32>, vector<4x8xf32> -> vector<4x8xf32>
    %169 = tpu.concatenate %132, %168 in 1 : vector<4x8xf32>, vector<4x8xf32> -> vector<4x16xf32>
    %170 = arith.addf %167, %169 : vector<4x16xf32>
    %c4 = arith.constant 4 : index
    %c0_65 = arith.constant 0 : index
    %c0_66 = arith.constant 0 : index
    %171 = vector.load %arg1[%c4, %c0_65, %c0_66] : memref<8x4x8xf32, #tpu.memory_space<vmem>>, vector<1x4x8xf32>
    %172 = vector.shape_cast %171 : vector<1x4x8xf32> to vector<4x8xf32>
    %173 = tpu.concatenate %172, %172, %172, %172 in 1 : vector<4x8xf32>, vector<4x8xf32>, vector<4x8xf32>, vector<4x8xf32> -> vector<4x32xf32>
    %174 = arith.mulf %173, %4 : vector<4x32xf32>
    %cst_67 = arith.constant dense<0.000000e+00> : vector<4x64xf32>
    %175 = tpu.matmul %172, %0, %cst_67 {dimension_numbers = #tpu.dot_dimension_numbers<[1], [0], [0], [1], [0, 0, 1, 1], [], []>} : vector<4x8xf32>, vector<8x64xf32>, vector<4x64xf32> -> vector<4x64xf32>
    %cst_68 = arith.constant dense<0.000000e+00> : vector<4x64xf32>
    %176 = tpu.matmul %164, %1, %cst_68 {dimension_numbers = #tpu.dot_dimension_numbers<[1], [0], [0], [1], [0, 0, 1, 1], [], []>} : vector<4x32xf32>, vector<32x64xf32>, vector<4x64xf32> -> vector<4x64xf32>
    %177 = arith.addf %175, %176 : vector<4x64xf32>
    %178 = vector.broadcast %2 : vector<1x64xf32> to vector<4x64xf32>
    %179 = arith.addf %177, %178 : vector<4x64xf32>
    %180 = vector.extract_strided_slice %179 {offsets = [0, 0], sizes = [4, 32], strides = [1, 1]} : vector<4x64xf32> to vector<4x32xf32>
    %181 = arith.negf %180 : vector<4x32xf32>
    %182 = math.exp %181 : vector<4x32xf32>
    %cst_69 = arith.constant 1.000000e+00 : f32
    %183 = vector.broadcast %cst_69 : f32 to vector<4x32xf32>
    %184 = arith.addf %183, %182 : vector<4x32xf32>
    %185 = arith.divf %183, %184 : vector<4x32xf32>
    %186 = vector.extract_strided_slice %179 {offsets = [0, 32], sizes = [4, 32], strides = [1, 1]} : vector<4x64xf32> to vector<4x32xf32>
    %187 = arith.negf %186 : vector<4x32xf32>
    %188 = math.exp %187 : vector<4x32xf32>
    %cst_70 = arith.constant 1.000000e+00 : f32
    %189 = vector.broadcast %cst_70 : f32 to vector<4x32xf32>
    %190 = arith.addf %189, %188 : vector<4x32xf32>
    %191 = arith.divf %189, %190 : vector<4x32xf32>
    %192 = tpu.concatenate %164, %164, %164, %164 in 1 : vector<4x32xf32>, vector<4x32xf32>, vector<4x32xf32>, vector<4x32xf32> -> vector<4x128xf32>
    %193 = arith.mulf %192, %3 : vector<4x128xf32>
    %cst_71 = arith.constant dense<0.000000e+00> : vector<4x32xf32>
    %194 = tpu.matmul %193, %5, %cst_71 {dimension_numbers = #tpu.dot_dimension_numbers<[1], [0], [0], [1], [0, 0, 1, 1], [], []>} : vector<4x128xf32>, vector<128x32xf32>, vector<4x32xf32> -> vector<4x32xf32>
    %cst_72 = arith.constant dense<0.000000e+00> : vector<4x32xf32>
    %195 = tpu.matmul %174, %6, %cst_72 {dimension_numbers = #tpu.dot_dimension_numbers<[1], [0], [0], [1], [0, 0, 1, 1], [], []>} : vector<4x32xf32>, vector<32x32xf32>, vector<4x32xf32> -> vector<4x32xf32>
    %196 = arith.mulf %185, %194 : vector<4x32xf32>
    %197 = arith.addf %195, %196 : vector<4x32xf32>
    %198 = arith.addf %197, %9 : vector<4x32xf32>
    %199 = math.tanh %198 : vector<4x32xf32>
    %200 = arith.mulf %191, %164 : vector<4x32xf32>
    %cst_73 = arith.constant 1.000000e+00 : f32
    %201 = vector.broadcast %cst_73 : f32 to vector<4x32xf32>
    %202 = arith.subf %201, %191 : vector<4x32xf32>
    %203 = arith.mulf %202, %199 : vector<4x32xf32>
    %204 = arith.addf %200, %203 : vector<4x32xf32>
    %205 = tpu.concatenate %204, %204, %204, %204 in 1 : vector<4x32xf32>, vector<4x32xf32>, vector<4x32xf32>, vector<4x32xf32> -> vector<4x128xf32>
    %206 = arith.mulf %205, %3 : vector<4x128xf32>
    %cst_74 = arith.constant dense<0.000000e+00> : vector<4x16xf32>
    %207 = tpu.matmul %206, %7, %cst_74 {dimension_numbers = #tpu.dot_dimension_numbers<[1], [0], [0], [1], [0, 0, 1, 1], [], []>} : vector<4x128xf32>, vector<128x16xf32>, vector<4x16xf32> -> vector<4x16xf32>
    %cst_75 = arith.constant dense<0.000000e+00> : vector<4x8xf32>
    %208 = tpu.matmul %174, %8, %cst_75 {dimension_numbers = #tpu.dot_dimension_numbers<[1], [0], [0], [1], [0, 0, 1, 1], [], []>} : vector<4x32xf32>, vector<32x8xf32>, vector<4x8xf32> -> vector<4x8xf32>
    %209 = tpu.concatenate %172, %208 in 1 : vector<4x8xf32>, vector<4x8xf32> -> vector<4x16xf32>
    %210 = arith.addf %207, %209 : vector<4x16xf32>
    %c5 = arith.constant 5 : index
    %c0_76 = arith.constant 0 : index
    %c0_77 = arith.constant 0 : index
    %211 = vector.load %arg1[%c5, %c0_76, %c0_77] : memref<8x4x8xf32, #tpu.memory_space<vmem>>, vector<1x4x8xf32>
    %212 = vector.shape_cast %211 : vector<1x4x8xf32> to vector<4x8xf32>
    %213 = tpu.concatenate %212, %212, %212, %212 in 1 : vector<4x8xf32>, vector<4x8xf32>, vector<4x8xf32>, vector<4x8xf32> -> vector<4x32xf32>
    %214 = arith.mulf %213, %4 : vector<4x32xf32>
    %cst_78 = arith.constant dense<0.000000e+00> : vector<4x64xf32>
    %215 = tpu.matmul %212, %0, %cst_78 {dimension_numbers = #tpu.dot_dimension_numbers<[1], [0], [0], [1], [0, 0, 1, 1], [], []>} : vector<4x8xf32>, vector<8x64xf32>, vector<4x64xf32> -> vector<4x64xf32>
    %cst_79 = arith.constant dense<0.000000e+00> : vector<4x64xf32>
    %216 = tpu.matmul %204, %1, %cst_79 {dimension_numbers = #tpu.dot_dimension_numbers<[1], [0], [0], [1], [0, 0, 1, 1], [], []>} : vector<4x32xf32>, vector<32x64xf32>, vector<4x64xf32> -> vector<4x64xf32>
    %217 = arith.addf %215, %216 : vector<4x64xf32>
    %218 = vector.broadcast %2 : vector<1x64xf32> to vector<4x64xf32>
    %219 = arith.addf %217, %218 : vector<4x64xf32>
    %220 = vector.extract_strided_slice %219 {offsets = [0, 0], sizes = [4, 32], strides = [1, 1]} : vector<4x64xf32> to vector<4x32xf32>
    %221 = arith.negf %220 : vector<4x32xf32>
    %222 = math.exp %221 : vector<4x32xf32>
    %cst_80 = arith.constant 1.000000e+00 : f32
    %223 = vector.broadcast %cst_80 : f32 to vector<4x32xf32>
    %224 = arith.addf %223, %222 : vector<4x32xf32>
    %225 = arith.divf %223, %224 : vector<4x32xf32>
    %226 = vector.extract_strided_slice %219 {offsets = [0, 32], sizes = [4, 32], strides = [1, 1]} : vector<4x64xf32> to vector<4x32xf32>
    %227 = arith.negf %226 : vector<4x32xf32>
    %228 = math.exp %227 : vector<4x32xf32>
    %cst_81 = arith.constant 1.000000e+00 : f32
    %229 = vector.broadcast %cst_81 : f32 to vector<4x32xf32>
    %230 = arith.addf %229, %228 : vector<4x32xf32>
    %231 = arith.divf %229, %230 : vector<4x32xf32>
    %232 = tpu.concatenate %204, %204, %204, %204 in 1 : vector<4x32xf32>, vector<4x32xf32>, vector<4x32xf32>, vector<4x32xf32> -> vector<4x128xf32>
    %233 = arith.mulf %232, %3 : vector<4x128xf32>
    %cst_82 = arith.constant dense<0.000000e+00> : vector<4x32xf32>
    %234 = tpu.matmul %233, %5, %cst_82 {dimension_numbers = #tpu.dot_dimension_numbers<[1], [0], [0], [1], [0, 0, 1, 1], [], []>} : vector<4x128xf32>, vector<128x32xf32>, vector<4x32xf32> -> vector<4x32xf32>
    %cst_83 = arith.constant dense<0.000000e+00> : vector<4x32xf32>
    %235 = tpu.matmul %214, %6, %cst_83 {dimension_numbers = #tpu.dot_dimension_numbers<[1], [0], [0], [1], [0, 0, 1, 1], [], []>} : vector<4x32xf32>, vector<32x32xf32>, vector<4x32xf32> -> vector<4x32xf32>
    %236 = arith.mulf %225, %234 : vector<4x32xf32>
    %237 = arith.addf %235, %236 : vector<4x32xf32>
    %238 = arith.addf %237, %9 : vector<4x32xf32>
    %239 = math.tanh %238 : vector<4x32xf32>
    %240 = arith.mulf %231, %204 : vector<4x32xf32>
    %cst_84 = arith.constant 1.000000e+00 : f32
    %241 = vector.broadcast %cst_84 : f32 to vector<4x32xf32>
    %242 = arith.subf %241, %231 : vector<4x32xf32>
    %243 = arith.mulf %242, %239 : vector<4x32xf32>
    %244 = arith.addf %240, %243 : vector<4x32xf32>
    %245 = tpu.concatenate %244, %244, %244, %244 in 1 : vector<4x32xf32>, vector<4x32xf32>, vector<4x32xf32>, vector<4x32xf32> -> vector<4x128xf32>
    %246 = arith.mulf %245, %3 : vector<4x128xf32>
    %cst_85 = arith.constant dense<0.000000e+00> : vector<4x16xf32>
    %247 = tpu.matmul %246, %7, %cst_85 {dimension_numbers = #tpu.dot_dimension_numbers<[1], [0], [0], [1], [0, 0, 1, 1], [], []>} : vector<4x128xf32>, vector<128x16xf32>, vector<4x16xf32> -> vector<4x16xf32>
    %cst_86 = arith.constant dense<0.000000e+00> : vector<4x8xf32>
    %248 = tpu.matmul %214, %8, %cst_86 {dimension_numbers = #tpu.dot_dimension_numbers<[1], [0], [0], [1], [0, 0, 1, 1], [], []>} : vector<4x32xf32>, vector<32x8xf32>, vector<4x8xf32> -> vector<4x8xf32>
    %249 = tpu.concatenate %212, %248 in 1 : vector<4x8xf32>, vector<4x8xf32> -> vector<4x16xf32>
    %250 = arith.addf %247, %249 : vector<4x16xf32>
    %c6 = arith.constant 6 : index
    %c0_87 = arith.constant 0 : index
    %c0_88 = arith.constant 0 : index
    %251 = vector.load %arg1[%c6, %c0_87, %c0_88] : memref<8x4x8xf32, #tpu.memory_space<vmem>>, vector<1x4x8xf32>
    %252 = vector.shape_cast %251 : vector<1x4x8xf32> to vector<4x8xf32>
    %253 = tpu.concatenate %252, %252, %252, %252 in 1 : vector<4x8xf32>, vector<4x8xf32>, vector<4x8xf32>, vector<4x8xf32> -> vector<4x32xf32>
    %254 = arith.mulf %253, %4 : vector<4x32xf32>
    %cst_89 = arith.constant dense<0.000000e+00> : vector<4x64xf32>
    %255 = tpu.matmul %252, %0, %cst_89 {dimension_numbers = #tpu.dot_dimension_numbers<[1], [0], [0], [1], [0, 0, 1, 1], [], []>} : vector<4x8xf32>, vector<8x64xf32>, vector<4x64xf32> -> vector<4x64xf32>
    %cst_90 = arith.constant dense<0.000000e+00> : vector<4x64xf32>
    %256 = tpu.matmul %244, %1, %cst_90 {dimension_numbers = #tpu.dot_dimension_numbers<[1], [0], [0], [1], [0, 0, 1, 1], [], []>} : vector<4x32xf32>, vector<32x64xf32>, vector<4x64xf32> -> vector<4x64xf32>
    %257 = arith.addf %255, %256 : vector<4x64xf32>
    %258 = vector.broadcast %2 : vector<1x64xf32> to vector<4x64xf32>
    %259 = arith.addf %257, %258 : vector<4x64xf32>
    %260 = vector.extract_strided_slice %259 {offsets = [0, 0], sizes = [4, 32], strides = [1, 1]} : vector<4x64xf32> to vector<4x32xf32>
    %261 = arith.negf %260 : vector<4x32xf32>
    %262 = math.exp %261 : vector<4x32xf32>
    %cst_91 = arith.constant 1.000000e+00 : f32
    %263 = vector.broadcast %cst_91 : f32 to vector<4x32xf32>
    %264 = arith.addf %263, %262 : vector<4x32xf32>
    %265 = arith.divf %263, %264 : vector<4x32xf32>
    %266 = vector.extract_strided_slice %259 {offsets = [0, 32], sizes = [4, 32], strides = [1, 1]} : vector<4x64xf32> to vector<4x32xf32>
    %267 = arith.negf %266 : vector<4x32xf32>
    %268 = math.exp %267 : vector<4x32xf32>
    %cst_92 = arith.constant 1.000000e+00 : f32
    %269 = vector.broadcast %cst_92 : f32 to vector<4x32xf32>
    %270 = arith.addf %269, %268 : vector<4x32xf32>
    %271 = arith.divf %269, %270 : vector<4x32xf32>
    %272 = tpu.concatenate %244, %244, %244, %244 in 1 : vector<4x32xf32>, vector<4x32xf32>, vector<4x32xf32>, vector<4x32xf32> -> vector<4x128xf32>
    %273 = arith.mulf %272, %3 : vector<4x128xf32>
    %cst_93 = arith.constant dense<0.000000e+00> : vector<4x32xf32>
    %274 = tpu.matmul %273, %5, %cst_93 {dimension_numbers = #tpu.dot_dimension_numbers<[1], [0], [0], [1], [0, 0, 1, 1], [], []>} : vector<4x128xf32>, vector<128x32xf32>, vector<4x32xf32> -> vector<4x32xf32>
    %cst_94 = arith.constant dense<0.000000e+00> : vector<4x32xf32>
    %275 = tpu.matmul %254, %6, %cst_94 {dimension_numbers = #tpu.dot_dimension_numbers<[1], [0], [0], [1], [0, 0, 1, 1], [], []>} : vector<4x32xf32>, vector<32x32xf32>, vector<4x32xf32> -> vector<4x32xf32>
    %276 = arith.mulf %265, %274 : vector<4x32xf32>
    %277 = arith.addf %275, %276 : vector<4x32xf32>
    %278 = arith.addf %277, %9 : vector<4x32xf32>
    %279 = math.tanh %278 : vector<4x32xf32>
    %280 = arith.mulf %271, %244 : vector<4x32xf32>
    %cst_95 = arith.constant 1.000000e+00 : f32
    %281 = vector.broadcast %cst_95 : f32 to vector<4x32xf32>
    %282 = arith.subf %281, %271 : vector<4x32xf32>
    %283 = arith.mulf %282, %279 : vector<4x32xf32>
    %284 = arith.addf %280, %283 : vector<4x32xf32>
    %285 = tpu.concatenate %284, %284, %284, %284 in 1 : vector<4x32xf32>, vector<4x32xf32>, vector<4x32xf32>, vector<4x32xf32> -> vector<4x128xf32>
    %286 = arith.mulf %285, %3 : vector<4x128xf32>
    %cst_96 = arith.constant dense<0.000000e+00> : vector<4x16xf32>
    %287 = tpu.matmul %286, %7, %cst_96 {dimension_numbers = #tpu.dot_dimension_numbers<[1], [0], [0], [1], [0, 0, 1, 1], [], []>} : vector<4x128xf32>, vector<128x16xf32>, vector<4x16xf32> -> vector<4x16xf32>
    %cst_97 = arith.constant dense<0.000000e+00> : vector<4x8xf32>
    %288 = tpu.matmul %254, %8, %cst_97 {dimension_numbers = #tpu.dot_dimension_numbers<[1], [0], [0], [1], [0, 0, 1, 1], [], []>} : vector<4x32xf32>, vector<32x8xf32>, vector<4x8xf32> -> vector<4x8xf32>
    %289 = tpu.concatenate %252, %288 in 1 : vector<4x8xf32>, vector<4x8xf32> -> vector<4x16xf32>
    %290 = arith.addf %287, %289 : vector<4x16xf32>
    %c7 = arith.constant 7 : index
    %c0_98 = arith.constant 0 : index
    %c0_99 = arith.constant 0 : index
    %291 = vector.load %arg1[%c7, %c0_98, %c0_99] : memref<8x4x8xf32, #tpu.memory_space<vmem>>, vector<1x4x8xf32>
    %292 = vector.shape_cast %291 : vector<1x4x8xf32> to vector<4x8xf32>
    %293 = tpu.concatenate %292, %292, %292, %292 in 1 : vector<4x8xf32>, vector<4x8xf32>, vector<4x8xf32>, vector<4x8xf32> -> vector<4x32xf32>
    %294 = arith.mulf %293, %4 : vector<4x32xf32>
    %cst_100 = arith.constant dense<0.000000e+00> : vector<4x64xf32>
    %295 = tpu.matmul %292, %0, %cst_100 {dimension_numbers = #tpu.dot_dimension_numbers<[1], [0], [0], [1], [0, 0, 1, 1], [], []>} : vector<4x8xf32>, vector<8x64xf32>, vector<4x64xf32> -> vector<4x64xf32>
    %cst_101 = arith.constant dense<0.000000e+00> : vector<4x64xf32>
    %296 = tpu.matmul %284, %1, %cst_101 {dimension_numbers = #tpu.dot_dimension_numbers<[1], [0], [0], [1], [0, 0, 1, 1], [], []>} : vector<4x32xf32>, vector<32x64xf32>, vector<4x64xf32> -> vector<4x64xf32>
    %297 = arith.addf %295, %296 : vector<4x64xf32>
    %298 = vector.broadcast %2 : vector<1x64xf32> to vector<4x64xf32>
    %299 = arith.addf %297, %298 : vector<4x64xf32>
    %300 = vector.extract_strided_slice %299 {offsets = [0, 0], sizes = [4, 32], strides = [1, 1]} : vector<4x64xf32> to vector<4x32xf32>
    %301 = arith.negf %300 : vector<4x32xf32>
    %302 = math.exp %301 : vector<4x32xf32>
    %cst_102 = arith.constant 1.000000e+00 : f32
    %303 = vector.broadcast %cst_102 : f32 to vector<4x32xf32>
    %304 = arith.addf %303, %302 : vector<4x32xf32>
    %305 = arith.divf %303, %304 : vector<4x32xf32>
    %306 = vector.extract_strided_slice %299 {offsets = [0, 32], sizes = [4, 32], strides = [1, 1]} : vector<4x64xf32> to vector<4x32xf32>
    %307 = arith.negf %306 : vector<4x32xf32>
    %308 = math.exp %307 : vector<4x32xf32>
    %cst_103 = arith.constant 1.000000e+00 : f32
    %309 = vector.broadcast %cst_103 : f32 to vector<4x32xf32>
    %310 = arith.addf %309, %308 : vector<4x32xf32>
    %311 = arith.divf %309, %310 : vector<4x32xf32>
    %312 = tpu.concatenate %284, %284, %284, %284 in 1 : vector<4x32xf32>, vector<4x32xf32>, vector<4x32xf32>, vector<4x32xf32> -> vector<4x128xf32>
    %313 = arith.mulf %312, %3 : vector<4x128xf32>
    %cst_104 = arith.constant dense<0.000000e+00> : vector<4x32xf32>
    %314 = tpu.matmul %313, %5, %cst_104 {dimension_numbers = #tpu.dot_dimension_numbers<[1], [0], [0], [1], [0, 0, 1, 1], [], []>} : vector<4x128xf32>, vector<128x32xf32>, vector<4x32xf32> -> vector<4x32xf32>
    %cst_105 = arith.constant dense<0.000000e+00> : vector<4x32xf32>
    %315 = tpu.matmul %294, %6, %cst_105 {dimension_numbers = #tpu.dot_dimension_numbers<[1], [0], [0], [1], [0, 0, 1, 1], [], []>} : vector<4x32xf32>, vector<32x32xf32>, vector<4x32xf32> -> vector<4x32xf32>
    %316 = arith.mulf %305, %314 : vector<4x32xf32>
    %317 = arith.addf %315, %316 : vector<4x32xf32>
    %318 = arith.addf %317, %9 : vector<4x32xf32>
    %319 = math.tanh %318 : vector<4x32xf32>
    %320 = arith.mulf %311, %284 : vector<4x32xf32>
    %cst_106 = arith.constant 1.000000e+00 : f32
    %321 = vector.broadcast %cst_106 : f32 to vector<4x32xf32>
    %322 = arith.subf %321, %311 : vector<4x32xf32>
    %323 = arith.mulf %322, %319 : vector<4x32xf32>
    %324 = arith.addf %320, %323 : vector<4x32xf32>
    %325 = tpu.concatenate %324, %324, %324, %324 in 1 : vector<4x32xf32>, vector<4x32xf32>, vector<4x32xf32>, vector<4x32xf32> -> vector<4x128xf32>
    %326 = arith.mulf %325, %3 : vector<4x128xf32>
    %cst_107 = arith.constant dense<0.000000e+00> : vector<4x16xf32>
    %327 = tpu.matmul %326, %7, %cst_107 {dimension_numbers = #tpu.dot_dimension_numbers<[1], [0], [0], [1], [0, 0, 1, 1], [], []>} : vector<4x128xf32>, vector<128x16xf32>, vector<4x16xf32> -> vector<4x16xf32>
    %cst_108 = arith.constant dense<0.000000e+00> : vector<4x8xf32>
    %328 = tpu.matmul %294, %8, %cst_108 {dimension_numbers = #tpu.dot_dimension_numbers<[1], [0], [0], [1], [0, 0, 1, 1], [], []>} : vector<4x32xf32>, vector<32x8xf32>, vector<4x8xf32> -> vector<4x8xf32>
    %329 = tpu.concatenate %292, %328 in 1 : vector<4x8xf32>, vector<4x8xf32> -> vector<4x16xf32>
    %330 = arith.addf %327, %329 : vector<4x16xf32>
    %331 = tpu.concatenate %50, %90, %130, %170, %210, %250, %290, %330, %324 in 1 : vector<4x16xf32>, vector<4x16xf32>, vector<4x16xf32>, vector<4x16xf32>, vector<4x16xf32>, vector<4x16xf32>, vector<4x16xf32>, vector<4x16xf32>, vector<4x32xf32> -> vector<4x160xf32>
    %c0_109 = arith.constant 0 : index
    %c0_110 = arith.constant 0 : index
    %332 = vector.load %arg13[%c0_109, %c0_110] : memref<4x160xf32, #tpu.memory_space<vmem>>, vector<4x160xf32>
    tpu.vector_store %arg13[%c0_109, %c0_110], %331 {strides = array<i32>} : memref<4x160xf32, #tpu.memory_space<vmem>>, vector<4x160xf32>,
    return
  }
  func.func @transform_0(%arg0: i32) -> (i32, i32, i32) {
    %c0_i32 = arith.constant 0 : i32
    %c0_i32_0 = arith.constant 0 : i32
    %c0_i32_1 = arith.constant 0 : i32
    %c0_i32_2 = arith.constant 0 : i32
    return %c0_i32, %c0_i32_0, %c0_i32_1 : i32, i32, i32
  }
  func.func @transform_1(%arg0: i32) -> (i32, i32) {
    %c0_i32 = arith.constant 0 : i32
    %c0_i32_0 = arith.constant 0 : i32
    %c0_i32_1 = arith.constant 0 : i32
    return %c0_i32, %c0_i32_0 : i32, i32
  }
  func.func @transform_2(%arg0: i32) -> (i32, i32) {
    %c0_i32 = arith.constant 0 : i32
    %c0_i32_0 = arith.constant 0 : i32
    %c0_i32_1 = arith.constant 0 : i32
    return %c0_i32, %c0_i32_0 : i32, i32
  }
  func.func @transform_3(%arg0: i32) -> (i32, i32) {
    %c0_i32 = arith.constant 0 : i32
    %c0_i32_0 = arith.constant 0 : i32
    %c0_i32_1 = arith.constant 0 : i32
    return %c0_i32, %c0_i32_0 : i32, i32
  }
  func.func @transform_4(%arg0: i32) -> (i32, i32) {
    %c0_i32 = arith.constant 0 : i32
    %c0_i32_0 = arith.constant 0 : i32
    %c0_i32_1 = arith.constant 0 : i32
    return %c0_i32, %c0_i32_0 : i32, i32
  }
  func.func @transform_5(%arg0: i32) -> (i32, i32) {
    %c0_i32 = arith.constant 0 : i32
    %c0_i32_0 = arith.constant 0 : i32
    %c0_i32_1 = arith.constant 0 : i32
    return %c0_i32, %c0_i32_0 : i32, i32
  }
  func.func @transform_6(%arg0: i32) -> (i32, i32) {
    %c0_i32 = arith.constant 0 : i32
    %c0_i32_0 = arith.constant 0 : i32
    %c0_i32_1 = arith.constant 0 : i32
    return %c0_i32, %c0_i32_0 : i32, i32
  }
  func.func @transform_7(%arg0: i32) -> (i32, i32) {
    %c0_i32 = arith.constant 0 : i32
    %c0_i32_0 = arith.constant 0 : i32
    %c0_i32_1 = arith.constant 0 : i32
    return %c0_i32, %c0_i32_0 : i32, i32
  }
  func.func @transform_8(%arg0: i32) -> (i32, i32) {
    %c0_i32 = arith.constant 0 : i32
    %c0_i32_0 = arith.constant 0 : i32
    %c0_i32_1 = arith.constant 0 : i32
    return %c0_i32, %c0_i32_0 : i32, i32
  }
  func.func @transform_9(%arg0: i32) -> (i32, i32) {
    %c0_i32 = arith.constant 0 : i32
    %c0_i32_0 = arith.constant 0 : i32
    %c0_i32_1 = arith.constant 0 : i32
    return %c0_i32, %c0_i32_0 : i32, i32
  }
  func.func @transform_10(%arg0: i32) -> (i32, i32) {
    %c0_i32 = arith.constant 0 : i32
    %c0_i32_0 = arith.constant 0 : i32
    %c0_i32_1 = arith.constant 0 : i32
    return %c0_i32, %c0_i32_0 : i32, i32
  }
  func.func @transform_11(%arg0: i32) -> (i32, i32) {
    %c0_i32 = arith.constant 0 : i32
    %c0_i32_0 = arith.constant 0 : i32
    %c0_i32_1 = arith.constant 0 : i32
    return %c0_i32, %c0_i32_0 : i32, i32
  }
  func.func @transform_12(%arg0: i32) -> (i32, i32) {
    %c0_i32 = arith.constant 0 : i32
    %c0_i32_0 = arith.constant 0 : i32
    %c0_i32_1 = arith.constant 0 : i32
    return %c0_i32, %c0_i32_0 : i32, i32
  }
}

</mosaic_0001>

<llo_original>
// kernel: mtgru_forward.2
$region0: #{mtgru_forward.2}
  #allocation0 [shape = 'u32[]', space=smem, size = 0x4, offset = 0x4, fixed_abs, tag = 'smem constant byte address 0x4 - core index']
  #allocation1 [shape = 'u32[144,128]{1,0:T(1,128)}', space=vmem, size = 0x12000, scoped, tag = 'internal scratch']
  %s0 = inlined_call_operand.vmem [shape: f32[8,4,16], index: 0, kind: input, shape index: {}]
  %s1 = inlined_call_operand.vmem [shape: f32[4,8], index: 1, kind: input, shape index: {}]
  %s2 = inlined_call_operand.hbm [shape: f32[16,96], index: 2, kind: input, shape index: {}]
  %s3 = inlined_call_operand.hbm [shape: f32[32,96], index: 3, kind: input, shape index: {}]
  %s4 = inlined_call_operand.hbm [shape: f32[1,96], index: 4, kind: input, shape index: {}]
  %s5 = inlined_call_operand.hbm [shape: f32[1,96], index: 5, kind: input, shape index: {}]
  %s6 = inlined_call_operand.vmem [shape: f32[32,8], index: 6, kind: input, shape index: {}]
  %s7 = inlined_call_operand.vmem [shape: f32[32,8], index: 7, kind: input, shape index: {}]
  %s8 = inlined_call_operand.hbm [shape: f32[1,8], index: 8, kind: input, shape index: {}]
  %s9 = inlined_call_operand.hbm [shape: f32[8,24], index: 9, kind: input, shape index: {}]
  %s10 = inlined_call_operand.hbm [shape: f32[1,24], index: 10, kind: input, shape index: {}]
  %s11 = inlined_call_operand.vmem [shape: f32[24,12], index: 11, kind: input, shape index: {}]
  %s12 = inlined_call_operand.hbm [shape: f32[1,12], index: 12, kind: input, shape index: {}]
  %s13 = inlined_call_operand.vmem [shape: f32[12,1888], index: 13, kind: input, shape index: {}]
  %s14 = inlined_call_operand.vmem [shape: f32[1,1888], index: 14, kind: input, shape index: {}]
  %s15 = inlined_call_operand.vmem [shape: f32[4,1904], index: 15, kind: output, shape index: {}]
  %s16 = sld [smem:[#allocation0]]
  $region102: #{mtgru_forward.2} parent=0
    _
  %s18 = ssub.s32 1, %s16
  %s19 = scalar_select 0, %s18, %s16
  $region1: #{mtgru_forward.2} parent=0
    #allocation2 [shape = 'u8[8192]{0}', space=vmem, size = 0x2000, scoped, tag = 'input window, operand 2, single buffered']
    #allocation3 [shape = 's32[1]{0}', space=sflag, size = 0x4, scoped, tag = 'scoped memory for mtgru_forward.2']
    #allocation4 [shape = 'u8[16384]{0}', space=vmem, size = 0x4000, scoped, tag = 'input window, operand 3, single buffered']
    #allocation5 [shape = 's32[1]{0}', space=sflag, size = 0x4, scoped, tag = 'scoped memory for mtgru_forward.2']
    #allocation6 [shape = 'u8[512]{0}', space=vmem, size = 0x400, scoped, tag = 'input window, operand 4, single buffered']
    #allocation7 [shape = 'u8[512]{0}', space=vmem, size = 0x400, scoped, tag = 'input window, operand 5, single buffered']
    #allocation8 [shape = 's32[1]{0}', space=sflag, size = 0x4, scoped, tag = 'scoped memory for mtgru_forward.2']
    #allocation9 [shape = 'u8[512]{0}', space=vmem, size = 0x400, scoped, tag = 'input window, operand 8, single buffered']
    #allocation10 [shape = 'u8[4096]{0}', space=vmem, size = 0x1000, scoped, tag = 'input window, operand 9, single buffered']
    #allocation11 [shape = 's32[1]{0}', space=sflag, size = 0x4, scoped, tag = 'scoped memory for mtgru_forward.2']
    #allocation12 [shape = 'u8[512]{0}', space=vmem, size = 0x400, scoped, tag = 'input window, operand 10, single buffered']
    #allocation13 [shape = 'u8[512]{0}', space=vmem, size = 0x400, scoped, tag = 'input window, operand 12, single buffered']
    #allocation14 [shape = 's32[1]{0}', space=sflag, size = 0x4, scoped, tag = 'scoped memory for mtgru_forward.2']
    %20 = vsyncpa [#allocation3], 0
    %21 = vsyncpa [#allocation5], 0
    %22 = vsyncpa [#allocation8], 0
    %23 = vsyncpa [#allocation11], 0
    %24 = vsyncpa [#allocation14], 0
    // Predicated region
    $region2: #{mtgru_forward.2} parent=1 // pred_check
      _
    $region3: #{mtgru_forward.2} parent=1 // pred_check_branch
      %26 = sbr.rel (0) target = $region5
    $region4: #{mtgru_forward.2} parent=1 // pred_region
      _
    $region5: #{mtgru_forward.2} parent=1 // pred_fallthru
      _
    // Predicated region
    $region6: #{mtgru_forward.2} parent=1 // pred_check
      _
    $region7: #{mtgru_forward.2} parent=1 // pred_check_branch
      %28 = sbr.rel (0) target = $region9
    $region8: #{mtgru_forward.2} parent=1 // pred_region
      _
    $region9: #{mtgru_forward.2} parent=1 // pred_fallthru
      _
    // Predicated region
    $region10: #{mtgru_forward.2} parent=1 // pred_check
      _
    $region11: #{mtgru_forward.2} parent=1 // pred_check_branch
      %30 = sbr.rel (0) target = $region13
    $region12: #{mtgru_forward.2} parent=1 // pred_region
      %s32 = ssub.s32 256, 256
      %33 = vsyncadd [#allocation3], %s32
      %s34 = sshll.u32 [#allocation2], 4
      %s35 = int_to_ptr.vmem [resolvable:$true] %s34
      %40 = dma.hbm_to_vmem [thread:$0]  %s2, 256, %s35, [#allocation3], 128, 128, 8
    $region13: #{mtgru_forward.2} parent=1 // pred_fallthru
      _
    // Predicated region
    $region14: #{mtgru_forward.2} parent=1 // pred_check
      _
    $region15: #{mtgru_forward.2} parent=1 // pred_check_branch
      %42 = sbr.rel (0) target = $region17
    $region16: #{mtgru_forward.2} parent=1 // pred_region
      %s44 = ssub.s32 512, 512
      %45 = vsyncadd [#allocation5], %s44
      %s46 = sshll.u32 [#allocation4], 4
      %s47 = int_to_ptr.vmem [resolvable:$true] %s46
      %52 = dma.hbm_to_vmem [thread:$0]  %s3, 512, %s47, [#allocation5], 128, 128, 8
    $region17: #{mtgru_forward.2} parent=1 // pred_fallthru
      _
    // Predicated region
    $region18: #{mtgru_forward.2} parent=1 // pred_check
      _
    $region19: #{mtgru_forward.2} parent=1 // pred_check_branch
      %54 = sbr.rel (0) target = $region21
    $region20: #{mtgru_forward.2} parent=1 // pred_region
      %s56 = ssub.s32 16, 16
      %57 = vsyncadd [#allocation5], %s56
      %s59 = sshll.u32 [#allocation6], 4
      %s60 = int_to_ptr.vmem [resolvable:$true] %s59
      %62 = dma.hbm_to_vmem [thread:$0]  %s4, 16, %s60, [#allocation5]
    $region21: #{mtgru_forward.2} parent=1 // pred_fallthru
      _
    // Predicated region
    $region22: #{mtgru_forward.2} parent=1 // pred_check
      _
    $region23: #{mtgru_forward.2} parent=1 // pred_check_branch
      %64 = sbr.rel (0) target = $region25
    $region24: #{mtgru_forward.2} parent=1 // pred_region
      %s66 = ssub.s32 16, 16
      %67 = vsyncadd [#allocation8], %s66
      %s69 = sshll.u32 [#allocation7], 4
      %s70 = int_to_ptr.vmem [resolvable:$true] %s69
      %72 = dma.hbm_to_vmem [thread:$0]  %s5, 16, %s70, [#allocation8]
    $region25: #{mtgru_forward.2} parent=1 // pred_fallthru
      _
    // Predicated region
    $region26: #{mtgru_forward.2} parent=1 // pred_check
      _
    $region27: #{mtgru_forward.2} parent=1 // pred_check_branch
      %74 = sbr.rel (0) target = $region29
    $region28: #{mtgru_forward.2} parent=1 // pred_region
      _
    $region29: #{mtgru_forward.2} parent=1 // pred_fallthru
      _
    // Predicated region
    $region30: #{mtgru_forward.2} parent=1 // pred_check
      _
    $region31: #{mtgru_forward.2} parent=1 // pred_check_branch
      %76 = sbr.rel (0) target = $region33
    $region32: #{mtgru_forward.2} parent=1 // pred_region
      _
    $region33: #{mtgru_forward.2} parent=1 // pred_fallthru
      _
    // Predicated region
    $region34: #{mtgru_forward.2} parent=1 // pred_check
      _
    $region35: #{mtgru_forward.2} parent=1 // pred_check_branch
      %78 = sbr.rel (0) target = $region37
    $region36: #{mtgru_forward.2} parent=1 // pred_region
      %s80 = ssub.s32 16, 16
      %81 = vsyncadd [#allocation8], %s80
      %s83 = sshll.u32 [#allocation9], 4
      %s84 = int_to_ptr.vmem [resolvable:$true] %s83
      %86 = dma.hbm_to_vmem [thread:$0]  %s8, 16, %s84, [#allocation8]
    $region37: #{mtgru_forward.2} parent=1 // pred_fallthru
      _
    // Predicated region
    $region38: #{mtgru_forward.2} parent=1 // pred_check
      _
    $region39: #{mtgru_forward.2} parent=1 // pred_check_branch
      %88 = sbr.rel (0) target = $region41
    $region40: #{mtgru_forward.2} parent=1 // pred_region
      %s90 = ssub.s32 128, 128
      %91 = vsyncadd [#allocation11], %s90
      %s93 = sshll.u32 [#allocation10], 4
      %s94 = int_to_ptr.vmem [resolvable:$true] %s93
      %96 = dma.hbm_to_vmem [thread:$0]  %s9, 128, %s94, [#allocation11]
    $region41: #{mtgru_forward.2} parent=1 // pred_fallthru
      _
    // Predicated region
    $region42: #{mtgru_forward.2} parent=1 // pred_check
      _
    $region43: #{mtgru_forward.2} parent=1 // pred_check_branch
      %98 = sbr.rel (0) target = $region45
    $region44: #{mtgru_forward.2} parent=1 // pred_region
      %s100 = ssub.s32 16, 16
      %101 = vsyncadd [#allocation11], %s100
      %s103 = sshll.u32 [#allocation12], 4
      %s104 = int_to_ptr.vmem [resolvable:$true] %s103
      %106 = dma.hbm_to_vmem [thread:$0]  %s10, 16, %s104, [#allocation11]
    $region45: #{mtgru_forward.2} parent=1 // pred_fallthru
      _
    // Predicated region
    $region46: #{mtgru_forward.2} parent=1 // pred_check
      _
    $region47: #{mtgru_forward.2} parent=1 // pred_check_branch
      %108 = sbr.rel (0) target = $region49
    $region48: #{mtgru_forward.2} parent=1 // pred_region
      _
    $region49: #{mtgru_forward.2} parent=1 // pred_fallthru
      _
    // Predicated region
    $region50: #{mtgru_forward.2} parent=1 // pred_check
      _
    $region51: #{mtgru_forward.2} parent=1 // pred_check_branch
      %110 = sbr.rel (0) target = $region53
    $region52: #{mtgru_forward.2} parent=1 // pred_region
      %s112 = ssub.s32 16, 16
      %113 = vsyncadd [#allocation14], %s112
      %s115 = sshll.u32 [#allocation13], 4
      %s116 = int_to_ptr.vmem [resolvable:$true] %s115
      %118 = dma.hbm_to_vmem [thread:$0]  %s12, 16, %s116, [#allocation14]
    $region53: #{mtgru_forward.2} parent=1 // pred_fallthru
      _
    // Predicated region
    $region54: #{mtgru_forward.2} parent=1 // pred_check
      _
    $region55: #{mtgru_forward.2} parent=1 // pred_check_branch
      %120 = sbr.rel (0) target = $region57
    $region56: #{mtgru_forward.2} parent=1 // pred_region
      _
    $region57: #{mtgru_forward.2} parent=1 // pred_fallthru
      _
    // Predicated region
    $region58: #{mtgru_forward.2} parent=1 // pred_check
      _
    $region59: #{mtgru_forward.2} parent=1 // pred_check_branch
      %122 = sbr.rel (0) target = $region61
    $region60: #{mtgru_forward.2} parent=1 // pred_region
      _
    $region61: #{mtgru_forward.2} parent=1 // pred_fallthru
      _
    // Predicated region
    $region62: #{mtgru_forward.2} parent=1 // pred_check
      _
    $region63: #{mtgru_forward.2} parent=1 // pred_check_branch
      %124 = sbr.rel (0) target = $region65
    $region64: #{mtgru_forward.2} parent=1 // pred_region
      %125 = dma.done [#allocation3], 256
    $region65: #{mtgru_forward.2} parent=1 // pred_fallthru
      _
    // Predicated region
    $region66: #{mtgru_forward.2} parent=1 // pred_check
      _
    $region67: #{mtgru_forward.2} parent=1 // pred_check_branch
      %127 = sbr.rel (0) target = $region69
    $region68: #{mtgru_forward.2} parent=1 // pred_region
      %128 = dma.done [#allocation5], 512
    $region69: #{mtgru_forward.2} parent=1 // pred_fallthru
      _
    // Predicated region
    $region70: #{mtgru_forward.2} parent=1 // pred_check
      _
    $region71: #{mtgru_forward.2} parent=1 // pred_check_branch
      %130 = sbr.rel (0) target = $region73
    $region72: #{mtgru_forward.2} parent=1 // pred_region
      %131 = dma.done [#allocation5], 16
    $region73: #{mtgru_forward.2} parent=1 // pred_fallthru
      _
    // Predicated region
    $region74: #{mtgru_forward.2} parent=1 // pred_check
      _
    $region75: #{mtgru_forward.2} parent=1 // pred_check_branch
      %133 = sbr.rel (0) target = $region77
    $region76: #{mtgru_forward.2} parent=1 // pred_region
      %134 = dma.done [#allocation8], 16
    $region77: #{mtgru_forward.2} parent=1 // pred_fallthru
      _
    // Predicated region
    $region78: #{mtgru_forward.2} parent=1 // pred_check
      _
    $region79: #{mtgru_forward.2} parent=1 // pred_check_branch
      %136 = sbr.rel (0) target = $region81
    $region80: #{mtgru_forward.2} parent=1 // pred_region
      %137 = dma.done [#allocation8], 16
    $region81: #{mtgru_forward.2} parent=1 // pred_fallthru
      _
    // Predicated region
    $region82: #{mtgru_forward.2} parent=1 // pred_check
      _
    $region83: #{mtgru_forward.2} parent=1 // pred_check_branch
      %139 = sbr.rel (0) target = $region85
    $region84: #{mtgru_forward.2} parent=1 // pred_region
      %140 = dma.done [#allocation11], 128
    $region85: #{mtgru_forward.2} parent=1 // pred_fallthru
      _
    // Predicated region
    $region86: #{mtgru_forward.2} parent=1 // pred_check
      _
    $region87: #{mtgru_forward.2} parent=1 // pred_check_branch
      %142 = sbr.rel (0) target = $region89
    $region88: #{mtgru_forward.2} parent=1 // pred_region
      %143 = dma.done [#allocation11], 16
    $region89: #{mtgru_forward.2} parent=1 // pred_fallthru
      _
    // Predicated region
    $region90: #{mtgru_forward.2} parent=1 // pred_check
      _
    $region91: #{mtgru_forward.2} parent=1 // pred_check_branch
      %145 = sbr.rel (0) target = $region93
    $region92: #{mtgru_forward.2} parent=1 // pred_region
      %146 = dma.done [#allocation14], 16
    $region93: #{mtgru_forward.2} parent=1 // pred_fallthru
      _
    %v147 = vld [vmem:[#allocation2] sm:$0xff]
    %v148 = vld [vmem:[#allocation2 + $0x8] sm:$0xff]
    %v149 = vld [vmem:[#allocation4] sm:$0xff]
    %v150 = vld [vmem:[#allocation4 + $0x8] sm:$0xff]
    %v151 = vld [vmem:[#allocation4 + $0x10] sm:$0xff]
    %v152 = vld [vmem:[#allocation4 + $0x18] sm:$0xff]
    %v153 = vld [vmem:[#allocation6] sm:$0x1]
    %v154 = vld [vmem:[#allocation7] sm:$0x1]
    %v155 = vld [vmem:[%s0] sm:$0xf]
    %v157 = vlaneseq
    %v158 = vshrl.u32 %v157, 7
    %v159 = vsub.s32 0, %v158
    %v160 = vrot.slane %v153, %v159
    %vm162 = vcmask 130048
    %v164 = vsel %vm162, %v155, 0
    %166 = vmatprep.subr.mxu0 0.0
    %167 = vmatpush1.msra.mxu0 0.0
    %168 = vmatprep.subr.mxu0 0.0
    %169 = vmatpush1.msra.mxu0 0.0
    %170 = vmatprep.subr.mxu0 0.0
    %171 = vmatpush1.msra.mxu0 0.0
    %172 = vmatprep.subr.mxu0 0.0
    %173 = vmatpush1.msra.mxu0 0.0
    %174 = vmatprep.subr.mxu0 0.0
    %175 = vmatpush1.msra.mxu0 0.0
    %176 = vmatprep.subr.mxu0 0.0
    %177 = vmatpush1.msra.mxu0 0.0
    %178 = vmatprep.subr.mxu0 0.0
    %179 = vmatpush1.msra.mxu0 0.0
    %180 = vmatprep.subr.mxu0 0.0
    %181 = vmatpush1.msra.mxu0 0.0
    %182 = vmatprep.subr.mxu0 0.0
    %183 = vmatpush1.msra.mxu0 0.0
    %184 = vmatprep.subr.mxu0 0.0
    %185 = vmatpush1.msra.mxu0 0.0
    %186 = vmatprep.subr.mxu0 0.0
    %187 = vmatpush1.msra.mxu0 0.0
    %188 = vmatprep.subr.mxu0 0.0
    %189 = vmatpush1.msra.mxu0 0.0
    %190 = vmatprep.subr.mxu0 0.0
    %191 = vmatpush1.msra.mxu0 0.0
    %192 = vmatprep.subr.mxu0 0.0
    %193 = vmatpush1.msra.mxu0 0.0
    %194 = vmatprep.subr.mxu0 0.0
    %195 = vmatpush1.msra.mxu0 %v148
    %196 = vmatprep.subr.mxu0 0.0
    %197 = vmatpush1.msra.mxu0 %v147
    %198 = vmatprep.subr.mxu0 0.0
    %199 = vmatpush2.msra.mxu0 0.0
    %200 = vmatprep.subr.mxu0 0.0
    %201 = vmatpush2.msra.mxu0 0.0
    %202 = vmatprep.subr.mxu0 0.0
    %203 = vmatpush2.msra.mxu0 0.0
    %204 = vmatprep.subr.mxu0 0.0
    %205 = vmatpush2.msra.mxu0 0.0
    %206 = vmatprep.subr.mxu0 0.0
    %207 = vmatpush2.msra.mxu0 0.0
    %208 = vmatprep.subr.mxu0 0.0
    %209 = vmatpush2.msra.mxu0 0.0
    %210 = vmatprep.subr.mxu0 0.0
    %211 = vmatpush2.msra.mxu0 0.0
    %212 = vmatprep.subr.mxu0 0.0
    %213 = vmatpush2.msra.mxu0 0.0
    %214 = vmatprep.subr.mxu0 0.0
    %215 = vmatpush2.msra.mxu0 0.0
    %216 = vmatprep.subr.mxu0 0.0
    %217 = vmatpush2.msra.mxu0 0.0
    %218 = vmatprep.subr.mxu0 0.0
    %219 = vmatpush2.msra.mxu0 0.0
    %220 = vmatprep.subr.mxu0 0.0
    %221 = vmatpush2.msra.mxu0 0.0
    %222 = vmatprep.subr.mxu0 0.0
    %223 = vmatpush2.msra.mxu0 0.0
    %224 = vmatprep.subr.mxu0 0.0
    %225 = vmatpush2.msra.mxu0 0.0
    %226 = vmatprep.subr.mxu0 0.0
    %227 = vmatpush2.msra.mxu0 0.0
    %228 = vmatprep.subr.mxu0 0.0
    %229 = vmatpush2.msra.mxu0 0.0
    %230 = vmatprep.mubr.f32.mxu0 0.0
    %231 = vmatmul.mubr.f32.gmra.mxu0 %v164
    %v232 = vpop.f32.mrf.mxu0
    %v233 = vadd.f32 %v160, %v232
    %v234 = vpop.f32.mrf.mxu0
    %235 = vdwg.mxu0
    %v237 = vlaneseq
    %v238 = vshrl.u32 %v237, 7
    %v239 = vsub.s32 0, %v238
    %v240 = vrot.slane %v154, %v239
    %vm242 = vcmask 261120
    %v244 = vsel %vm242, 0.0, 0
    %246 = vmatprep.subr.mxu0 0.0
    %247 = vmatpush1.msra.mxu0 0.0
    %248 = vmatprep.subr.mxu0 0.0
    %249 = vmatpush1.msra.mxu0 0.0
    %250 = vmatprep.subr.mxu0 0.0
    %251 = vmatpush1.msra.mxu0 0.0
    %252 = vmatprep.subr.mxu0 0.0
    %253 = vmatpush1.msra.mxu0 0.0
    %254 = vmatprep.subr.mxu0 0.0
    %255 = vmatpush1.msra.mxu0 0.0
    %256 = vmatprep.subr.mxu0 0.0
    %257 = vmatpush1.msra.mxu0 0.0
    %258 = vmatprep.subr.mxu0 0.0
    %259 = vmatpush1.msra.mxu0 0.0
    %260 = vmatprep.subr.mxu0 0.0
    %261 = vmatpush1.msra.mxu0 0.0
    %262 = vmatprep.subr.mxu0 0.0
    %263 = vmatpush1.msra.mxu0 0.0
    %264 = vmatprep.subr.mxu0 0.0
    %265 = vmatpush1.msra.mxu0 0.0
    %266 = vmatprep.subr.mxu0 0.0
    %267 = vmatpush1.msra.mxu0 0.0
    %268 = vmatprep.subr.mxu0 0.0
    %269 = vmatpush1.msra.mxu0 0.0
    %270 = vmatprep.subr.mxu0 0.0
    %271 = vmatpush1.msra.mxu0 %v152
    %272 = vmatprep.subr.mxu0 0.0
    %273 = vmatpush1.msra.mxu0 %v151
    %274 = vmatprep.subr.mxu0 0.0
    %275 = vmatpush1.msra.mxu0 %v150
    %276 = vmatprep.subr.mxu0 0.0
    %277 = vmatpush1.msra.mxu0 %v149
    %278 = vmatprep.subr.mxu0 0.0
    %279 = vmatpush2.msra.mxu0 0.0
    %280 = vmatprep.subr.mxu0 0.0
    %281 = vmatpush2.msra.mxu0 0.0
    %282 = vmatprep.subr.mxu0 0.0
    %283 = vmatpush2.msra.mxu0 0.0
    %284 = vmatprep.subr.mxu0 0.0
    %285 = vmatpush2.msra.mxu0 0.0
    %286 = vmatprep.subr.mxu0 0.0
    %287 = vmatpush2.msra.mxu0 0.0
    %288 = vmatprep.subr.mxu0 0.0
    %289 = vmatpush2.msra.mxu0 0.0
    %290 = vmatprep.subr.mxu0 0.0
    %291 = vmatpush2.msra.mxu0 0.0
    %292 = vmatprep.subr.mxu0 0.0
    %293 = vmatpush2.msra.mxu0 0.0
    %294 = vmatprep.subr.mxu0 0.0
    %295 = vmatpush2.msra.mxu0 0.0
    %296 = vmatprep.subr.mxu0 0.0
    %297 = vmatpush2.msra.mxu0 0.0
    %298 = vmatprep.subr.mxu0 0.0
    %299 = vmatpush2.msra.mxu0 0.0
    %300 = vmatprep.subr.mxu0 0.0
    %301 = vmatpush2.msra.mxu0 0.0
    %302 = vmatprep.subr.mxu0 0.0
    %303 = vmatpush2.msra.mxu0 0.0
    %304 = vmatprep.subr.mxu0 0.0
    %305 = vmatpush2.msra.mxu0 0.0
    %306 = vmatprep.subr.mxu0 0.0
    %307 = vmatpush2.msra.mxu0 0.0
    %308 = vmatprep.subr.mxu0 0.0
    %309 = vmatpush2.msra.mxu0 0.0
    %310 = vmatprep.mubr.f32.mxu0 0.0
    %311 = vmatmul.mubr.f32.gmra.mxu0 %v244
    %v312 = vpop.f32.mrf.mxu0
    %v313 = vadd.f32 %v240, %v312
    %v314 = vpop.f32.mrf.mxu0
    %315 = vdwg.mxu0
    %v316 = vadd.f32 %v233, %v313
    %v317 = vxor.u32 %v316, 2147483648
    %v318 = vmul.f32 %v317, 1.442695
    %v319 = vpow.pop %v318
    %v320 = vadd.f32 %v319, 1.0
    %v321 = vrcp.pop %v320
    %v322 = vmul.f32 1.0, %v321
    %324 = vrot.lane.b32.xlu0 %v313, 64
    %v325 = vpop.permute.xlu0 %324
    %v327 = vmul.f32 %v322, %v325
    %329 = vrot.lane.b32.xlu0 %v327, 64
    %v330 = vpop.permute.xlu0 %329
    %v332 = vadd.f32 %v233, %v330
    %v333 = vtanh.pop %v332
    %v334 = vsub.f32 1.0, %v322
    %336 = vrot.lane.b32.xlu0 %v333, 96
    %v337 = vpop.permute.xlu0 %336
    %v339 = vmul.f32 %v334, %v337
    %v340 = vmul.f32 %v322, 0.0
    %v341 = vadd.f32 %v339, %v340
    %s342 = scalar_lea.vmem %s0, 4
    %v343 = vld [vmem:[%s342] sm:$0xf]
    %v345 = vsel %vm162, %v343, 0
    %347 = vmatprep.subr.mxu0 0.0
    %348 = vmatpush1.msra.mxu0 0.0
    %349 = vmatprep.subr.mxu0 0.0
    %350 = vmatpush1.msra.mxu0 0.0
    %351 = vmatprep.subr.mxu0 0.0
    %352 = vmatpush1.msra.mxu0 0.0
    %353 = vmatprep.subr.mxu0 0.0
    %354 = vmatpush1.msra.mxu0 0.0
    %355 = vmatprep.subr.mxu0 0.0
    %356 = vmatpush1.msra.mxu0 0.0
    %357 = vmatprep.subr.mxu0 0.0
    %358 = vmatpush1.msra.mxu0 0.0
    %359 = vmatprep.subr.mxu0 0.0
    %360 = vmatpush1.msra.mxu0 0.0
    %361 = vmatprep.subr.mxu0 0.0
    %362 = vmatpush1.msra.mxu0 0.0
    %363 = vmatprep.subr.mxu0 0.0
    %364 = vmatpush1.msra.mxu0 0.0
    %365 = vmatprep.subr.mxu0 0.0
    %366 = vmatpush1.msra.mxu0 0.0
    %367 = vmatprep.subr.mxu0 0.0
    %368 = vmatpush1.msra.mxu0 0.0
    %369 = vmatprep.subr.mxu0 0.0
    %370 = vmatpush1.msra.mxu0 0.0
    %371 = vmatprep.subr.mxu0 0.0
    %372 = vmatpush1.msra.mxu0 0.0
    %373 = vmatprep.subr.mxu0 0.0
    %374 = vmatpush1.msra.mxu0 0.0
    %375 = vmatprep.subr.mxu0 0.0
    %376 = vmatpush1.msra.mxu0 %v148
    %377 = vmatprep.subr.mxu0 0.0
    %378 = vmatpush1.msra.mxu0 %v147
    %379 = vmatprep.subr.mxu0 0.0
    %380 = vmatpush2.msra.mxu0 0.0
    %381 = vmatprep.subr.mxu0 0.0
    %382 = vmatpush2.msra.mxu0 0.0
    %383 = vmatprep.subr.mxu0 0.0
    %384 = vmatpush2.msra.mxu0 0.0
    %385 = vmatprep.subr.mxu0 0.0
    %386 = vmatpush2.msra.mxu0 0.0
    %387 = vmatprep.subr.mxu0 0.0
    %388 = vmatpush2.msra.mxu0 0.0
    %389 = vmatprep.subr.mxu0 0.0
    %390 = vmatpush2.msra.mxu0 0.0
    %391 = vmatprep.subr.mxu0 0.0
    %392 = vmatpush2.msra.mxu0 0.0
    %393 = vmatprep.subr.mxu0 0.0
    %394 = vmatpush2.msra.mxu0 0.0
    %395 = vmatprep.subr.mxu0 0.0
    %396 = vmatpush2.msra.mxu0 0.0
    %397 = vmatprep.subr.mxu0 0.0
    %398 = vmatpush2.msra.mxu0 0.0
    %399 = vmatprep.subr.mxu0 0.0
    %400 = vmatpush2.msra.mxu0 0.0
    %401 = vmatprep.subr.mxu0 0.0
    %402 = vmatpush2.msra.mxu0 0.0
    %403 = vmatprep.subr.mxu0 0.0
    %404 = vmatpush2.msra.mxu0 0.0
    %405 = vmatprep.subr.mxu0 0.0
    %406 = vmatpush2.msra.mxu0 0.0
    %407 = vmatprep.subr.mxu0 0.0
    %408 = vmatpush2.msra.mxu0 0.0
    %409 = vmatprep.subr.mxu0 0.0
    %410 = vmatpush2.msra.mxu0 0.0
    %411 = vmatprep.mubr.f32.mxu0 0.0
    %412 = vmatmul.mubr.f32.gmra.mxu0 %v345
    %v413 = vpop.f32.mrf.mxu0
    %v414 = vadd.f32 %v160, %v413
    %v415 = vpop.f32.mrf.mxu0
    %416 = vdwg.mxu0
    %418 = vrot.lane.b32.xlu0 %v341, 96
    %v419 = vpop.permute.xlu0 %418
    %v420 = vsel %vm242, %v419, 0
    %422 = vmatprep.subr.mxu0 0.0
    %423 = vmatpush1.msra.mxu0 0.0
    %424 = vmatprep.subr.mxu0 0.0
    %425 = vmatpush1.msra.mxu0 0.0
    %426 = vmatprep.subr.mxu0 0.0
    %427 = vmatpush1.msra.mxu0 0.0
    %428 = vmatprep.subr.mxu0 0.0
    %429 = vmatpush1.msra.mxu0 0.0
    %430 = vmatprep.subr.mxu0 0.0
    %431 = vmatpush1.msra.mxu0 0.0
    %432 = vmatprep.subr.mxu0 0.0
    %433 = vmatpush1.msra.mxu0 0.0
    %434 = vmatprep.subr.mxu0 0.0
    %435 = vmatpush1.msra.mxu0 0.0
    %436 = vmatprep.subr.mxu0 0.0
    %437 = vmatpush1.msra.mxu0 0.0
    %438 = vmatprep.subr.mxu0 0.0
    %439 = vmatpush1.msra.mxu0 0.0
    %440 = vmatprep.subr.mxu0 0.0
    %441 = vmatpush1.msra.mxu0 0.0
    %442 = vmatprep.subr.mxu0 0.0
    %443 = vmatpush1.msra.mxu0 0.0
    %444 = vmatprep.subr.mxu0 0.0
    %445 = vmatpush1.msra.mxu0 0.0
    %446 = vmatprep.subr.mxu0 0.0
    %447 = vmatpush1.msra.mxu0 %v152
    %448 = vmatprep.subr.mxu0 0.0
    %449 = vmatpush1.msra.mxu0 %v151
    %450 = vmatprep.subr.mxu0 0.0
    %451 = vmatpush1.msra.mxu0 %v150
    %452 = vmatprep.subr.mxu0 0.0
    %453 = vmatpush1.msra.mxu0 %v149
    %454 = vmatprep.subr.mxu0 0.0
    %455 = vmatpush2.msra.mxu0 0.0
    %456 = vmatprep.subr.mxu0 0.0
    %457 = vmatpush2.msra.mxu0 0.0
    %458 = vmatprep.subr.mxu0 0.0
    %459 = vmatpush2.msra.mxu0 0.0
    %460 = vmatprep.subr.mxu0 0.0
    %461 = vmatpush2.msra.mxu0 0.0
    %462 = vmatprep.subr.mxu0 0.0
    %463 = vmatpush2.msra.mxu0 0.0
    %464 = vmatprep.subr.mxu0 0.0
    %465 = vmatpush2.msra.mxu0 0.0
    %466 = vmatprep.subr.mxu0 0.0
    %467 = vmatpush2.msra.mxu0 0.0
    %468 = vmatprep.subr.mxu0 0.0
    %469 = vmatpush2.msra.mxu0 0.0
    %470 = vmatprep.subr.mxu0 0.0
    %471 = vmatpush2.msra.mxu0 0.0
    %472 = vmatprep.subr.mxu0 0.0
    %473 = vmatpush2.msra.mxu0 0.0
    %474 = vmatprep.subr.mxu0 0.0
    %475 = vmatpush2.msra.mxu0 0.0
    %476 = vmatprep.subr.mxu0 0.0
    %477 = vmatpush2.msra.mxu0 0.0
    %478 = vmatprep.subr.mxu0 0.0
    %479 = vmatpush2.msra.mxu0 0.0
    %480 = vmatprep.subr.mxu0 0.0
    %481 = vmatpush2.msra.mxu0 0.0
    %482 = vmatprep.subr.mxu0 0.0
    %483 = vmatpush2.msra.mxu0 0.0
    %484 = vmatprep.subr.mxu0 0.0
    %485 = vmatpush2.msra.mxu0 0.0
    %486 = vmatprep.mubr.f32.mxu0 0.0
    %487 = vmatmul.mubr.f32.gmra.mxu0 %v420
    %v488 = vpop.f32.mrf.mxu0
    %v489 = vadd.f32 %v240, %v488
    %v490 = vpop.f32.mrf.mxu0
    %491 = vdwg.mxu0
    %v492 = vadd.f32 %v414, %v489
    %v493 = vxor.u32 %v492, 2147483648
    %v494 = vmul.f32 %v493, 1.442695
    %v495 = vpow.pop %v494
    %v496 = vadd.f32 %v495, 1.0
    %v497 = vrcp.pop %v496
    %v498 = vmul.f32 1.0, %v497
    %500 = vrot.lane.b32.xlu0 %v489, 64
    %v501 = vpop.permute.xlu0 %500
    %v503 = vmul.f32 %v498, %v501
    %505 = vrot.lane.b32.xlu0 %v503, 64
    %v506 = vpop.permute.xlu0 %505
    %v508 = vadd.f32 %v414, %v506
    %v509 = vtanh.pop %v508
    %v510 = vsub.f32 1.0, %v498
    %512 = vrot.lane.b32.xlu0 %v509, 96
    %v513 = vpop.permute.xlu0 %512
    %v515 = vmul.f32 %v510, %v513
    %v516 = vmul.f32 %v498, %v341
    %v517 = vadd.f32 %v515, %v516
    %s518 = scalar_lea.vmem %s0, 8
    %v519 = vld [vmem:[%s518] sm:$0xf]
    %v521 = vsel %vm162, %v519, 0
    %523 = vmatprep.subr.mxu0 0.0
    %524 = vmatpush1.msra.mxu0 0.0
    %525 = vmatprep.subr.mxu0 0.0
    %526 = vmatpush1.msra.mxu0 0.0
    %527 = vmatprep.subr.mxu0 0.0
    %528 = vmatpush1.msra.mxu0 0.0
    %529 = vmatprep.subr.mxu0 0.0
    %530 = vmatpush1.msra.mxu0 0.0
    %531 = vmatprep.subr.mxu0 0.0
    %532 = vmatpush1.msra.mxu0 0.0
    %533 = vmatprep.subr.mxu0 0.0
    %534 = vmatpush1.msra.mxu0 0.0
    %535 = vmatprep.subr.mxu0 0.0
    %536 = vmatpush1.msra.mxu0 0.0
    %537 = vmatprep.subr.mxu0 0.0
    %538 = vmatpush1.msra.mxu0 0.0
    %539 = vmatprep.subr.mxu0 0.0
    %540 = vmatpush1.msra.mxu0 0.0
    %541 = vmatprep.subr.mxu0 0.0
    %542 = vmatpush1.msra.mxu0 0.0
    %543 = vmatprep.subr.mxu0 0.0
    %544 = vmatpush1.msra.mxu0 0.0
    %545 = vmatprep.subr.mxu0 0.0
    %546 = vmatpush1.msra.mxu0 0.0
    %547 = vmatprep.subr.mxu0 0.0
    %548 = vmatpush1.msra.mxu0 0.0
    %549 = vmatprep.subr.mxu0 0.0
    %550 = vmatpush1.msra.mxu0 0.0
    %551 = vmatprep.subr.mxu0 0.0
    %552 = vmatpush1.msra.mxu0 %v148
    %553 = vmatprep.subr.mxu0 0.0
    %554 = vmatpush1.msra.mxu0 %v147
    %555 = vmatprep.subr.mxu0 0.0
    %556 = vmatpush2.msra.mxu0 0.0
    %557 = vmatprep.subr.mxu0 0.0
    %558 = vmatpush2.msra.mxu0 0.0
    %559 = vmatprep.subr.mxu0 0.0
    %560 = vmatpush2.msra.mxu0 0.0
    %561 = vmatprep.subr.mxu0 0.0
    %562 = vmatpush2.msra.mxu0 0.0
    %563 = vmatprep.subr.mxu0 0.0
    %564 = vmatpush2.msra.mxu0 0.0
    %565 = vmatprep.subr.mxu0 0.0
    %566 = vmatpush2.msra.mxu0 0.0
    %567 = vmatprep.subr.mxu0 0.0
    %568 = vmatpush2.msra.mxu0 0.0
    %569 = vmatprep.subr.mxu0 0.0
    %570 = vmatpush2.msra.mxu0 0.0
    %571 = vmatprep.subr.mxu0 0.0
    %572 = vmatpush2.msra.mxu0 0.0
    %573 = vmatprep.subr.mxu0 0.0
    %574 = vmatpush2.msra.mxu0 0.0
    %575 = vmatprep.subr.mxu0 0.0
    %576 = vmatpush2.msra.mxu0 0.0
    %577 = vmatprep.subr.mxu0 0.0
    %578 = vmatpush2.msra.mxu0 0.0
    %579 = vmatprep.subr.mxu0 0.0
    %580 = vmatpush2.msra.mxu0 0.0
    %581 = vmatprep.subr.mxu0 0.0
    %582 = vmatpush2.msra.mxu0 0.0
    %583 = vmatprep.subr.mxu0 0.0
    %584 = vmatpush2.msra.mxu0 0.0
    %585 = vmatprep.subr.mxu0 0.0
    %586 = vmatpush2.msra.mxu0 0.0
    %587 = vmatprep.mubr.f32.mxu0 0.0
    %588 = vmatmul.mubr.f32.gmra.mxu0 %v521
    %v589 = vpop.f32.mrf.mxu0
    %v590 = vadd.f32 %v160, %v589
    %v591 = vpop.f32.mrf.mxu0
    %592 = vdwg.mxu0
    %594 = vrot.lane.b32.xlu0 %v517, 96
    %v595 = vpop.permute.xlu0 %594
    %v596 = vsel %vm242, %v595, 0
    %598 = vmatprep.subr.mxu0 0.0
    %599 = vmatpush1.msra.mxu0 0.0
    %600 = vmatprep.subr.mxu0 0.0
    %601 = vmatpush1.msra.mxu0 0.0
    %602 = vmatprep.subr.mxu0 0.0
    %603 = vmatpush1.msra.mxu0 0.0
    %604 = vmatprep.subr.mxu0 0.0
    %605 = vmatpush1.msra.mxu0 0.0
    %606 = vmatprep.subr.mxu0 0.0
    %607 = vmatpush1.msra.mxu0 0.0
    %608 = vmatprep.subr.mxu0 0.0
    %609 = vmatpush1.msra.mxu0 0.0
    %610 = vmatprep.subr.mxu0 0.0
    %611 = vmatpush1.msra.mxu0 0.0
    %612 = vmatprep.subr.mxu0 0.0
    %613 = vmatpush1.msra.mxu0 0.0
    %614 = vmatprep.subr.mxu0 0.0
    %615 = vmatpush1.msra.mxu0 0.0
    %616 = vmatprep.subr.mxu0 0.0
    %617 = vmatpush1.msra.mxu0 0.0
    %618 = vmatprep.subr.mxu0 0.0
    %619 = vmatpush1.msra.mxu0 0.0
    %620 = vmatprep.subr.mxu0 0.0
    %621 = vmatpush1.msra.mxu0 0.0
    %622 = vmatprep.subr.mxu0 0.0
    %623 = vmatpush1.msra.mxu0 %v152
    %624 = vmatprep.subr.mxu0 0.0
    %625 = vmatpush1.msra.mxu0 %v151
    %626 = vmatprep.subr.mxu0 0.0
    %627 = vmatpush1.msra.mxu0 %v150
    %628 = vmatprep.subr.mxu0 0.0
    %629 = vmatpush1.msra.mxu0 %v149
    %630 = vmatprep.subr.mxu0 0.0
    %631 = vmatpush2.msra.mxu0 0.0
    %632 = vmatprep.subr.mxu0 0.0
    %633 = vmatpush2.msra.mxu0 0.0
    %634 = vmatprep.subr.mxu0 0.0
    %635 = vmatpush2.msra.mxu0 0.0
    %636 = vmatprep.subr.mxu0 0.0
    %637 = vmatpush2.msra.mxu0 0.0
    %638 = vmatprep.subr.mxu0 0.0
    %639 = vmatpush2.msra.mxu0 0.0
    %640 = vmatprep.subr.mxu0 0.0
    %641 = vmatpush2.msra.mxu0 0.0
    %642 = vmatprep.subr.mxu0 0.0
    %643 = vmatpush2.msra.mxu0 0.0
    %644 = vmatprep.subr.mxu0 0.0
    %645 = vmatpush2.msra.mxu0 0.0
    %646 = vmatprep.subr.mxu0 0.0
    %647 = vmatpush2.msra.mxu0 0.0
    %648 = vmatprep.subr.mxu0 0.0
    %649 = vmatpush2.msra.mxu0 0.0
    %650 = vmatprep.subr.mxu0 0.0
    %651 = vmatpush2.msra.mxu0 0.0
    %652 = vmatprep.subr.mxu0 0.0
    %653 = vmatpush2.msra.mxu0 0.0
    %654 = vmatprep.subr.mxu0 0.0
    %655 = vmatpush2.msra.mxu0 0.0
    %656 = vmatprep.subr.mxu0 0.0
    %657 = vmatpush2.msra.mxu0 0.0
    %658 = vmatprep.subr.mxu0 0.0
    %659 = vmatpush2.msra.mxu0 0.0
    %660 = vmatprep.subr.mxu0 0.0
    %661 = vmatpush2.msra.mxu0 0.0
    %662 = vmatprep.mubr.f32.mxu0 0.0
    %663 = vmatmul.mubr.f32.gmra.mxu0 %v596
    %v664 = vpop.f32.mrf.mxu0
    %v665 = vadd.f32 %v240, %v664
    %v666 = vpop.f32.mrf.mxu0
    %667 = vdwg.mxu0
    %v668 = vadd.f32 %v590, %v665
    %v669 = vxor.u32 %v668, 2147483648
    %v670 = vmul.f32 %v669, 1.442695
    %v671 = vpow.pop %v670
    %v672 = vadd.f32 %v671, 1.0
    %v673 = vrcp.pop %v672
    %v674 = vmul.f32 1.0, %v673
    %676 = vrot.lane.b32.xlu0 %v665, 64
    %v677 = vpop.permute.xlu0 %676
    %v679 = vmul.f32 %v674, %v677
    %681 = vrot.lane.b32.xlu0 %v679, 64
    %v682 = vpop.permute.xlu0 %681
    %v684 = vadd.f32 %v590, %v682
    %v685 = vtanh.pop %v684
    %v686 = vsub.f32 1.0, %v674
    %688 = vrot.lane.b32.xlu0 %v685, 96
    %v689 = vpop.permute.xlu0 %688
    %v691 = vmul.f32 %v686, %v689
    %v692 = vmul.f32 %v674, %v517
    %v693 = vadd.f32 %v691, %v692
    %s694 = scalar_lea.vmem %s0, 12
    %v695 = vld [vmem:[%s694] sm:$0xf]
    %v697 = vsel %vm162, %v695, 0
    %699 = vmatprep.subr.mxu0 0.0
    %700 = vmatpush1.msra.mxu0 0.0
    %701 = vmatprep.subr.mxu0 0.0
    %702 = vmatpush1.msra.mxu0 0.0
    %703 = vmatprep.subr.mxu0 0.0
    %704 = vmatpush1.msra.mxu0 0.0
    %705 = vmatprep.subr.mxu0 0.0
    %706 = vmatpush1.msra.mxu0 0.0
    %707 = vmatprep.subr.mxu0 0.0
    %708 = vmatpush1.msra.mxu0 0.0
    %709 = vmatprep.subr.mxu0 0.0
    %710 = vmatpush1.msra.mxu0 0.0
    %711 = vmatprep.subr.mxu0 0.0
    %712 = vmatpush1.msra.mxu0 0.0
    %713 = vmatprep.subr.mxu0 0.0
    %714 = vmatpush1.msra.mxu0 0.0
    %715 = vmatprep.subr.mxu0 0.0
    %716 = vmatpush1.msra.mxu0 0.0
    %717 = vmatprep.subr.mxu0 0.0
    %718 = vmatpush1.msra.mxu0 0.0
    %719 = vmatprep.subr.mxu0 0.0
    %720 = vmatpush1.msra.mxu0 0.0
    %721 = vmatprep.subr.mxu0 0.0
    %722 = vmatpush1.msra.mxu0 0.0
    %723 = vmatprep.subr.mxu0 0.0
    %724 = vmatpush1.msra.mxu0 0.0
    %725 = vmatprep.subr.mxu0 0.0
    %726 = vmatpush1.msra.mxu0 0.0
    %727 = vmatprep.subr.mxu0 0.0
    %728 = vmatpush1.msra.mxu0 %v148
    %729 = vmatprep.subr.mxu0 0.0
    %730 = vmatpush1.msra.mxu0 %v147
    %731 = vmatprep.subr.mxu0 0.0
    %732 = vmatpush2.msra.mxu0 0.0
    %733 = vmatprep.subr.mxu0 0.0
    %734 = vmatpush2.msra.mxu0 0.0
    %735 = vmatprep.subr.mxu0 0.0
    %736 = vmatpush2.msra.mxu0 0.0
    %737 = vmatprep.subr.mxu0 0.0
    %738 = vmatpush2.msra.mxu0 0.0
    %739 = vmatprep.subr.mxu0 0.0
    %740 = vmatpush2.msra.mxu0 0.0
    %741 = vmatprep.subr.mxu0 0.0
    %742 = vmatpush2.msra.mxu0 0.0
    %743 = vmatprep.subr.mxu0 0.0
    %744 = vmatpush2.msra.mxu0 0.0
    %745 = vmatprep.subr.mxu0 0.0
    %746 = vmatpush2.msra.mxu0 0.0
    %747 = vmatprep.subr.mxu0 0.0
    %748 = vmatpush2.msra.mxu0 0.0
    %749 = vmatprep.subr.mxu0 0.0
    %750 = vmatpush2.msra.mxu0 0.0
    %751 = vmatprep.subr.mxu0 0.0
    %752 = vmatpush2.msra.mxu0 0.0
    %753 = vmatprep.subr.mxu0 0.0
    %754 = vmatpush2.msra.mxu0 0.0
    %755 = vmatprep.subr.mxu0 0.0
    %756 = vmatpush2.msra.mxu0 0.0
    %757 = vmatprep.subr.mxu0 0.0
    %758 = vmatpush2.msra.mxu0 0.0
    %759 = vmatprep.subr.mxu0 0.0
    %760 = vmatpush2.msra.mxu0 0.0
    %761 = vmatprep.subr.mxu0 0.0
    %762 = vmatpush2.msra.mxu0 0.0
    %763 = vmatprep.mubr.f32.mxu0 0.0
    %764 = vmatmul.mubr.f32.gmra.mxu0 %v697
    %v765 = vpop.f32.mrf.mxu0
    %v766 = vadd.f32 %v160, %v765
    %v767 = vpop.f32.mrf.mxu0
    %768 = vdwg.mxu0
    %770 = vrot.lane.b32.xlu0 %v693, 96
    %v771 = vpop.permute.xlu0 %770
    %v772 = vsel %vm242, %v771, 0
    %774 = vmatprep.subr.mxu0 0.0
    %775 = vmatpush1.msra.mxu0 0.0
    %776 = vmatprep.subr.mxu0 0.0
    %777 = vmatpush1.msra.mxu0 0.0
    %778 = vmatprep.subr.mxu0 0.0
    %779 = vmatpush1.msra.mxu0 0.0
    %780 = vmatprep.subr.mxu0 0.0
    %781 = vmatpush1.msra.mxu0 0.0
    %782 = vmatprep.subr.mxu0 0.0
    %783 = vmatpush1.msra.mxu0 0.0
    %784 = vmatprep.subr.mxu0 0.0
    %785 = vmatpush1.msra.mxu0 0.0
    %786 = vmatprep.subr.mxu0 0.0
    %787 = vmatpush1.msra.mxu0 0.0
    %788 = vmatprep.subr.mxu0 0.0
    %789 = vmatpush1.msra.mxu0 0.0
    %790 = vmatprep.subr.mxu0 0.0
    %791 = vmatpush1.msra.mxu0 0.0
    %792 = vmatprep.subr.mxu0 0.0
    %793 = vmatpush1.msra.mxu0 0.0
    %794 = vmatprep.subr.mxu0 0.0
    %795 = vmatpush1.msra.mxu0 0.0
    %796 = vmatprep.subr.mxu0 0.0
    %797 = vmatpush1.msra.mxu0 0.0
    %798 = vmatprep.subr.mxu0 0.0
    %799 = vmatpush1.msra.mxu0 %v152
    %800 = vmatprep.subr.mxu0 0.0
    %801 = vmatpush1.msra.mxu0 %v151
    %802 = vmatprep.subr.mxu0 0.0
    %803 = vmatpush1.msra.mxu0 %v150
    %804 = vmatprep.subr.mxu0 0.0
    %805 = vmatpush1.msra.mxu0 %v149
    %806 = vmatprep.subr.mxu0 0.0
    %807 = vmatpush2.msra.mxu0 0.0
    %808 = vmatprep.subr.mxu0 0.0
    %809 = vmatpush2.msra.mxu0 0.0
    %810 = vmatprep.subr.mxu0 0.0
    %811 = vmatpush2.msra.mxu0 0.0
    %812 = vmatprep.subr.mxu0 0.0
    %813 = vmatpush2.msra.mxu0 0.0
    %814 = vmatprep.subr.mxu0 0.0
    %815 = vmatpush2.msra.mxu0 0.0
    %816 = vmatprep.subr.mxu0 0.0
    %817 = vmatpush2.msra.mxu0 0.0
    %818 = vmatprep.subr.mxu0 0.0
    %819 = vmatpush2.msra.mxu0 0.0
    %820 = vmatprep.subr.mxu0 0.0
    %821 = vmatpush2.msra.mxu0 0.0
    %822 = vmatprep.subr.mxu0 0.0
    %823 = vmatpush2.msra.mxu0 0.0
    %824 = vmatprep.subr.mxu0 0.0
    %825 = vmatpush2.msra.mxu0 0.0
    %826 = vmatprep.subr.mxu0 0.0
    %827 = vmatpush2.msra.mxu0 0.0
    %828 = vmatprep.subr.mxu0 0.0
    %829 = vmatpush2.msra.mxu0 0.0
    %830 = vmatprep.subr.mxu0 0.0
    %831 = vmatpush2.msra.mxu0 0.0
    %832 = vmatprep.subr.mxu0 0.0
    %833 = vmatpush2.msra.mxu0 0.0
    %834 = vmatprep.subr.mxu0 0.0
    %835 = vmatpush2.msra.mxu0 0.0
    %836 = vmatprep.subr.mxu0 0.0
    %837 = vmatpush2.msra.mxu0 0.0
    %838 = vmatprep.mubr.f32.mxu0 0.0
    %839 = vmatmul.mubr.f32.gmra.mxu0 %v772
    %v840 = vpop.f32.mrf.mxu0
    %v841 = vadd.f32 %v240, %v840
    %v842 = vpop.f32.mrf.mxu0
    %843 = vdwg.mxu0
    %v844 = vadd.f32 %v766, %v841
    %v845 = vxor.u32 %v844, 2147483648
    %v846 = vmul.f32 %v845, 1.442695
    %v847 = vpow.pop %v846
    %v848 = vadd.f32 %v847, 1.0
    %v849 = vrcp.pop %v848
    %v850 = vmul.f32 1.0, %v849
    %852 = vrot.lane.b32.xlu0 %v841, 64
    %v853 = vpop.permute.xlu0 %852
    %v855 = vmul.f32 %v850, %v853
    %857 = vrot.lane.b32.xlu0 %v855, 64
    %v858 = vpop.permute.xlu0 %857
    %v860 = vadd.f32 %v766, %v858
    %v861 = vtanh.pop %v860
    %v862 = vsub.f32 1.0, %v850
    %864 = vrot.lane.b32.xlu0 %v861, 96
    %v865 = vpop.permute.xlu0 %864
    %v867 = vmul.f32 %v862, %v865
    %v868 = vmul.f32 %v850, %v693
    %v869 = vadd.f32 %v867, %v868
    %s870 = scalar_lea.vmem %s0, 16
    %v871 = vld [vmem:[%s870] sm:$0xf]
    %v873 = vsel %vm162, %v871, 0
    %875 = vmatprep.subr.mxu0 0.0
    %876 = vmatpush1.msra.mxu0 0.0
    %877 = vmatprep.subr.mxu0 0.0
    %878 = vmatpush1.msra.mxu0 0.0
    %879 = vmatprep.subr.mxu0 0.0
    %880 = vmatpush1.msra.mxu0 0.0
    %881 = vmatprep.subr.mxu0 0.0
    %882 = vmatpush1.msra.mxu0 0.0
    %883 = vmatprep.subr.mxu0 0.0
    %884 = vmatpush1.msra.mxu0 0.0
    %885 = vmatprep.subr.mxu0 0.0
    %886 = vmatpush1.msra.mxu0 0.0
    %887 = vmatprep.subr.mxu0 0.0
    %888 = vmatpush1.msra.mxu0 0.0
    %889 = vmatprep.subr.mxu0 0.0
    %890 = vmatpush1.msra.mxu0 0.0
    %891 = vmatprep.subr.mxu0 0.0
    %892 = vmatpush1.msra.mxu0 0.0
    %893 = vmatprep.subr.mxu0 0.0
    %894 = vmatpush1.msra.mxu0 0.0
    %895 = vmatprep.subr.mxu0 0.0
    %896 = vmatpush1.msra.mxu0 0.0
    %897 = vmatprep.subr.mxu0 0.0
    %898 = vmatpush1.msra.mxu0 0.0
    %899 = vmatprep.subr.mxu0 0.0
    %900 = vmatpush1.msra.mxu0 0.0
    %901 = vmatprep.subr.mxu0 0.0
    %902 = vmatpush1.msra.mxu0 0.0
    %903 = vmatprep.subr.mxu0 0.0
    %904 = vmatpush1.msra.mxu0 %v148
    %905 = vmatprep.subr.mxu0 0.0
    %906 = vmatpush1.msra.mxu0 %v147
    %907 = vmatprep.subr.mxu0 0.0
    %908 = vmatpush2.msra.mxu0 0.0
    %909 = vmatprep.subr.mxu0 0.0
    %910 = vmatpush2.msra.mxu0 0.0
    %911 = vmatprep.subr.mxu0 0.0
    %912 = vmatpush2.msra.mxu0 0.0
    %913 = vmatprep.subr.mxu0 0.0
    %914 = vmatpush2.msra.mxu0 0.0
    %915 = vmatprep.subr.mxu0 0.0
    %916 = vmatpush2.msra.mxu0 0.0
    %917 = vmatprep.subr.mxu0 0.0
    %918 = vmatpush2.msra.mxu0 0.0
    %919 = vmatprep.subr.mxu0 0.0
    %920 = vmatpush2.msra.mxu0 0.0
    %921 = vmatprep.subr.mxu0 0.0
    %922 = vmatpush2.msra.mxu0 0.0
    %923 = vmatprep.subr.mxu0 0.0
    %924 = vmatpush2.msra.mxu0 0.0
    %925 = vmatprep.subr.mxu0 0.0
    %926 = vmatpush2.msra.mxu0 0.0
    %927 = vmatprep.subr.mxu0 0.0
    %928 = vmatpush2.msra.mxu0 0.0
    %929 = vmatprep.subr.mxu0 0.0
    %930 = vmatpush2.msra.mxu0 0.0
    %931 = vmatprep.subr.mxu0 0.0
    %932 = vmatpush2.msra.mxu0 0.0
    %933 = vmatprep.subr.mxu0 0.0
    %934 = vmatpush2.msra.mxu0 0.0
    %935 = vmatprep.subr.mxu0 0.0
    %936 = vmatpush2.msra.mxu0 0.0
    %937 = vmatprep.subr.mxu0 0.0
    %938 = vmatpush2.msra.mxu0 0.0
    %939 = vmatprep.mubr.f32.mxu0 0.0
    %940 = vmatmul.mubr.f32.gmra.mxu0 %v873
    %v941 = vpop.f32.mrf.mxu0
    %v942 = vadd.f32 %v160, %v941
    %v943 = vpop.f32.mrf.mxu0
    %944 = vdwg.mxu0
    %946 = vrot.lane.b32.xlu0 %v869, 96
    %v947 = vpop.permute.xlu0 %946
    %v948 = vsel %vm242, %v947, 0
    %950 = vmatprep.subr.mxu0 0.0
    %951 = vmatpush1.msra.mxu0 0.0
    %952 = vmatprep.subr.mxu0 0.0
    %953 = vmatpush1.msra.mxu0 0.0
    %954 = vmatprep.subr.mxu0 0.0
    %955 = vmatpush1.msra.mxu0 0.0
    %956 = vmatprep.subr.mxu0 0.0
    %957 = vmatpush1.msra.mxu0 0.0
    %958 = vmatprep.subr.mxu0 0.0
    %959 = vmatpush1.msra.mxu0 0.0
    %960 = vmatprep.subr.mxu0 0.0
    %961 = vmatpush1.msra.mxu0 0.0
    %962 = vmatprep.subr.mxu0 0.0
    %963 = vmatpush1.msra.mxu0 0.0
    %964 = vmatprep.subr.mxu0 0.0
    %965 = vmatpush1.msra.mxu0 0.0
    %966 = vmatprep.subr.mxu0 0.0
    %967 = vmatpush1.msra.mxu0 0.0
    %968 = vmatprep.subr.mxu0 0.0
    %969 = vmatpush1.msra.mxu0 0.0
    %970 = vmatprep.subr.mxu0 0.0
    %971 = vmatpush1.msra.mxu0 0.0
    %972 = vmatprep.subr.mxu0 0.0
    %973 = vmatpush1.msra.mxu0 0.0
    %974 = vmatprep.subr.mxu0 0.0
    %975 = vmatpush1.msra.mxu0 %v152
    %976 = vmatprep.subr.mxu0 0.0
    %977 = vmatpush1.msra.mxu0 %v151
    %978 = vmatprep.subr.mxu0 0.0
    %979 = vmatpush1.msra.mxu0 %v150
    %980 = vmatprep.subr.mxu0 0.0
    %981 = vmatpush1.msra.mxu0 %v149
    %982 = vmatprep.subr.mxu0 0.0
    %983 = vmatpush2.msra.mxu0 0.0
    %984 = vmatprep.subr.mxu0 0.0
    %985 = vmatpush2.msra.mxu0 0.0
    %986 = vmatprep.subr.mxu0 0.0
    %987 = vmatpush2.msra.mxu0 0.0
    %988 = vmatprep.subr.mxu0 0.0
    %989 = vmatpush2.msra.mxu0 0.0
    %990 = vmatprep.subr.mxu0 0.0
    %991 = vmatpush2.msra.mxu0 0.0
    %992 = vmatprep.subr.mxu0 0.0
    %993 = vmatpush2.msra.mxu0 0.0
    %994 = vmatprep.subr.mxu0 0.0
    %995 = vmatpush2.msra.mxu0 0.0
    %996 = vmatprep.subr.mxu0 0.0
    %997 = vmatpush2.msra.mxu0 0.0
    %998 = vmatprep.subr.mxu0 0.0
    %999 = vmatpush2.msra.mxu0 0.0
    %1000 = vmatprep.subr.mxu0 0.0
    %1001 = vmatpush2.msra.mxu0 0.0
    %1002 = vmatprep.subr.mxu0 0.0
    %1003 = vmatpush2.msra.mxu0 0.0
    %1004 = vmatprep.subr.mxu0 0.0
    %1005 = vmatpush2.msra.mxu0 0.0
    %1006 = vmatprep.subr.mxu0 0.0
    %1007 = vmatpush2.msra.mxu0 0.0
    %1008 = vmatprep.subr.mxu0 0.0
    %1009 = vmatpush2.msra.mxu0 0.0
    %1010 = vmatprep.subr.mxu0 0.0
    %1011 = vmatpush2.msra.mxu0 0.0
    %1012 = vmatprep.subr.mxu0 0.0
    %1013 = vmatpush2.msra.mxu0 0.0
    %1014 = vmatprep.mubr.f32.mxu0 0.0
    %1015 = vmatmul.mubr.f32.gmra.mxu0 %v948
    %v1016 = vpop.f32.mrf.mxu0
    %v1017 = vadd.f32 %v240, %v1016
    %v1018 = vpop.f32.mrf.mxu0
    %1019 = vdwg.mxu0
    %v1020 = vadd.f32 %v942, %v1017
    %v1021 = vxor.u32 %v1020, 2147483648
    %v1022 = vmul.f32 %v1021, 1.442695
    %v1023 = vpow.pop %v1022
    %v1024 = vadd.f32 %v1023, 1.0
    %v1025 = vrcp.pop %v1024
    %v1026 = vmul.f32 1.0, %v1025
    %1028 = vrot.lane.b32.xlu0 %v1017, 64
    %v1029 = vpop.permute.xlu0 %1028
    %v1031 = vmul.f32 %v1026, %v1029
    %1033 = vrot.lane.b32.xlu0 %v1031, 64
    %v1034 = vpop.permute.xlu0 %1033
    %v1036 = vadd.f32 %v942, %v1034
    %v1037 = vtanh.pop %v1036
    %v1038 = vsub.f32 1.0, %v1026
    %1040 = vrot.lane.b32.xlu0 %v1037, 96
    %v1041 = vpop.permute.xlu0 %1040
    %v1043 = vmul.f32 %v1038, %v1041
    %v1044 = vmul.f32 %v1026, %v869
    %v1045 = vadd.f32 %v1043, %v1044
    %s1046 = scalar_lea.vmem %s0, 20
    %v1047 = vld [vmem:[%s1046] sm:$0xf]
    %v1049 = vsel %vm162, %v1047, 0
    %1051 = vmatprep.subr.mxu0 0.0
    %1052 = vmatpush1.msra.mxu0 0.0
    %1053 = vmatprep.subr.mxu0 0.0
    %1054 = vmatpush1.msra.mxu0 0.0
    %1055 = vmatprep.subr.mxu0 0.0
    %1056 = vmatpush1.msra.mxu0 0.0
    %1057 = vmatprep.subr.mxu0 0.0
    %1058 = vmatpush1.msra.mxu0 0.0
    %1059 = vmatprep.subr.mxu0 0.0
    %1060 = vmatpush1.msra.mxu0 0.0
    %1061 = vmatprep.subr.mxu0 0.0
    %1062 = vmatpush1.msra.mxu0 0.0
    %1063 = vmatprep.subr.mxu0 0.0
    %1064 = vmatpush1.msra.mxu0 0.0
    %1065 = vmatprep.subr.mxu0 0.0
    %1066 = vmatpush1.msra.mxu0 0.0
    %1067 = vmatprep.subr.mxu0 0.0
    %1068 = vmatpush1.msra.mxu0 0.0
    %1069 = vmatprep.subr.mxu0 0.0
    %1070 = vmatpush1.msra.mxu0 0.0
    %1071 = vmatprep.subr.mxu0 0.0
    %1072 = vmatpush1.msra.mxu0 0.0
    %1073 = vmatprep.subr.mxu0 0.0
    %1074 = vmatpush1.msra.mxu0 0.0
    %1075 = vmatprep.subr.mxu0 0.0
    %1076 = vmatpush1.msra.mxu0 0.0
    %1077 = vmatprep.subr.mxu0 0.0
    %1078 = vmatpush1.msra.mxu0 0.0
    %1079 = vmatprep.subr.mxu0 0.0
    %1080 = vmatpush1.msra.mxu0 %v148
    %1081 = vmatprep.subr.mxu0 0.0
    %1082 = vmatpush1.msra.mxu0 %v147
    %1083 = vmatprep.subr.mxu0 0.0
    %1084 = vmatpush2.msra.mxu0 0.0
    %1085 = vmatprep.subr.mxu0 0.0
    %1086 = vmatpush2.msra.mxu0 0.0
    %1087 = vmatprep.subr.mxu0 0.0
    %1088 = vmatpush2.msra.mxu0 0.0
    %1089 = vmatprep.subr.mxu0 0.0
    %1090 = vmatpush2.msra.mxu0 0.0
    %1091 = vmatprep.subr.mxu0 0.0
    %1092 = vmatpush2.msra.mxu0 0.0
    %1093 = vmatprep.subr.mxu0 0.0
    %1094 = vmatpush2.msra.mxu0 0.0
    %1095 = vmatprep.subr.mxu0 0.0
    %1096 = vmatpush2.msra.mxu0 0.0
    %1097 = vmatprep.subr.mxu0 0.0
    %1098 = vmatpush2.msra.mxu0 0.0
    %1099 = vmatprep.subr.mxu0 0.0
    %1100 = vmatpush2.msra.mxu0 0.0
    %1101 = vmatprep.subr.mxu0 0.0
    %1102 = vmatpush2.msra.mxu0 0.0
    %1103 = vmatprep.subr.mxu0 0.0
    %1104 = vmatpush2.msra.mxu0 0.0
    %1105 = vmatprep.subr.mxu0 0.0
    %1106 = vmatpush2.msra.mxu0 0.0
    %1107 = vmatprep.subr.mxu0 0.0
    %1108 = vmatpush2.msra.mxu0 0.0
    %1109 = vmatprep.subr.mxu0 0.0
    %1110 = vmatpush2.msra.mxu0 0.0
    %1111 = vmatprep.subr.mxu0 0.0
    %1112 = vmatpush2.msra.mxu0 0.0
    %1113 = vmatprep.subr.mxu0 0.0
    %1114 = vmatpush2.msra.mxu0 0.0
    %1115 = vmatprep.mubr.f32.mxu0 0.0
    %1116 = vmatmul.mubr.f32.gmra.mxu0 %v1049
    %v1117 = vpop.f32.mrf.mxu0
    %v1118 = vadd.f32 %v160, %v1117
    %v1119 = vpop.f32.mrf.mxu0
    %1120 = vdwg.mxu0
    %1122 = vrot.lane.b32.xlu0 %v1045, 96
    %v1123 = vpop.permute.xlu0 %1122
    %v1124 = vsel %vm242, %v1123, 0
    %1126 = vmatprep.subr.mxu0 0.0
    %1127 = vmatpush1.msra.mxu0 0.0
    %1128 = vmatprep.subr.mxu0 0.0
    %1129 = vmatpush1.msra.mxu0 0.0
    %1130 = vmatprep.subr.mxu0 0.0
    %1131 = vmatpush1.msra.mxu0 0.0
    %1132 = vmatprep.subr.mxu0 0.0
    %1133 = vmatpush1.msra.mxu0 0.0
    %1134 = vmatprep.subr.mxu0 0.0
    %1135 = vmatpush1.msra.mxu0 0.0
    %1136 = vmatprep.subr.mxu0 0.0
    %1137 = vmatpush1.msra.mxu0 0.0
    %1138 = vmatprep.subr.mxu0 0.0
    %1139 = vmatpush1.msra.mxu0 0.0
    %1140 = vmatprep.subr.mxu0 0.0
    %1141 = vmatpush1.msra.mxu0 0.0
    %1142 = vmatprep.subr.mxu0 0.0
    %1143 = vmatpush1.msra.mxu0 0.0
    %1144 = vmatprep.subr.mxu0 0.0
    %1145 = vmatpush1.msra.mxu0 0.0
    %1146 = vmatprep.subr.mxu0 0.0
    %1147 = vmatpush1.msra.mxu0 0.0
    %1148 = vmatprep.subr.mxu0 0.0
    %1149 = vmatpush1.msra.mxu0 0.0
    %1150 = vmatprep.subr.mxu0 0.0
    %1151 = vmatpush1.msra.mxu0 %v152
    %1152 = vmatprep.subr.mxu0 0.0
    %1153 = vmatpush1.msra.mxu0 %v151
    %1154 = vmatprep.subr.mxu0 0.0
    %1155 = vmatpush1.msra.mxu0 %v150
    %1156 = vmatprep.subr.mxu0 0.0
    %1157 = vmatpush1.msra.mxu0 %v149
    %1158 = vmatprep.subr.mxu0 0.0
    %1159 = vmatpush2.msra.mxu0 0.0
    %1160 = vmatprep.subr.mxu0 0.0
    %1161 = vmatpush2.msra.mxu0 0.0
    %1162 = vmatprep.subr.mxu0 0.0
    %1163 = vmatpush2.msra.mxu0 0.0
    %1164 = vmatprep.subr.mxu0 0.0
    %1165 = vmatpush2.msra.mxu0 0.0
    %1166 = vmatprep.subr.mxu0 0.0
    %1167 = vmatpush2.msra.mxu0 0.0
    %1168 = vmatprep.subr.mxu0 0.0
    %1169 = vmatpush2.msra.mxu0 0.0
    %1170 = vmatprep.subr.mxu0 0.0
    %1171 = vmatpush2.msra.mxu0 0.0
    %1172 = vmatprep.subr.mxu0 0.0
    %1173 = vmatpush2.msra.mxu0 0.0
    %1174 = vmatprep.subr.mxu0 0.0
    %1175 = vmatpush2.msra.mxu0 0.0
    %1176 = vmatprep.subr.mxu0 0.0
    %1177 = vmatpush2.msra.mxu0 0.0
    %1178 = vmatprep.subr.mxu0 0.0
    %1179 = vmatpush2.msra.mxu0 0.0
    %1180 = vmatprep.subr.mxu0 0.0
    %1181 = vmatpush2.msra.mxu0 0.0
    %1182 = vmatprep.subr.mxu0 0.0
    %1183 = vmatpush2.msra.mxu0 0.0
    %1184 = vmatprep.subr.mxu0 0.0
    %1185 = vmatpush2.msra.mxu0 0.0
    %1186 = vmatprep.subr.mxu0 0.0
    %1187 = vmatpush2.msra.mxu0 0.0
    %1188 = vmatprep.subr.mxu0 0.0
    %1189 = vmatpush2.msra.mxu0 0.0
    %1190 = vmatprep.mubr.f32.mxu0 0.0
    %1191 = vmatmul.mubr.f32.gmra.mxu0 %v1124
    %v1192 = vpop.f32.mrf.mxu0
    %v1193 = vadd.f32 %v240, %v1192
    %v1194 = vpop.f32.mrf.mxu0
    %1195 = vdwg.mxu0
    %v1196 = vadd.f32 %v1118, %v1193
    %v1197 = vxor.u32 %v1196, 2147483648
    %v1198 = vmul.f32 %v1197, 1.442695
    %v1199 = vpow.pop %v1198
    %v1200 = vadd.f32 %v1199, 1.0
    %v1201 = vrcp.pop %v1200
    %v1202 = vmul.f32 1.0, %v1201
    %1204 = vrot.lane.b32.xlu0 %v1193, 64
    %v1205 = vpop.permute.xlu0 %1204
    %v1207 = vmul.f32 %v1202, %v1205
    %1209 = vrot.lane.b32.xlu0 %v1207, 64
    %v1210 = vpop.permute.xlu0 %1209
    %v1212 = vadd.f32 %v1118, %v1210
    %v1213 = vtanh.pop %v1212
    %v1214 = vsub.f32 1.0, %v1202
    %1216 = vrot.lane.b32.xlu0 %v1213, 96
    %v1217 = vpop.permute.xlu0 %1216
    %v1219 = vmul.f32 %v1214, %v1217
    %v1220 = vmul.f32 %v1202, %v1045
    %v1221 = vadd.f32 %v1219, %v1220
    %s1222 = scalar_lea.vmem %s0, 24
    %v1223 = vld [vmem:[%s1222] sm:$0xf]
    %v1225 = vsel %vm162, %v1223, 0
    %1227 = vmatprep.subr.mxu0 0.0
    %1228 = vmatpush1.msra.mxu0 0.0
    %1229 = vmatprep.subr.mxu0 0.0
    %1230 = vmatpush1.msra.mxu0 0.0
    %1231 = vmatprep.subr.mxu0 0.0
    %1232 = vmatpush1.msra.mxu0 0.0
    %1233 = vmatprep.subr.mxu0 0.0
    %1234 = vmatpush1.msra.mxu0 0.0
    %1235 = vmatprep.subr.mxu0 0.0
    %1236 = vmatpush1.msra.mxu0 0.0
    %1237 = vmatprep.subr.mxu0 0.0
    %1238 = vmatpush1.msra.mxu0 0.0
    %1239 = vmatprep.subr.mxu0 0.0
    %1240 = vmatpush1.msra.mxu0 0.0
    %1241 = vmatprep.subr.mxu0 0.0
    %1242 = vmatpush1.msra.mxu0 0.0
    %1243 = vmatprep.subr.mxu0 0.0
    %1244 = vmatpush1.msra.mxu0 0.0
    %1245 = vmatprep.subr.mxu0 0.0
    %1246 = vmatpush1.msra.mxu0 0.0
    %1247 = vmatprep.subr.mxu0 0.0
    %1248 = vmatpush1.msra.mxu0 0.0
    %1249 = vmatprep.subr.mxu0 0.0
    %1250 = vmatpush1.msra.mxu0 0.0
    %1251 = vmatprep.subr.mxu0 0.0
    %1252 = vmatpush1.msra.mxu0 0.0
    %1253 = vmatprep.subr.mxu0 0.0
    %1254 = vmatpush1.msra.mxu0 0.0
    %1255 = vmatprep.subr.mxu0 0.0
    %1256 = vmatpush1.msra.mxu0 %v148
    %1257 = vmatprep.subr.mxu0 0.0
    %1258 = vmatpush1.msra.mxu0 %v147
    %1259 = vmatprep.subr.mxu0 0.0
    %1260 = vmatpush2.msra.mxu0 0.0
    %1261 = vmatprep.subr.mxu0 0.0
    %1262 = vmatpush2.msra.mxu0 0.0
    %1263 = vmatprep.subr.mxu0 0.0
    %1264 = vmatpush2.msra.mxu0 0.0
    %1265 = vmatprep.subr.mxu0 0.0
    %1266 = vmatpush2.msra.mxu0 0.0
    %1267 = vmatprep.subr.mxu0 0.0
    %1268 = vmatpush2.msra.mxu0 0.0
    %1269 = vmatprep.subr.mxu0 0.0
    %1270 = vmatpush2.msra.mxu0 0.0
    %1271 = vmatprep.subr.mxu0 0.0
    %1272 = vmatpush2.msra.mxu0 0.0
    %1273 = vmatprep.subr.mxu0 0.0
    %1274 = vmatpush2.msra.mxu0 0.0
    %1275 = vmatprep.subr.mxu0 0.0
    %1276 = vmatpush2.msra.mxu0 0.0
    %1277 = vmatprep.subr.mxu0 0.0
    %1278 = vmatpush2.msra.mxu0 0.0
    %1279 = vmatprep.subr.mxu0 0.0
    %1280 = vmatpush2.msra.mxu0 0.0
    %1281 = vmatprep.subr.mxu0 0.0
    %1282 = vmatpush2.msra.mxu0 0.0
    %1283 = vmatprep.subr.mxu0 0.0
    %1284 = vmatpush2.msra.mxu0 0.0
    %1285 = vmatprep.subr.mxu0 0.0
    %1286 = vmatpush2.msra.mxu0 0.0
    %1287 = vmatprep.subr.mxu0 0.0
    %1288 = vmatpush2.msra.mxu0 0.0
    %1289 = vmatprep.subr.mxu0 0.0
    %1290 = vmatpush2.msra.mxu0 0.0
    %1291 = vmatprep.mubr.f32.mxu0 0.0
    %1292 = vmatmul.mubr.f32.gmra.mxu0 %v1225
    %v1293 = vpop.f32.mrf.mxu0
    %v1294 = vadd.f32 %v160, %v1293
    %v1295 = vpop.f32.mrf.mxu0
    %1296 = vdwg.mxu0
    %1298 = vrot.lane.b32.xlu0 %v1221, 96
    %v1299 = vpop.permute.xlu0 %1298
    %v1300 = vsel %vm242, %v1299, 0
    %1302 = vmatprep.subr.mxu0 0.0
    %1303 = vmatpush1.msra.mxu0 0.0
    %1304 = vmatprep.subr.mxu0 0.0
    %1305 = vmatpush1.msra.mxu0 0.0
    %1306 = vmatprep.subr.mxu0 0.0
    %1307 = vmatpush1.msra.mxu0 0.0
    %1308 = vmatprep.subr.mxu0 0.0
    %1309 = vmatpush1.msra.mxu0 0.0
    %1310 = vmatprep.subr.mxu0 0.0
    %1311 = vmatpush1.msra.mxu0 0.0
    %1312 = vmatprep.subr.mxu0 0.0
    %1313 = vmatpush1.msra.mxu0 0.0
    %1314 = vmatprep.subr.mxu0 0.0
    %1315 = vmatpush1.msra.mxu0 0.0
    %1316 = vmatprep.subr.mxu0 0.0
    %1317 = vmatpush1.msra.mxu0 0.0
    %1318 = vmatprep.subr.mxu0 0.0
    %1319 = vmatpush1.msra.mxu0 0.0
    %1320 = vmatprep.subr.mxu0 0.0
    %1321 = vmatpush1.msra.mxu0 0.0
    %1322 = vmatprep.subr.mxu0 0.0
    %1323 = vmatpush1.msra.mxu0 0.0
    %1324 = vmatprep.subr.mxu0 0.0
    %1325 = vmatpush1.msra.mxu0 0.0
    %1326 = vmatprep.subr.mxu0 0.0
    %1327 = vmatpush1.msra.mxu0 %v152
    %1328 = vmatprep.subr.mxu0 0.0
    %1329 = vmatpush1.msra.mxu0 %v151
    %1330 = vmatprep.subr.mxu0 0.0
    %1331 = vmatpush1.msra.mxu0 %v150
    %1332 = vmatprep.subr.mxu0 0.0
    %1333 = vmatpush1.msra.mxu0 %v149
    %1334 = vmatprep.subr.mxu0 0.0
    %1335 = vmatpush2.msra.mxu0 0.0
    %1336 = vmatprep.subr.mxu0 0.0
    %1337 = vmatpush2.msra.mxu0 0.0
    %1338 = vmatprep.subr.mxu0 0.0
    %1339 = vmatpush2.msra.mxu0 0.0
    %1340 = vmatprep.subr.mxu0 0.0
    %1341 = vmatpush2.msra.mxu0 0.0
    %1342 = vmatprep.subr.mxu0 0.0
    %1343 = vmatpush2.msra.mxu0 0.0
    %1344 = vmatprep.subr.mxu0 0.0
    %1345 = vmatpush2.msra.mxu0 0.0
    %1346 = vmatprep.subr.mxu0 0.0
    %1347 = vmatpush2.msra.mxu0 0.0
    %1348 = vmatprep.subr.mxu0 0.0
    %1349 = vmatpush2.msra.mxu0 0.0
    %1350 = vmatprep.subr.mxu0 0.0
    %1351 = vmatpush2.msra.mxu0 0.0
    %1352 = vmatprep.subr.mxu0 0.0
    %1353 = vmatpush2.msra.mxu0 0.0
    %1354 = vmatprep.subr.mxu0 0.0
    %1355 = vmatpush2.msra.mxu0 0.0
    %1356 = vmatprep.subr.mxu0 0.0
    %1357 = vmatpush2.msra.mxu0 0.0
    %1358 = vmatprep.subr.mxu0 0.0
    %1359 = vmatpush2.msra.mxu0 0.0
    %1360 = vmatprep.subr.mxu0 0.0
    %1361 = vmatpush2.msra.mxu0 0.0
    %1362 = vmatprep.subr.mxu0 0.0
    %1363 = vmatpush2.msra.mxu0 0.0
    %1364 = vmatprep.subr.mxu0 0.0
    %1365 = vmatpush2.msra.mxu0 0.0
    %1366 = vmatprep.mubr.f32.mxu0 0.0
    %1367 = vmatmul.mubr.f32.gmra.mxu0 %v1300
    %v1368 = vpop.f32.mrf.mxu0
    %v1369 = vadd.f32 %v240, %v1368
    %v1370 = vpop.f32.mrf.mxu0
    %1371 = vdwg.mxu0
    %v1372 = vadd.f32 %v1294, %v1369
    %v1373 = vxor.u32 %v1372, 2147483648
    %v1374 = vmul.f32 %v1373, 1.442695
    %v1375 = vpow.pop %v1374
    %v1376 = vadd.f32 %v1375, 1.0
    %v1377 = vrcp.pop %v1376
    %v1378 = vmul.f32 1.0, %v1377
    %1380 = vrot.lane.b32.xlu0 %v1369, 64
    %v1381 = vpop.permute.xlu0 %1380
    %v1383 = vmul.f32 %v1378, %v1381
    %1385 = vrot.lane.b32.xlu0 %v1383, 64
    %v1386 = vpop.permute.xlu0 %1385
    %v1388 = vadd.f32 %v1294, %v1386
    %v1389 = vtanh.pop %v1388
    %v1390 = vsub.f32 1.0, %v1378
    %1392 = vrot.lane.b32.xlu0 %v1389, 96
    %v1393 = vpop.permute.xlu0 %1392
    %v1395 = vmul.f32 %v1390, %v1393
    %v1396 = vmul.f32 %v1378, %v1221
    %v1397 = vadd.f32 %v1395, %v1396
    %s1398 = scalar_lea.vmem %s0, 28
    %v1399 = vld [vmem:[%s1398] sm:$0xf]
    %v1401 = vsel %vm162, %v1399, 0
    %1403 = vmatprep.subr.mxu0 0.0
    %1404 = vmatpush1.msra.mxu0 0.0
    %1405 = vmatprep.subr.mxu0 0.0
    %1406 = vmatpush1.msra.mxu0 0.0
    %1407 = vmatprep.subr.mxu0 0.0
    %1408 = vmatpush1.msra.mxu0 0.0
    %1409 = vmatprep.subr.mxu0 0.0
    %1410 = vmatpush1.msra.mxu0 0.0
    %1411 = vmatprep.subr.mxu0 0.0
    %1412 = vmatpush1.msra.mxu0 0.0
    %1413 = vmatprep.subr.mxu0 0.0
    %1414 = vmatpush1.msra.mxu0 0.0
    %1415 = vmatprep.subr.mxu0 0.0
    %1416 = vmatpush1.msra.mxu0 0.0
    %1417 = vmatprep.subr.mxu0 0.0
    %1418 = vmatpush1.msra.mxu0 0.0
    %1419 = vmatprep.subr.mxu0 0.0
    %1420 = vmatpush1.msra.mxu0 0.0
    %1421 = vmatprep.subr.mxu0 0.0
    %1422 = vmatpush1.msra.mxu0 0.0
    %1423 = vmatprep.subr.mxu0 0.0
    %1424 = vmatpush1.msra.mxu0 0.0
    %1425 = vmatprep.subr.mxu0 0.0
    %1426 = vmatpush1.msra.mxu0 0.0
    %1427 = vmatprep.subr.mxu0 0.0
    %1428 = vmatpush1.msra.mxu0 0.0
    %1429 = vmatprep.subr.mxu0 0.0
    %1430 = vmatpush1.msra.mxu0 0.0
    %1431 = vmatprep.subr.mxu0 0.0
    %1432 = vmatpush1.msra.mxu0 %v148
    %1433 = vmatprep.subr.mxu0 0.0
    %1434 = vmatpush1.msra.mxu0 %v147
    %1435 = vmatprep.subr.mxu0 0.0
    %1436 = vmatpush2.msra.mxu0 0.0
    %1437 = vmatprep.subr.mxu0 0.0
    %1438 = vmatpush2.msra.mxu0 0.0
    %1439 = vmatprep.subr.mxu0 0.0
    %1440 = vmatpush2.msra.mxu0 0.0
    %1441 = vmatprep.subr.mxu0 0.0
    %1442 = vmatpush2.msra.mxu0 0.0
    %1443 = vmatprep.subr.mxu0 0.0
    %1444 = vmatpush2.msra.mxu0 0.0
    %1445 = vmatprep.subr.mxu0 0.0
    %1446 = vmatpush2.msra.mxu0 0.0
    %1447 = vmatprep.subr.mxu0 0.0
    %1448 = vmatpush2.msra.mxu0 0.0
    %1449 = vmatprep.subr.mxu0 0.0
    %1450 = vmatpush2.msra.mxu0 0.0
    %1451 = vmatprep.subr.mxu0 0.0
    %1452 = vmatpush2.msra.mxu0 0.0
    %1453 = vmatprep.subr.mxu0 0.0
    %1454 = vmatpush2.msra.mxu0 0.0
    %1455 = vmatprep.subr.mxu0 0.0
    %1456 = vmatpush2.msra.mxu0 0.0
    %1457 = vmatprep.subr.mxu0 0.0
    %1458 = vmatpush2.msra.mxu0 0.0
    %1459 = vmatprep.subr.mxu0 0.0
    %1460 = vmatpush2.msra.mxu0 0.0
    %1461 = vmatprep.subr.mxu0 0.0
    %1462 = vmatpush2.msra.mxu0 0.0
    %1463 = vmatprep.subr.mxu0 0.0
    %1464 = vmatpush2.msra.mxu0 0.0
    %1465 = vmatprep.subr.mxu0 0.0
    %1466 = vmatpush2.msra.mxu0 0.0
    %1467 = vmatprep.mubr.f32.mxu0 0.0
    %1468 = vmatmul.mubr.f32.gmra.mxu0 %v1401
    %v1469 = vpop.f32.mrf.mxu0
    %v1470 = vadd.f32 %v160, %v1469
    %v1471 = vpop.f32.mrf.mxu0
    %1472 = vdwg.mxu0
    %1474 = vrot.lane.b32.xlu0 %v1397, 96
    %v1475 = vpop.permute.xlu0 %1474
    %v1476 = vsel %vm242, %v1475, 0
    %1478 = vmatprep.subr.mxu0 0.0
    %1479 = vmatpush1.msra.mxu0 0.0
    %1480 = vmatprep.subr.mxu0 0.0
    %1481 = vmatpush1.msra.mxu0 0.0
    %1482 = vmatprep.subr.mxu0 0.0
    %1483 = vmatpush1.msra.mxu0 0.0
    %1484 = vmatprep.subr.mxu0 0.0
    %1485 = vmatpush1.msra.mxu0 0.0
    %1486 = vmatprep.subr.mxu0 0.0
    %1487 = vmatpush1.msra.mxu0 0.0
    %1488 = vmatprep.subr.mxu0 0.0
    %1489 = vmatpush1.msra.mxu0 0.0
    %1490 = vmatprep.subr.mxu0 0.0
    %1491 = vmatpush1.msra.mxu0 0.0
    %1492 = vmatprep.subr.mxu0 0.0
    %1493 = vmatpush1.msra.mxu0 0.0
    %1494 = vmatprep.subr.mxu0 0.0
    %1495 = vmatpush1.msra.mxu0 0.0
    %1496 = vmatprep.subr.mxu0 0.0
    %1497 = vmatpush1.msra.mxu0 0.0
    %1498 = vmatprep.subr.mxu0 0.0
    %1499 = vmatpush1.msra.mxu0 0.0
    %1500 = vmatprep.subr.mxu0 0.0
    %1501 = vmatpush1.msra.mxu0 0.0
    %1502 = vmatprep.subr.mxu0 0.0
    %1503 = vmatpush1.msra.mxu0 %v152
    %1504 = vmatprep.subr.mxu0 0.0
    %1505 = vmatpush1.msra.mxu0 %v151
    %1506 = vmatprep.subr.mxu0 0.0
    %1507 = vmatpush1.msra.mxu0 %v150
    %1508 = vmatprep.subr.mxu0 0.0
    %1509 = vmatpush1.msra.mxu0 %v149
    %1510 = vmatprep.subr.mxu0 0.0
    %1511 = vmatpush2.msra.mxu0 0.0
    %1512 = vmatprep.subr.mxu0 0.0
    %1513 = vmatpush2.msra.mxu0 0.0
    %1514 = vmatprep.subr.mxu0 0.0
    %1515 = vmatpush2.msra.mxu0 0.0
    %1516 = vmatprep.subr.mxu0 0.0
    %1517 = vmatpush2.msra.mxu0 0.0
    %1518 = vmatprep.subr.mxu0 0.0
    %1519 = vmatpush2.msra.mxu0 0.0
    %1520 = vmatprep.subr.mxu0 0.0
    %1521 = vmatpush2.msra.mxu0 0.0
    %1522 = vmatprep.subr.mxu0 0.0
    %1523 = vmatpush2.msra.mxu0 0.0
    %1524 = vmatprep.subr.mxu0 0.0
    %1525 = vmatpush2.msra.mxu0 0.0
    %1526 = vmatprep.subr.mxu0 0.0
    %1527 = vmatpush2.msra.mxu0 0.0
    %1528 = vmatprep.subr.mxu0 0.0
    %1529 = vmatpush2.msra.mxu0 0.0
    %1530 = vmatprep.subr.mxu0 0.0
    %1531 = vmatpush2.msra.mxu0 0.0
    %1532 = vmatprep.subr.mxu0 0.0
    %1533 = vmatpush2.msra.mxu0 0.0
    %1534 = vmatprep.subr.mxu0 0.0
    %1535 = vmatpush2.msra.mxu0 0.0
    %1536 = vmatprep.subr.mxu0 0.0
    %1537 = vmatpush2.msra.mxu0 0.0
    %1538 = vmatprep.subr.mxu0 0.0
    %1539 = vmatpush2.msra.mxu0 0.0
    %1540 = vmatprep.subr.mxu0 0.0
    %1541 = vmatpush2.msra.mxu0 0.0
    %1542 = vmatprep.mubr.f32.mxu0 0.0
    %1543 = vmatmul.mubr.f32.gmra.mxu0 %v1476
    %v1544 = vpop.f32.mrf.mxu0
    %v1545 = vadd.f32 %v240, %v1544
    %v1546 = vpop.f32.mrf.mxu0
    %1547 = vdwg.mxu0
    %v1548 = vadd.f32 %v1470, %v1545
    %v1549 = vxor.u32 %v1548, 2147483648
    %v1550 = vmul.f32 %v1549, 1.442695
    %v1551 = vpow.pop %v1550
    %v1552 = vadd.f32 %v1551, 1.0
    %v1553 = vrcp.pop %v1552
    %v1554 = vmul.f32 1.0, %v1553
    %1556 = vrot.lane.b32.xlu0 %v1545, 64
    %v1557 = vpop.permute.xlu0 %1556
    %v1559 = vmul.f32 %v1554, %v1557
    %1561 = vrot.lane.b32.xlu0 %v1559, 64
    %v1562 = vpop.permute.xlu0 %1561
    %v1564 = vadd.f32 %v1470, %v1562
    %v1565 = vtanh.pop %v1564
    %v1566 = vsub.f32 1.0, %v1554
    %1568 = vrot.lane.b32.xlu0 %v1565, 96
    %v1569 = vpop.permute.xlu0 %1568
    %v1571 = vmul.f32 %v1566, %v1569
    %v1572 = vmul.f32 %v1554, %v1397
    %v1573 = vadd.f32 %v1571, %v1572
    %v1574 = vld [vmem:[%s6] sm:$0xff]
    %v1575 = vld [vmem:[%s6 + $0x8] sm:$0xff]
    %v1576 = vld [vmem:[%s6 + $0x10] sm:$0xff]
    %v1577 = vld [vmem:[%s6 + $0x18] sm:$0xff]
    %1579 = vrot.lane.b32.xlu0 %v1573, 96
    %v1580 = vpop.permute.xlu0 %1579
    %v1581 = vsel %vm242, %v1580, 0
    %1583 = vmatprep.subr.mxu0 0.0
    %1584 = vmatpush1.msra.mxu0 0.0
    %1585 = vmatprep.subr.mxu0 0.0
    %1586 = vmatpush1.msra.mxu0 0.0
    %1587 = vmatprep.subr.mxu0 0.0
    %1588 = vmatpush1.msra.mxu0 0.0
    %1589 = vmatprep.subr.mxu0 0.0
    %1590 = vmatpush1.msra.mxu0 0.0
    %1591 = vmatprep.subr.mxu0 0.0
    %1592 = vmatpush1.msra.mxu0 0.0
    %1593 = vmatprep.subr.mxu0 0.0
    %1594 = vmatpush1.msra.mxu0 0.0
    %1595 = vmatprep.subr.mxu0 0.0
    %1596 = vmatpush1.msra.mxu0 0.0
    %1597 = vmatprep.subr.mxu0 0.0
    %1598 = vmatpush1.msra.mxu0 0.0
    %1599 = vmatprep.subr.mxu0 0.0
    %1600 = vmatpush1.msra.mxu0 0.0
    %1601 = vmatprep.subr.mxu0 0.0
    %1602 = vmatpush1.msra.mxu0 0.0
    %1603 = vmatprep.subr.mxu0 0.0
    %1604 = vmatpush1.msra.mxu0 0.0
    %1605 = vmatprep.subr.mxu0 0.0
    %1606 = vmatpush1.msra.mxu0 0.0
    %1607 = vmatprep.subr.mxu0 0.0
    %1608 = vmatpush1.msra.mxu0 %v1577
    %1609 = vmatprep.subr.mxu0 0.0
    %1610 = vmatpush1.msra.mxu0 %v1576
    %1611 = vmatprep.subr.mxu0 0.0
    %1612 = vmatpush1.msra.mxu0 %v1575
    %1613 = vmatprep.subr.mxu0 0.0
    %1614 = vmatpush1.msra.mxu0 %v1574
    %1615 = vmatprep.subr.mxu0 0.0
    %1616 = vmatpush2.msra.mxu0 0.0
    %1617 = vmatprep.subr.mxu0 0.0
    %1618 = vmatpush2.msra.mxu0 0.0
    %1619 = vmatprep.subr.mxu0 0.0
    %1620 = vmatpush2.msra.mxu0 0.0
    %1621 = vmatprep.subr.mxu0 0.0
    %1622 = vmatpush2.msra.mxu0 0.0
    %1623 = vmatprep.subr.mxu0 0.0
    %1624 = vmatpush2.msra.mxu0 0.0
    %1625 = vmatprep.subr.mxu0 0.0
    %1626 = vmatpush2.msra.mxu0 0.0
    %1627 = vmatprep.subr.mxu0 0.0
    %1628 = vmatpush2.msra.mxu0 0.0
    %1629 = vmatprep.subr.mxu0 0.0
    %1630 = vmatpush2.msra.mxu0 0.0
    %1631 = vmatprep.subr.mxu0 0.0
    %1632 = vmatpush2.msra.mxu0 0.0
    %1633 = vmatprep.subr.mxu0 0.0
    %1634 = vmatpush2.msra.mxu0 0.0
    %1635 = vmatprep.subr.mxu0 0.0
    %1636 = vmatpush2.msra.mxu0 0.0
    %1637 = vmatprep.subr.mxu0 0.0
    %1638 = vmatpush2.msra.mxu0 0.0
    %1639 = vmatprep.subr.mxu0 0.0
    %1640 = vmatpush2.msra.mxu0 0.0
    %1641 = vmatprep.subr.mxu0 0.0
    %1642 = vmatpush2.msra.mxu0 0.0
    %1643 = vmatprep.subr.mxu0 0.0
    %1644 = vmatpush2.msra.mxu0 0.0
    %1645 = vmatprep.subr.mxu0 0.0
    %1646 = vmatpush2.msra.mxu0 0.0
    %1647 = vmatprep.mubr.f32.mxu0 0.0
    %1648 = vmatmul.mubr.f32.gmra.mxu0 %v1581
    %v1649 = vpop.f32.mrf.mxu0
    %v1650 = vadd.f32 0.0, %v1649
    %v1651 = vpop.f32.mrf.mxu0
    %1652 = vdwg.mxu0
    %v1653 = vld [vmem:[%s7] sm:$0xff]
    %v1654 = vld [vmem:[%s7 + $0x8] sm:$0xff]
    %v1655 = vld [vmem:[%s7 + $0x10] sm:$0xff]
    %v1656 = vld [vmem:[%s7 + $0x18] sm:$0xff]
    %v1657 = vld [vmem:[#allocation9] sm:$0x1]
    %v1659 = vlaneseq
    %v1660 = vshrl.u32 %v1659, 7
    %v1661 = vsub.s32 0, %v1660
    %v1662 = vrot.slane %v1657, %v1661
    %1664 = vmatprep.subr.mxu0 0.0
    %1665 = vmatpush1.msra.mxu0 0.0
    %1666 = vmatprep.subr.mxu0 0.0
    %1667 = vmatpush1.msra.mxu0 0.0
    %1668 = vmatprep.subr.mxu0 0.0
    %1669 = vmatpush1.msra.mxu0 0.0
    %1670 = vmatprep.subr.mxu0 0.0
    %1671 = vmatpush1.msra.mxu0 0.0
    %1672 = vmatprep.subr.mxu0 0.0
    %1673 = vmatpush1.msra.mxu0 0.0
    %1674 = vmatprep.subr.mxu0 0.0
    %1675 = vmatpush1.msra.mxu0 0.0
    %1676 = vmatprep.subr.mxu0 0.0
    %1677 = vmatpush1.msra.mxu0 0.0
    %1678 = vmatprep.subr.mxu0 0.0
    %1679 = vmatpush1.msra.mxu0 0.0
    %1680 = vmatprep.subr.mxu0 0.0
    %1681 = vmatpush1.msra.mxu0 0.0
    %1682 = vmatprep.subr.mxu0 0.0
    %1683 = vmatpush1.msra.mxu0 0.0
    %1684 = vmatprep.subr.mxu0 0.0
    %1685 = vmatpush1.msra.mxu0 0.0
    %1686 = vmatprep.subr.mxu0 0.0
    %1687 = vmatpush1.msra.mxu0 0.0
    %1688 = vmatprep.subr.mxu0 0.0
    %1689 = vmatpush1.msra.mxu0 %v1656
    %1690 = vmatprep.subr.mxu0 0.0
    %1691 = vmatpush1.msra.mxu0 %v1655
    %1692 = vmatprep.subr.mxu0 0.0
    %1693 = vmatpush1.msra.mxu0 %v1654
    %1694 = vmatprep.subr.mxu0 0.0
    %1695 = vmatpush1.msra.mxu0 %v1653
    %1696 = vmatprep.subr.mxu0 0.0
    %1697 = vmatpush2.msra.mxu0 0.0
    %1698 = vmatprep.subr.mxu0 0.0
    %1699 = vmatpush2.msra.mxu0 0.0
    %1700 = vmatprep.subr.mxu0 0.0
    %1701 = vmatpush2.msra.mxu0 0.0
    %1702 = vmatprep.subr.mxu0 0.0
    %1703 = vmatpush2.msra.mxu0 0.0
    %1704 = vmatprep.subr.mxu0 0.0
    %1705 = vmatpush2.msra.mxu0 0.0
    %1706 = vmatprep.subr.mxu0 0.0
    %1707 = vmatpush2.msra.mxu0 0.0
    %1708 = vmatprep.subr.mxu0 0.0
    %1709 = vmatpush2.msra.mxu0 0.0
    %1710 = vmatprep.subr.mxu0 0.0
    %1711 = vmatpush2.msra.mxu0 0.0
    %1712 = vmatprep.subr.mxu0 0.0
    %1713 = vmatpush2.msra.mxu0 0.0
    %1714 = vmatprep.subr.mxu0 0.0
    %1715 = vmatpush2.msra.mxu0 0.0
    %1716 = vmatprep.subr.mxu0 0.0
    %1717 = vmatpush2.msra.mxu0 0.0
    %1718 = vmatprep.subr.mxu0 0.0
    %1719 = vmatpush2.msra.mxu0 0.0
    %1720 = vmatprep.subr.mxu0 0.0
    %1721 = vmatpush2.msra.mxu0 0.0
    %1722 = vmatprep.subr.mxu0 0.0
    %1723 = vmatpush2.msra.mxu0 0.0
    %1724 = vmatprep.subr.mxu0 0.0
    %1725 = vmatpush2.msra.mxu0 0.0
    %1726 = vmatprep.subr.mxu0 0.0
    %1727 = vmatpush2.msra.mxu0 0.0
    %1728 = vmatprep.mubr.f32.mxu0 0.0
    %1729 = vmatmul.mubr.f32.gmra.mxu0 %v1581
    %v1730 = vpop.f32.mrf.mxu0
    %v1731 = vadd.f32 %v1662, %v1730
    %v1732 = vpop.f32.mrf.mxu0
    %1733 = vdwg.mxu0
    %v1734 = vld [vmem:[%s1] sm:$0xf]
    %v1735 = vmul.f32 %v1731, 1.442695
    %v1736 = vpow.pop %v1735
    %v1737 = vmul.f32 %v1734, %v1736
    %v1738 = vadd.f32 %v1650, %v1737
    %v1739 = vld [vmem:[#allocation10] sm:$0xff]
    %v1740 = vld [vmem:[#allocation12] sm:$0x1]
    %v1742 = vlaneseq
    %v1743 = vshrl.u32 %v1742, 7
    %v1744 = vsub.s32 0, %v1743
    %v1745 = vrot.slane %v1740, %v1744
    %vm1747 = vcmask 64512
    %v1749 = vsel %vm1747, %v1738, 0
    %1751 = vmatprep.subr.mxu0 0.0
    %1752 = vmatpush1.msra.mxu0 0.0
    %1753 = vmatprep.subr.mxu0 0.0
    %1754 = vmatpush1.msra.mxu0 0.0
    %1755 = vmatprep.subr.mxu0 0.0
    %1756 = vmatpush1.msra.mxu0 0.0
    %1757 = vmatprep.subr.mxu0 0.0
    %1758 = vmatpush1.msra.mxu0 0.0
    %1759 = vmatprep.subr.mxu0 0.0
    %1760 = vmatpush1.msra.mxu0 0.0
    %1761 = vmatprep.subr.mxu0 0.0
    %1762 = vmatpush1.msra.mxu0 0.0
    %1763 = vmatprep.subr.mxu0 0.0
    %1764 = vmatpush1.msra.mxu0 0.0
    %1765 = vmatprep.subr.mxu0 0.0
    %1766 = vmatpush1.msra.mxu0 0.0
    %1767 = vmatprep.subr.mxu0 0.0
    %1768 = vmatpush1.msra.mxu0 0.0
    %1769 = vmatprep.subr.mxu0 0.0
    %1770 = vmatpush1.msra.mxu0 0.0
    %1771 = vmatprep.subr.mxu0 0.0
    %1772 = vmatpush1.msra.mxu0 0.0
    %1773 = vmatprep.subr.mxu0 0.0
    %1774 = vmatpush1.msra.mxu0 0.0
    %1775 = vmatprep.subr.mxu0 0.0
    %1776 = vmatpush1.msra.mxu0 0.0
    %1777 = vmatprep.subr.mxu0 0.0
    %1778 = vmatpush1.msra.mxu0 0.0
    %1779 = vmatprep.subr.mxu0 0.0
    %1780 = vmatpush1.msra.mxu0 0.0
    %1781 = vmatprep.subr.mxu0 0.0
    %1782 = vmatpush1.msra.mxu0 %v1739
    %1783 = vmatprep.subr.mxu0 0.0
    %1784 = vmatpush2.msra.mxu0 0.0
    %1785 = vmatprep.subr.mxu0 0.0
    %1786 = vmatpush2.msra.mxu0 0.0
    %1787 = vmatprep.subr.mxu0 0.0
    %1788 = vmatpush2.msra.mxu0 0.0
    %1789 = vmatprep.subr.mxu0 0.0
    %1790 = vmatpush2.msra.mxu0 0.0
    %1791 = vmatprep.subr.mxu0 0.0
    %1792 = vmatpush2.msra.mxu0 0.0
    %1793 = vmatprep.subr.mxu0 0.0
    %1794 = vmatpush2.msra.mxu0 0.0
    %1795 = vmatprep.subr.mxu0 0.0
    %1796 = vmatpush2.msra.mxu0 0.0
    %1797 = vmatprep.subr.mxu0 0.0
    %1798 = vmatpush2.msra.mxu0 0.0
    %1799 = vmatprep.subr.mxu0 0.0
    %1800 = vmatpush2.msra.mxu0 0.0
    %1801 = vmatprep.subr.mxu0 0.0
    %1802 = vmatpush2.msra.mxu0 0.0
    %1803 = vmatprep.subr.mxu0 0.0
    %1804 = vmatpush2.msra.mxu0 0.0
    %1805 = vmatprep.subr.mxu0 0.0
    %1806 = vmatpush2.msra.mxu0 0.0
    %1807 = vmatprep.subr.mxu0 0.0
    %1808 = vmatpush2.msra.mxu0 0.0
    %1809 = vmatprep.subr.mxu0 0.0
    %1810 = vmatpush2.msra.mxu0 0.0
    %1811 = vmatprep.subr.mxu0 0.0
    %1812 = vmatpush2.msra.mxu0 0.0
    %1813 = vmatprep.subr.mxu0 0.0
    %1814 = vmatpush2.msra.mxu0 0.0
    %1815 = vmatprep.mubr.f32.mxu0 0.0
    %1816 = vmatmul.mubr.f32.gmra.mxu0 %v1749
    %v1817 = vpop.f32.mrf.mxu0
    %v1818 = vadd.f32 %v1745, %v1817
    %v1819 = vpop.f32.mrf.mxu0
    %1820 = vdwg.mxu0
    %v1821 = vtanh.pop %v1818
    %v1822 = vld [vmem:[%s11] sm:$0xff]
    %v1823 = vld [vmem:[%s11 + $0x8] sm:$0xff]
    %v1824 = vld [vmem:[%s11 + $0x10] sm:$0xff]
    %v1825 = vld [vmem:[#allocation13] sm:$0x1]
    %v1827 = vlaneseq
    %v1828 = vshrl.u32 %v1827, 7
    %v1829 = vsub.s32 0, %v1828
    %v1830 = vrot.slane %v1825, %v1829
    %vm1832 = vcmask 195584
    %v1834 = vsel %vm1832, %v1821, 0
    %1836 = vmatprep.subr.mxu0 0.0
    %1837 = vmatpush1.msra.mxu0 0.0
    %1838 = vmatprep.subr.mxu0 0.0
    %1839 = vmatpush1.msra.mxu0 0.0
    %1840 = vmatprep.subr.mxu0 0.0
    %1841 = vmatpush1.msra.mxu0 0.0
    %1842 = vmatprep.subr.mxu0 0.0
    %1843 = vmatpush1.msra.mxu0 0.0
    %1844 = vmatprep.subr.mxu0 0.0
    %1845 = vmatpush1.msra.mxu0 0.0
    %1846 = vmatprep.subr.mxu0 0.0
    %1847 = vmatpush1.msra.mxu0 0.0
    %1848 = vmatprep.subr.mxu0 0.0
    %1849 = vmatpush1.msra.mxu0 0.0
    %1850 = vmatprep.subr.mxu0 0.0
    %1851 = vmatpush1.msra.mxu0 0.0
    %1852 = vmatprep.subr.mxu0 0.0
    %1853 = vmatpush1.msra.mxu0 0.0
    %1854 = vmatprep.subr.mxu0 0.0
    %1855 = vmatpush1.msra.mxu0 0.0
    %1856 = vmatprep.subr.mxu0 0.0
    %1857 = vmatpush1.msra.mxu0 0.0
    %1858 = vmatprep.subr.mxu0 0.0
    %1859 = vmatpush1.msra.mxu0 0.0
    %1860 = vmatprep.subr.mxu0 0.0
    %1861 = vmatpush1.msra.mxu0 0.0
    %1862 = vmatprep.subr.mxu0 0.0
    %1863 = vmatpush1.msra.mxu0 %v1824
    %1864 = vmatprep.subr.mxu0 0.0
    %1865 = vmatpush1.msra.mxu0 %v1823
    %1866 = vmatprep.subr.mxu0 0.0
    %1867 = vmatpush1.msra.mxu0 %v1822
    %1868 = vmatprep.subr.mxu0 0.0
    %1869 = vmatpush2.msra.mxu0 0.0
    %1870 = vmatprep.subr.mxu0 0.0
    %1871 = vmatpush2.msra.mxu0 0.0
    %1872 = vmatprep.subr.mxu0 0.0
    %1873 = vmatpush2.msra.mxu0 0.0
    %1874 = vmatprep.subr.mxu0 0.0
    %1875 = vmatpush2.msra.mxu0 0.0
    %1876 = vmatprep.subr.mxu0 0.0
    %1877 = vmatpush2.msra.mxu0 0.0
    %1878 = vmatprep.subr.mxu0 0.0
    %1879 = vmatpush2.msra.mxu0 0.0
    %1880 = vmatprep.subr.mxu0 0.0
    %1881 = vmatpush2.msra.mxu0 0.0
    %1882 = vmatprep.subr.mxu0 0.0
    %1883 = vmatpush2.msra.mxu0 0.0
    %1884 = vmatprep.subr.mxu0 0.0
    %1885 = vmatpush2.msra.mxu0 0.0
    %1886 = vmatprep.subr.mxu0 0.0
    %1887 = vmatpush2.msra.mxu0 0.0
    %1888 = vmatprep.subr.mxu0 0.0
    %1889 = vmatpush2.msra.mxu0 0.0
    %1890 = vmatprep.subr.mxu0 0.0
    %1891 = vmatpush2.msra.mxu0 0.0
    %1892 = vmatprep.subr.mxu0 0.0
    %1893 = vmatpush2.msra.mxu0 0.0
    %1894 = vmatprep.subr.mxu0 0.0
    %1895 = vmatpush2.msra.mxu0 0.0
    %1896 = vmatprep.subr.mxu0 0.0
    %1897 = vmatpush2.msra.mxu0 0.0
    %1898 = vmatprep.subr.mxu0 0.0
    %1899 = vmatpush2.msra.mxu0 0.0
    %1900 = vmatprep.mubr.f32.mxu0 0.0
    %1901 = vmatmul.mubr.f32.gmra.mxu0 %v1834
    %v1902 = vpop.f32.mrf.mxu0
    %v1903 = vadd.f32 %v1830, %v1902
    %v1904 = vpop.f32.mrf.mxu0
    %1905 = vdwg.mxu0
    %v1906 = vld [vmem:[%s13] sm:$0xff]
    %v1907 = vld [vmem:[%s13 + $0x8] sm:$0xff]
    %v1908 = vld [vmem:[%s13 + $0x10] sm:$0xff]
    %v1909 = vld [vmem:[%s13 + $0x18] sm:$0xff]
    %v1910 = vld [vmem:[%s13 + $0x20] sm:$0xff]
    %v1911 = vld [vmem:[%s13 + $0x28] sm:$0xff]
    %v1912 = vld [vmem:[%s13 + $0x30] sm:$0xff]
    %v1913 = vld [vmem:[%s13 + $0x38] sm:$0xff]
    %v1914 = vld [vmem:[%s13 + $0x40] sm:$0xff]
    %v1915 = vld [vmem:[%s13 + $0x48] sm:$0xff]
    %v1916 = vld [vmem:[%s13 + $0x50] sm:$0xff]
    %v1917 = vld [vmem:[%s13 + $0x58] sm:$0xff]
    %v1918 = vld [vmem:[%s13 + $0x60] sm:$0xff]
    %v1919 = vld [vmem:[%s13 + $0x68] sm:$0xff]
    %v1920 = vld [vmem:[%s13 + $0x70] sm:$0xff]
    %v1921 = vld [vmem:[%s13 + $0x78] sm:$0xf]
    %v1922 = vld [vmem:[%s13 + $0x80] sm:$0xf]
    %v1923 = vld [vmem:[%s13 + $0x88] sm:$0xf]
    %v1924 = vld [vmem:[%s13 + $0x90] sm:$0xf]
    %v1925 = vld [vmem:[%s13 + $0x98] sm:$0xf]
    %v1926 = vld [vmem:[%s13 + $0xa0] sm:$0xf]
    %v1927 = vld [vmem:[%s13 + $0xa8] sm:$0xf]
    %v1928 = vld [vmem:[%s13 + $0xb0] sm:$0xf]
    %v1929 = vld [vmem:[%s13 + $0xb8] sm:$0xf]
    %v1930 = vld [vmem:[%s13 + $0xc0] sm:$0xf]
    %v1931 = vld [vmem:[%s13 + $0xc8] sm:$0xf]
    %v1932 = vld [vmem:[%s13 + $0xd0] sm:$0xf]
    %v1933 = vld [vmem:[%s13 + $0xd8] sm:$0xf]
    %v1934 = vld [vmem:[%s13 + $0xe0] sm:$0xf]
    %v1935 = vld [vmem:[%s13 + $0xe8] sm:$0xf]
    %v1936 = vld [vmem:[%s14] sm:$0xff]
    %v1937 = vld [vmem:[%s14 + $0x8] sm:$0x7f]
    %v1940 = vlaneseq
    %v1941 = vshrl.u32 %v1940, 7
    %v1942 = vsub.s32 0, %v1941
    %v1943 = vrot.slane %v1936, %v1942
    %v1944 = vlaneseq
    %v1945 = vshrl.u32 %v1944, 7
    %v1946 = vsub.s32 1, %v1945
    %v1947 = vrot.slane %v1936, %v1946
    %v1948 = vlaneseq
    %v1949 = vshrl.u32 %v1948, 7
    %v1950 = vsub.s32 2, %v1949
    %v1951 = vrot.slane %v1936, %v1950
    %v1952 = vlaneseq
    %v1953 = vshrl.u32 %v1952, 7
    %v1954 = vsub.s32 3, %v1953
    %v1955 = vrot.slane %v1936, %v1954
    %v1956 = vlaneseq
    %v1957 = vshrl.u32 %v1956, 7
    %v1958 = vsub.s32 4, %v1957
    %v1959 = vrot.slane %v1936, %v1958
    %v1960 = vlaneseq
    %v1961 = vshrl.u32 %v1960, 7
    %v1962 = vsub.s32 5, %v1961
    %v1963 = vrot.slane %v1936, %v1962
    %v1964 = vlaneseq
    %v1965 = vshrl.u32 %v1964, 7
    %v1966 = vsub.s32 6, %v1965
    %v1967 = vrot.slane %v1936, %v1966
    %v1968 = vlaneseq
    %v1969 = vshrl.u32 %v1968, 7
    %v1970 = vsub.s32 7, %v1969
    %v1971 = vrot.slane %v1936, %v1970
    %v1972 = vlaneseq
    %v1973 = vshrl.u32 %v1972, 7
    %v1974 = vsub.s32 0, %v1973
    %v1975 = vrot.slane %v1937, %v1974
    %v1976 = vlaneseq
    %v1977 = vshrl.u32 %v1976, 7
    %v1978 = vsub.s32 1, %v1977
    %v1979 = vrot.slane %v1937, %v1978
    %v1980 = vlaneseq
    %v1981 = vshrl.u32 %v1980, 7
    %v1982 = vsub.s32 2, %v1981
    %v1983 = vrot.slane %v1937, %v1982
    %v1984 = vlaneseq
    %v1985 = vshrl.u32 %v1984, 7
    %v1986 = vsub.s32 3, %v1985
    %v1987 = vrot.slane %v1937, %v1986
    %v1988 = vlaneseq
    %v1989 = vshrl.u32 %v1988, 7
    %v1990 = vsub.s32 4, %v1989
    %v1991 = vrot.slane %v1937, %v1990
    %v1992 = vlaneseq
    %v1993 = vshrl.u32 %v1992, 7
    %v1994 = vsub.s32 5, %v1993
    %v1995 = vrot.slane %v1937, %v1994
    %v1996 = vlaneseq
    %v1997 = vshrl.u32 %v1996, 7
    %v1998 = vsub.s32 6, %v1997
    %v1999 = vrot.slane %v1937, %v1998
    %vm2015 = vcmask 97280
    %v2017 = vsel %vm2015, %v1903, 0
    %vm2019 = vcmask 1043456
    %v2021 = vsel %vm2019, %v1921, 0
    %v2024 = vsel %vm2019, %v1922, 0
    %v2027 = vsel %vm2019, %v1923, 0
    %v2030 = vsel %vm2019, %v1924, 0
    %v2033 = vsel %vm2019, %v1925, 0
    %v2036 = vsel %vm2019, %v1926, 0
    %v2039 = vsel %vm2019, %v1927, 0
    %v2042 = vsel %vm2019, %v1928, 0
    %v2045 = vsel %vm2019, %v1929, 0
    %v2048 = vsel %vm2019, %v1930, 0
    %v2051 = vsel %vm2019, %v1931, 0
    %v2054 = vsel %vm2019, %v1932, 0
    %v2057 = vsel %vm2019, %v1933, 0
    %v2060 = vsel %vm2019, %v1934, 0
    %v2063 = vsel %vm2019, %v1935, 0
    %2065 = vmatprep.subr.mxu0 0.0
    %2066 = vmatpush1.msra.mxu0 0.0
    %2067 = vmatprep.subr.mxu0 0.0
    %2068 = vmatpush1.msra.mxu0 0.0
    %2069 = vmatprep.subr.mxu0 0.0
    %2070 = vmatpush1.msra.mxu0 0.0
    %2071 = vmatprep.subr.mxu0 0.0
    %2072 = vmatpush1.msra.mxu0 0.0
    %2073 = vmatprep.subr.mxu0 0.0
    %2074 = vmatpush1.msra.mxu0 0.0
    %2075 = vmatprep.subr.mxu0 0.0
    %2076 = vmatpush1.msra.mxu0 0.0
    %2077 = vmatprep.subr.mxu0 0.0
    %2078 = vmatpush1.msra.mxu0 0.0
    %2079 = vmatprep.subr.mxu0 0.0
    %2080 = vmatpush1.msra.mxu0 0.0
    %2081 = vmatprep.subr.mxu0 0.0
    %2082 = vmatpush1.msra.mxu0 0.0
    %2083 = vmatprep.subr.mxu0 0.0
    %2084 = vmatpush1.msra.mxu0 0.0
    %2085 = vmatprep.subr.mxu0 0.0
    %2086 = vmatpush1.msra.mxu0 0.0
    %2087 = vmatprep.subr.mxu0 0.0
    %2088 = vmatpush1.msra.mxu0 0.0
    %2089 = vmatprep.subr.mxu0 0.0
    %2090 = vmatpush1.msra.mxu0 0.0
    %2091 = vmatprep.subr.mxu0 0.0
    %2092 = vmatpush1.msra.mxu0 0.0
    %2093 = vmatprep.subr.mxu0 %v2024
    %2094 = vmatpush1.msra.mxu0 %v2021
    %2095 = vmatprep.subr.mxu0 %v1907
    %2096 = vmatpush1.msra.mxu0 %v1906
    %2097 = vmatprep.subr.mxu0 0.0
    %2098 = vmatpush2.msra.mxu0 0.0
    %2099 = vmatprep.subr.mxu0 0.0
    %2100 = vmatpush2.msra.mxu0 0.0
    %2101 = vmatprep.subr.mxu0 0.0
    %2102 = vmatpush2.msra.mxu0 0.0
    %2103 = vmatprep.subr.mxu0 0.0
    %2104 = vmatpush2.msra.mxu0 0.0
    %2105 = vmatprep.subr.mxu0 0.0
    %2106 = vmatpush2.msra.mxu0 0.0
    %2107 = vmatprep.subr.mxu0 0.0
    %2108 = vmatpush2.msra.mxu0 0.0
    %2109 = vmatprep.subr.mxu0 0.0
    %2110 = vmatpush2.msra.mxu0 0.0
    %2111 = vmatprep.subr.mxu0 0.0
    %2112 = vmatpush2.msra.mxu0 0.0
    %2113 = vmatprep.subr.mxu0 0.0
    %2114 = vmatpush2.msra.mxu0 0.0
    %2115 = vmatprep.subr.mxu0 0.0
    %2116 = vmatpush2.msra.mxu0 0.0
    %2117 = vmatprep.subr.mxu0 0.0
    %2118 = vmatpush2.msra.mxu0 0.0
    %2119 = vmatprep.subr.mxu0 0.0
    %2120 = vmatpush2.msra.mxu0 0.0
    %2121 = vmatprep.subr.mxu0 0.0
    %2122 = vmatpush2.msra.mxu0 0.0
    %2123 = vmatprep.subr.mxu0 0.0
    %2124 = vmatpush2.msra.mxu0 0.0
    %2125 = vmatprep.subr.mxu0 0.0
    %2126 = vmatpush2.msra.mxu0 0.0
    %2127 = vmatprep.subr.mxu0 0.0
    %2128 = vmatpush2.msra.mxu0 0.0
    %2129 = vmatprep.mubr.f32.mxu0 0.0
    %2130 = vmatmul.mubr.f32.gmra.mxu0 %v2017
    %v2131 = vpop.f32.mrf.mxu0
    %v2132 = vadd.f32 %v1943, %v2131
    %v2133 = vpop.f32.mrf.mxu0
    %v2134 = vadd.f32 %v1947, %v2133
    %2135 = vdwg.mxu0
    %2136 = vmatprep.subr.mxu0 0.0
    %2137 = vmatpush1.msra.mxu0 0.0
    %2138 = vmatprep.subr.mxu0 0.0
    %2139 = vmatpush1.msra.mxu0 0.0
    %2140 = vmatprep.subr.mxu0 0.0
    %2141 = vmatpush1.msra.mxu0 0.0
    %2142 = vmatprep.subr.mxu0 0.0
    %2143 = vmatpush1.msra.mxu0 0.0
    %2144 = vmatprep.subr.mxu0 0.0
    %2145 = vmatpush1.msra.mxu0 0.0
    %2146 = vmatprep.subr.mxu0 0.0
    %2147 = vmatpush1.msra.mxu0 0.0
    %2148 = vmatprep.subr.mxu0 0.0
    %2149 = vmatpush1.msra.mxu0 0.0
    %2150 = vmatprep.subr.mxu0 0.0
    %2151 = vmatpush1.msra.mxu0 0.0
    %2152 = vmatprep.subr.mxu0 0.0
    %2153 = vmatpush1.msra.mxu0 0.0
    %2154 = vmatprep.subr.mxu0 0.0
    %2155 = vmatpush1.msra.mxu0 0.0
    %2156 = vmatprep.subr.mxu0 0.0
    %2157 = vmatpush1.msra.mxu0 0.0
    %2158 = vmatprep.subr.mxu0 0.0
    %2159 = vmatpush1.msra.mxu0 0.0
    %2160 = vmatprep.subr.mxu0 0.0
    %2161 = vmatpush1.msra.mxu0 0.0
    %2162 = vmatprep.subr.mxu0 0.0
    %2163 = vmatpush1.msra.mxu0 0.0
    %2164 = vmatprep.subr.mxu0 %v2030
    %2165 = vmatpush1.msra.mxu0 %v2027
    %2166 = vmatprep.subr.mxu0 %v1909
    %2167 = vmatpush1.msra.mxu0 %v1908
    %2168 = vmatprep.subr.mxu0 0.0
    %2169 = vmatpush2.msra.mxu0 0.0
    %2170 = vmatprep.subr.mxu0 0.0
    %2171 = vmatpush2.msra.mxu0 0.0
    %2172 = vmatprep.subr.mxu0 0.0
    %2173 = vmatpush2.msra.mxu0 0.0
    %2174 = vmatprep.subr.mxu0 0.0
    %2175 = vmatpush2.msra.mxu0 0.0
    %2176 = vmatprep.subr.mxu0 0.0
    %2177 = vmatpush2.msra.mxu0 0.0
    %2178 = vmatprep.subr.mxu0 0.0
    %2179 = vmatpush2.msra.mxu0 0.0
    %2180 = vmatprep.subr.mxu0 0.0
    %2181 = vmatpush2.msra.mxu0 0.0
    %2182 = vmatprep.subr.mxu0 0.0
    %2183 = vmatpush2.msra.mxu0 0.0
    %2184 = vmatprep.subr.mxu0 0.0
    %2185 = vmatpush2.msra.mxu0 0.0
    %2186 = vmatprep.subr.mxu0 0.0
    %2187 = vmatpush2.msra.mxu0 0.0
    %2188 = vmatprep.subr.mxu0 0.0
    %2189 = vmatpush2.msra.mxu0 0.0
    %2190 = vmatprep.subr.mxu0 0.0
    %2191 = vmatpush2.msra.mxu0 0.0
    %2192 = vmatprep.subr.mxu0 0.0
    %2193 = vmatpush2.msra.mxu0 0.0
    %2194 = vmatprep.subr.mxu0 0.0
    %2195 = vmatpush2.msra.mxu0 0.0
    %2196 = vmatprep.subr.mxu0 0.0
    %2197 = vmatpush2.msra.mxu0 0.0
    %2198 = vmatprep.subr.mxu0 0.0
    %2199 = vmatpush2.msra.mxu0 0.0
    %2200 = vmatprep.mubr.f32.mxu0 0.0
    %2201 = vmatmul.mubr.f32.gmra.mxu0 %v2017
    %v2202 = vpop.f32.mrf.mxu0
    %v2203 = vadd.f32 %v1951, %v2202
    %v2204 = vpop.f32.mrf.mxu0
    %v2205 = vadd.f32 %v1955, %v2204
    %2206 = vdwg.mxu0
    %2207 = vmatprep.subr.mxu0 0.0
    %2208 = vmatpush1.msra.mxu0 0.0
    %2209 = vmatprep.subr.mxu0 0.0
    %2210 = vmatpush1.msra.mxu0 0.0
    %2211 = vmatprep.subr.mxu0 0.0
    %2212 = vmatpush1.msra.mxu0 0.0
    %2213 = vmatprep.subr.mxu0 0.0
    %2214 = vmatpush1.msra.mxu0 0.0
    %2215 = vmatprep.subr.mxu0 0.0
    %2216 = vmatpush1.msra.mxu0 0.0
    %2217 = vmatprep.subr.mxu0 0.0
    %2218 = vmatpush1.msra.mxu0 0.0
    %2219 = vmatprep.subr.mxu0 0.0
    %2220 = vmatpush1.msra.mxu0 0.0
    %2221 = vmatprep.subr.mxu0 0.0
    %2222 = vmatpush1.msra.mxu0 0.0
    %2223 = vmatprep.subr.mxu0 0.0
    %2224 = vmatpush1.msra.mxu0 0.0
    %2225 = vmatprep.subr.mxu0 0.0
    %2226 = vmatpush1.msra.mxu0 0.0
    %2227 = vmatprep.subr.mxu0 0.0
    %2228 = vmatpush1.msra.mxu0 0.0
    %2229 = vmatprep.subr.mxu0 0.0
    %2230 = vmatpush1.msra.mxu0 0.0
    %2231 = vmatprep.subr.mxu0 0.0
    %2232 = vmatpush1.msra.mxu0 0.0
    %2233 = vmatprep.subr.mxu0 0.0
    %2234 = vmatpush1.msra.mxu0 0.0
    %2235 = vmatprep.subr.mxu0 %v2036
    %2236 = vmatpush1.msra.mxu0 %v2033
    %2237 = vmatprep.subr.mxu0 %v1911
    %2238 = vmatpush1.msra.mxu0 %v1910
    %2239 = vmatprep.subr.mxu0 0.0
    %2240 = vmatpush2.msra.mxu0 0.0
    %2241 = vmatprep.subr.mxu0 0.0
    %2242 = vmatpush2.msra.mxu0 0.0
    %2243 = vmatprep.subr.mxu0 0.0
    %2244 = vmatpush2.msra.mxu0 0.0
    %2245 = vmatprep.subr.mxu0 0.0
    %2246 = vmatpush2.msra.mxu0 0.0
    %2247 = vmatprep.subr.mxu0 0.0
    %2248 = vmatpush2.msra.mxu0 0.0
    %2249 = vmatprep.subr.mxu0 0.0
    %2250 = vmatpush2.msra.mxu0 0.0
    %2251 = vmatprep.subr.mxu0 0.0
    %2252 = vmatpush2.msra.mxu0 0.0
    %2253 = vmatprep.subr.mxu0 0.0
    %2254 = vmatpush2.msra.mxu0 0.0
    %2255 = vmatprep.subr.mxu0 0.0
    %2256 = vmatpush2.msra.mxu0 0.0
    %2257 = vmatprep.subr.mxu0 0.0
    %2258 = vmatpush2.msra.mxu0 0.0
    %2259 = vmatprep.subr.mxu0 0.0
    %2260 = vmatpush2.msra.mxu0 0.0
    %2261 = vmatprep.subr.mxu0 0.0
    %2262 = vmatpush2.msra.mxu0 0.0
    %2263 = vmatprep.subr.mxu0 0.0
    %2264 = vmatpush2.msra.mxu0 0.0
    %2265 = vmatprep.subr.mxu0 0.0
    %2266 = vmatpush2.msra.mxu0 0.0
    %2267 = vmatprep.subr.mxu0 0.0
    %2268 = vmatpush2.msra.mxu0 0.0
    %2269 = vmatprep.subr.mxu0 0.0
    %2270 = vmatpush2.msra.mxu0 0.0
    %2271 = vmatprep.mubr.f32.mxu0 0.0
    %2272 = vmatmul.mubr.f32.gmra.mxu0 %v2017
    %v2273 = vpop.f32.mrf.mxu0
    %v2274 = vadd.f32 %v1959, %v2273
    %v2275 = vpop.f32.mrf.mxu0
    %v2276 = vadd.f32 %v1963, %v2275
    %2277 = vdwg.mxu0
    %2278 = vmatprep.subr.mxu0 0.0
    %2279 = vmatpush1.msra.mxu0 0.0
    %2280 = vmatprep.subr.mxu0 0.0
    %2281 = vmatpush1.msra.mxu0 0.0
    %2282 = vmatprep.subr.mxu0 0.0
    %2283 = vmatpush1.msra.mxu0 0.0
    %2284 = vmatprep.subr.mxu0 0.0
    %2285 = vmatpush1.msra.mxu0 0.0
    %2286 = vmatprep.subr.mxu0 0.0
    %2287 = vmatpush1.msra.mxu0 0.0
    %2288 = vmatprep.subr.mxu0 0.0
    %2289 = vmatpush1.msra.mxu0 0.0
    %2290 = vmatprep.subr.mxu0 0.0
    %2291 = vmatpush1.msra.mxu0 0.0
    %2292 = vmatprep.subr.mxu0 0.0
    %2293 = vmatpush1.msra.mxu0 0.0
    %2294 = vmatprep.subr.mxu0 0.0
    %2295 = vmatpush1.msra.mxu0 0.0
    %2296 = vmatprep.subr.mxu0 0.0
    %2297 = vmatpush1.msra.mxu0 0.0
    %2298 = vmatprep.subr.mxu0 0.0
    %2299 = vmatpush1.msra.mxu0 0.0
    %2300 = vmatprep.subr.mxu0 0.0
    %2301 = vmatpush1.msra.mxu0 0.0
    %2302 = vmatprep.subr.mxu0 0.0
    %2303 = vmatpush1.msra.mxu0 0.0
    %2304 = vmatprep.subr.mxu0 0.0
    %2305 = vmatpush1.msra.mxu0 0.0
    %2306 = vmatprep.subr.mxu0 %v2042
    %2307 = vmatpush1.msra.mxu0 %v2039
    %2308 = vmatprep.subr.mxu0 %v1913
    %2309 = vmatpush1.msra.mxu0 %v1912
    %2310 = vmatprep.subr.mxu0 0.0
    %2311 = vmatpush2.msra.mxu0 0.0
    %2312 = vmatprep.subr.mxu0 0.0
    %2313 = vmatpush2.msra.mxu0 0.0
    %2314 = vmatprep.subr.mxu0 0.0
    %2315 = vmatpush2.msra.mxu0 0.0
    %2316 = vmatprep.subr.mxu0 0.0
    %2317 = vmatpush2.msra.mxu0 0.0
    %2318 = vmatprep.subr.mxu0 0.0
    %2319 = vmatpush2.msra.mxu0 0.0
    %2320 = vmatprep.subr.mxu0 0.0
    %2321 = vmatpush2.msra.mxu0 0.0
    %2322 = vmatprep.subr.mxu0 0.0
    %2323 = vmatpush2.msra.mxu0 0.0
    %2324 = vmatprep.subr.mxu0 0.0
    %2325 = vmatpush2.msra.mxu0 0.0
    %2326 = vmatprep.subr.mxu0 0.0
    %2327 = vmatpush2.msra.mxu0 0.0
    %2328 = vmatprep.subr.mxu0 0.0
    %2329 = vmatpush2.msra.mxu0 0.0
    %2330 = vmatprep.subr.mxu0 0.0
    %2331 = vmatpush2.msra.mxu0 0.0
    %2332 = vmatprep.subr.mxu0 0.0
    %2333 = vmatpush2.msra.mxu0 0.0
    %2334 = vmatprep.subr.mxu0 0.0
    %2335 = vmatpush2.msra.mxu0 0.0
    %2336 = vmatprep.subr.mxu0 0.0
    %2337 = vmatpush2.msra.mxu0 0.0
    %2338 = vmatprep.subr.mxu0 0.0
    %2339 = vmatpush2.msra.mxu0 0.0
    %2340 = vmatprep.subr.mxu0 0.0
    %2341 = vmatpush2.msra.mxu0 0.0
    %2342 = vmatprep.mubr.f32.mxu0 0.0
    %2343 = vmatmul.mubr.f32.gmra.mxu0 %v2017
    %v2344 = vpop.f32.mrf.mxu0
    %v2345 = vadd.f32 %v1967, %v2344
    %v2346 = vpop.f32.mrf.mxu0
    %v2347 = vadd.f32 %v1971, %v2346
    %2348 = vdwg.mxu0
    %2349 = vmatprep.subr.mxu0 0.0
    %2350 = vmatpush1.msra.mxu0 0.0
    %2351 = vmatprep.subr.mxu0 0.0
    %2352 = vmatpush1.msra.mxu0 0.0
    %2353 = vmatprep.subr.mxu0 0.0
    %2354 = vmatpush1.msra.mxu0 0.0
    %2355 = vmatprep.subr.mxu0 0.0
    %2356 = vmatpush1.msra.mxu0 0.0
    %2357 = vmatprep.subr.mxu0 0.0
    %2358 = vmatpush1.msra.mxu0 0.0
    %2359 = vmatprep.subr.mxu0 0.0
    %2360 = vmatpush1.msra.mxu0 0.0
    %2361 = vmatprep.subr.mxu0 0.0
    %2362 = vmatpush1.msra.mxu0 0.0
    %2363 = vmatprep.subr.mxu0 0.0
    %2364 = vmatpush1.msra.mxu0 0.0
    %2365 = vmatprep.subr.mxu0 0.0
    %2366 = vmatpush1.msra.mxu0 0.0
    %2367 = vmatprep.subr.mxu0 0.0
    %2368 = vmatpush1.msra.mxu0 0.0
    %2369 = vmatprep.subr.mxu0 0.0
    %2370 = vmatpush1.msra.mxu0 0.0
    %2371 = vmatprep.subr.mxu0 0.0
    %2372 = vmatpush1.msra.mxu0 0.0
    %2373 = vmatprep.subr.mxu0 0.0
    %2374 = vmatpush1.msra.mxu0 0.0
    %2375 = vmatprep.subr.mxu0 0.0
    %2376 = vmatpush1.msra.mxu0 0.0
    %2377 = vmatprep.subr.mxu0 %v2048
    %2378 = vmatpush1.msra.mxu0 %v2045
    %2379 = vmatprep.subr.mxu0 %v1915
    %2380 = vmatpush1.msra.mxu0 %v1914
    %2381 = vmatprep.subr.mxu0 0.0
    %2382 = vmatpush2.msra.mxu0 0.0
    %2383 = vmatprep.subr.mxu0 0.0
    %2384 = vmatpush2.msra.mxu0 0.0
    %2385 = vmatprep.subr.mxu0 0.0
    %2386 = vmatpush2.msra.mxu0 0.0
    %2387 = vmatprep.subr.mxu0 0.0
    %2388 = vmatpush2.msra.mxu0 0.0
    %2389 = vmatprep.subr.mxu0 0.0
    %2390 = vmatpush2.msra.mxu0 0.0
    %2391 = vmatprep.subr.mxu0 0.0
    %2392 = vmatpush2.msra.mxu0 0.0
    %2393 = vmatprep.subr.mxu0 0.0
    %2394 = vmatpush2.msra.mxu0 0.0
    %2395 = vmatprep.subr.mxu0 0.0
    %2396 = vmatpush2.msra.mxu0 0.0
    %2397 = vmatprep.subr.mxu0 0.0
    %2398 = vmatpush2.msra.mxu0 0.0
    %2399 = vmatprep.subr.mxu0 0.0
    %2400 = vmatpush2.msra.mxu0 0.0
    %2401 = vmatprep.subr.mxu0 0.0
    %2402 = vmatpush2.msra.mxu0 0.0
    %2403 = vmatprep.subr.mxu0 0.0
    %2404 = vmatpush2.msra.mxu0 0.0
    %2405 = vmatprep.subr.mxu0 0.0
    %2406 = vmatpush2.msra.mxu0 0.0
    %2407 = vmatprep.subr.mxu0 0.0
    %2408 = vmatpush2.msra.mxu0 0.0
    %2409 = vmatprep.subr.mxu0 0.0
    %2410 = vmatpush2.msra.mxu0 0.0
    %2411 = vmatprep.subr.mxu0 0.0
    %2412 = vmatpush2.msra.mxu0 0.0
    %2413 = vmatprep.mubr.f32.mxu0 0.0
    %2414 = vmatmul.mubr.f32.gmra.mxu0 %v2017
    %v2415 = vpop.f32.mrf.mxu0
    %v2416 = vadd.f32 %v1975, %v2415
    %v2417 = vpop.f32.mrf.mxu0
    %v2418 = vadd.f32 %v1979, %v2417
    %2419 = vdwg.mxu0
    %2420 = vmatprep.subr.mxu0 0.0
    %2421 = vmatpush1.msra.mxu0 0.0
    %2422 = vmatprep.subr.mxu0 0.0
    %2423 = vmatpush1.msra.mxu0 0.0
    %2424 = vmatprep.subr.mxu0 0.0
    %2425 = vmatpush1.msra.mxu0 0.0
    %2426 = vmatprep.subr.mxu0 0.0
    %2427 = vmatpush1.msra.mxu0 0.0
    %2428 = vmatprep.subr.mxu0 0.0
    %2429 = vmatpush1.msra.mxu0 0.0
    %2430 = vmatprep.subr.mxu0 0.0
    %2431 = vmatpush1.msra.mxu0 0.0
    %2432 = vmatprep.subr.mxu0 0.0
    %2433 = vmatpush1.msra.mxu0 0.0
    %2434 = vmatprep.subr.mxu0 0.0
    %2435 = vmatpush1.msra.mxu0 0.0
    %2436 = vmatprep.subr.mxu0 0.0
    %2437 = vmatpush1.msra.mxu0 0.0
    %2438 = vmatprep.subr.mxu0 0.0
    %2439 = vmatpush1.msra.mxu0 0.0
    %2440 = vmatprep.subr.mxu0 0.0
    %2441 = vmatpush1.msra.mxu0 0.0
    %2442 = vmatprep.subr.mxu0 0.0
    %2443 = vmatpush1.msra.mxu0 0.0
    %2444 = vmatprep.subr.mxu0 0.0
    %2445 = vmatpush1.msra.mxu0 0.0
    %2446 = vmatprep.subr.mxu0 0.0
    %2447 = vmatpush1.msra.mxu0 0.0
    %2448 = vmatprep.subr.mxu0 %v2054
    %2449 = vmatpush1.msra.mxu0 %v2051
    %2450 = vmatprep.subr.mxu0 %v1917
    %2451 = vmatpush1.msra.mxu0 %v1916
    %2452 = vmatprep.subr.mxu0 0.0
    %2453 = vmatpush2.msra.mxu0 0.0
    %2454 = vmatprep.subr.mxu0 0.0
    %2455 = vmatpush2.msra.mxu0 0.0
    %2456 = vmatprep.subr.mxu0 0.0
    %2457 = vmatpush2.msra.mxu0 0.0
    %2458 = vmatprep.subr.mxu0 0.0
    %2459 = vmatpush2.msra.mxu0 0.0
    %2460 = vmatprep.subr.mxu0 0.0
    %2461 = vmatpush2.msra.mxu0 0.0
    %2462 = vmatprep.subr.mxu0 0.0
    %2463 = vmatpush2.msra.mxu0 0.0
    %2464 = vmatprep.subr.mxu0 0.0
    %2465 = vmatpush2.msra.mxu0 0.0
    %2466 = vmatprep.subr.mxu0 0.0
    %2467 = vmatpush2.msra.mxu0 0.0
    %2468 = vmatprep.subr.mxu0 0.0
    %2469 = vmatpush2.msra.mxu0 0.0
    %2470 = vmatprep.subr.mxu0 0.0
    %2471 = vmatpush2.msra.mxu0 0.0
    %2472 = vmatprep.subr.mxu0 0.0
    %2473 = vmatpush2.msra.mxu0 0.0
    %2474 = vmatprep.subr.mxu0 0.0
    %2475 = vmatpush2.msra.mxu0 0.0
    %2476 = vmatprep.subr.mxu0 0.0
    %2477 = vmatpush2.msra.mxu0 0.0
    %2478 = vmatprep.subr.mxu0 0.0
    %2479 = vmatpush2.msra.mxu0 0.0
    %2480 = vmatprep.subr.mxu0 0.0
    %2481 = vmatpush2.msra.mxu0 0.0
    %2482 = vmatprep.subr.mxu0 0.0
    %2483 = vmatpush2.msra.mxu0 0.0
    %2484 = vmatprep.mubr.f32.mxu0 0.0
    %2485 = vmatmul.mubr.f32.gmra.mxu0 %v2017
    %v2486 = vpop.f32.mrf.mxu0
    %v2487 = vadd.f32 %v1983, %v2486
    %v2488 = vpop.f32.mrf.mxu0
    %v2489 = vadd.f32 %v1987, %v2488
    %2490 = vdwg.mxu0
    %2491 = vmatprep.subr.mxu0 0.0
    %2492 = vmatpush1.msra.mxu0 0.0
    %2493 = vmatprep.subr.mxu0 0.0
    %2494 = vmatpush1.msra.mxu0 0.0
    %2495 = vmatprep.subr.mxu0 0.0
    %2496 = vmatpush1.msra.mxu0 0.0
    %2497 = vmatprep.subr.mxu0 0.0
    %2498 = vmatpush1.msra.mxu0 0.0
    %2499 = vmatprep.subr.mxu0 0.0
    %2500 = vmatpush1.msra.mxu0 0.0
    %2501 = vmatprep.subr.mxu0 0.0
    %2502 = vmatpush1.msra.mxu0 0.0
    %2503 = vmatprep.subr.mxu0 0.0
    %2504 = vmatpush1.msra.mxu0 0.0
    %2505 = vmatprep.subr.mxu0 0.0
    %2506 = vmatpush1.msra.mxu0 0.0
    %2507 = vmatprep.subr.mxu0 0.0
    %2508 = vmatpush1.msra.mxu0 0.0
    %2509 = vmatprep.subr.mxu0 0.0
    %2510 = vmatpush1.msra.mxu0 0.0
    %2511 = vmatprep.subr.mxu0 0.0
    %2512 = vmatpush1.msra.mxu0 0.0
    %2513 = vmatprep.subr.mxu0 0.0
    %2514 = vmatpush1.msra.mxu0 0.0
    %2515 = vmatprep.subr.mxu0 0.0
    %2516 = vmatpush1.msra.mxu0 0.0
    %2517 = vmatprep.subr.mxu0 0.0
    %2518 = vmatpush1.msra.mxu0 0.0
    %2519 = vmatprep.subr.mxu0 %v2060
    %2520 = vmatpush1.msra.mxu0 %v2057
    %2521 = vmatprep.subr.mxu0 %v1919
    %2522 = vmatpush1.msra.mxu0 %v1918
    %2523 = vmatprep.subr.mxu0 0.0
    %2524 = vmatpush2.msra.mxu0 0.0
    %2525 = vmatprep.subr.mxu0 0.0
    %2526 = vmatpush2.msra.mxu0 0.0
    %2527 = vmatprep.subr.mxu0 0.0
    %2528 = vmatpush2.msra.mxu0 0.0
    %2529 = vmatprep.subr.mxu0 0.0
    %2530 = vmatpush2.msra.mxu0 0.0
    %2531 = vmatprep.subr.mxu0 0.0
    %2532 = vmatpush2.msra.mxu0 0.0
    %2533 = vmatprep.subr.mxu0 0.0
    %2534 = vmatpush2.msra.mxu0 0.0
    %2535 = vmatprep.subr.mxu0 0.0
    %2536 = vmatpush2.msra.mxu0 0.0
    %2537 = vmatprep.subr.mxu0 0.0
    %2538 = vmatpush2.msra.mxu0 0.0
    %2539 = vmatprep.subr.mxu0 0.0
    %2540 = vmatpush2.msra.mxu0 0.0
    %2541 = vmatprep.subr.mxu0 0.0
    %2542 = vmatpush2.msra.mxu0 0.0
    %2543 = vmatprep.subr.mxu0 0.0
    %2544 = vmatpush2.msra.mxu0 0.0
    %2545 = vmatprep.subr.mxu0 0.0
    %2546 = vmatpush2.msra.mxu0 0.0
    %2547 = vmatprep.subr.mxu0 0.0
    %2548 = vmatpush2.msra.mxu0 0.0
    %2549 = vmatprep.subr.mxu0 0.0
    %2550 = vmatpush2.msra.mxu0 0.0
    %2551 = vmatprep.subr.mxu0 0.0
    %2552 = vmatpush2.msra.mxu0 0.0
    %2553 = vmatprep.subr.mxu0 0.0
    %2554 = vmatpush2.msra.mxu0 0.0
    %2555 = vmatprep.mubr.f32.mxu0 0.0
    %2556 = vmatmul.mubr.f32.gmra.mxu0 %v2017
    %v2557 = vpop.f32.mrf.mxu0
    %v2558 = vadd.f32 %v1991, %v2557
    %v2559 = vpop.f32.mrf.mxu0
    %v2560 = vadd.f32 %v1995, %v2559
    %2561 = vdwg.mxu0
    %2562 = vmatprep.subr.mxu0 0.0
    %2563 = vmatpush1.msra.mxu0 0.0
    %2564 = vmatprep.subr.mxu0 0.0
    %2565 = vmatpush1.msra.mxu0 0.0
    %2566 = vmatprep.subr.mxu0 0.0
    %2567 = vmatpush1.msra.mxu0 0.0
    %2568 = vmatprep.subr.mxu0 0.0
    %2569 = vmatpush1.msra.mxu0 0.0
    %2570 = vmatprep.subr.mxu0 0.0
    %2571 = vmatpush1.msra.mxu0 0.0
    %2572 = vmatprep.subr.mxu0 0.0
    %2573 = vmatpush1.msra.mxu0 0.0
    %2574 = vmatprep.subr.mxu0 0.0
    %2575 = vmatpush1.msra.mxu0 0.0
    %2576 = vmatprep.subr.mxu0 0.0
    %2577 = vmatpush1.msra.mxu0 0.0
    %2578 = vmatprep.subr.mxu0 0.0
    %2579 = vmatpush1.msra.mxu0 0.0
    %2580 = vmatprep.subr.mxu0 0.0
    %2581 = vmatpush1.msra.mxu0 0.0
    %2582 = vmatprep.subr.mxu0 0.0
    %2583 = vmatpush1.msra.mxu0 0.0
    %2584 = vmatprep.subr.mxu0 0.0
    %2585 = vmatpush1.msra.mxu0 0.0
    %2586 = vmatprep.subr.mxu0 0.0
    %2587 = vmatpush1.msra.mxu0 0.0
    %2588 = vmatprep.subr.mxu0 0.0
    %2589 = vmatpush1.msra.mxu0 0.0
    %2590 = vmatprep.subr.mxu0 0.0
    %2591 = vmatpush1.msra.mxu0 %v2063
    %2592 = vmatprep.subr.mxu0 0.0
    %2593 = vmatpush1.msra.mxu0 %v1920
    %2594 = vmatprep.subr.mxu0 0.0
    %2595 = vmatpush2.msra.mxu0 0.0
    %2596 = vmatprep.subr.mxu0 0.0
    %2597 = vmatpush2.msra.mxu0 0.0
    %2598 = vmatprep.subr.mxu0 0.0
    %2599 = vmatpush2.msra.mxu0 0.0
    %2600 = vmatprep.subr.mxu0 0.0
    %2601 = vmatpush2.msra.mxu0 0.0
    %2602 = vmatprep.subr.mxu0 0.0
    %2603 = vmatpush2.msra.mxu0 0.0
    %2604 = vmatprep.subr.mxu0 0.0
    %2605 = vmatpush2.msra.mxu0 0.0
    %2606 = vmatprep.subr.mxu0 0.0
    %2607 = vmatpush2.msra.mxu0 0.0
    %2608 = vmatprep.subr.mxu0 0.0
    %2609 = vmatpush2.msra.mxu0 0.0
    %2610 = vmatprep.subr.mxu0 0.0
    %2611 = vmatpush2.msra.mxu0 0.0
    %2612 = vmatprep.subr.mxu0 0.0
    %2613 = vmatpush2.msra.mxu0 0.0
    %2614 = vmatprep.subr.mxu0 0.0
    %2615 = vmatpush2.msra.mxu0 0.0
    %2616 = vmatprep.subr.mxu0 0.0
    %2617 = vmatpush2.msra.mxu0 0.0
    %2618 = vmatprep.subr.mxu0 0.0
    %2619 = vmatpush2.msra.mxu0 0.0
    %2620 = vmatprep.subr.mxu0 0.0
    %2621 = vmatpush2.msra.mxu0 0.0
    %2622 = vmatprep.subr.mxu0 0.0
    %2623 = vmatpush2.msra.mxu0 0.0
    %2624 = vmatprep.subr.mxu0 0.0
    %2625 = vmatpush2.msra.mxu0 0.0
    %2626 = vmatprep.mubr.f32.mxu0 0.0
    %2627 = vmatmul.mubr.f32.gmra.mxu0 %v2017
    %v2628 = vpop.f32.mrf.mxu0
    %v2629 = vadd.f32 %v1999, %v2628
    %v2630 = vpop.f32.mrf.mxu0
    %2631 = vdwg.mxu0
    %2633 = vrot.lane.b32.xlu0 %v1731, 8
    %v2634 = vpop.permute.xlu0 %2633
    %2651 = vrot.lane.b32.xlu0 %v2132, 16
    %v2652 = vpop.permute.xlu0 %2651
    %2653 = vrot.lane.b32.xlu0 %v2134, 16
    %v2654 = vpop.permute.xlu0 %2653
    %2655 = vrot.lane.b32.xlu0 %v2203, 16
    %v2656 = vpop.permute.xlu0 %2655
    %2657 = vrot.lane.b32.xlu0 %v2205, 16
    %v2658 = vpop.permute.xlu0 %2657
    %2659 = vrot.lane.b32.xlu0 %v2274, 16
    %v2660 = vpop.permute.xlu0 %2659
    %2661 = vrot.lane.b32.xlu0 %v2276, 16
    %v2662 = vpop.permute.xlu0 %2661
    %2663 = vrot.lane.b32.xlu0 %v2345, 16
    %v2664 = vpop.permute.xlu0 %2663
    %2665 = vrot.lane.b32.xlu0 %v2347, 16
    %v2666 = vpop.permute.xlu0 %2665
    %2667 = vrot.lane.b32.xlu0 %v2416, 16
    %v2668 = vpop.permute.xlu0 %2667
    %2669 = vrot.lane.b32.xlu0 %v2418, 16
    %v2670 = vpop.permute.xlu0 %2669
    %2671 = vrot.lane.b32.xlu0 %v2487, 16
    %v2672 = vpop.permute.xlu0 %2671
    %2673 = vrot.lane.b32.xlu0 %v2489, 16
    %v2674 = vpop.permute.xlu0 %2673
    %2675 = vrot.lane.b32.xlu0 %v2558, 16
    %v2676 = vpop.permute.xlu0 %2675
    %2677 = vrot.lane.b32.xlu0 %v2560, 16
    %v2678 = vpop.permute.xlu0 %2677
    %2679 = vrot.lane.b32.xlu0 %v2629, 16
    %v2680 = vpop.permute.xlu0 %2679
    %v2681 = vsel %vm162, %v2652, %v2654
    %v2682 = vsel %vm162, %v2654, %v2656
    %v2683 = vsel %vm162, %v2656, %v2658
    %v2684 = vsel %vm162, %v2658, %v2660
    %v2685 = vsel %vm162, %v2660, %v2662
    %v2686 = vsel %vm162, %v2662, %v2664
    %v2687 = vsel %vm162, %v2664, %v2666
    %v2688 = vsel %vm162, %v2666, %v2668
    %v2689 = vsel %vm162, %v2668, %v2670
    %v2690 = vsel %vm162, %v2670, %v2672
    %v2691 = vsel %vm162, %v2672, %v2674
    %v2692 = vsel %vm162, %v2674, %v2676
    %v2693 = vsel %vm162, %v2676, %v2678
    %v2694 = vsel %vm162, %v2678, %v2680
    %v2697 = vsel %vm1747, %v1650, %v2634
    %v2698 = vsel %vm162, %v2697, %v2652
    %v2700 = vcombine.low %v2698, %v2681
    %v2701 = vcombine.low %v2682, %v2683
    %v2702 = vcombine.low %v2684, %v2685
    %v2703 = vcombine.low %v2686, %v2687
    %v2704 = vcombine.low %v2688, %v2689
    %v2705 = vcombine.low %v2690, %v2691
    %v2706 = vcombine.low %v2692, %v2693
    %2714 = vst [vmem:[%s15] sm:$0xff] %v2700
    %2715 = vst [vmem:[%s15 + $0x8] sm:$0xff] %v2701
    %2716 = vst [vmem:[%s15 + $0x10] sm:$0xff] %v2702
    %2717 = vst [vmem:[%s15 + $0x18] sm:$0xff] %v2703
    %2718 = vst [vmem:[%s15 + $0x20] sm:$0xff] %v2704
    %2719 = vst [vmem:[%s15 + $0x28] sm:$0xff] %v2705
    %2720 = vst [vmem:[%s15 + $0x30] sm:$0xff] %v2706
    %vm2721 = vcmask 912384
    %2722 = vst.msk [vmem:[%s15 + $0x38] sm:$0xf] %vm2721, %v2694
    // Predicated region
    $region94: #{mtgru_forward.2} parent=1 // pred_check
      _
    $region95: #{mtgru_forward.2} parent=1 // pred_check_branch
      %2724 = sbr.rel (0) target = $region97
    $region96: #{mtgru_forward.2} parent=1 // pred_region
      _
    $region97: #{mtgru_forward.2} parent=1 // pred_fallthru
      _
    // Predicated region
    $region98: #{mtgru_forward.2} parent=1 // pred_check
      _
    $region99: #{mtgru_forward.2} parent=1 // pred_check_branch
      %2726 = sbr.rel (0) target = $region101
    $region100: #{mtgru_forward.2} parent=1 // pred_region
      _
    $region101: #{mtgru_forward.2} parent=1 // pred_fallthru
      _
    %2727 = vsyncpa [#allocation3], 1
    %2728 = vsyncpa [#allocation5], 1
    %2729 = vsyncpa [#allocation8], 1
    %2730 = vsyncpa [#allocation11], 1
    %2731 = vsyncpa [#allocation14], 1

// kernel: mtgru_forward.3
$region0: #{mtgru_forward.3}
  #allocation0 [shape = 'u32[]', space=smem, size = 0x4, offset = 0x4, fixed_abs, tag = 'smem constant byte address 0x4 - core index']
  #allocation1 [shape = 'u32[144,128]{1,0:T(1,128)}', space=vmem, size = 0x12000, scoped, tag = 'internal scratch']
  %s0 = inlined_call_operand.vmem [shape: f32[8,4,8], index: 0, kind: input, shape index: {}]
  %s1 = inlined_call_operand.vmem [shape: f32[4,32], index: 1, kind: input, shape index: {}]
  %s2 = inlined_call_operand.vmem [shape: f32[4,128], index: 2, kind: input, shape index: {}]
  %s3 = inlined_call_operand.vmem [shape: f32[4,32], index: 3, kind: input, shape index: {}]
  %s4 = inlined_call_operand.vmem [shape: f32[8,64], index: 4, kind: input, shape index: {}]
  %s5 = inlined_call_operand.vmem [shape: f32[32,64], index: 5, kind: input, shape index: {}]
  %s6 = inlined_call_operand.vmem [shape: f32[1,64], index: 6, kind: input, shape index: {}]
  %s7 = inlined_call_operand.vmem [shape: f32[128,32], index: 7, kind: input, shape index: {}]
  %s8 = inlined_call_operand.vmem [shape: f32[4,32], index: 8, kind: input, shape index: {}]
  %s9 = inlined_call_operand.vmem [shape: f32[32,32], index: 9, kind: input, shape index: {}]
  %s10 = inlined_call_operand.vmem [shape: f32[128,16], index: 10, kind: input, shape index: {}]
  %s11 = inlined_call_operand.vmem [shape: f32[32,8], index: 11, kind: input, shape index: {}]
  %s12 = inlined_call_operand.vmem [shape: f32[4,160], index: 12, kind: output, shape index: {}]
  %s13 = sld [smem:[#allocation0]]
  $region58: #{mtgru_forward.3} parent=0
    _
  %s15 = ssub.s32 1, %s13
  %s16 = scalar_select 0, %s15, %s13
  // Predicated region
  $region2: #{mtgru_forward.3} parent=0 // pred_check
    _
  $region3: #{mtgru_forward.3} parent=0 // pred_check_branch
    %18 = sbr.rel (0) target = $region5
  $region4: #{mtgru_forward.3} parent=0 // pred_region
    _
  $region5: #{mtgru_forward.3} parent=0 // pred_fallthru
    _
  // Predicated region
  $region6: #{mtgru_forward.3} parent=0 // pred_check
    _
  $region7: #{mtgru_forward.3} parent=0 // pred_check_branch
    %20 = sbr.rel (0) target = $region9
  $region8: #{mtgru_forward.3} parent=0 // pred_region
    _
  $region9: #{mtgru_forward.3} parent=0 // pred_fallthru
    _
  // Predicated region
  $region10: #{mtgru_forward.3} parent=0 // pred_check
    _
  $region11: #{mtgru_forward.3} parent=0 // pred_check_branch
    %22 = sbr.rel (0) target = $region13
  $region12: #{mtgru_forward.3} parent=0 // pred_region
    _
  $region13: #{mtgru_forward.3} parent=0 // pred_fallthru
    _
  // Predicated region
  $region14: #{mtgru_forward.3} parent=0 // pred_check
    _
  $region15: #{mtgru_forward.3} parent=0 // pred_check_branch
    %24 = sbr.rel (0) target = $region17
  $region16: #{mtgru_forward.3} parent=0 // pred_region
    _
  $region17: #{mtgru_forward.3} parent=0 // pred_fallthru
    _
  // Predicated region
  $region18: #{mtgru_forward.3} parent=0 // pred_check
    _
  $region19: #{mtgru_forward.3} parent=0 // pred_check_branch
    %26 = sbr.rel (0) target = $region21
  $region20: #{mtgru_forward.3} parent=0 // pred_region
    _
  $region21: #{mtgru_forward.3} parent=0 // pred_fallthru
    _
  // Predicated region
  $region22: #{mtgru_forward.3} parent=0 // pred_check
    _
  $region23: #{mtgru_forward.3} parent=0 // pred_check_branch
    %28 = sbr.rel (0) target = $region25
  $region24: #{mtgru_forward.3} parent=0 // pred_region
    _
  $region25: #{mtgru_forward.3} parent=0 // pred_fallthru
    _
  // Predicated region
  $region26: #{mtgru_forward.3} parent=0 // pred_check
    _
  $region27: #{mtgru_forward.3} parent=0 // pred_check_branch
    %30 = sbr.rel (0) target = $region29
  $region28: #{mtgru_forward.3} parent=0 // pred_region
    _
  $region29: #{mtgru_forward.3} parent=0 // pred_fallthru
    _
  // Predicated region
  $region30: #{mtgru_forward.3} parent=0 // pred_check
    _
  $region31: #{mtgru_forward.3} parent=0 // pred_check_branch
    %32 = sbr.rel (0) target = $region33
  $region32: #{mtgru_forward.3} parent=0 // pred_region
    _
  $region33: #{mtgru_forward.3} parent=0 // pred_fallthru
    _
  // Predicated region
  $region34: #{mtgru_forward.3} parent=0 // pred_check
    _
  $region35: #{mtgru_forward.3} parent=0 // pred_check_branch
    %34 = sbr.rel (0) target = $region37
  $region36: #{mtgru_forward.3} parent=0 // pred_region
    _
  $region37: #{mtgru_forward.3} parent=0 // pred_fallthru
    _
  // Predicated region
  $region38: #{mtgru_forward.3} parent=0 // pred_check
    _
  $region39: #{mtgru_forward.3} parent=0 // pred_check_branch
    %36 = sbr.rel (0) target = $region41
  $region40: #{mtgru_forward.3} parent=0 // pred_region
    _
  $region41: #{mtgru_forward.3} parent=0 // pred_fallthru
    _
  // Predicated region
  $region42: #{mtgru_forward.3} parent=0 // pred_check
    _
  $region43: #{mtgru_forward.3} parent=0 // pred_check_branch
    %38 = sbr.rel (0) target = $region45
  $region44: #{mtgru_forward.3} parent=0 // pred_region
    _
  $region45: #{mtgru_forward.3} parent=0 // pred_fallthru
    _
  // Predicated region
  $region46: #{mtgru_forward.3} parent=0 // pred_check
    _
  $region47: #{mtgru_forward.3} parent=0 // pred_check_branch
    %40 = sbr.rel (0) target = $region49
  $region48: #{mtgru_forward.3} parent=0 // pred_region
    _
  $region49: #{mtgru_forward.3} parent=0 // pred_fallthru
    _
  %v41 = vld [vmem:[%s4] sm:$0xff]
  %v42 = vld [vmem:[%s5] sm:$0xff]
  %v43 = vld [vmem:[%s5 + $0x8] sm:$0xff]
  %v44 = vld [vmem:[%s5 + $0x10] sm:$0xff]
  %v45 = vld [vmem:[%s5 + $0x18] sm:$0xff]
  %v46 = vld [vmem:[%s6] sm:$0x1]
  %v47 = vld [vmem:[%s2] sm:$0xf]
  %v48 = vld [vmem:[%s3] sm:$0xf]
  %v49 = vld [vmem:[%s7] sm:$0xff]
  %v50 = vld [vmem:[%s7 + $0x8] sm:$0xff]
  %v51 = vld [vmem:[%s7 + $0x10] sm:$0xff]
  %v52 = vld [vmem:[%s7 + $0x18] sm:$0xff]
  %v53 = vld [vmem:[%s7 + $0x20] sm:$0xff]
  %v54 = vld [vmem:[%s7 + $0x28] sm:$0xff]
  %v55 = vld [vmem:[%s7 + $0x30] sm:$0xff]
  %v56 = vld [vmem:[%s7 + $0x38] sm:$0xff]
  %v57 = vld [vmem:[%s7 + $0x40] sm:$0xff]
  %v58 = vld [vmem:[%s7 + $0x48] sm:$0xff]
  %v59 = vld [vmem:[%s7 + $0x50] sm:$0xff]
  %v60 = vld [vmem:[%s7 + $0x58] sm:$0xff]
  %v61 = vld [vmem:[%s7 + $0x60] sm:$0xff]
  %v62 = vld [vmem:[%s7 + $0x68] sm:$0xff]
  %v63 = vld [vmem:[%s7 + $0x70] sm:$0xff]
  %v64 = vld [vmem:[%s7 + $0x78] sm:$0xff]
  %v65 = vld [vmem:[%s9] sm:$0xff]
  %v66 = vld [vmem:[%s9 + $0x8] sm:$0xff]
  %v67 = vld [vmem:[%s9 + $0x10] sm:$0xff]
  %v68 = vld [vmem:[%s9 + $0x18] sm:$0xff]
  %v69 = vld [vmem:[%s10] sm:$0xff]
  %v70 = vld [vmem:[%s10 + $0x8] sm:$0xff]
  %v71 = vld [vmem:[%s10 + $0x10] sm:$0xff]
  %v72 = vld [vmem:[%s10 + $0x18] sm:$0xff]
  %v73 = vld [vmem:[%s10 + $0x20] sm:$0xff]
  %v74 = vld [vmem:[%s10 + $0x28] sm:$0xff]
  %v75 = vld [vmem:[%s10 + $0x30] sm:$0xff]
  %v76 = vld [vmem:[%s10 + $0x38] sm:$0xff]
  %v77 = vld [vmem:[%s10 + $0x40] sm:$0xff]
  %v78 = vld [vmem:[%s10 + $0x48] sm:$0xff]
  %v79 = vld [vmem:[%s10 + $0x50] sm:$0xff]
  %v80 = vld [vmem:[%s10 + $0x58] sm:$0xff]
  %v81 = vld [vmem:[%s10 + $0x60] sm:$0xff]
  %v82 = vld [vmem:[%s10 + $0x68] sm:$0xff]
  %v83 = vld [vmem:[%s10 + $0x70] sm:$0xff]
  %v84 = vld [vmem:[%s10 + $0x78] sm:$0xff]
  %v85 = vld [vmem:[%s11] sm:$0xff]
  %v86 = vld [vmem:[%s11 + $0x8] sm:$0xff]
  %v87 = vld [vmem:[%s11 + $0x10] sm:$0xff]
  %v88 = vld [vmem:[%s11 + $0x18] sm:$0xff]
  %v89 = vld [vmem:[%s8] sm:$0xf]
  %v90 = vld [vmem:[%s1] sm:$0xf]
  %v91 = vld [vmem:[%s0] sm:$0xf]
  %93 = vrot.lane.b32.xlu0 %v91, 8
  %v94 = vpop.permute.xlu0 %93
  %96 = vrot.lane.b32.xlu0 %v91, 16
  %v97 = vpop.permute.xlu0 %96
  %99 = vrot.lane.b32.xlu0 %v91, 24
  %v100 = vpop.permute.xlu0 %99
  %vm102 = vcmask 64512
  %v103 = vsel %vm102, %v91, %v94
  %vm104 = vcmask 130048
  %v105 = vsel %vm104, %v103, %v97
  %vm106 = vcmask 195584
  %v107 = vsel %vm106, %v105, %v100
  %v108 = vmul.f32 %v107, %v48
  %vm109 = vcmask 261120
  %v111 = vsel %vm109, %v90, 0
  %113 = vmatprep.subr.mxu0 0.0
  %114 = vmatpush1.msra.mxu0 0.0
  %115 = vmatprep.subr.mxu0 0.0
  %116 = vmatpush1.msra.mxu0 0.0
  %117 = vmatprep.subr.mxu0 0.0
  %118 = vmatpush1.msra.mxu0 0.0
  %119 = vmatprep.subr.mxu0 0.0
  %120 = vmatpush1.msra.mxu0 0.0
  %121 = vmatprep.subr.mxu0 0.0
  %122 = vmatpush1.msra.mxu0 0.0
  %123 = vmatprep.subr.mxu0 0.0
  %124 = vmatpush1.msra.mxu0 0.0
  %125 = vmatprep.subr.mxu0 0.0
  %126 = vmatpush1.msra.mxu0 0.0
  %127 = vmatprep.subr.mxu0 0.0
  %128 = vmatpush1.msra.mxu0 0.0
  %129 = vmatprep.subr.mxu0 0.0
  %130 = vmatpush1.msra.mxu0 0.0
  %131 = vmatprep.subr.mxu0 0.0
  %132 = vmatpush1.msra.mxu0 0.0
  %133 = vmatprep.subr.mxu0 0.0
  %134 = vmatpush1.msra.mxu0 0.0
  %135 = vmatprep.subr.mxu0 0.0
  %136 = vmatpush1.msra.mxu0 0.0
  %137 = vmatprep.subr.mxu0 0.0
  %138 = vmatpush1.msra.mxu0 %v45
  %139 = vmatprep.subr.mxu0 0.0
  %140 = vmatpush1.msra.mxu0 %v44
  %141 = vmatprep.subr.mxu0 0.0
  %142 = vmatpush1.msra.mxu0 %v43
  %143 = vmatprep.subr.mxu0 0.0
  %144 = vmatpush1.msra.mxu0 %v42
  %145 = vmatprep.subr.mxu0 0.0
  %146 = vmatpush2.msra.mxu0 0.0
  %147 = vmatprep.subr.mxu0 0.0
  %148 = vmatpush2.msra.mxu0 0.0
  %149 = vmatprep.subr.mxu0 0.0
  %150 = vmatpush2.msra.mxu0 0.0
  %151 = vmatprep.subr.mxu0 0.0
  %152 = vmatpush2.msra.mxu0 0.0
  %153 = vmatprep.subr.mxu0 0.0
  %154 = vmatpush2.msra.mxu0 0.0
  %155 = vmatprep.subr.mxu0 0.0
  %156 = vmatpush2.msra.mxu0 0.0
  %157 = vmatprep.subr.mxu0 0.0
  %158 = vmatpush2.msra.mxu0 0.0
  %159 = vmatprep.subr.mxu0 0.0
  %160 = vmatpush2.msra.mxu0 0.0
  %161 = vmatprep.subr.mxu0 0.0
  %162 = vmatpush2.msra.mxu0 0.0
  %163 = vmatprep.subr.mxu0 0.0
  %164 = vmatpush2.msra.mxu0 0.0
  %165 = vmatprep.subr.mxu0 0.0
  %166 = vmatpush2.msra.mxu0 0.0
  %167 = vmatprep.subr.mxu0 0.0
  %168 = vmatpush2.msra.mxu0 0.0
  %169 = vmatprep.subr.mxu0 0.0
  %170 = vmatpush2.msra.mxu0 0.0
  %171 = vmatprep.subr.mxu0 0.0
  %172 = vmatpush2.msra.mxu0 0.0
  %173 = vmatprep.subr.mxu0 0.0
  %174 = vmatpush2.msra.mxu0 0.0
  %175 = vmatprep.subr.mxu0 0.0
  %176 = vmatpush2.msra.mxu0 0.0
  %177 = vmatprep.mubr.f32.mxu0 0.0
  %178 = vmatmul.mubr.f32.gmra.mxu0 %v111
  %v179 = vpop.f32.mrf.mxu0
  %v180 = vadd.f32 0.0, %v179
  %v181 = vpop.f32.mrf.mxu0
  %182 = vdwg.mxu0
  %v183 = vsel %vm102, %v91, 0
  %185 = vmatprep.subr.mxu0 0.0
  %186 = vmatpush1.msra.mxu0 0.0
  %187 = vmatprep.subr.mxu0 0.0
  %188 = vmatpush1.msra.mxu0 0.0
  %189 = vmatprep.subr.mxu0 0.0
  %190 = vmatpush1.msra.mxu0 0.0
  %191 = vmatprep.subr.mxu0 0.0
  %192 = vmatpush1.msra.mxu0 0.0
  %193 = vmatprep.subr.mxu0 0.0
  %194 = vmatpush1.msra.mxu0 0.0
  %195 = vmatprep.subr.mxu0 0.0
  %196 = vmatpush1.msra.mxu0 0.0
  %197 = vmatprep.subr.mxu0 0.0
  %198 = vmatpush1.msra.mxu0 0.0
  %199 = vmatprep.subr.mxu0 0.0
  %200 = vmatpush1.msra.mxu0 0.0
  %201 = vmatprep.subr.mxu0 0.0
  %202 = vmatpush1.msra.mxu0 0.0
  %203 = vmatprep.subr.mxu0 0.0
  %204 = vmatpush1.msra.mxu0 0.0
  %205 = vmatprep.subr.mxu0 0.0
  %206 = vmatpush1.msra.mxu0 0.0
  %207 = vmatprep.subr.mxu0 0.0
  %208 = vmatpush1.msra.mxu0 0.0
  %209 = vmatprep.subr.mxu0 0.0
  %210 = vmatpush1.msra.mxu0 0.0
  %211 = vmatprep.subr.mxu0 0.0
  %212 = vmatpush1.msra.mxu0 0.0
  %213 = vmatprep.subr.mxu0 0.0
  %214 = vmatpush1.msra.mxu0 0.0
  %215 = vmatprep.subr.mxu0 0.0
  %216 = vmatpush1.msra.mxu0 %v41
  %217 = vmatprep.subr.mxu0 0.0
  %218 = vmatpush2.msra.mxu0 0.0
  %219 = vmatprep.subr.mxu0 0.0
  %220 = vmatpush2.msra.mxu0 0.0
  %221 = vmatprep.subr.mxu0 0.0
  %222 = vmatpush2.msra.mxu0 0.0
  %223 = vmatprep.subr.mxu0 0.0
  %224 = vmatpush2.msra.mxu0 0.0
  %225 = vmatprep.subr.mxu0 0.0
  %226 = vmatpush2.msra.mxu0 0.0
  %227 = vmatprep.subr.mxu0 0.0
  %228 = vmatpush2.msra.mxu0 0.0
  %229 = vmatprep.subr.mxu0 0.0
  %230 = vmatpush2.msra.mxu0 0.0
  %231 = vmatprep.subr.mxu0 0.0
  %232 = vmatpush2.msra.mxu0 0.0
  %233 = vmatprep.subr.mxu0 0.0
  %234 = vmatpush2.msra.mxu0 0.0
  %235 = vmatprep.subr.mxu0 0.0
  %236 = vmatpush2.msra.mxu0 0.0
  %237 = vmatprep.subr.mxu0 0.0
  %238 = vmatpush2.msra.mxu0 0.0
  %239 = vmatprep.subr.mxu0 0.0
  %240 = vmatpush2.msra.mxu0 0.0
  %241 = vmatprep.subr.mxu0 0.0
  %242 = vmatpush2.msra.mxu0 0.0
  %243 = vmatprep.subr.mxu0 0.0
  %244 = vmatpush2.msra.mxu0 0.0
  %245 = vmatprep.subr.mxu0 0.0
  %246 = vmatpush2.msra.mxu0 0.0
  %247 = vmatprep.subr.mxu0 0.0
  %248 = vmatpush2.msra.mxu0 0.0
  %249 = vmatprep.mubr.f32.mxu0 0.0
  %250 = vmatmul.mubr.f32.gmra.mxu0 %v183
  %v251 = vpop.f32.mrf.mxu0
  %v252 = vadd.f32 %v180, %v251
  %v253 = vpop.f32.mrf.mxu0
  %254 = vdwg.mxu0
  %v256 = vlaneseq
  %v257 = vshrl.u32 %v256, 7
  %v258 = vsub.s32 0, %v257
  %v259 = vrot.slane %v46, %v258
  %v261 = vadd.f32 %v252, %v259
  %v262 = vxor.u32 %v261, 2147483648
  %v263 = vmul.f32 %v262, 1.442695
  %v264 = vpow.pop %v263
  %v265 = vadd.f32 %v264, 1.0
  %v266 = vrcp.pop %v265
  %v267 = vmul.f32 1.0, %v266
  %268 = vrot.lane.b32.xlu0 %v90, 32
  %v269 = vpop.permute.xlu0 %268
  %271 = vrot.lane.b32.xlu0 %v90, 64
  %v272 = vpop.permute.xlu0 %271
  %274 = vrot.lane.b32.xlu0 %v90, 96
  %v275 = vpop.permute.xlu0 %274
  %v277 = vsel %vm109, %v90, %v269
  %vm278 = vcmask 523264
  %v279 = vsel %vm278, %v277, %v272
  %vm280 = vcmask 785408
  %v281 = vsel %vm280, %v279, %v275
  %v282 = vmul.f32 %v281, %v47
  %283 = vmatprep.subr.mxu0 0.0
  %284 = vmatpush1.msra.mxu0 %v64
  %285 = vmatprep.subr.mxu0 0.0
  %286 = vmatpush1.msra.mxu0 %v63
  %287 = vmatprep.subr.mxu0 0.0
  %288 = vmatpush1.msra.mxu0 %v62
  %289 = vmatprep.subr.mxu0 0.0
  %290 = vmatpush1.msra.mxu0 %v61
  %291 = vmatprep.subr.mxu0 0.0
  %292 = vmatpush1.msra.mxu0 %v60
  %293 = vmatprep.subr.mxu0 0.0
  %294 = vmatpush1.msra.mxu0 %v59
  %295 = vmatprep.subr.mxu0 0.0
  %296 = vmatpush1.msra.mxu0 %v58
  %297 = vmatprep.subr.mxu0 0.0
  %298 = vmatpush1.msra.mxu0 %v57
  %299 = vmatprep.subr.mxu0 0.0
  %300 = vmatpush1.msra.mxu0 %v56
  %301 = vmatprep.subr.mxu0 0.0
  %302 = vmatpush1.msra.mxu0 %v55
  %303 = vmatprep.subr.mxu0 0.0
  %304 = vmatpush1.msra.mxu0 %v54
  %305 = vmatprep.subr.mxu0 0.0
  %306 = vmatpush1.msra.mxu0 %v53
  %307 = vmatprep.subr.mxu0 0.0
  %308 = vmatpush1.msra.mxu0 %v52
  %309 = vmatprep.subr.mxu0 0.0
  %310 = vmatpush1.msra.mxu0 %v51
  %311 = vmatprep.subr.mxu0 0.0
  %312 = vmatpush1.msra.mxu0 %v50
  %313 = vmatprep.subr.mxu0 0.0
  %314 = vmatpush1.msra.mxu0 %v49
  %315 = vmatprep.subr.mxu0 0.0
  %316 = vmatpush2.msra.mxu0 0.0
  %317 = vmatprep.subr.mxu0 0.0
  %318 = vmatpush2.msra.mxu0 0.0
  %319 = vmatprep.subr.mxu0 0.0
  %320 = vmatpush2.msra.mxu0 0.0
  %321 = vmatprep.subr.mxu0 0.0
  %322 = vmatpush2.msra.mxu0 0.0
  %323 = vmatprep.subr.mxu0 0.0
  %324 = vmatpush2.msra.mxu0 0.0
  %325 = vmatprep.subr.mxu0 0.0
  %326 = vmatpush2.msra.mxu0 0.0
  %327 = vmatprep.subr.mxu0 0.0
  %328 = vmatpush2.msra.mxu0 0.0
  %329 = vmatprep.subr.mxu0 0.0
  %330 = vmatpush2.msra.mxu0 0.0
  %331 = vmatprep.subr.mxu0 0.0
  %332 = vmatpush2.msra.mxu0 0.0
  %333 = vmatprep.subr.mxu0 0.0
  %334 = vmatpush2.msra.mxu0 0.0
  %335 = vmatprep.subr.mxu0 0.0
  %336 = vmatpush2.msra.mxu0 0.0
  %337 = vmatprep.subr.mxu0 0.0
  %338 = vmatpush2.msra.mxu0 0.0
  %339 = vmatprep.subr.mxu0 0.0
  %340 = vmatpush2.msra.mxu0 0.0
  %341 = vmatprep.subr.mxu0 0.0
  %342 = vmatpush2.msra.mxu0 0.0
  %343 = vmatprep.subr.mxu0 0.0
  %344 = vmatpush2.msra.mxu0 0.0
  %345 = vmatprep.subr.mxu0 0.0
  %346 = vmatpush2.msra.mxu0 0.0
  %347 = vmatprep.mubr.f32.mxu0 0.0
  %348 = vmatmul.mubr.f32.gmra.mxu0 %v282
  %v349 = vpop.f32.mrf.mxu0
  %v350 = vadd.f32 0.0, %v349
  %v351 = vpop.f32.mrf.mxu0
  %352 = vdwg.mxu0
  %v353 = vmul.f32 %v267, %v350
  %v355 = vsel %vm109, %v108, 0
  %357 = vmatprep.subr.mxu0 0.0
  %358 = vmatpush1.msra.mxu0 0.0
  %359 = vmatprep.subr.mxu0 0.0
  %360 = vmatpush1.msra.mxu0 0.0
  %361 = vmatprep.subr.mxu0 0.0
  %362 = vmatpush1.msra.mxu0 0.0
  %363 = vmatprep.subr.mxu0 0.0
  %364 = vmatpush1.msra.mxu0 0.0
  %365 = vmatprep.subr.mxu0 0.0
  %366 = vmatpush1.msra.mxu0 0.0
  %367 = vmatprep.subr.mxu0 0.0
  %368 = vmatpush1.msra.mxu0 0.0
  %369 = vmatprep.subr.mxu0 0.0
  %370 = vmatpush1.msra.mxu0 0.0
  %371 = vmatprep.subr.mxu0 0.0
  %372 = vmatpush1.msra.mxu0 0.0
  %373 = vmatprep.subr.mxu0 0.0
  %374 = vmatpush1.msra.mxu0 0.0
  %375 = vmatprep.subr.mxu0 0.0
  %376 = vmatpush1.msra.mxu0 0.0
  %377 = vmatprep.subr.mxu0 0.0
  %378 = vmatpush1.msra.mxu0 0.0
  %379 = vmatprep.subr.mxu0 0.0
  %380 = vmatpush1.msra.mxu0 0.0
  %381 = vmatprep.subr.mxu0 0.0
  %382 = vmatpush1.msra.mxu0 %v68
  %383 = vmatprep.subr.mxu0 0.0
  %384 = vmatpush1.msra.mxu0 %v67
  %385 = vmatprep.subr.mxu0 0.0
  %386 = vmatpush1.msra.mxu0 %v66
  %387 = vmatprep.subr.mxu0 0.0
  %388 = vmatpush1.msra.mxu0 %v65
  %389 = vmatprep.subr.mxu0 0.0
  %390 = vmatpush2.msra.mxu0 0.0
  %391 = vmatprep.subr.mxu0 0.0
  %392 = vmatpush2.msra.mxu0 0.0
  %393 = vmatprep.subr.mxu0 0.0
  %394 = vmatpush2.msra.mxu0 0.0
  %395 = vmatprep.subr.mxu0 0.0
  %396 = vmatpush2.msra.mxu0 0.0
  %397 = vmatprep.subr.mxu0 0.0
  %398 = vmatpush2.msra.mxu0 0.0
  %399 = vmatprep.subr.mxu0 0.0
  %400 = vmatpush2.msra.mxu0 0.0
  %401 = vmatprep.subr.mxu0 0.0
  %402 = vmatpush2.msra.mxu0 0.0
  %403 = vmatprep.subr.mxu0 0.0
  %404 = vmatpush2.msra.mxu0 0.0
  %405 = vmatprep.subr.mxu0 0.0
  %406 = vmatpush2.msra.mxu0 0.0
  %407 = vmatprep.subr.mxu0 0.0
  %408 = vmatpush2.msra.mxu0 0.0
  %409 = vmatprep.subr.mxu0 0.0
  %410 = vmatpush2.msra.mxu0 0.0
  %411 = vmatprep.subr.mxu0 0.0
  %412 = vmatpush2.msra.mxu0 0.0
  %413 = vmatprep.subr.mxu0 0.0
  %414 = vmatpush2.msra.mxu0 0.0
  %415 = vmatprep.subr.mxu0 0.0
  %416 = vmatpush2.msra.mxu0 0.0
  %417 = vmatprep.subr.mxu0 0.0
  %418 = vmatpush2.msra.mxu0 0.0
  %419 = vmatprep.subr.mxu0 0.0
  %420 = vmatpush2.msra.mxu0 0.0
  %421 = vmatprep.mubr.f32.mxu0 0.0
  %422 = vmatmul.mubr.f32.gmra.mxu0 %v355
  %v423 = vpop.f32.mrf.mxu0
  %v424 = vadd.f32 %v353, %v423
  %v425 = vpop.f32.mrf.mxu0
  %426 = vdwg.mxu0
  %v427 = vadd.f32 %v424, %v89
  %v428 = vtanh.pop %v427
  %v429 = vmul.f32 %v267, %v269
  %v430 = vsub.f32 1.0, %v267
  %432 = vrot.lane.b32.xlu0 %v428, 32
  %v433 = vpop.permute.xlu0 %432
  %v435 = vmul.f32 %v430, %v433
  %v436 = vadd.f32 %v429, %v435
  %438 = vrot.lane.b32.xlu0 %v436, 96
  %v439 = vpop.permute.xlu0 %438
  %441 = vrot.lane.b32.xlu0 %v436, 32
  %v442 = vpop.permute.xlu0 %441
  %444 = vrot.lane.b32.xlu0 %v436, 64
  %v445 = vpop.permute.xlu0 %444
  %v447 = vsel %vm109, %v439, %v436
  %v448 = vsel %vm278, %v447, %v442
  %v449 = vsel %vm280, %v448, %v445
  %v450 = vmul.f32 %v449, %v47
  %451 = vmatprep.subr.mxu0 0.0
  %452 = vmatpush1.msra.mxu0 0.0
  %453 = vmatprep.subr.mxu0 0.0
  %454 = vmatpush1.msra.mxu0 0.0
  %455 = vmatprep.subr.mxu0 0.0
  %456 = vmatpush1.msra.mxu0 0.0
  %457 = vmatprep.subr.mxu0 0.0
  %458 = vmatpush1.msra.mxu0 0.0
  %459 = vmatprep.subr.mxu0 0.0
  %460 = vmatpush1.msra.mxu0 0.0
  %461 = vmatprep.subr.mxu0 0.0
  %462 = vmatpush1.msra.mxu0 0.0
  %463 = vmatprep.subr.mxu0 0.0
  %464 = vmatpush1.msra.mxu0 0.0
  %465 = vmatprep.subr.mxu0 0.0
  %466 = vmatpush1.msra.mxu0 0.0
  %467 = vmatprep.subr.mxu0 0.0
  %468 = vmatpush1.msra.mxu0 0.0
  %469 = vmatprep.subr.mxu0 0.0
  %470 = vmatpush1.msra.mxu0 0.0
  %471 = vmatprep.subr.mxu0 0.0
  %472 = vmatpush1.msra.mxu0 0.0
  %473 = vmatprep.subr.mxu0 0.0
  %474 = vmatpush1.msra.mxu0 0.0
  %475 = vmatprep.subr.mxu0 0.0
  %476 = vmatpush1.msra.mxu0 %v88
  %477 = vmatprep.subr.mxu0 0.0
  %478 = vmatpush1.msra.mxu0 %v87
  %479 = vmatprep.subr.mxu0 0.0
  %480 = vmatpush1.msra.mxu0 %v86
  %481 = vmatprep.subr.mxu0 0.0
  %482 = vmatpush1.msra.mxu0 %v85
  %483 = vmatprep.subr.mxu0 0.0
  %484 = vmatpush2.msra.mxu0 0.0
  %485 = vmatprep.subr.mxu0 0.0
  %486 = vmatpush2.msra.mxu0 0.0
  %487 = vmatprep.subr.mxu0 0.0
  %488 = vmatpush2.msra.mxu0 0.0
  %489 = vmatprep.subr.mxu0 0.0
  %490 = vmatpush2.msra.mxu0 0.0
  %491 = vmatprep.subr.mxu0 0.0
  %492 = vmatpush2.msra.mxu0 0.0
  %493 = vmatprep.subr.mxu0 0.0
  %494 = vmatpush2.msra.mxu0 0.0
  %495 = vmatprep.subr.mxu0 0.0
  %496 = vmatpush2.msra.mxu0 0.0
  %497 = vmatprep.subr.mxu0 0.0
  %498 = vmatpush2.msra.mxu0 0.0
  %499 = vmatprep.subr.mxu0 0.0
  %500 = vmatpush2.msra.mxu0 0.0
  %501 = vmatprep.subr.mxu0 0.0
  %502 = vmatpush2.msra.mxu0 0.0
  %503 = vmatprep.subr.mxu0 0.0
  %504 = vmatpush2.msra.mxu0 0.0
  %505 = vmatprep.subr.mxu0 0.0
  %506 = vmatpush2.msra.mxu0 0.0
  %507 = vmatprep.subr.mxu0 0.0
  %508 = vmatpush2.msra.mxu0 0.0
  %509 = vmatprep.subr.mxu0 0.0
  %510 = vmatpush2.msra.mxu0 0.0
  %511 = vmatprep.subr.mxu0 0.0
  %512 = vmatpush2.msra.mxu0 0.0
  %513 = vmatprep.subr.mxu0 0.0
  %514 = vmatpush2.msra.mxu0 0.0
  %515 = vmatprep.mubr.f32.mxu0 0.0
  %516 = vmatmul.mubr.f32.gmra.mxu0 %v355
  %v517 = vpop.f32.mrf.mxu0
  %v518 = vadd.f32 0.0, %v517
  %v519 = vpop.f32.mrf.mxu0
  %520 = vdwg.mxu0
  %522 = vrot.lane.b32.xlu0 %v518, 8
  %v523 = vpop.permute.xlu0 %522
  %v525 = vsel %vm102, %v91, %v523
  %526 = vmatprep.subr.mxu0 0.0
  %527 = vmatpush1.msra.mxu0 %v84
  %528 = vmatprep.subr.mxu0 0.0
  %529 = vmatpush1.msra.mxu0 %v83
  %530 = vmatprep.subr.mxu0 0.0
  %531 = vmatpush1.msra.mxu0 %v82
  %532 = vmatprep.subr.mxu0 0.0
  %533 = vmatpush1.msra.mxu0 %v81
  %534 = vmatprep.subr.mxu0 0.0
  %535 = vmatpush1.msra.mxu0 %v80
  %536 = vmatprep.subr.mxu0 0.0
  %537 = vmatpush1.msra.mxu0 %v79
  %538 = vmatprep.subr.mxu0 0.0
  %539 = vmatpush1.msra.mxu0 %v78
  %540 = vmatprep.subr.mxu0 0.0
  %541 = vmatpush1.msra.mxu0 %v77
  %542 = vmatprep.subr.mxu0 0.0
  %543 = vmatpush1.msra.mxu0 %v76
  %544 = vmatprep.subr.mxu0 0.0
  %545 = vmatpush1.msra.mxu0 %v75
  %546 = vmatprep.subr.mxu0 0.0
  %547 = vmatpush1.msra.mxu0 %v74
  %548 = vmatprep.subr.mxu0 0.0
  %549 = vmatpush1.msra.mxu0 %v73
  %550 = vmatprep.subr.mxu0 0.0
  %551 = vmatpush1.msra.mxu0 %v72
  %552 = vmatprep.subr.mxu0 0.0
  %553 = vmatpush1.msra.mxu0 %v71
  %554 = vmatprep.subr.mxu0 0.0
  %555 = vmatpush1.msra.mxu0 %v70
  %556 = vmatprep.subr.mxu0 0.0
  %557 = vmatpush1.msra.mxu0 %v69
  %558 = vmatprep.subr.mxu0 0.0
  %559 = vmatpush2.msra.mxu0 0.0
  %560 = vmatprep.subr.mxu0 0.0
  %561 = vmatpush2.msra.mxu0 0.0
  %562 = vmatprep.subr.mxu0 0.0
  %563 = vmatpush2.msra.mxu0 0.0
  %564 = vmatprep.subr.mxu0 0.0
  %565 = vmatpush2.msra.mxu0 0.0
  %566 = vmatprep.subr.mxu0 0.0
  %567 = vmatpush2.msra.mxu0 0.0
  %568 = vmatprep.subr.mxu0 0.0
  %569 = vmatpush2.msra.mxu0 0.0
  %570 = vmatprep.subr.mxu0 0.0
  %571 = vmatpush2.msra.mxu0 0.0
  %572 = vmatprep.subr.mxu0 0.0
  %573 = vmatpush2.msra.mxu0 0.0
  %574 = vmatprep.subr.mxu0 0.0
  %575 = vmatpush2.msra.mxu0 0.0
  %576 = vmatprep.subr.mxu0 0.0
  %577 = vmatpush2.msra.mxu0 0.0
  %578 = vmatprep.subr.mxu0 0.0
  %579 = vmatpush2.msra.mxu0 0.0
  %580 = vmatprep.subr.mxu0 0.0
  %581 = vmatpush2.msra.mxu0 0.0
  %582 = vmatprep.subr.mxu0 0.0
  %583 = vmatpush2.msra.mxu0 0.0
  %584 = vmatprep.subr.mxu0 0.0
  %585 = vmatpush2.msra.mxu0 0.0
  %586 = vmatprep.subr.mxu0 0.0
  %587 = vmatpush2.msra.mxu0 0.0
  %588 = vmatprep.subr.mxu0 0.0
  %589 = vmatpush2.msra.mxu0 0.0
  %590 = vmatprep.mubr.f32.mxu0 0.0
  %591 = vmatmul.mubr.f32.gmra.mxu0 %v450
  %v592 = vpop.f32.mrf.mxu0
  %v593 = vadd.f32 %v525, %v592
  %v594 = vpop.f32.mrf.mxu0
  %595 = vdwg.mxu0
  %s596 = scalar_lea.vmem %s0, 4
  %v597 = vld [vmem:[%s596] sm:$0xf]
  %599 = vrot.lane.b32.xlu0 %v597, 8
  %v600 = vpop.permute.xlu0 %599
  %602 = vrot.lane.b32.xlu0 %v597, 16
  %v603 = vpop.permute.xlu0 %602
  %605 = vrot.lane.b32.xlu0 %v597, 24
  %v606 = vpop.permute.xlu0 %605
  %v608 = vsel %vm102, %v597, %v600
  %v609 = vsel %vm104, %v608, %v603
  %v610 = vsel %vm106, %v609, %v606
  %v611 = vmul.f32 %v610, %v48
  %v612 = vsel %vm109, %v439, 0
  %614 = vmatprep.subr.mxu0 0.0
  %615 = vmatpush1.msra.mxu0 0.0
  %616 = vmatprep.subr.mxu0 0.0
  %617 = vmatpush1.msra.mxu0 0.0
  %618 = vmatprep.subr.mxu0 0.0
  %619 = vmatpush1.msra.mxu0 0.0
  %620 = vmatprep.subr.mxu0 0.0
  %621 = vmatpush1.msra.mxu0 0.0
  %622 = vmatprep.subr.mxu0 0.0
  %623 = vmatpush1.msra.mxu0 0.0
  %624 = vmatprep.subr.mxu0 0.0
  %625 = vmatpush1.msra.mxu0 0.0
  %626 = vmatprep.subr.mxu0 0.0
  %627 = vmatpush1.msra.mxu0 0.0
  %628 = vmatprep.subr.mxu0 0.0
  %629 = vmatpush1.msra.mxu0 0.0
  %630 = vmatprep.subr.mxu0 0.0
  %631 = vmatpush1.msra.mxu0 0.0
  %632 = vmatprep.subr.mxu0 0.0
  %633 = vmatpush1.msra.mxu0 0.0
  %634 = vmatprep.subr.mxu0 0.0
  %635 = vmatpush1.msra.mxu0 0.0
  %636 = vmatprep.subr.mxu0 0.0
  %637 = vmatpush1.msra.mxu0 0.0
  %638 = vmatprep.subr.mxu0 0.0
  %639 = vmatpush1.msra.mxu0 %v45
  %640 = vmatprep.subr.mxu0 0.0
  %641 = vmatpush1.msra.mxu0 %v44
  %642 = vmatprep.subr.mxu0 0.0
  %643 = vmatpush1.msra.mxu0 %v43
  %644 = vmatprep.subr.mxu0 0.0
  %645 = vmatpush1.msra.mxu0 %v42
  %646 = vmatprep.subr.mxu0 0.0
  %647 = vmatpush2.msra.mxu0 0.0
  %648 = vmatprep.subr.mxu0 0.0
  %649 = vmatpush2.msra.mxu0 0.0
  %650 = vmatprep.subr.mxu0 0.0
  %651 = vmatpush2.msra.mxu0 0.0
  %652 = vmatprep.subr.mxu0 0.0
  %653 = vmatpush2.msra.mxu0 0.0
  %654 = vmatprep.subr.mxu0 0.0
  %655 = vmatpush2.msra.mxu0 0.0
  %656 = vmatprep.subr.mxu0 0.0
  %657 = vmatpush2.msra.mxu0 0.0
  %658 = vmatprep.subr.mxu0 0.0
  %659 = vmatpush2.msra.mxu0 0.0
  %660 = vmatprep.subr.mxu0 0.0
  %661 = vmatpush2.msra.mxu0 0.0
  %662 = vmatprep.subr.mxu0 0.0
  %663 = vmatpush2.msra.mxu0 0.0
  %664 = vmatprep.subr.mxu0 0.0
  %665 = vmatpush2.msra.mxu0 0.0
  %666 = vmatprep.subr.mxu0 0.0
  %667 = vmatpush2.msra.mxu0 0.0
  %668 = vmatprep.subr.mxu0 0.0
  %669 = vmatpush2.msra.mxu0 0.0
  %670 = vmatprep.subr.mxu0 0.0
  %671 = vmatpush2.msra.mxu0 0.0
  %672 = vmatprep.subr.mxu0 0.0
  %673 = vmatpush2.msra.mxu0 0.0
  %674 = vmatprep.subr.mxu0 0.0
  %675 = vmatpush2.msra.mxu0 0.0
  %676 = vmatprep.subr.mxu0 0.0
  %677 = vmatpush2.msra.mxu0 0.0
  %678 = vmatprep.mubr.f32.mxu0 0.0
  %679 = vmatmul.mubr.f32.gmra.mxu0 %v612
  %v680 = vpop.f32.mrf.mxu0
  %v681 = vadd.f32 0.0, %v680
  %v682 = vpop.f32.mrf.mxu0
  %683 = vdwg.mxu0
  %v684 = vsel %vm102, %v597, 0
  %686 = vmatprep.subr.mxu0 0.0
  %687 = vmatpush1.msra.mxu0 0.0
  %688 = vmatprep.subr.mxu0 0.0
  %689 = vmatpush1.msra.mxu0 0.0
  %690 = vmatprep.subr.mxu0 0.0
  %691 = vmatpush1.msra.mxu0 0.0
  %692 = vmatprep.subr.mxu0 0.0
  %693 = vmatpush1.msra.mxu0 0.0
  %694 = vmatprep.subr.mxu0 0.0
  %695 = vmatpush1.msra.mxu0 0.0
  %696 = vmatprep.subr.mxu0 0.0
  %697 = vmatpush1.msra.mxu0 0.0
  %698 = vmatprep.subr.mxu0 0.0
  %699 = vmatpush1.msra.mxu0 0.0
  %700 = vmatprep.subr.mxu0 0.0
  %701 = vmatpush1.msra.mxu0 0.0
  %702 = vmatprep.subr.mxu0 0.0
  %703 = vmatpush1.msra.mxu0 0.0
  %704 = vmatprep.subr.mxu0 0.0
  %705 = vmatpush1.msra.mxu0 0.0
  %706 = vmatprep.subr.mxu0 0.0
  %707 = vmatpush1.msra.mxu0 0.0
  %708 = vmatprep.subr.mxu0 0.0
  %709 = vmatpush1.msra.mxu0 0.0
  %710 = vmatprep.subr.mxu0 0.0
  %711 = vmatpush1.msra.mxu0 0.0
  %712 = vmatprep.subr.mxu0 0.0
  %713 = vmatpush1.msra.mxu0 0.0
  %714 = vmatprep.subr.mxu0 0.0
  %715 = vmatpush1.msra.mxu0 0.0
  %716 = vmatprep.subr.mxu0 0.0
  %717 = vmatpush1.msra.mxu0 %v41
  %718 = vmatprep.subr.mxu0 0.0
  %719 = vmatpush2.msra.mxu0 0.0
  %720 = vmatprep.subr.mxu0 0.0
  %721 = vmatpush2.msra.mxu0 0.0
  %722 = vmatprep.subr.mxu0 0.0
  %723 = vmatpush2.msra.mxu0 0.0
  %724 = vmatprep.subr.mxu0 0.0
  %725 = vmatpush2.msra.mxu0 0.0
  %726 = vmatprep.subr.mxu0 0.0
  %727 = vmatpush2.msra.mxu0 0.0
  %728 = vmatprep.subr.mxu0 0.0
  %729 = vmatpush2.msra.mxu0 0.0
  %730 = vmatprep.subr.mxu0 0.0
  %731 = vmatpush2.msra.mxu0 0.0
  %732 = vmatprep.subr.mxu0 0.0
  %733 = vmatpush2.msra.mxu0 0.0
  %734 = vmatprep.subr.mxu0 0.0
  %735 = vmatpush2.msra.mxu0 0.0
  %736 = vmatprep.subr.mxu0 0.0
  %737 = vmatpush2.msra.mxu0 0.0
  %738 = vmatprep.subr.mxu0 0.0
  %739 = vmatpush2.msra.mxu0 0.0
  %740 = vmatprep.subr.mxu0 0.0
  %741 = vmatpush2.msra.mxu0 0.0
  %742 = vmatprep.subr.mxu0 0.0
  %743 = vmatpush2.msra.mxu0 0.0
  %744 = vmatprep.subr.mxu0 0.0
  %745 = vmatpush2.msra.mxu0 0.0
  %746 = vmatprep.subr.mxu0 0.0
  %747 = vmatpush2.msra.mxu0 0.0
  %748 = vmatprep.subr.mxu0 0.0
  %749 = vmatpush2.msra.mxu0 0.0
  %750 = vmatprep.mubr.f32.mxu0 0.0
  %751 = vmatmul.mubr.f32.gmra.mxu0 %v684
  %v752 = vpop.f32.mrf.mxu0
  %v753 = vadd.f32 %v681, %v752
  %v754 = vpop.f32.mrf.mxu0
  %755 = vdwg.mxu0
  %v756 = vadd.f32 %v753, %v259
  %v757 = vxor.u32 %v756, 2147483648
  %v758 = vmul.f32 %v757, 1.442695
  %v759 = vpow.pop %v758
  %v760 = vadd.f32 %v759, 1.0
  %v761 = vrcp.pop %v760
  %v762 = vmul.f32 1.0, %v761
  %763 = vmatprep.subr.mxu0 0.0
  %764 = vmatpush1.msra.mxu0 %v64
  %765 = vmatprep.subr.mxu0 0.0
  %766 = vmatpush1.msra.mxu0 %v63
  %767 = vmatprep.subr.mxu0 0.0
  %768 = vmatpush1.msra.mxu0 %v62
  %769 = vmatprep.subr.mxu0 0.0
  %770 = vmatpush1.msra.mxu0 %v61
  %771 = vmatprep.subr.mxu0 0.0
  %772 = vmatpush1.msra.mxu0 %v60
  %773 = vmatprep.subr.mxu0 0.0
  %774 = vmatpush1.msra.mxu0 %v59
  %775 = vmatprep.subr.mxu0 0.0
  %776 = vmatpush1.msra.mxu0 %v58
  %777 = vmatprep.subr.mxu0 0.0
  %778 = vmatpush1.msra.mxu0 %v57
  %779 = vmatprep.subr.mxu0 0.0
  %780 = vmatpush1.msra.mxu0 %v56
  %781 = vmatprep.subr.mxu0 0.0
  %782 = vmatpush1.msra.mxu0 %v55
  %783 = vmatprep.subr.mxu0 0.0
  %784 = vmatpush1.msra.mxu0 %v54
  %785 = vmatprep.subr.mxu0 0.0
  %786 = vmatpush1.msra.mxu0 %v53
  %787 = vmatprep.subr.mxu0 0.0
  %788 = vmatpush1.msra.mxu0 %v52
  %789 = vmatprep.subr.mxu0 0.0
  %790 = vmatpush1.msra.mxu0 %v51
  %791 = vmatprep.subr.mxu0 0.0
  %792 = vmatpush1.msra.mxu0 %v50
  %793 = vmatprep.subr.mxu0 0.0
  %794 = vmatpush1.msra.mxu0 %v49
  %795 = vmatprep.subr.mxu0 0.0
  %796 = vmatpush2.msra.mxu0 0.0
  %797 = vmatprep.subr.mxu0 0.0
  %798 = vmatpush2.msra.mxu0 0.0
  %799 = vmatprep.subr.mxu0 0.0
  %800 = vmatpush2.msra.mxu0 0.0
  %801 = vmatprep.subr.mxu0 0.0
  %802 = vmatpush2.msra.mxu0 0.0
  %803 = vmatprep.subr.mxu0 0.0
  %804 = vmatpush2.msra.mxu0 0.0
  %805 = vmatprep.subr.mxu0 0.0
  %806 = vmatpush2.msra.mxu0 0.0
  %807 = vmatprep.subr.mxu0 0.0
  %808 = vmatpush2.msra.mxu0 0.0
  %809 = vmatprep.subr.mxu0 0.0
  %810 = vmatpush2.msra.mxu0 0.0
  %811 = vmatprep.subr.mxu0 0.0
  %812 = vmatpush2.msra.mxu0 0.0
  %813 = vmatprep.subr.mxu0 0.0
  %814 = vmatpush2.msra.mxu0 0.0
  %815 = vmatprep.subr.mxu0 0.0
  %816 = vmatpush2.msra.mxu0 0.0
  %817 = vmatprep.subr.mxu0 0.0
  %818 = vmatpush2.msra.mxu0 0.0
  %819 = vmatprep.subr.mxu0 0.0
  %820 = vmatpush2.msra.mxu0 0.0
  %821 = vmatprep.subr.mxu0 0.0
  %822 = vmatpush2.msra.mxu0 0.0
  %823 = vmatprep.subr.mxu0 0.0
  %824 = vmatpush2.msra.mxu0 0.0
  %825 = vmatprep.subr.mxu0 0.0
  %826 = vmatpush2.msra.mxu0 0.0
  %827 = vmatprep.mubr.f32.mxu0 0.0
  %828 = vmatmul.mubr.f32.gmra.mxu0 %v450
  %v829 = vpop.f32.mrf.mxu0
  %v830 = vadd.f32 0.0, %v829
  %v831 = vpop.f32.mrf.mxu0
  %832 = vdwg.mxu0
  %v833 = vmul.f32 %v762, %v830
  %v835 = vsel %vm109, %v611, 0
  %837 = vmatprep.subr.mxu0 0.0
  %838 = vmatpush1.msra.mxu0 0.0
  %839 = vmatprep.subr.mxu0 0.0
  %840 = vmatpush1.msra.mxu0 0.0
  %841 = vmatprep.subr.mxu0 0.0
  %842 = vmatpush1.msra.mxu0 0.0
  %843 = vmatprep.subr.mxu0 0.0
  %844 = vmatpush1.msra.mxu0 0.0
  %845 = vmatprep.subr.mxu0 0.0
  %846 = vmatpush1.msra.mxu0 0.0
  %847 = vmatprep.subr.mxu0 0.0
  %848 = vmatpush1.msra.mxu0 0.0
  %849 = vmatprep.subr.mxu0 0.0
  %850 = vmatpush1.msra.mxu0 0.0
  %851 = vmatprep.subr.mxu0 0.0
  %852 = vmatpush1.msra.mxu0 0.0
  %853 = vmatprep.subr.mxu0 0.0
  %854 = vmatpush1.msra.mxu0 0.0
  %855 = vmatprep.subr.mxu0 0.0
  %856 = vmatpush1.msra.mxu0 0.0
  %857 = vmatprep.subr.mxu0 0.0
  %858 = vmatpush1.msra.mxu0 0.0
  %859 = vmatprep.subr.mxu0 0.0
  %860 = vmatpush1.msra.mxu0 0.0
  %861 = vmatprep.subr.mxu0 0.0
  %862 = vmatpush1.msra.mxu0 %v68
  %863 = vmatprep.subr.mxu0 0.0
  %864 = vmatpush1.msra.mxu0 %v67
  %865 = vmatprep.subr.mxu0 0.0
  %866 = vmatpush1.msra.mxu0 %v66
  %867 = vmatprep.subr.mxu0 0.0
  %868 = vmatpush1.msra.mxu0 %v65
  %869 = vmatprep.subr.mxu0 0.0
  %870 = vmatpush2.msra.mxu0 0.0
  %871 = vmatprep.subr.mxu0 0.0
  %872 = vmatpush2.msra.mxu0 0.0
  %873 = vmatprep.subr.mxu0 0.0
  %874 = vmatpush2.msra.mxu0 0.0
  %875 = vmatprep.subr.mxu0 0.0
  %876 = vmatpush2.msra.mxu0 0.0
  %877 = vmatprep.subr.mxu0 0.0
  %878 = vmatpush2.msra.mxu0 0.0
  %879 = vmatprep.subr.mxu0 0.0
  %880 = vmatpush2.msra.mxu0 0.0
  %881 = vmatprep.subr.mxu0 0.0
  %882 = vmatpush2.msra.mxu0 0.0
  %883 = vmatprep.subr.mxu0 0.0
  %884 = vmatpush2.msra.mxu0 0.0
  %885 = vmatprep.subr.mxu0 0.0
  %886 = vmatpush2.msra.mxu0 0.0
  %887 = vmatprep.subr.mxu0 0.0
  %888 = vmatpush2.msra.mxu0 0.0
  %889 = vmatprep.subr.mxu0 0.0
  %890 = vmatpush2.msra.mxu0 0.0
  %891 = vmatprep.subr.mxu0 0.0
  %892 = vmatpush2.msra.mxu0 0.0
  %893 = vmatprep.subr.mxu0 0.0
  %894 = vmatpush2.msra.mxu0 0.0
  %895 = vmatprep.subr.mxu0 0.0
  %896 = vmatpush2.msra.mxu0 0.0
  %897 = vmatprep.subr.mxu0 0.0
  %898 = vmatpush2.msra.mxu0 0.0
  %899 = vmatprep.subr.mxu0 0.0
  %900 = vmatpush2.msra.mxu0 0.0
  %901 = vmatprep.mubr.f32.mxu0 0.0
  %902 = vmatmul.mubr.f32.gmra.mxu0 %v835
  %v903 = vpop.f32.mrf.mxu0
  %v904 = vadd.f32 %v833, %v903
  %v905 = vpop.f32.mrf.mxu0
  %906 = vdwg.mxu0
  %v907 = vadd.f32 %v904, %v89
  %v908 = vtanh.pop %v907
  %v909 = vmul.f32 %v762, %v436
  %v910 = vsub.f32 1.0, %v762
  %912 = vrot.lane.b32.xlu0 %v908, 32
  %v913 = vpop.permute.xlu0 %912
  %v915 = vmul.f32 %v910, %v913
  %v916 = vadd.f32 %v909, %v915
  %918 = vrot.lane.b32.xlu0 %v916, 96
  %v919 = vpop.permute.xlu0 %918
  %921 = vrot.lane.b32.xlu0 %v916, 32
  %v922 = vpop.permute.xlu0 %921
  %924 = vrot.lane.b32.xlu0 %v916, 64
  %v925 = vpop.permute.xlu0 %924
  %v927 = vsel %vm109, %v919, %v916
  %v928 = vsel %vm278, %v927, %v922
  %v929 = vsel %vm280, %v928, %v925
  %v930 = vmul.f32 %v929, %v47
  %931 = vmatprep.subr.mxu0 0.0
  %932 = vmatpush1.msra.mxu0 0.0
  %933 = vmatprep.subr.mxu0 0.0
  %934 = vmatpush1.msra.mxu0 0.0
  %935 = vmatprep.subr.mxu0 0.0
  %936 = vmatpush1.msra.mxu0 0.0
  %937 = vmatprep.subr.mxu0 0.0
  %938 = vmatpush1.msra.mxu0 0.0
  %939 = vmatprep.subr.mxu0 0.0
  %940 = vmatpush1.msra.mxu0 0.0
  %941 = vmatprep.subr.mxu0 0.0
  %942 = vmatpush1.msra.mxu0 0.0
  %943 = vmatprep.subr.mxu0 0.0
  %944 = vmatpush1.msra.mxu0 0.0
  %945 = vmatprep.subr.mxu0 0.0
  %946 = vmatpush1.msra.mxu0 0.0
  %947 = vmatprep.subr.mxu0 0.0
  %948 = vmatpush1.msra.mxu0 0.0
  %949 = vmatprep.subr.mxu0 0.0
  %950 = vmatpush1.msra.mxu0 0.0
  %951 = vmatprep.subr.mxu0 0.0
  %952 = vmatpush1.msra.mxu0 0.0
  %953 = vmatprep.subr.mxu0 0.0
  %954 = vmatpush1.msra.mxu0 0.0
  %955 = vmatprep.subr.mxu0 0.0
  %956 = vmatpush1.msra.mxu0 %v88
  %957 = vmatprep.subr.mxu0 0.0
  %958 = vmatpush1.msra.mxu0 %v87
  %959 = vmatprep.subr.mxu0 0.0
  %960 = vmatpush1.msra.mxu0 %v86
  %961 = vmatprep.subr.mxu0 0.0
  %962 = vmatpush1.msra.mxu0 %v85
  %963 = vmatprep.subr.mxu0 0.0
  %964 = vmatpush2.msra.mxu0 0.0
  %965 = vmatprep.subr.mxu0 0.0
  %966 = vmatpush2.msra.mxu0 0.0
  %967 = vmatprep.subr.mxu0 0.0
  %968 = vmatpush2.msra.mxu0 0.0
  %969 = vmatprep.subr.mxu0 0.0
  %970 = vmatpush2.msra.mxu0 0.0
  %971 = vmatprep.subr.mxu0 0.0
  %972 = vmatpush2.msra.mxu0 0.0
  %973 = vmatprep.subr.mxu0 0.0
  %974 = vmatpush2.msra.mxu0 0.0
  %975 = vmatprep.subr.mxu0 0.0
  %976 = vmatpush2.msra.mxu0 0.0
  %977 = vmatprep.subr.mxu0 0.0
  %978 = vmatpush2.msra.mxu0 0.0
  %979 = vmatprep.subr.mxu0 0.0
  %980 = vmatpush2.msra.mxu0 0.0
  %981 = vmatprep.subr.mxu0 0.0
  %982 = vmatpush2.msra.mxu0 0.0
  %983 = vmatprep.subr.mxu0 0.0
  %984 = vmatpush2.msra.mxu0 0.0
  %985 = vmatprep.subr.mxu0 0.0
  %986 = vmatpush2.msra.mxu0 0.0
  %987 = vmatprep.subr.mxu0 0.0
  %988 = vmatpush2.msra.mxu0 0.0
  %989 = vmatprep.subr.mxu0 0.0
  %990 = vmatpush2.msra.mxu0 0.0
  %991 = vmatprep.subr.mxu0 0.0
  %992 = vmatpush2.msra.mxu0 0.0
  %993 = vmatprep.subr.mxu0 0.0
  %994 = vmatpush2.msra.mxu0 0.0
  %995 = vmatprep.mubr.f32.mxu0 0.0
  %996 = vmatmul.mubr.f32.gmra.mxu0 %v835
  %v997 = vpop.f32.mrf.mxu0
  %v998 = vadd.f32 0.0, %v997
  %v999 = vpop.f32.mrf.mxu0
  %1000 = vdwg.mxu0
  %1002 = vrot.lane.b32.xlu0 %v998, 8
  %v1003 = vpop.permute.xlu0 %1002
  %v1005 = vsel %vm102, %v597, %v1003
  %1006 = vmatprep.subr.mxu0 0.0
  %1007 = vmatpush1.msra.mxu0 %v84
  %1008 = vmatprep.subr.mxu0 0.0
  %1009 = vmatpush1.msra.mxu0 %v83
  %1010 = vmatprep.subr.mxu0 0.0
  %1011 = vmatpush1.msra.mxu0 %v82
  %1012 = vmatprep.subr.mxu0 0.0
  %1013 = vmatpush1.msra.mxu0 %v81
  %1014 = vmatprep.subr.mxu0 0.0
  %1015 = vmatpush1.msra.mxu0 %v80
  %1016 = vmatprep.subr.mxu0 0.0
  %1017 = vmatpush1.msra.mxu0 %v79
  %1018 = vmatprep.subr.mxu0 0.0
  %1019 = vmatpush1.msra.mxu0 %v78
  %1020 = vmatprep.subr.mxu0 0.0
  %1021 = vmatpush1.msra.mxu0 %v77
  %1022 = vmatprep.subr.mxu0 0.0
  %1023 = vmatpush1.msra.mxu0 %v76
  %1024 = vmatprep.subr.mxu0 0.0
  %1025 = vmatpush1.msra.mxu0 %v75
  %1026 = vmatprep.subr.mxu0 0.0
  %1027 = vmatpush1.msra.mxu0 %v74
  %1028 = vmatprep.subr.mxu0 0.0
  %1029 = vmatpush1.msra.mxu0 %v73
  %1030 = vmatprep.subr.mxu0 0.0
  %1031 = vmatpush1.msra.mxu0 %v72
  %1032 = vmatprep.subr.mxu0 0.0
  %1033 = vmatpush1.msra.mxu0 %v71
  %1034 = vmatprep.subr.mxu0 0.0
  %1035 = vmatpush1.msra.mxu0 %v70
  %1036 = vmatprep.subr.mxu0 0.0
  %1037 = vmatpush1.msra.mxu0 %v69
  %1038 = vmatprep.subr.mxu0 0.0
  %1039 = vmatpush2.msra.mxu0 0.0
  %1040 = vmatprep.subr.mxu0 0.0
  %1041 = vmatpush2.msra.mxu0 0.0
  %1042 = vmatprep.subr.mxu0 0.0
  %1043 = vmatpush2.msra.mxu0 0.0
  %1044 = vmatprep.subr.mxu0 0.0
  %1045 = vmatpush2.msra.mxu0 0.0
  %1046 = vmatprep.subr.mxu0 0.0
  %1047 = vmatpush2.msra.mxu0 0.0
  %1048 = vmatprep.subr.mxu0 0.0
  %1049 = vmatpush2.msra.mxu0 0.0
  %1050 = vmatprep.subr.mxu0 0.0
  %1051 = vmatpush2.msra.mxu0 0.0
  %1052 = vmatprep.subr.mxu0 0.0
  %1053 = vmatpush2.msra.mxu0 0.0
  %1054 = vmatprep.subr.mxu0 0.0
  %1055 = vmatpush2.msra.mxu0 0.0
  %1056 = vmatprep.subr.mxu0 0.0
  %1057 = vmatpush2.msra.mxu0 0.0
  %1058 = vmatprep.subr.mxu0 0.0
  %1059 = vmatpush2.msra.mxu0 0.0
  %1060 = vmatprep.subr.mxu0 0.0
  %1061 = vmatpush2.msra.mxu0 0.0
  %1062 = vmatprep.subr.mxu0 0.0
  %1063 = vmatpush2.msra.mxu0 0.0
  %1064 = vmatprep.subr.mxu0 0.0
  %1065 = vmatpush2.msra.mxu0 0.0
  %1066 = vmatprep.subr.mxu0 0.0
  %1067 = vmatpush2.msra.mxu0 0.0
  %1068 = vmatprep.subr.mxu0 0.0
  %1069 = vmatpush2.msra.mxu0 0.0
  %1070 = vmatprep.mubr.f32.mxu0 0.0
  %1071 = vmatmul.mubr.f32.gmra.mxu0 %v930
  %v1072 = vpop.f32.mrf.mxu0
  %v1073 = vadd.f32 %v1005, %v1072
  %v1074 = vpop.f32.mrf.mxu0
  %1075 = vdwg.mxu0
  %s1076 = scalar_lea.vmem %s0, 8
  %v1077 = vld [vmem:[%s1076] sm:$0xf]
  %1079 = vrot.lane.b32.xlu0 %v1077, 8
  %v1080 = vpop.permute.xlu0 %1079
  %1082 = vrot.lane.b32.xlu0 %v1077, 16
  %v1083 = vpop.permute.xlu0 %1082
  %1085 = vrot.lane.b32.xlu0 %v1077, 24
  %v1086 = vpop.permute.xlu0 %1085
  %v1088 = vsel %vm102, %v1077, %v1080
  %v1089 = vsel %vm104, %v1088, %v1083
  %v1090 = vsel %vm106, %v1089, %v1086
  %v1091 = vmul.f32 %v1090, %v48
  %v1092 = vsel %vm109, %v919, 0
  %1094 = vmatprep.subr.mxu0 0.0
  %1095 = vmatpush1.msra.mxu0 0.0
  %1096 = vmatprep.subr.mxu0 0.0
  %1097 = vmatpush1.msra.mxu0 0.0
  %1098 = vmatprep.subr.mxu0 0.0
  %1099 = vmatpush1.msra.mxu0 0.0
  %1100 = vmatprep.subr.mxu0 0.0
  %1101 = vmatpush1.msra.mxu0 0.0
  %1102 = vmatprep.subr.mxu0 0.0
  %1103 = vmatpush1.msra.mxu0 0.0
  %1104 = vmatprep.subr.mxu0 0.0
  %1105 = vmatpush1.msra.mxu0 0.0
  %1106 = vmatprep.subr.mxu0 0.0
  %1107 = vmatpush1.msra.mxu0 0.0
  %1108 = vmatprep.subr.mxu0 0.0
  %1109 = vmatpush1.msra.mxu0 0.0
  %1110 = vmatprep.subr.mxu0 0.0
  %1111 = vmatpush1.msra.mxu0 0.0
  %1112 = vmatprep.subr.mxu0 0.0
  %1113 = vmatpush1.msra.mxu0 0.0
  %1114 = vmatprep.subr.mxu0 0.0
  %1115 = vmatpush1.msra.mxu0 0.0
  %1116 = vmatprep.subr.mxu0 0.0
  %1117 = vmatpush1.msra.mxu0 0.0
  %1118 = vmatprep.subr.mxu0 0.0
  %1119 = vmatpush1.msra.mxu0 %v45
  %1120 = vmatprep.subr.mxu0 0.0
  %1121 = vmatpush1.msra.mxu0 %v44
  %1122 = vmatprep.subr.mxu0 0.0
  %1123 = vmatpush1.msra.mxu0 %v43
  %1124 = vmatprep.subr.mxu0 0.0
  %1125 = vmatpush1.msra.mxu0 %v42
  %1126 = vmatprep.subr.mxu0 0.0
  %1127 = vmatpush2.msra.mxu0 0.0
  %1128 = vmatprep.subr.mxu0 0.0
  %1129 = vmatpush2.msra.mxu0 0.0
  %1130 = vmatprep.subr.mxu0 0.0
  %1131 = vmatpush2.msra.mxu0 0.0
  %1132 = vmatprep.subr.mxu0 0.0
  %1133 = vmatpush2.msra.mxu0 0.0
  %1134 = vmatprep.subr.mxu0 0.0
  %1135 = vmatpush2.msra.mxu0 0.0
  %1136 = vmatprep.subr.mxu0 0.0
  %1137 = vmatpush2.msra.mxu0 0.0
  %1138 = vmatprep.subr.mxu0 0.0
  %1139 = vmatpush2.msra.mxu0 0.0
  %1140 = vmatprep.subr.mxu0 0.0
  %1141 = vmatpush2.msra.mxu0 0.0
  %1142 = vmatprep.subr.mxu0 0.0
  %1143 = vmatpush2.msra.mxu0 0.0
  %1144 = vmatprep.subr.mxu0 0.0
  %1145 = vmatpush2.msra.mxu0 0.0
  %1146 = vmatprep.subr.mxu0 0.0
  %1147 = vmatpush2.msra.mxu0 0.0
  %1148 = vmatprep.subr.mxu0 0.0
  %1149 = vmatpush2.msra.mxu0 0.0
  %1150 = vmatprep.subr.mxu0 0.0
  %1151 = vmatpush2.msra.mxu0 0.0
  %1152 = vmatprep.subr.mxu0 0.0
  %1153 = vmatpush2.msra.mxu0 0.0
  %1154 = vmatprep.subr.mxu0 0.0
  %1155 = vmatpush2.msra.mxu0 0.0
  %1156 = vmatprep.subr.mxu0 0.0
  %1157 = vmatpush2.msra.mxu0 0.0
  %1158 = vmatprep.mubr.f32.mxu0 0.0
  %1159 = vmatmul.mubr.f32.gmra.mxu0 %v1092
  %v1160 = vpop.f32.mrf.mxu0
  %v1161 = vadd.f32 0.0, %v1160
  %v1162 = vpop.f32.mrf.mxu0
  %1163 = vdwg.mxu0
  %v1164 = vsel %vm102, %v1077, 0
  %1166 = vmatprep.subr.mxu0 0.0
  %1167 = vmatpush1.msra.mxu0 0.0
  %1168 = vmatprep.subr.mxu0 0.0
  %1169 = vmatpush1.msra.mxu0 0.0
  %1170 = vmatprep.subr.mxu0 0.0
  %1171 = vmatpush1.msra.mxu0 0.0
  %1172 = vmatprep.subr.mxu0 0.0
  %1173 = vmatpush1.msra.mxu0 0.0
  %1174 = vmatprep.subr.mxu0 0.0
  %1175 = vmatpush1.msra.mxu0 0.0
  %1176 = vmatprep.subr.mxu0 0.0
  %1177 = vmatpush1.msra.mxu0 0.0
  %1178 = vmatprep.subr.mxu0 0.0
  %1179 = vmatpush1.msra.mxu0 0.0
  %1180 = vmatprep.subr.mxu0 0.0
  %1181 = vmatpush1.msra.mxu0 0.0
  %1182 = vmatprep.subr.mxu0 0.0
  %1183 = vmatpush1.msra.mxu0 0.0
  %1184 = vmatprep.subr.mxu0 0.0
  %1185 = vmatpush1.msra.mxu0 0.0
  %1186 = vmatprep.subr.mxu0 0.0
  %1187 = vmatpush1.msra.mxu0 0.0
  %1188 = vmatprep.subr.mxu0 0.0
  %1189 = vmatpush1.msra.mxu0 0.0
  %1190 = vmatprep.subr.mxu0 0.0
  %1191 = vmatpush1.msra.mxu0 0.0
  %1192 = vmatprep.subr.mxu0 0.0
  %1193 = vmatpush1.msra.mxu0 0.0
  %1194 = vmatprep.subr.mxu0 0.0
  %1195 = vmatpush1.msra.mxu0 0.0
  %1196 = vmatprep.subr.mxu0 0.0
  %1197 = vmatpush1.msra.mxu0 %v41
  %1198 = vmatprep.subr.mxu0 0.0
  %1199 = vmatpush2.msra.mxu0 0.0
  %1200 = vmatprep.subr.mxu0 0.0
  %1201 = vmatpush2.msra.mxu0 0.0
  %1202 = vmatprep.subr.mxu0 0.0
  %1203 = vmatpush2.msra.mxu0 0.0
  %1204 = vmatprep.subr.mxu0 0.0
  %1205 = vmatpush2.msra.mxu0 0.0
  %1206 = vmatprep.subr.mxu0 0.0
  %1207 = vmatpush2.msra.mxu0 0.0
  %1208 = vmatprep.subr.mxu0 0.0
  %1209 = vmatpush2.msra.mxu0 0.0
  %1210 = vmatprep.subr.mxu0 0.0
  %1211 = vmatpush2.msra.mxu0 0.0
  %1212 = vmatprep.subr.mxu0 0.0
  %1213 = vmatpush2.msra.mxu0 0.0
  %1214 = vmatprep.subr.mxu0 0.0
  %1215 = vmatpush2.msra.mxu0 0.0
  %1216 = vmatprep.subr.mxu0 0.0
  %1217 = vmatpush2.msra.mxu0 0.0
  %1218 = vmatprep.subr.mxu0 0.0
  %1219 = vmatpush2.msra.mxu0 0.0
  %1220 = vmatprep.subr.mxu0 0.0
  %1221 = vmatpush2.msra.mxu0 0.0
  %1222 = vmatprep.subr.mxu0 0.0
  %1223 = vmatpush2.msra.mxu0 0.0
  %1224 = vmatprep.subr.mxu0 0.0
  %1225 = vmatpush2.msra.mxu0 0.0
  %1226 = vmatprep.subr.mxu0 0.0
  %1227 = vmatpush2.msra.mxu0 0.0
  %1228 = vmatprep.subr.mxu0 0.0
  %1229 = vmatpush2.msra.mxu0 0.0
  %1230 = vmatprep.mubr.f32.mxu0 0.0
  %1231 = vmatmul.mubr.f32.gmra.mxu0 %v1164
  %v1232 = vpop.f32.mrf.mxu0
  %v1233 = vadd.f32 %v1161, %v1232
  %v1234 = vpop.f32.mrf.mxu0
  %1235 = vdwg.mxu0
  %v1236 = vadd.f32 %v1233, %v259
  %v1237 = vxor.u32 %v1236, 2147483648
  %v1238 = vmul.f32 %v1237, 1.442695
  %v1239 = vpow.pop %v1238
  %v1240 = vadd.f32 %v1239, 1.0
  %v1241 = vrcp.pop %v1240
  %v1242 = vmul.f32 1.0, %v1241
  %1243 = vmatprep.subr.mxu0 0.0
  %1244 = vmatpush1.msra.mxu0 %v64
  %1245 = vmatprep.subr.mxu0 0.0
  %1246 = vmatpush1.msra.mxu0 %v63
  %1247 = vmatprep.subr.mxu0 0.0
  %1248 = vmatpush1.msra.mxu0 %v62
  %1249 = vmatprep.subr.mxu0 0.0
  %1250 = vmatpush1.msra.mxu0 %v61
  %1251 = vmatprep.subr.mxu0 0.0
  %1252 = vmatpush1.msra.mxu0 %v60
  %1253 = vmatprep.subr.mxu0 0.0
  %1254 = vmatpush1.msra.mxu0 %v59
  %1255 = vmatprep.subr.mxu0 0.0
  %1256 = vmatpush1.msra.mxu0 %v58
  %1257 = vmatprep.subr.mxu0 0.0
  %1258 = vmatpush1.msra.mxu0 %v57
  %1259 = vmatprep.subr.mxu0 0.0
  %1260 = vmatpush1.msra.mxu0 %v56
  %1261 = vmatprep.subr.mxu0 0.0
  %1262 = vmatpush1.msra.mxu0 %v55
  %1263 = vmatprep.subr.mxu0 0.0
  %1264 = vmatpush1.msra.mxu0 %v54
  %1265 = vmatprep.subr.mxu0 0.0
  %1266 = vmatpush1.msra.mxu0 %v53
  %1267 = vmatprep.subr.mxu0 0.0
  %1268 = vmatpush1.msra.mxu0 %v52
  %1269 = vmatprep.subr.mxu0 0.0
  %1270 = vmatpush1.msra.mxu0 %v51
  %1271 = vmatprep.subr.mxu0 0.0
  %1272 = vmatpush1.msra.mxu0 %v50
  %1273 = vmatprep.subr.mxu0 0.0
  %1274 = vmatpush1.msra.mxu0 %v49
  %1275 = vmatprep.subr.mxu0 0.0
  %1276 = vmatpush2.msra.mxu0 0.0
  %1277 = vmatprep.subr.mxu0 0.0
  %1278 = vmatpush2.msra.mxu0 0.0
  %1279 = vmatprep.subr.mxu0 0.0
  %1280 = vmatpush2.msra.mxu0 0.0
  %1281 = vmatprep.subr.mxu0 0.0
  %1282 = vmatpush2.msra.mxu0 0.0
  %1283 = vmatprep.subr.mxu0 0.0
  %1284 = vmatpush2.msra.mxu0 0.0
  %1285 = vmatprep.subr.mxu0 0.0
  %1286 = vmatpush2.msra.mxu0 0.0
  %1287 = vmatprep.subr.mxu0 0.0
  %1288 = vmatpush2.msra.mxu0 0.0
  %1289 = vmatprep.subr.mxu0 0.0
  %1290 = vmatpush2.msra.mxu0 0.0
  %1291 = vmatprep.subr.mxu0 0.0
  %1292 = vmatpush2.msra.mxu0 0.0
  %1293 = vmatprep.subr.mxu0 0.0
  %1294 = vmatpush2.msra.mxu0 0.0
  %1295 = vmatprep.subr.mxu0 0.0
  %1296 = vmatpush2.msra.mxu0 0.0
  %1297 = vmatprep.subr.mxu0 0.0
  %1298 = vmatpush2.msra.mxu0 0.0
  %1299 = vmatprep.subr.mxu0 0.0
  %1300 = vmatpush2.msra.mxu0 0.0
  %1301 = vmatprep.subr.mxu0 0.0
  %1302 = vmatpush2.msra.mxu0 0.0
  %1303 = vmatprep.subr.mxu0 0.0
  %1304 = vmatpush2.msra.mxu0 0.0
  %1305 = vmatprep.subr.mxu0 0.0
  %1306 = vmatpush2.msra.mxu0 0.0
  %1307 = vmatprep.mubr.f32.mxu0 0.0
  %1308 = vmatmul.mubr.f32.gmra.mxu0 %v930
  %v1309 = vpop.f32.mrf.mxu0
  %v1310 = vadd.f32 0.0, %v1309
  %v1311 = vpop.f32.mrf.mxu0
  %1312 = vdwg.mxu0
  %v1313 = vmul.f32 %v1242, %v1310
  %v1315 = vsel %vm109, %v1091, 0
  %1317 = vmatprep.subr.mxu0 0.0
  %1318 = vmatpush1.msra.mxu0 0.0
  %1319 = vmatprep.subr.mxu0 0.0
  %1320 = vmatpush1.msra.mxu0 0.0
  %1321 = vmatprep.subr.mxu0 0.0
  %1322 = vmatpush1.msra.mxu0 0.0
  %1323 = vmatprep.subr.mxu0 0.0
  %1324 = vmatpush1.msra.mxu0 0.0
  %1325 = vmatprep.subr.mxu0 0.0
  %1326 = vmatpush1.msra.mxu0 0.0
  %1327 = vmatprep.subr.mxu0 0.0
  %1328 = vmatpush1.msra.mxu0 0.0
  %1329 = vmatprep.subr.mxu0 0.0
  %1330 = vmatpush1.msra.mxu0 0.0
  %1331 = vmatprep.subr.mxu0 0.0
  %1332 = vmatpush1.msra.mxu0 0.0
  %1333 = vmatprep.subr.mxu0 0.0
  %1334 = vmatpush1.msra.mxu0 0.0
  %1335 = vmatprep.subr.mxu0 0.0
  %1336 = vmatpush1.msra.mxu0 0.0
  %1337 = vmatprep.subr.mxu0 0.0
  %1338 = vmatpush1.msra.mxu0 0.0
  %1339 = vmatprep.subr.mxu0 0.0
  %1340 = vmatpush1.msra.mxu0 0.0
  %1341 = vmatprep.subr.mxu0 0.0
  %1342 = vmatpush1.msra.mxu0 %v68
  %1343 = vmatprep.subr.mxu0 0.0
  %1344 = vmatpush1.msra.mxu0 %v67
  %1345 = vmatprep.subr.mxu0 0.0
  %1346 = vmatpush1.msra.mxu0 %v66
  %1347 = vmatprep.subr.mxu0 0.0
  %1348 = vmatpush1.msra.mxu0 %v65
  %1349 = vmatprep.subr.mxu0 0.0
  %1350 = vmatpush2.msra.mxu0 0.0
  %1351 = vmatprep.subr.mxu0 0.0
  %1352 = vmatpush2.msra.mxu0 0.0
  %1353 = vmatprep.subr.mxu0 0.0
  %1354 = vmatpush2.msra.mxu0 0.0
  %1355 = vmatprep.subr.mxu0 0.0
  %1356 = vmatpush2.msra.mxu0 0.0
  %1357 = vmatprep.subr.mxu0 0.0
  %1358 = vmatpush2.msra.mxu0 0.0
  %1359 = vmatprep.subr.mxu0 0.0
  %1360 = vmatpush2.msra.mxu0 0.0
  %1361 = vmatprep.subr.mxu0 0.0
  %1362 = vmatpush2.msra.mxu0 0.0
  %1363 = vmatprep.subr.mxu0 0.0
  %1364 = vmatpush2.msra.mxu0 0.0
  %1365 = vmatprep.subr.mxu0 0.0
  %1366 = vmatpush2.msra.mxu0 0.0
  %1367 = vmatprep.subr.mxu0 0.0
  %1368 = vmatpush2.msra.mxu0 0.0
  %1369 = vmatprep.subr.mxu0 0.0
  %1370 = vmatpush2.msra.mxu0 0.0
  %1371 = vmatprep.subr.mxu0 0.0
  %1372 = vmatpush2.msra.mxu0 0.0
  %1373 = vmatprep.subr.mxu0 0.0
  %1374 = vmatpush2.msra.mxu0 0.0
  %1375 = vmatprep.subr.mxu0 0.0
  %1376 = vmatpush2.msra.mxu0 0.0
  %1377 = vmatprep.subr.mxu0 0.0
  %1378 = vmatpush2.msra.mxu0 0.0
  %1379 = vmatprep.subr.mxu0 0.0
  %1380 = vmatpush2.msra.mxu0 0.0
  %1381 = vmatprep.mubr.f32.mxu0 0.0
  %1382 = vmatmul.mubr.f32.gmra.mxu0 %v1315
  %v1383 = vpop.f32.mrf.mxu0
  %v1384 = vadd.f32 %v1313, %v1383
  %v1385 = vpop.f32.mrf.mxu0
  %1386 = vdwg.mxu0
  %v1387 = vadd.f32 %v1384, %v89
  %v1388 = vtanh.pop %v1387
  %v1389 = vmul.f32 %v1242, %v916
  %v1390 = vsub.f32 1.0, %v1242
  %1392 = vrot.lane.b32.xlu0 %v1388, 32
  %v1393 = vpop.permute.xlu0 %1392
  %v1395 = vmul.f32 %v1390, %v1393
  %v1396 = vadd.f32 %v1389, %v1395
  %1398 = vrot.lane.b32.xlu0 %v1396, 96
  %v1399 = vpop.permute.xlu0 %1398
  %1401 = vrot.lane.b32.xlu0 %v1396, 32
  %v1402 = vpop.permute.xlu0 %1401
  %1404 = vrot.lane.b32.xlu0 %v1396, 64
  %v1405 = vpop.permute.xlu0 %1404
  %v1407 = vsel %vm109, %v1399, %v1396
  %v1408 = vsel %vm278, %v1407, %v1402
  %v1409 = vsel %vm280, %v1408, %v1405
  %v1410 = vmul.f32 %v1409, %v47
  %1411 = vmatprep.subr.mxu0 0.0
  %1412 = vmatpush1.msra.mxu0 0.0
  %1413 = vmatprep.subr.mxu0 0.0
  %1414 = vmatpush1.msra.mxu0 0.0
  %1415 = vmatprep.subr.mxu0 0.0
  %1416 = vmatpush1.msra.mxu0 0.0
  %1417 = vmatprep.subr.mxu0 0.0
  %1418 = vmatpush1.msra.mxu0 0.0
  %1419 = vmatprep.subr.mxu0 0.0
  %1420 = vmatpush1.msra.mxu0 0.0
  %1421 = vmatprep.subr.mxu0 0.0
  %1422 = vmatpush1.msra.mxu0 0.0
  %1423 = vmatprep.subr.mxu0 0.0
  %1424 = vmatpush1.msra.mxu0 0.0
  %1425 = vmatprep.subr.mxu0 0.0
  %1426 = vmatpush1.msra.mxu0 0.0
  %1427 = vmatprep.subr.mxu0 0.0
  %1428 = vmatpush1.msra.mxu0 0.0
  %1429 = vmatprep.subr.mxu0 0.0
  %1430 = vmatpush1.msra.mxu0 0.0
  %1431 = vmatprep.subr.mxu0 0.0
  %1432 = vmatpush1.msra.mxu0 0.0
  %1433 = vmatprep.subr.mxu0 0.0
  %1434 = vmatpush1.msra.mxu0 0.0
  %1435 = vmatprep.subr.mxu0 0.0
  %1436 = vmatpush1.msra.mxu0 %v88
  %1437 = vmatprep.subr.mxu0 0.0
  %1438 = vmatpush1.msra.mxu0 %v87
  %1439 = vmatprep.subr.mxu0 0.0
  %1440 = vmatpush1.msra.mxu0 %v86
  %1441 = vmatprep.subr.mxu0 0.0
  %1442 = vmatpush1.msra.mxu0 %v85
  %1443 = vmatprep.subr.mxu0 0.0
  %1444 = vmatpush2.msra.mxu0 0.0
  %1445 = vmatprep.subr.mxu0 0.0
  %1446 = vmatpush2.msra.mxu0 0.0
  %1447 = vmatprep.subr.mxu0 0.0
  %1448 = vmatpush2.msra.mxu0 0.0
  %1449 = vmatprep.subr.mxu0 0.0
  %1450 = vmatpush2.msra.mxu0 0.0
  %1451 = vmatprep.subr.mxu0 0.0
  %1452 = vmatpush2.msra.mxu0 0.0
  %1453 = vmatprep.subr.mxu0 0.0
  %1454 = vmatpush2.msra.mxu0 0.0
  %1455 = vmatprep.subr.mxu0 0.0
  %1456 = vmatpush2.msra.mxu0 0.0
  %1457 = vmatprep.subr.mxu0 0.0
  %1458 = vmatpush2.msra.mxu0 0.0
  %1459 = vmatprep.subr.mxu0 0.0
  %1460 = vmatpush2.msra.mxu0 0.0
  %1461 = vmatprep.subr.mxu0 0.0
  %1462 = vmatpush2.msra.mxu0 0.0
  %1463 = vmatprep.subr.mxu0 0.0
  %1464 = vmatpush2.msra.mxu0 0.0
  %1465 = vmatprep.subr.mxu0 0.0
  %1466 = vmatpush2.msra.mxu0 0.0
  %1467 = vmatprep.subr.mxu0 0.0
  %1468 = vmatpush2.msra.mxu0 0.0
  %1469 = vmatprep.subr.mxu0 0.0
  %1470 = vmatpush2.msra.mxu0 0.0
  %1471 = vmatprep.subr.mxu0 0.0
  %1472 = vmatpush2.msra.mxu0 0.0
  %1473 = vmatprep.subr.mxu0 0.0
  %1474 = vmatpush2.msra.mxu0 0.0
  %1475 = vmatprep.mubr.f32.mxu0 0.0
  %1476 = vmatmul.mubr.f32.gmra.mxu0 %v1315
  %v1477 = vpop.f32.mrf.mxu0
  %v1478 = vadd.f32 0.0, %v1477
  %v1479 = vpop.f32.mrf.mxu0
  %1480 = vdwg.mxu0
  %1482 = vrot.lane.b32.xlu0 %v1478, 8
  %v1483 = vpop.permute.xlu0 %1482
  %v1485 = vsel %vm102, %v1077, %v1483
  %1486 = vmatprep.subr.mxu0 0.0
  %1487 = vmatpush1.msra.mxu0 %v84
  %1488 = vmatprep.subr.mxu0 0.0
  %1489 = vmatpush1.msra.mxu0 %v83
  %1490 = vmatprep.subr.mxu0 0.0
  %1491 = vmatpush1.msra.mxu0 %v82
  %1492 = vmatprep.subr.mxu0 0.0
  %1493 = vmatpush1.msra.mxu0 %v81
  %1494 = vmatprep.subr.mxu0 0.0
  %1495 = vmatpush1.msra.mxu0 %v80
  %1496 = vmatprep.subr.mxu0 0.0
  %1497 = vmatpush1.msra.mxu0 %v79
  %1498 = vmatprep.subr.mxu0 0.0
  %1499 = vmatpush1.msra.mxu0 %v78
  %1500 = vmatprep.subr.mxu0 0.0
  %1501 = vmatpush1.msra.mxu0 %v77
  %1502 = vmatprep.subr.mxu0 0.0
  %1503 = vmatpush1.msra.mxu0 %v76
  %1504 = vmatprep.subr.mxu0 0.0
  %1505 = vmatpush1.msra.mxu0 %v75
  %1506 = vmatprep.subr.mxu0 0.0
  %1507 = vmatpush1.msra.mxu0 %v74
  %1508 = vmatprep.subr.mxu0 0.0
  %1509 = vmatpush1.msra.mxu0 %v73
  %1510 = vmatprep.subr.mxu0 0.0
  %1511 = vmatpush1.msra.mxu0 %v72
  %1512 = vmatprep.subr.mxu0 0.0
  %1513 = vmatpush1.msra.mxu0 %v71
  %1514 = vmatprep.subr.mxu0 0.0
  %1515 = vmatpush1.msra.mxu0 %v70
  %1516 = vmatprep.subr.mxu0 0.0
  %1517 = vmatpush1.msra.mxu0 %v69
  %1518 = vmatprep.subr.mxu0 0.0
  %1519 = vmatpush2.msra.mxu0 0.0
  %1520 = vmatprep.subr.mxu0 0.0
  %1521 = vmatpush2.msra.mxu0 0.0
  %1522 = vmatprep.subr.mxu0 0.0
  %1523 = vmatpush2.msra.mxu0 0.0
  %1524 = vmatprep.subr.mxu0 0.0
  %1525 = vmatpush2.msra.mxu0 0.0
  %1526 = vmatprep.subr.mxu0 0.0
  %1527 = vmatpush2.msra.mxu0 0.0
  %1528 = vmatprep.subr.mxu0 0.0
  %1529 = vmatpush2.msra.mxu0 0.0
  %1530 = vmatprep.subr.mxu0 0.0
  %1531 = vmatpush2.msra.mxu0 0.0
  %1532 = vmatprep.subr.mxu0 0.0
  %1533 = vmatpush2.msra.mxu0 0.0
  %1534 = vmatprep.subr.mxu0 0.0
  %1535 = vmatpush2.msra.mxu0 0.0
  %1536 = vmatprep.subr.mxu0 0.0
  %1537 = vmatpush2.msra.mxu0 0.0
  %1538 = vmatprep.subr.mxu0 0.0
  %1539 = vmatpush2.msra.mxu0 0.0
  %1540 = vmatprep.subr.mxu0 0.0
  %1541 = vmatpush2.msra.mxu0 0.0
  %1542 = vmatprep.subr.mxu0 0.0
  %1543 = vmatpush2.msra.mxu0 0.0
  %1544 = vmatprep.subr.mxu0 0.0
  %1545 = vmatpush2.msra.mxu0 0.0
  %1546 = vmatprep.subr.mxu0 0.0
  %1547 = vmatpush2.msra.mxu0 0.0
  %1548 = vmatprep.subr.mxu0 0.0
  %1549 = vmatpush2.msra.mxu0 0.0
  %1550 = vmatprep.mubr.f32.mxu0 0.0
  %1551 = vmatmul.mubr.f32.gmra.mxu0 %v1410
  %v1552 = vpop.f32.mrf.mxu0
  %v1553 = vadd.f32 %v1485, %v1552
  %v1554 = vpop.f32.mrf.mxu0
  %1555 = vdwg.mxu0
  %s1556 = scalar_lea.vmem %s0, 12
  %v1557 = vld [vmem:[%s1556] sm:$0xf]
  %1559 = vrot.lane.b32.xlu0 %v1557, 8
  %v1560 = vpop.permute.xlu0 %1559
  %1562 = vrot.lane.b32.xlu0 %v1557, 16
  %v1563 = vpop.permute.xlu0 %1562
  %1565 = vrot.lane.b32.xlu0 %v1557, 24
  %v1566 = vpop.permute.xlu0 %1565
  %v1568 = vsel %vm102, %v1557, %v1560
  %v1569 = vsel %vm104, %v1568, %v1563
  %v1570 = vsel %vm106, %v1569, %v1566
  %v1571 = vmul.f32 %v1570, %v48
  %v1572 = vsel %vm109, %v1399, 0
  %1574 = vmatprep.subr.mxu0 0.0
  %1575 = vmatpush1.msra.mxu0 0.0
  %1576 = vmatprep.subr.mxu0 0.0
  %1577 = vmatpush1.msra.mxu0 0.0
  %1578 = vmatprep.subr.mxu0 0.0
  %1579 = vmatpush1.msra.mxu0 0.0
  %1580 = vmatprep.subr.mxu0 0.0
  %1581 = vmatpush1.msra.mxu0 0.0
  %1582 = vmatprep.subr.mxu0 0.0
  %1583 = vmatpush1.msra.mxu0 0.0
  %1584 = vmatprep.subr.mxu0 0.0
  %1585 = vmatpush1.msra.mxu0 0.0
  %1586 = vmatprep.subr.mxu0 0.0
  %1587 = vmatpush1.msra.mxu0 0.0
  %1588 = vmatprep.subr.mxu0 0.0
  %1589 = vmatpush1.msra.mxu0 0.0
  %1590 = vmatprep.subr.mxu0 0.0
  %1591 = vmatpush1.msra.mxu0 0.0
  %1592 = vmatprep.subr.mxu0 0.0
  %1593 = vmatpush1.msra.mxu0 0.0
  %1594 = vmatprep.subr.mxu0 0.0
  %1595 = vmatpush1.msra.mxu0 0.0
  %1596 = vmatprep.subr.mxu0 0.0
  %1597 = vmatpush1.msra.mxu0 0.0
  %1598 = vmatprep.subr.mxu0 0.0
  %1599 = vmatpush1.msra.mxu0 %v45
  %1600 = vmatprep.subr.mxu0 0.0
  %1601 = vmatpush1.msra.mxu0 %v44
  %1602 = vmatprep.subr.mxu0 0.0
  %1603 = vmatpush1.msra.mxu0 %v43
  %1604 = vmatprep.subr.mxu0 0.0
  %1605 = vmatpush1.msra.mxu0 %v42
  %1606 = vmatprep.subr.mxu0 0.0
  %1607 = vmatpush2.msra.mxu0 0.0
  %1608 = vmatprep.subr.mxu0 0.0
  %1609 = vmatpush2.msra.mxu0 0.0
  %1610 = vmatprep.subr.mxu0 0.0
  %1611 = vmatpush2.msra.mxu0 0.0
  %1612 = vmatprep.subr.mxu0 0.0
  %1613 = vmatpush2.msra.mxu0 0.0
  %1614 = vmatprep.subr.mxu0 0.0
  %1615 = vmatpush2.msra.mxu0 0.0
  %1616 = vmatprep.subr.mxu0 0.0
  %1617 = vmatpush2.msra.mxu0 0.0
  %1618 = vmatprep.subr.mxu0 0.0
  %1619 = vmatpush2.msra.mxu0 0.0
  %1620 = vmatprep.subr.mxu0 0.0
  %1621 = vmatpush2.msra.mxu0 0.0
  %1622 = vmatprep.subr.mxu0 0.0
  %1623 = vmatpush2.msra.mxu0 0.0
  %1624 = vmatprep.subr.mxu0 0.0
  %1625 = vmatpush2.msra.mxu0 0.0
  %1626 = vmatprep.subr.mxu0 0.0
  %1627 = vmatpush2.msra.mxu0 0.0
  %1628 = vmatprep.subr.mxu0 0.0
  %1629 = vmatpush2.msra.mxu0 0.0
  %1630 = vmatprep.subr.mxu0 0.0
  %1631 = vmatpush2.msra.mxu0 0.0
  %1632 = vmatprep.subr.mxu0 0.0
  %1633 = vmatpush2.msra.mxu0 0.0
  %1634 = vmatprep.subr.mxu0 0.0
  %1635 = vmatpush2.msra.mxu0 0.0
  %1636 = vmatprep.subr.mxu0 0.0
  %1637 = vmatpush2.msra.mxu0 0.0
  %1638 = vmatprep.mubr.f32.mxu0 0.0
  %1639 = vmatmul.mubr.f32.gmra.mxu0 %v1572
  %v1640 = vpop.f32.mrf.mxu0
  %v1641 = vadd.f32 0.0, %v1640
  %v1642 = vpop.f32.mrf.mxu0
  %1643 = vdwg.mxu0
  %v1644 = vsel %vm102, %v1557, 0
  %1646 = vmatprep.subr.mxu0 0.0
  %1647 = vmatpush1.msra.mxu0 0.0
  %1648 = vmatprep.subr.mxu0 0.0
  %1649 = vmatpush1.msra.mxu0 0.0
  %1650 = vmatprep.subr.mxu0 0.0
  %1651 = vmatpush1.msra.mxu0 0.0
  %1652 = vmatprep.subr.mxu0 0.0
  %1653 = vmatpush1.msra.mxu0 0.0
  %1654 = vmatprep.subr.mxu0 0.0
  %1655 = vmatpush1.msra.mxu0 0.0
  %1656 = vmatprep.subr.mxu0 0.0
  %1657 = vmatpush1.msra.mxu0 0.0
  %1658 = vmatprep.subr.mxu0 0.0
  %1659 = vmatpush1.msra.mxu0 0.0
  %1660 = vmatprep.subr.mxu0 0.0
  %1661 = vmatpush1.msra.mxu0 0.0
  %1662 = vmatprep.subr.mxu0 0.0
  %1663 = vmatpush1.msra.mxu0 0.0
  %1664 = vmatprep.subr.mxu0 0.0
  %1665 = vmatpush1.msra.mxu0 0.0
  %1666 = vmatprep.subr.mxu0 0.0
  %1667 = vmatpush1.msra.mxu0 0.0
  %1668 = vmatprep.subr.mxu0 0.0
  %1669 = vmatpush1.msra.mxu0 0.0
  %1670 = vmatprep.subr.mxu0 0.0
  %1671 = vmatpush1.msra.mxu0 0.0
  %1672 = vmatprep.subr.mxu0 0.0
  %1673 = vmatpush1.msra.mxu0 0.0
  %1674 = vmatprep.subr.mxu0 0.0
  %1675 = vmatpush1.msra.mxu0 0.0
  %1676 = vmatprep.subr.mxu0 0.0
  %1677 = vmatpush1.msra.mxu0 %v41
  %1678 = vmatprep.subr.mxu0 0.0
  %1679 = vmatpush2.msra.mxu0 0.0
  %1680 = vmatprep.subr.mxu0 0.0
  %1681 = vmatpush2.msra.mxu0 0.0
  %1682 = vmatprep.subr.mxu0 0.0
  %1683 = vmatpush2.msra.mxu0 0.0
  %1684 = vmatprep.subr.mxu0 0.0
  %1685 = vmatpush2.msra.mxu0 0.0
  %1686 = vmatprep.subr.mxu0 0.0
  %1687 = vmatpush2.msra.mxu0 0.0
  %1688 = vmatprep.subr.mxu0 0.0
  %1689 = vmatpush2.msra.mxu0 0.0
  %1690 = vmatprep.subr.mxu0 0.0
  %1691 = vmatpush2.msra.mxu0 0.0
  %1692 = vmatprep.subr.mxu0 0.0
  %1693 = vmatpush2.msra.mxu0 0.0
  %1694 = vmatprep.subr.mxu0 0.0
  %1695 = vmatpush2.msra.mxu0 0.0
  %1696 = vmatprep.subr.mxu0 0.0
  %1697 = vmatpush2.msra.mxu0 0.0
  %1698 = vmatprep.subr.mxu0 0.0
  %1699 = vmatpush2.msra.mxu0 0.0
  %1700 = vmatprep.subr.mxu0 0.0
  %1701 = vmatpush2.msra.mxu0 0.0
  %1702 = vmatprep.subr.mxu0 0.0
  %1703 = vmatpush2.msra.mxu0 0.0
  %1704 = vmatprep.subr.mxu0 0.0
  %1705 = vmatpush2.msra.mxu0 0.0
  %1706 = vmatprep.subr.mxu0 0.0
  %1707 = vmatpush2.msra.mxu0 0.0
  %1708 = vmatprep.subr.mxu0 0.0
  %1709 = vmatpush2.msra.mxu0 0.0
  %1710 = vmatprep.mubr.f32.mxu0 0.0
  %1711 = vmatmul.mubr.f32.gmra.mxu0 %v1644
  %v1712 = vpop.f32.mrf.mxu0
  %v1713 = vadd.f32 %v1641, %v1712
  %v1714 = vpop.f32.mrf.mxu0
  %1715 = vdwg.mxu0
  %v1716 = vadd.f32 %v1713, %v259
  %v1717 = vxor.u32 %v1716, 2147483648
  %v1718 = vmul.f32 %v1717, 1.442695
  %v1719 = vpow.pop %v1718
  %v1720 = vadd.f32 %v1719, 1.0
  %v1721 = vrcp.pop %v1720
  %v1722 = vmul.f32 1.0, %v1721
  %1723 = vmatprep.subr.mxu0 0.0
  %1724 = vmatpush1.msra.mxu0 %v64
  %1725 = vmatprep.subr.mxu0 0.0
  %1726 = vmatpush1.msra.mxu0 %v63
  %1727 = vmatprep.subr.mxu0 0.0
  %1728 = vmatpush1.msra.mxu0 %v62
  %1729 = vmatprep.subr.mxu0 0.0
  %1730 = vmatpush1.msra.mxu0 %v61
  %1731 = vmatprep.subr.mxu0 0.0
  %1732 = vmatpush1.msra.mxu0 %v60
  %1733 = vmatprep.subr.mxu0 0.0
  %1734 = vmatpush1.msra.mxu0 %v59
  %1735 = vmatprep.subr.mxu0 0.0
  %1736 = vmatpush1.msra.mxu0 %v58
  %1737 = vmatprep.subr.mxu0 0.0
  %1738 = vmatpush1.msra.mxu0 %v57
  %1739 = vmatprep.subr.mxu0 0.0
  %1740 = vmatpush1.msra.mxu0 %v56
  %1741 = vmatprep.subr.mxu0 0.0
  %1742 = vmatpush1.msra.mxu0 %v55
  %1743 = vmatprep.subr.mxu0 0.0
  %1744 = vmatpush1.msra.mxu0 %v54
  %1745 = vmatprep.subr.mxu0 0.0
  %1746 = vmatpush1.msra.mxu0 %v53
  %1747 = vmatprep.subr.mxu0 0.0
  %1748 = vmatpush1.msra.mxu0 %v52
  %1749 = vmatprep.subr.mxu0 0.0
  %1750 = vmatpush1.msra.mxu0 %v51
  %1751 = vmatprep.subr.mxu0 0.0
  %1752 = vmatpush1.msra.mxu0 %v50
  %1753 = vmatprep.subr.mxu0 0.0
  %1754 = vmatpush1.msra.mxu0 %v49
  %1755 = vmatprep.subr.mxu0 0.0
  %1756 = vmatpush2.msra.mxu0 0.0
  %1757 = vmatprep.subr.mxu0 0.0
  %1758 = vmatpush2.msra.mxu0 0.0
  %1759 = vmatprep.subr.mxu0 0.0
  %1760 = vmatpush2.msra.mxu0 0.0
  %1761 = vmatprep.subr.mxu0 0.0
  %1762 = vmatpush2.msra.mxu0 0.0
  %1763 = vmatprep.subr.mxu0 0.0
  %1764 = vmatpush2.msra.mxu0 0.0
  %1765 = vmatprep.subr.mxu0 0.0
  %1766 = vmatpush2.msra.mxu0 0.0
  %1767 = vmatprep.subr.mxu0 0.0
  %1768 = vmatpush2.msra.mxu0 0.0
  %1769 = vmatprep.subr.mxu0 0.0
  %1770 = vmatpush2.msra.mxu0 0.0
  %1771 = vmatprep.subr.mxu0 0.0
  %1772 = vmatpush2.msra.mxu0 0.0
  %1773 = vmatprep.subr.mxu0 0.0
  %1774 = vmatpush2.msra.mxu0 0.0
  %1775 = vmatprep.subr.mxu0 0.0
  %1776 = vmatpush2.msra.mxu0 0.0
  %1777 = vmatprep.subr.mxu0 0.0
  %1778 = vmatpush2.msra.mxu0 0.0
  %1779 = vmatprep.subr.mxu0 0.0
  %1780 = vmatpush2.msra.mxu0 0.0
  %1781 = vmatprep.subr.mxu0 0.0
  %1782 = vmatpush2.msra.mxu0 0.0
  %1783 = vmatprep.subr.mxu0 0.0
  %1784 = vmatpush2.msra.mxu0 0.0
  %1785 = vmatprep.subr.mxu0 0.0
  %1786 = vmatpush2.msra.mxu0 0.0
  %1787 = vmatprep.mubr.f32.mxu0 0.0
  %1788 = vmatmul.mubr.f32.gmra.mxu0 %v1410
  %v1789 = vpop.f32.mrf.mxu0
  %v1790 = vadd.f32 0.0, %v1789
  %v1791 = vpop.f32.mrf.mxu0
  %1792 = vdwg.mxu0
  %v1793 = vmul.f32 %v1722, %v1790
  %v1795 = vsel %vm109, %v1571, 0
  %1797 = vmatprep.subr.mxu0 0.0
  %1798 = vmatpush1.msra.mxu0 0.0
  %1799 = vmatprep.subr.mxu0 0.0
  %1800 = vmatpush1.msra.mxu0 0.0
  %1801 = vmatprep.subr.mxu0 0.0
  %1802 = vmatpush1.msra.mxu0 0.0
  %1803 = vmatprep.subr.mxu0 0.0
  %1804 = vmatpush1.msra.mxu0 0.0
  %1805 = vmatprep.subr.mxu0 0.0
  %1806 = vmatpush1.msra.mxu0 0.0
  %1807 = vmatprep.subr.mxu0 0.0
  %1808 = vmatpush1.msra.mxu0 0.0
  %1809 = vmatprep.subr.mxu0 0.0
  %1810 = vmatpush1.msra.mxu0 0.0
  %1811 = vmatprep.subr.mxu0 0.0
  %1812 = vmatpush1.msra.mxu0 0.0
  %1813 = vmatprep.subr.mxu0 0.0
  %1814 = vmatpush1.msra.mxu0 0.0
  %1815 = vmatprep.subr.mxu0 0.0
  %1816 = vmatpush1.msra.mxu0 0.0
  %1817 = vmatprep.subr.mxu0 0.0
  %1818 = vmatpush1.msra.mxu0 0.0
  %1819 = vmatprep.subr.mxu0 0.0
  %1820 = vmatpush1.msra.mxu0 0.0
  %1821 = vmatprep.subr.mxu0 0.0
  %1822 = vmatpush1.msra.mxu0 %v68
  %1823 = vmatprep.subr.mxu0 0.0
  %1824 = vmatpush1.msra.mxu0 %v67
  %1825 = vmatprep.subr.mxu0 0.0
  %1826 = vmatpush1.msra.mxu0 %v66
  %1827 = vmatprep.subr.mxu0 0.0
  %1828 = vmatpush1.msra.mxu0 %v65
  %1829 = vmatprep.subr.mxu0 0.0
  %1830 = vmatpush2.msra.mxu0 0.0
  %1831 = vmatprep.subr.mxu0 0.0
  %1832 = vmatpush2.msra.mxu0 0.0
  %1833 = vmatprep.subr.mxu0 0.0
  %1834 = vmatpush2.msra.mxu0 0.0
  %1835 = vmatprep.subr.mxu0 0.0
  %1836 = vmatpush2.msra.mxu0 0.0
  %1837 = vmatprep.subr.mxu0 0.0
  %1838 = vmatpush2.msra.mxu0 0.0
  %1839 = vmatprep.subr.mxu0 0.0
  %1840 = vmatpush2.msra.mxu0 0.0
  %1841 = vmatprep.subr.mxu0 0.0
  %1842 = vmatpush2.msra.mxu0 0.0
  %1843 = vmatprep.subr.mxu0 0.0
  %1844 = vmatpush2.msra.mxu0 0.0
  %1845 = vmatprep.subr.mxu0 0.0
  %1846 = vmatpush2.msra.mxu0 0.0
  %1847 = vmatprep.subr.mxu0 0.0
  %1848 = vmatpush2.msra.mxu0 0.0
  %1849 = vmatprep.subr.mxu0 0.0
  %1850 = vmatpush2.msra.mxu0 0.0
  %1851 = vmatprep.subr.mxu0 0.0
  %1852 = vmatpush2.msra.mxu0 0.0
  %1853 = vmatprep.subr.mxu0 0.0
  %1854 = vmatpush2.msra.mxu0 0.0
  %1855 = vmatprep.subr.mxu0 0.0
  %1856 = vmatpush2.msra.mxu0 0.0
  %1857 = vmatprep.subr.mxu0 0.0
  %1858 = vmatpush2.msra.mxu0 0.0
  %1859 = vmatprep.subr.mxu0 0.0
  %1860 = vmatpush2.msra.mxu0 0.0
  %1861 = vmatprep.mubr.f32.mxu0 0.0
  %1862 = vmatmul.mubr.f32.gmra.mxu0 %v1795
  %v1863 = vpop.f32.mrf.mxu0
  %v1864 = vadd.f32 %v1793, %v1863
  %v1865 = vpop.f32.mrf.mxu0
  %1866 = vdwg.mxu0
  %v1867 = vadd.f32 %v1864, %v89
  %v1868 = vtanh.pop %v1867
  %v1869 = vmul.f32 %v1722, %v1396
  %v1870 = vsub.f32 1.0, %v1722
  %1872 = vrot.lane.b32.xlu0 %v1868, 32
  %v1873 = vpop.permute.xlu0 %1872
  %v1875 = vmul.f32 %v1870, %v1873
  %v1876 = vadd.f32 %v1869, %v1875
  %1878 = vrot.lane.b32.xlu0 %v1876, 96
  %v1879 = vpop.permute.xlu0 %1878
  %1881 = vrot.lane.b32.xlu0 %v1876, 32
  %v1882 = vpop.permute.xlu0 %1881
  %1884 = vrot.lane.b32.xlu0 %v1876, 64
  %v1885 = vpop.permute.xlu0 %1884
  %v1887 = vsel %vm109, %v1879, %v1876
  %v1888 = vsel %vm278, %v1887, %v1882
  %v1889 = vsel %vm280, %v1888, %v1885
  %v1890 = vmul.f32 %v1889, %v47
  %1891 = vmatprep.subr.mxu0 0.0
  %1892 = vmatpush1.msra.mxu0 0.0
  %1893 = vmatprep.subr.mxu0 0.0
  %1894 = vmatpush1.msra.mxu0 0.0
  %1895 = vmatprep.subr.mxu0 0.0
  %1896 = vmatpush1.msra.mxu0 0.0
  %1897 = vmatprep.subr.mxu0 0.0
  %1898 = vmatpush1.msra.mxu0 0.0
  %1899 = vmatprep.subr.mxu0 0.0
  %1900 = vmatpush1.msra.mxu0 0.0
  %1901 = vmatprep.subr.mxu0 0.0
  %1902 = vmatpush1.msra.mxu0 0.0
  %1903 = vmatprep.subr.mxu0 0.0
  %1904 = vmatpush1.msra.mxu0 0.0
  %1905 = vmatprep.subr.mxu0 0.0
  %1906 = vmatpush1.msra.mxu0 0.0
  %1907 = vmatprep.subr.mxu0 0.0
  %1908 = vmatpush1.msra.mxu0 0.0
  %1909 = vmatprep.subr.mxu0 0.0
  %1910 = vmatpush1.msra.mxu0 0.0
  %1911 = vmatprep.subr.mxu0 0.0
  %1912 = vmatpush1.msra.mxu0 0.0
  %1913 = vmatprep.subr.mxu0 0.0
  %1914 = vmatpush1.msra.mxu0 0.0
  %1915 = vmatprep.subr.mxu0 0.0
  %1916 = vmatpush1.msra.mxu0 %v88
  %1917 = vmatprep.subr.mxu0 0.0
  %1918 = vmatpush1.msra.mxu0 %v87
  %1919 = vmatprep.subr.mxu0 0.0
  %1920 = vmatpush1.msra.mxu0 %v86
  %1921 = vmatprep.subr.mxu0 0.0
  %1922 = vmatpush1.msra.mxu0 %v85
  %1923 = vmatprep.subr.mxu0 0.0
  %1924 = vmatpush2.msra.mxu0 0.0
  %1925 = vmatprep.subr.mxu0 0.0
  %1926 = vmatpush2.msra.mxu0 0.0
  %1927 = vmatprep.subr.mxu0 0.0
  %1928 = vmatpush2.msra.mxu0 0.0
  %1929 = vmatprep.subr.mxu0 0.0
  %1930 = vmatpush2.msra.mxu0 0.0
  %1931 = vmatprep.subr.mxu0 0.0
  %1932 = vmatpush2.msra.mxu0 0.0
  %1933 = vmatprep.subr.mxu0 0.0
  %1934 = vmatpush2.msra.mxu0 0.0
  %1935 = vmatprep.subr.mxu0 0.0
  %1936 = vmatpush2.msra.mxu0 0.0
  %1937 = vmatprep.subr.mxu0 0.0
  %1938 = vmatpush2.msra.mxu0 0.0
  %1939 = vmatprep.subr.mxu0 0.0
  %1940 = vmatpush2.msra.mxu0 0.0
  %1941 = vmatprep.subr.mxu0 0.0
  %1942 = vmatpush2.msra.mxu0 0.0
  %1943 = vmatprep.subr.mxu0 0.0
  %1944 = vmatpush2.msra.mxu0 0.0
  %1945 = vmatprep.subr.mxu0 0.0
  %1946 = vmatpush2.msra.mxu0 0.0
  %1947 = vmatprep.subr.mxu0 0.0
  %1948 = vmatpush2.msra.mxu0 0.0
  %1949 = vmatprep.subr.mxu0 0.0
  %1950 = vmatpush2.msra.mxu0 0.0
  %1951 = vmatprep.subr.mxu0 0.0
  %1952 = vmatpush2.msra.mxu0 0.0
  %1953 = vmatprep.subr.mxu0 0.0
  %1954 = vmatpush2.msra.mxu0 0.0
  %1955 = vmatprep.mubr.f32.mxu0 0.0
  %1956 = vmatmul.mubr.f32.gmra.mxu0 %v1795
  %v1957 = vpop.f32.mrf.mxu0
  %v1958 = vadd.f32 0.0, %v1957
  %v1959 = vpop.f32.mrf.mxu0
  %1960 = vdwg.mxu0
  %1962 = vrot.lane.b32.xlu0 %v1958, 8
  %v1963 = vpop.permute.xlu0 %1962
  %v1965 = vsel %vm102, %v1557, %v1963
  %1966 = vmatprep.subr.mxu0 0.0
  %1967 = vmatpush1.msra.mxu0 %v84
  %1968 = vmatprep.subr.mxu0 0.0
  %1969 = vmatpush1.msra.mxu0 %v83
  %1970 = vmatprep.subr.mxu0 0.0
  %1971 = vmatpush1.msra.mxu0 %v82
  %1972 = vmatprep.subr.mxu0 0.0
  %1973 = vmatpush1.msra.mxu0 %v81
  %1974 = vmatprep.subr.mxu0 0.0
  %1975 = vmatpush1.msra.mxu0 %v80
  %1976 = vmatprep.subr.mxu0 0.0
  %1977 = vmatpush1.msra.mxu0 %v79
  %1978 = vmatprep.subr.mxu0 0.0
  %1979 = vmatpush1.msra.mxu0 %v78
  %1980 = vmatprep.subr.mxu0 0.0
  %1981 = vmatpush1.msra.mxu0 %v77
  %1982 = vmatprep.subr.mxu0 0.0
  %1983 = vmatpush1.msra.mxu0 %v76
  %1984 = vmatprep.subr.mxu0 0.0
  %1985 = vmatpush1.msra.mxu0 %v75
  %1986 = vmatprep.subr.mxu0 0.0
  %1987 = vmatpush1.msra.mxu0 %v74
  %1988 = vmatprep.subr.mxu0 0.0
  %1989 = vmatpush1.msra.mxu0 %v73
  %1990 = vmatprep.subr.mxu0 0.0
  %1991 = vmatpush1.msra.mxu0 %v72
  %1992 = vmatprep.subr.mxu0 0.0
  %1993 = vmatpush1.msra.mxu0 %v71
  %1994 = vmatprep.subr.mxu0 0.0
  %1995 = vmatpush1.msra.mxu0 %v70
  %1996 = vmatprep.subr.mxu0 0.0
  %1997 = vmatpush1.msra.mxu0 %v69
  %1998 = vmatprep.subr.mxu0 0.0
  %1999 = vmatpush2.msra.mxu0 0.0
  %2000 = vmatprep.subr.mxu0 0.0
  %2001 = vmatpush2.msra.mxu0 0.0
  %2002 = vmatprep.subr.mxu0 0.0
  %2003 = vmatpush2.msra.mxu0 0.0
  %2004 = vmatprep.subr.mxu0 0.0
  %2005 = vmatpush2.msra.mxu0 0.0
  %2006 = vmatprep.subr.mxu0 0.0
  %2007 = vmatpush2.msra.mxu0 0.0
  %2008 = vmatprep.subr.mxu0 0.0
  %2009 = vmatpush2.msra.mxu0 0.0
  %2010 = vmatprep.subr.mxu0 0.0
  %2011 = vmatpush2.msra.mxu0 0.0
  %2012 = vmatprep.subr.mxu0 0.0
  %2013 = vmatpush2.msra.mxu0 0.0
  %2014 = vmatprep.subr.mxu0 0.0
  %2015 = vmatpush2.msra.mxu0 0.0
  %2016 = vmatprep.subr.mxu0 0.0
  %2017 = vmatpush2.msra.mxu0 0.0
  %2018 = vmatprep.subr.mxu0 0.0
  %2019 = vmatpush2.msra.mxu0 0.0
  %2020 = vmatprep.subr.mxu0 0.0
  %2021 = vmatpush2.msra.mxu0 0.0
  %2022 = vmatprep.subr.mxu0 0.0
  %2023 = vmatpush2.msra.mxu0 0.0
  %2024 = vmatprep.subr.mxu0 0.0
  %2025 = vmatpush2.msra.mxu0 0.0
  %2026 = vmatprep.subr.mxu0 0.0
  %2027 = vmatpush2.msra.mxu0 0.0
  %2028 = vmatprep.subr.mxu0 0.0
  %2029 = vmatpush2.msra.mxu0 0.0
  %2030 = vmatprep.mubr.f32.mxu0 0.0
  %2031 = vmatmul.mubr.f32.gmra.mxu0 %v1890
  %v2032 = vpop.f32.mrf.mxu0
  %v2033 = vadd.f32 %v1965, %v2032
  %v2034 = vpop.f32.mrf.mxu0
  %2035 = vdwg.mxu0
  %s2036 = scalar_lea.vmem %s0, 16
  %v2037 = vld [vmem:[%s2036] sm:$0xf]
  %2039 = vrot.lane.b32.xlu0 %v2037, 8
  %v2040 = vpop.permute.xlu0 %2039
  %2042 = vrot.lane.b32.xlu0 %v2037, 16
  %v2043 = vpop.permute.xlu0 %2042
  %2045 = vrot.lane.b32.xlu0 %v2037, 24
  %v2046 = vpop.permute.xlu0 %2045
  %v2048 = vsel %vm102, %v2037, %v2040
  %v2049 = vsel %vm104, %v2048, %v2043
  %v2050 = vsel %vm106, %v2049, %v2046
  %v2051 = vmul.f32 %v2050, %v48
  %v2052 = vsel %vm109, %v1879, 0
  %2054 = vmatprep.subr.mxu0 0.0
  %2055 = vmatpush1.msra.mxu0 0.0
  %2056 = vmatprep.subr.mxu0 0.0
  %2057 = vmatpush1.msra.mxu0 0.0
  %2058 = vmatprep.subr.mxu0 0.0
  %2059 = vmatpush1.msra.mxu0 0.0
  %2060 = vmatprep.subr.mxu0 0.0
  %2061 = vmatpush1.msra.mxu0 0.0
  %2062 = vmatprep.subr.mxu0 0.0
  %2063 = vmatpush1.msra.mxu0 0.0
  %2064 = vmatprep.subr.mxu0 0.0
  %2065 = vmatpush1.msra.mxu0 0.0
  %2066 = vmatprep.subr.mxu0 0.0
  %2067 = vmatpush1.msra.mxu0 0.0
  %2068 = vmatprep.subr.mxu0 0.0
  %2069 = vmatpush1.msra.mxu0 0.0
  %2070 = vmatprep.subr.mxu0 0.0
  %2071 = vmatpush1.msra.mxu0 0.0
  %2072 = vmatprep.subr.mxu0 0.0
  %2073 = vmatpush1.msra.mxu0 0.0
  %2074 = vmatprep.subr.mxu0 0.0
  %2075 = vmatpush1.msra.mxu0 0.0
  %2076 = vmatprep.subr.mxu0 0.0
  %2077 = vmatpush1.msra.mxu0 0.0
  %2078 = vmatprep.subr.mxu0 0.0
  %2079 = vmatpush1.msra.mxu0 %v45
  %2080 = vmatprep.subr.mxu0 0.0
  %2081 = vmatpush1.msra.mxu0 %v44
  %2082 = vmatprep.subr.mxu0 0.0
  %2083 = vmatpush1.msra.mxu0 %v43
  %2084 = vmatprep.subr.mxu0 0.0
  %2085 = vmatpush1.msra.mxu0 %v42
  %2086 = vmatprep.subr.mxu0 0.0
  %2087 = vmatpush2.msra.mxu0 0.0
  %2088 = vmatprep.subr.mxu0 0.0
  %2089 = vmatpush2.msra.mxu0 0.0
  %2090 = vmatprep.subr.mxu0 0.0
  %2091 = vmatpush2.msra.mxu0 0.0
  %2092 = vmatprep.subr.mxu0 0.0
  %2093 = vmatpush2.msra.mxu0 0.0
  %2094 = vmatprep.subr.mxu0 0.0
  %2095 = vmatpush2.msra.mxu0 0.0
  %2096 = vmatprep.subr.mxu0 0.0
  %2097 = vmatpush2.msra.mxu0 0.0
  %2098 = vmatprep.subr.mxu0 0.0
  %2099 = vmatpush2.msra.mxu0 0.0
  %2100 = vmatprep.subr.mxu0 0.0
  %2101 = vmatpush2.msra.mxu0 0.0
  %2102 = vmatprep.subr.mxu0 0.0
  %2103 = vmatpush2.msra.mxu0 0.0
  %2104 = vmatprep.subr.mxu0 0.0
  %2105 = vmatpush2.msra.mxu0 0.0
  %2106 = vmatprep.subr.mxu0 0.0
  %2107 = vmatpush2.msra.mxu0 0.0
  %2108 = vmatprep.subr.mxu0 0.0
  %2109 = vmatpush2.msra.mxu0 0.0
  %2110 = vmatprep.subr.mxu0 0.0
  %2111 = vmatpush2.msra.mxu0 0.0
  %2112 = vmatprep.subr.mxu0 0.0
  %2113 = vmatpush2.msra.mxu0 0.0
  %2114 = vmatprep.subr.mxu0 0.0
  %2115 = vmatpush2.msra.mxu0 0.0
  %2116 = vmatprep.subr.mxu0 0.0
  %2117 = vmatpush2.msra.mxu0 0.0
  %2118 = vmatprep.mubr.f32.mxu0 0.0
  %2119 = vmatmul.mubr.f32.gmra.mxu0 %v2052
  %v2120 = vpop.f32.mrf.mxu0
  %v2121 = vadd.f32 0.0, %v2120
  %v2122 = vpop.f32.mrf.mxu0
  %2123 = vdwg.mxu0
  %v2124 = vsel %vm102, %v2037, 0
  %2126 = vmatprep.subr.mxu0 0.0
  %2127 = vmatpush1.msra.mxu0 0.0
  %2128 = vmatprep.subr.mxu0 0.0
  %2129 = vmatpush1.msra.mxu0 0.0
  %2130 = vmatprep.subr.mxu0 0.0
  %2131 = vmatpush1.msra.mxu0 0.0
  %2132 = vmatprep.subr.mxu0 0.0
  %2133 = vmatpush1.msra.mxu0 0.0
  %2134 = vmatprep.subr.mxu0 0.0
  %2135 = vmatpush1.msra.mxu0 0.0
  %2136 = vmatprep.subr.mxu0 0.0
  %2137 = vmatpush1.msra.mxu0 0.0
  %2138 = vmatprep.subr.mxu0 0.0
  %2139 = vmatpush1.msra.mxu0 0.0
  %2140 = vmatprep.subr.mxu0 0.0
  %2141 = vmatpush1.msra.mxu0 0.0
  %2142 = vmatprep.subr.mxu0 0.0
  %2143 = vmatpush1.msra.mxu0 0.0
  %2144 = vmatprep.subr.mxu0 0.0
  %2145 = vmatpush1.msra.mxu0 0.0
  %2146 = vmatprep.subr.mxu0 0.0
  %2147 = vmatpush1.msra.mxu0 0.0
  %2148 = vmatprep.subr.mxu0 0.0
  %2149 = vmatpush1.msra.mxu0 0.0
  %2150 = vmatprep.subr.mxu0 0.0
  %2151 = vmatpush1.msra.mxu0 0.0
  %2152 = vmatprep.subr.mxu0 0.0
  %2153 = vmatpush1.msra.mxu0 0.0
  %2154 = vmatprep.subr.mxu0 0.0
  %2155 = vmatpush1.msra.mxu0 0.0
  %2156 = vmatprep.subr.mxu0 0.0
  %2157 = vmatpush1.msra.mxu0 %v41
  %2158 = vmatprep.subr.mxu0 0.0
  %2159 = vmatpush2.msra.mxu0 0.0
  %2160 = vmatprep.subr.mxu0 0.0
  %2161 = vmatpush2.msra.mxu0 0.0
  %2162 = vmatprep.subr.mxu0 0.0
  %2163 = vmatpush2.msra.mxu0 0.0
  %2164 = vmatprep.subr.mxu0 0.0
  %2165 = vmatpush2.msra.mxu0 0.0
  %2166 = vmatprep.subr.mxu0 0.0
  %2167 = vmatpush2.msra.mxu0 0.0
  %2168 = vmatprep.subr.mxu0 0.0
  %2169 = vmatpush2.msra.mxu0 0.0
  %2170 = vmatprep.subr.mxu0 0.0
  %2171 = vmatpush2.msra.mxu0 0.0
  %2172 = vmatprep.subr.mxu0 0.0
  %2173 = vmatpush2.msra.mxu0 0.0
  %2174 = vmatprep.subr.mxu0 0.0
  %2175 = vmatpush2.msra.mxu0 0.0
  %2176 = vmatprep.subr.mxu0 0.0
  %2177 = vmatpush2.msra.mxu0 0.0
  %2178 = vmatprep.subr.mxu0 0.0
  %2179 = vmatpush2.msra.mxu0 0.0
  %2180 = vmatprep.subr.mxu0 0.0
  %2181 = vmatpush2.msra.mxu0 0.0
  %2182 = vmatprep.subr.mxu0 0.0
  %2183 = vmatpush2.msra.mxu0 0.0
  %2184 = vmatprep.subr.mxu0 0.0
  %2185 = vmatpush2.msra.mxu0 0.0
  %2186 = vmatprep.subr.mxu0 0.0
  %2187 = vmatpush2.msra.mxu0 0.0
  %2188 = vmatprep.subr.mxu0 0.0
  %2189 = vmatpush2.msra.mxu0 0.0
  %2190 = vmatprep.mubr.f32.mxu0 0.0
  %2191 = vmatmul.mubr.f32.gmra.mxu0 %v2124
  %v2192 = vpop.f32.mrf.mxu0
  %v2193 = vadd.f32 %v2121, %v2192
  %v2194 = vpop.f32.mrf.mxu0
  %2195 = vdwg.mxu0
  %v2196 = vadd.f32 %v2193, %v259
  %v2197 = vxor.u32 %v2196, 2147483648
  %v2198 = vmul.f32 %v2197, 1.442695
  %v2199 = vpow.pop %v2198
  %v2200 = vadd.f32 %v2199, 1.0
  %v2201 = vrcp.pop %v2200
  %v2202 = vmul.f32 1.0, %v2201
  %2203 = vmatprep.subr.mxu0 0.0
  %2204 = vmatpush1.msra.mxu0 %v64
  %2205 = vmatprep.subr.mxu0 0.0
  %2206 = vmatpush1.msra.mxu0 %v63
  %2207 = vmatprep.subr.mxu0 0.0
  %2208 = vmatpush1.msra.mxu0 %v62
  %2209 = vmatprep.subr.mxu0 0.0
  %2210 = vmatpush1.msra.mxu0 %v61
  %2211 = vmatprep.subr.mxu0 0.0
  %2212 = vmatpush1.msra.mxu0 %v60
  %2213 = vmatprep.subr.mxu0 0.0
  %2214 = vmatpush1.msra.mxu0 %v59
  %2215 = vmatprep.subr.mxu0 0.0
  %2216 = vmatpush1.msra.mxu0 %v58
  %2217 = vmatprep.subr.mxu0 0.0
  %2218 = vmatpush1.msra.mxu0 %v57
  %2219 = vmatprep.subr.mxu0 0.0
  %2220 = vmatpush1.msra.mxu0 %v56
  %2221 = vmatprep.subr.mxu0 0.0
  %2222 = vmatpush1.msra.mxu0 %v55
  %2223 = vmatprep.subr.mxu0 0.0
  %2224 = vmatpush1.msra.mxu0 %v54
  %2225 = vmatprep.subr.mxu0 0.0
  %2226 = vmatpush1.msra.mxu0 %v53
  %2227 = vmatprep.subr.mxu0 0.0
  %2228 = vmatpush1.msra.mxu0 %v52
  %2229 = vmatprep.subr.mxu0 0.0
  %2230 = vmatpush1.msra.mxu0 %v51
  %2231 = vmatprep.subr.mxu0 0.0
  %2232 = vmatpush1.msra.mxu0 %v50
  %2233 = vmatprep.subr.mxu0 0.0
  %2234 = vmatpush1.msra.mxu0 %v49
  %2235 = vmatprep.subr.mxu0 0.0
  %2236 = vmatpush2.msra.mxu0 0.0
  %2237 = vmatprep.subr.mxu0 0.0
  %2238 = vmatpush2.msra.mxu0 0.0
  %2239 = vmatprep.subr.mxu0 0.0
  %2240 = vmatpush2.msra.mxu0 0.0
  %2241 = vmatprep.subr.mxu0 0.0
  %2242 = vmatpush2.msra.mxu0 0.0
  %2243 = vmatprep.subr.mxu0 0.0
  %2244 = vmatpush2.msra.mxu0 0.0
  %2245 = vmatprep.subr.mxu0 0.0
  %2246 = vmatpush2.msra.mxu0 0.0
  %2247 = vmatprep.subr.mxu0 0.0
  %2248 = vmatpush2.msra.mxu0 0.0
  %2249 = vmatprep.subr.mxu0 0.0
  %2250 = vmatpush2.msra.mxu0 0.0
  %2251 = vmatprep.subr.mxu0 0.0
  %2252 = vmatpush2.msra.mxu0 0.0
  %2253 = vmatprep.subr.mxu0 0.0
  %2254 = vmatpush2.msra.mxu0 0.0
  %2255 = vmatprep.subr.mxu0 0.0
  %2256 = vmatpush2.msra.mxu0 0.0
  %2257 = vmatprep.subr.mxu0 0.0
  %2258 = vmatpush2.msra.mxu0 0.0
  %2259 = vmatprep.subr.mxu0 0.0
  %2260 = vmatpush2.msra.mxu0 0.0
  %2261 = vmatprep.subr.mxu0 0.0
  %2262 = vmatpush2.msra.mxu0 0.0
  %2263 = vmatprep.subr.mxu0 0.0
  %2264 = vmatpush2.msra.mxu0 0.0
  %2265 = vmatprep.subr.mxu0 0.0
  %2266 = vmatpush2.msra.mxu0 0.0
  %2267 = vmatprep.mubr.f32.mxu0 0.0
  %2268 = vmatmul.mubr.f32.gmra.mxu0 %v1890
  %v2269 = vpop.f32.mrf.mxu0
  %v2270 = vadd.f32 0.0, %v2269
  %v2271 = vpop.f32.mrf.mxu0
  %2272 = vdwg.mxu0
  %v2273 = vmul.f32 %v2202, %v2270
  %v2275 = vsel %vm109, %v2051, 0
  %2277 = vmatprep.subr.mxu0 0.0
  %2278 = vmatpush1.msra.mxu0 0.0
  %2279 = vmatprep.subr.mxu0 0.0
  %2280 = vmatpush1.msra.mxu0 0.0
  %2281 = vmatprep.subr.mxu0 0.0
  %2282 = vmatpush1.msra.mxu0 0.0
  %2283 = vmatprep.subr.mxu0 0.0
  %2284 = vmatpush1.msra.mxu0 0.0
  %2285 = vmatprep.subr.mxu0 0.0
  %2286 = vmatpush1.msra.mxu0 0.0
  %2287 = vmatprep.subr.mxu0 0.0
  %2288 = vmatpush1.msra.mxu0 0.0
  %2289 = vmatprep.subr.mxu0 0.0
  %2290 = vmatpush1.msra.mxu0 0.0
  %2291 = vmatprep.subr.mxu0 0.0
  %2292 = vmatpush1.msra.mxu0 0.0
  %2293 = vmatprep.subr.mxu0 0.0
  %2294 = vmatpush1.msra.mxu0 0.0
  %2295 = vmatprep.subr.mxu0 0.0
  %2296 = vmatpush1.msra.mxu0 0.0
  %2297 = vmatprep.subr.mxu0 0.0
  %2298 = vmatpush1.msra.mxu0 0.0
  %2299 = vmatprep.subr.mxu0 0.0
  %2300 = vmatpush1.msra.mxu0 0.0
  %2301 = vmatprep.subr.mxu0 0.0
  %2302 = vmatpush1.msra.mxu0 %v68
  %2303 = vmatprep.subr.mxu0 0.0
  %2304 = vmatpush1.msra.mxu0 %v67
  %2305 = vmatprep.subr.mxu0 0.0
  %2306 = vmatpush1.msra.mxu0 %v66
  %2307 = vmatprep.subr.mxu0 0.0
  %2308 = vmatpush1.msra.mxu0 %v65
  %2309 = vmatprep.subr.mxu0 0.0
  %2310 = vmatpush2.msra.mxu0 0.0
  %2311 = vmatprep.subr.mxu0 0.0
  %2312 = vmatpush2.msra.mxu0 0.0
  %2313 = vmatprep.subr.mxu0 0.0
  %2314 = vmatpush2.msra.mxu0 0.0
  %2315 = vmatprep.subr.mxu0 0.0
  %2316 = vmatpush2.msra.mxu0 0.0
  %2317 = vmatprep.subr.mxu0 0.0
  %2318 = vmatpush2.msra.mxu0 0.0
  %2319 = vmatprep.subr.mxu0 0.0
  %2320 = vmatpush2.msra.mxu0 0.0
  %2321 = vmatprep.subr.mxu0 0.0
  %2322 = vmatpush2.msra.mxu0 0.0
  %2323 = vmatprep.subr.mxu0 0.0
  %2324 = vmatpush2.msra.mxu0 0.0
  %2325 = vmatprep.subr.mxu0 0.0
  %2326 = vmatpush2.msra.mxu0 0.0
  %2327 = vmatprep.subr.mxu0 0.0
  %2328 = vmatpush2.msra.mxu0 0.0
  %2329 = vmatprep.subr.mxu0 0.0
  %2330 = vmatpush2.msra.mxu0 0.0
  %2331 = vmatprep.subr.mxu0 0.0
  %2332 = vmatpush2.msra.mxu0 0.0
  %2333 = vmatprep.subr.mxu0 0.0
  %2334 = vmatpush2.msra.mxu0 0.0
  %2335 = vmatprep.subr.mxu0 0.0
  %2336 = vmatpush2.msra.mxu0 0.0
  %2337 = vmatprep.subr.mxu0 0.0
  %2338 = vmatpush2.msra.mxu0 0.0
  %2339 = vmatprep.subr.mxu0 0.0
  %2340 = vmatpush2.msra.mxu0 0.0
  %2341 = vmatprep.mubr.f32.mxu0 0.0
  %2342 = vmatmul.mubr.f32.gmra.mxu0 %v2275
  %v2343 = vpop.f32.mrf.mxu0
  %v2344 = vadd.f32 %v2273, %v2343
  %v2345 = vpop.f32.mrf.mxu0
  %2346 = vdwg.mxu0
  %v2347 = vadd.f32 %v2344, %v89
  %v2348 = vtanh.pop %v2347
  %v2349 = vmul.f32 %v2202, %v1876
  %v2350 = vsub.f32 1.0, %v2202
  %2352 = vrot.lane.b32.xlu0 %v2348, 32
  %v2353 = vpop.permute.xlu0 %2352
  %v2355 = vmul.f32 %v2350, %v2353
  %v2356 = vadd.f32 %v2349, %v2355
  %2358 = vrot.lane.b32.xlu0 %v2356, 96
  %v2359 = vpop.permute.xlu0 %2358
  %2361 = vrot.lane.b32.xlu0 %v2356, 32
  %v2362 = vpop.permute.xlu0 %2361
  %2364 = vrot.lane.b32.xlu0 %v2356, 64
  %v2365 = vpop.permute.xlu0 %2364
  %v2367 = vsel %vm109, %v2359, %v2356
  %v2368 = vsel %vm278, %v2367, %v2362
  %v2369 = vsel %vm280, %v2368, %v2365
  %v2370 = vmul.f32 %v2369, %v47
  %2371 = vmatprep.subr.mxu0 0.0
  %2372 = vmatpush1.msra.mxu0 0.0
  %2373 = vmatprep.subr.mxu0 0.0
  %2374 = vmatpush1.msra.mxu0 0.0
  %2375 = vmatprep.subr.mxu0 0.0
  %2376 = vmatpush1.msra.mxu0 0.0
  %2377 = vmatprep.subr.mxu0 0.0
  %2378 = vmatpush1.msra.mxu0 0.0
  %2379 = vmatprep.subr.mxu0 0.0
  %2380 = vmatpush1.msra.mxu0 0.0
  %2381 = vmatprep.subr.mxu0 0.0
  %2382 = vmatpush1.msra.mxu0 0.0
  %2383 = vmatprep.subr.mxu0 0.0
  %2384 = vmatpush1.msra.mxu0 0.0
  %2385 = vmatprep.subr.mxu0 0.0
  %2386 = vmatpush1.msra.mxu0 0.0
  %2387 = vmatprep.subr.mxu0 0.0
  %2388 = vmatpush1.msra.mxu0 0.0
  %2389 = vmatprep.subr.mxu0 0.0
  %2390 = vmatpush1.msra.mxu0 0.0
  %2391 = vmatprep.subr.mxu0 0.0
  %2392 = vmatpush1.msra.mxu0 0.0
  %2393 = vmatprep.subr.mxu0 0.0
  %2394 = vmatpush1.msra.mxu0 0.0
  %2395 = vmatprep.subr.mxu0 0.0
  %2396 = vmatpush1.msra.mxu0 %v88
  %2397 = vmatprep.subr.mxu0 0.0
  %2398 = vmatpush1.msra.mxu0 %v87
  %2399 = vmatprep.subr.mxu0 0.0
  %2400 = vmatpush1.msra.mxu0 %v86
  %2401 = vmatprep.subr.mxu0 0.0
  %2402 = vmatpush1.msra.mxu0 %v85
  %2403 = vmatprep.subr.mxu0 0.0
  %2404 = vmatpush2.msra.mxu0 0.0
  %2405 = vmatprep.subr.mxu0 0.0
  %2406 = vmatpush2.msra.mxu0 0.0
  %2407 = vmatprep.subr.mxu0 0.0
  %2408 = vmatpush2.msra.mxu0 0.0
  %2409 = vmatprep.subr.mxu0 0.0
  %2410 = vmatpush2.msra.mxu0 0.0
  %2411 = vmatprep.subr.mxu0 0.0
  %2412 = vmatpush2.msra.mxu0 0.0
  %2413 = vmatprep.subr.mxu0 0.0
  %2414 = vmatpush2.msra.mxu0 0.0
  %2415 = vmatprep.subr.mxu0 0.0
  %2416 = vmatpush2.msra.mxu0 0.0
  %2417 = vmatprep.subr.mxu0 0.0
  %2418 = vmatpush2.msra.mxu0 0.0
  %2419 = vmatprep.subr.mxu0 0.0
  %2420 = vmatpush2.msra.mxu0 0.0
  %2421 = vmatprep.subr.mxu0 0.0
  %2422 = vmatpush2.msra.mxu0 0.0
  %2423 = vmatprep.subr.mxu0 0.0
  %2424 = vmatpush2.msra.mxu0 0.0
  %2425 = vmatprep.subr.mxu0 0.0
  %2426 = vmatpush2.msra.mxu0 0.0
  %2427 = vmatprep.subr.mxu0 0.0
  %2428 = vmatpush2.msra.mxu0 0.0
  %2429 = vmatprep.subr.mxu0 0.0
  %2430 = vmatpush2.msra.mxu0 0.0
  %2431 = vmatprep.subr.mxu0 0.0
  %2432 = vmatpush2.msra.mxu0 0.0
  %2433 = vmatprep.subr.mxu0 0.0
  %2434 = vmatpush2.msra.mxu0 0.0
  %2435 = vmatprep.mubr.f32.mxu0 0.0
  %2436 = vmatmul.mubr.f32.gmra.mxu0 %v2275
  %v2437 = vpop.f32.mrf.mxu0
  %v2438 = vadd.f32 0.0, %v2437
  %v2439 = vpop.f32.mrf.mxu0
  %2440 = vdwg.mxu0
  %2442 = vrot.lane.b32.xlu0 %v2438, 8
  %v2443 = vpop.permute.xlu0 %2442
  %v2445 = vsel %vm102, %v2037, %v2443
  %2446 = vmatprep.subr.mxu0 0.0
  %2447 = vmatpush1.msra.mxu0 %v84
  %2448 = vmatprep.subr.mxu0 0.0
  %2449 = vmatpush1.msra.mxu0 %v83
  %2450 = vmatprep.subr.mxu0 0.0
  %2451 = vmatpush1.msra.mxu0 %v82
  %2452 = vmatprep.subr.mxu0 0.0
  %2453 = vmatpush1.msra.mxu0 %v81
  %2454 = vmatprep.subr.mxu0 0.0
  %2455 = vmatpush1.msra.mxu0 %v80
  %2456 = vmatprep.subr.mxu0 0.0
  %2457 = vmatpush1.msra.mxu0 %v79
  %2458 = vmatprep.subr.mxu0 0.0
  %2459 = vmatpush1.msra.mxu0 %v78
  %2460 = vmatprep.subr.mxu0 0.0
  %2461 = vmatpush1.msra.mxu0 %v77
  %2462 = vmatprep.subr.mxu0 0.0
  %2463 = vmatpush1.msra.mxu0 %v76
  %2464 = vmatprep.subr.mxu0 0.0
  %2465 = vmatpush1.msra.mxu0 %v75
  %2466 = vmatprep.subr.mxu0 0.0
  %2467 = vmatpush1.msra.mxu0 %v74
  %2468 = vmatprep.subr.mxu0 0.0
  %2469 = vmatpush1.msra.mxu0 %v73
  %2470 = vmatprep.subr.mxu0 0.0
  %2471 = vmatpush1.msra.mxu0 %v72
  %2472 = vmatprep.subr.mxu0 0.0
  %2473 = vmatpush1.msra.mxu0 %v71
  %2474 = vmatprep.subr.mxu0 0.0
  %2475 = vmatpush1.msra.mxu0 %v70
  %2476 = vmatprep.subr.mxu0 0.0
  %2477 = vmatpush1.msra.mxu0 %v69
  %2478 = vmatprep.subr.mxu0 0.0
  %2479 = vmatpush2.msra.mxu0 0.0
  %2480 = vmatprep.subr.mxu0 0.0
  %2481 = vmatpush2.msra.mxu0 0.0
  %2482 = vmatprep.subr.mxu0 0.0
  %2483 = vmatpush2.msra.mxu0 0.0
  %2484 = vmatprep.subr.mxu0 0.0
  %2485 = vmatpush2.msra.mxu0 0.0
  %2486 = vmatprep.subr.mxu0 0.0
  %2487 = vmatpush2.msra.mxu0 0.0
  %2488 = vmatprep.subr.mxu0 0.0
  %2489 = vmatpush2.msra.mxu0 0.0
  %2490 = vmatprep.subr.mxu0 0.0
  %2491 = vmatpush2.msra.mxu0 0.0
  %2492 = vmatprep.subr.mxu0 0.0
  %2493 = vmatpush2.msra.mxu0 0.0
  %2494 = vmatprep.subr.mxu0 0.0
  %2495 = vmatpush2.msra.mxu0 0.0
  %2496 = vmatprep.subr.mxu0 0.0
  %2497 = vmatpush2.msra.mxu0 0.0
  %2498 = vmatprep.subr.mxu0 0.0
  %2499 = vmatpush2.msra.mxu0 0.0
  %2500 = vmatprep.subr.mxu0 0.0
  %2501 = vmatpush2.msra.mxu0 0.0
  %2502 = vmatprep.subr.mxu0 0.0
  %2503 = vmatpush2.msra.mxu0 0.0
  %2504 = vmatprep.subr.mxu0 0.0
  %2505 = vmatpush2.msra.mxu0 0.0
  %2506 = vmatprep.subr.mxu0 0.0
  %2507 = vmatpush2.msra.mxu0 0.0
  %2508 = vmatprep.subr.mxu0 0.0
  %2509 = vmatpush2.msra.mxu0 0.0
  %2510 = vmatprep.mubr.f32.mxu0 0.0
  %2511 = vmatmul.mubr.f32.gmra.mxu0 %v2370
  %v2512 = vpop.f32.mrf.mxu0
  %v2513 = vadd.f32 %v2445, %v2512
  %v2514 = vpop.f32.mrf.mxu0
  %2515 = vdwg.mxu0
  %s2516 = scalar_lea.vmem %s0, 20
  %v2517 = vld [vmem:[%s2516] sm:$0xf]
  %2519 = vrot.lane.b32.xlu0 %v2517, 8
  %v2520 = vpop.permute.xlu0 %2519
  %2522 = vrot.lane.b32.xlu0 %v2517, 16
  %v2523 = vpop.permute.xlu0 %2522
  %2525 = vrot.lane.b32.xlu0 %v2517, 24
  %v2526 = vpop.permute.xlu0 %2525
  %v2528 = vsel %vm102, %v2517, %v2520
  %v2529 = vsel %vm104, %v2528, %v2523
  %v2530 = vsel %vm106, %v2529, %v2526
  %v2531 = vmul.f32 %v2530, %v48
  %v2532 = vsel %vm109, %v2359, 0
  %2534 = vmatprep.subr.mxu0 0.0
  %2535 = vmatpush1.msra.mxu0 0.0
  %2536 = vmatprep.subr.mxu0 0.0
  %2537 = vmatpush1.msra.mxu0 0.0
  %2538 = vmatprep.subr.mxu0 0.0
  %2539 = vmatpush1.msra.mxu0 0.0
  %2540 = vmatprep.subr.mxu0 0.0
  %2541 = vmatpush1.msra.mxu0 0.0
  %2542 = vmatprep.subr.mxu0 0.0
  %2543 = vmatpush1.msra.mxu0 0.0
  %2544 = vmatprep.subr.mxu0 0.0
  %2545 = vmatpush1.msra.mxu0 0.0
  %2546 = vmatprep.subr.mxu0 0.0
  %2547 = vmatpush1.msra.mxu0 0.0
  %2548 = vmatprep.subr.mxu0 0.0
  %2549 = vmatpush1.msra.mxu0 0.0
  %2550 = vmatprep.subr.mxu0 0.0
  %2551 = vmatpush1.msra.mxu0 0.0
  %2552 = vmatprep.subr.mxu0 0.0
  %2553 = vmatpush1.msra.mxu0 0.0
  %2554 = vmatprep.subr.mxu0 0.0
  %2555 = vmatpush1.msra.mxu0 0.0
  %2556 = vmatprep.subr.mxu0 0.0
  %2557 = vmatpush1.msra.mxu0 0.0
  %2558 = vmatprep.subr.mxu0 0.0
  %2559 = vmatpush1.msra.mxu0 %v45
  %2560 = vmatprep.subr.mxu0 0.0
  %2561 = vmatpush1.msra.mxu0 %v44
  %2562 = vmatprep.subr.mxu0 0.0
  %2563 = vmatpush1.msra.mxu0 %v43
  %2564 = vmatprep.subr.mxu0 0.0
  %2565 = vmatpush1.msra.mxu0 %v42
  %2566 = vmatprep.subr.mxu0 0.0
  %2567 = vmatpush2.msra.mxu0 0.0
  %2568 = vmatprep.subr.mxu0 0.0
  %2569 = vmatpush2.msra.mxu0 0.0
  %2570 = vmatprep.subr.mxu0 0.0
  %2571 = vmatpush2.msra.mxu0 0.0
  %2572 = vmatprep.subr.mxu0 0.0
  %2573 = vmatpush2.msra.mxu0 0.0
  %2574 = vmatprep.subr.mxu0 0.0
  %2575 = vmatpush2.msra.mxu0 0.0
  %2576 = vmatprep.subr.mxu0 0.0
  %2577 = vmatpush2.msra.mxu0 0.0
  %2578 = vmatprep.subr.mxu0 0.0
  %2579 = vmatpush2.msra.mxu0 0.0
  %2580 = vmatprep.subr.mxu0 0.0
  %2581 = vmatpush2.msra.mxu0 0.0
  %2582 = vmatprep.subr.mxu0 0.0
  %2583 = vmatpush2.msra.mxu0 0.0
  %2584 = vmatprep.subr.mxu0 0.0
  %2585 = vmatpush2.msra.mxu0 0.0
  %2586 = vmatprep.subr.mxu0 0.0
  %2587 = vmatpush2.msra.mxu0 0.0
  %2588 = vmatprep.subr.mxu0 0.0
  %2589 = vmatpush2.msra.mxu0 0.0
  %2590 = vmatprep.subr.mxu0 0.0
  %2591 = vmatpush2.msra.mxu0 0.0
  %2592 = vmatprep.subr.mxu0 0.0
  %2593 = vmatpush2.msra.mxu0 0.0
  %2594 = vmatprep.subr.mxu0 0.0
  %2595 = vmatpush2.msra.mxu0 0.0
  %2596 = vmatprep.subr.mxu0 0.0
  %2597 = vmatpush2.msra.mxu0 0.0
  %2598 = vmatprep.mubr.f32.mxu0 0.0
  %2599 = vmatmul.mubr.f32.gmra.mxu0 %v2532
  %v2600 = vpop.f32.mrf.mxu0
  %v2601 = vadd.f32 0.0, %v2600
  %v2602 = vpop.f32.mrf.mxu0
  %2603 = vdwg.mxu0
  %v2604 = vsel %vm102, %v2517, 0
  %2606 = vmatprep.subr.mxu0 0.0
  %2607 = vmatpush1.msra.mxu0 0.0
  %2608 = vmatprep.subr.mxu0 0.0
  %2609 = vmatpush1.msra.mxu0 0.0
  %2610 = vmatprep.subr.mxu0 0.0
  %2611 = vmatpush1.msra.mxu0 0.0
  %2612 = vmatprep.subr.mxu0 0.0
  %2613 = vmatpush1.msra.mxu0 0.0
  %2614 = vmatprep.subr.mxu0 0.0
  %2615 = vmatpush1.msra.mxu0 0.0
  %2616 = vmatprep.subr.mxu0 0.0
  %2617 = vmatpush1.msra.mxu0 0.0
  %2618 = vmatprep.subr.mxu0 0.0
  %2619 = vmatpush1.msra.mxu0 0.0
  %2620 = vmatprep.subr.mxu0 0.0
  %2621 = vmatpush1.msra.mxu0 0.0
  %2622 = vmatprep.subr.mxu0 0.0
  %2623 = vmatpush1.msra.mxu0 0.0
  %2624 = vmatprep.subr.mxu0 0.0
  %2625 = vmatpush1.msra.mxu0 0.0
  %2626 = vmatprep.subr.mxu0 0.0
  %2627 = vmatpush1.msra.mxu0 0.0
  %2628 = vmatprep.subr.mxu0 0.0
  %2629 = vmatpush1.msra.mxu0 0.0
  %2630 = vmatprep.subr.mxu0 0.0
  %2631 = vmatpush1.msra.mxu0 0.0
  %2632 = vmatprep.subr.mxu0 0.0
  %2633 = vmatpush1.msra.mxu0 0.0
  %2634 = vmatprep.subr.mxu0 0.0
  %2635 = vmatpush1.msra.mxu0 0.0
  %2636 = vmatprep.subr.mxu0 0.0
  %2637 = vmatpush1.msra.mxu0 %v41
  %2638 = vmatprep.subr.mxu0 0.0
  %2639 = vmatpush2.msra.mxu0 0.0
  %2640 = vmatprep.subr.mxu0 0.0
  %2641 = vmatpush2.msra.mxu0 0.0
  %2642 = vmatprep.subr.mxu0 0.0
  %2643 = vmatpush2.msra.mxu0 0.0
  %2644 = vmatprep.subr.mxu0 0.0
  %2645 = vmatpush2.msra.mxu0 0.0
  %2646 = vmatprep.subr.mxu0 0.0
  %2647 = vmatpush2.msra.mxu0 0.0
  %2648 = vmatprep.subr.mxu0 0.0
  %2649 = vmatpush2.msra.mxu0 0.0
  %2650 = vmatprep.subr.mxu0 0.0
  %2651 = vmatpush2.msra.mxu0 0.0
  %2652 = vmatprep.subr.mxu0 0.0
  %2653 = vmatpush2.msra.mxu0 0.0
  %2654 = vmatprep.subr.mxu0 0.0
  %2655 = vmatpush2.msra.mxu0 0.0
  %2656 = vmatprep.subr.mxu0 0.0
  %2657 = vmatpush2.msra.mxu0 0.0
  %2658 = vmatprep.subr.mxu0 0.0
  %2659 = vmatpush2.msra.mxu0 0.0
  %2660 = vmatprep.subr.mxu0 0.0
  %2661 = vmatpush2.msra.mxu0 0.0
  %2662 = vmatprep.subr.mxu0 0.0
  %2663 = vmatpush2.msra.mxu0 0.0
  %2664 = vmatprep.subr.mxu0 0.0
  %2665 = vmatpush2.msra.mxu0 0.0
  %2666 = vmatprep.subr.mxu0 0.0
  %2667 = vmatpush2.msra.mxu0 0.0
  %2668 = vmatprep.subr.mxu0 0.0
  %2669 = vmatpush2.msra.mxu0 0.0
  %2670 = vmatprep.mubr.f32.mxu0 0.0
  %2671 = vmatmul.mubr.f32.gmra.mxu0 %v2604
  %v2672 = vpop.f32.mrf.mxu0
  %v2673 = vadd.f32 %v2601, %v2672
  %v2674 = vpop.f32.mrf.mxu0
  %2675 = vdwg.mxu0
  %v2676 = vadd.f32 %v2673, %v259
  %v2677 = vxor.u32 %v2676, 2147483648
  %v2678 = vmul.f32 %v2677, 1.442695
  %v2679 = vpow.pop %v2678
  %v2680 = vadd.f32 %v2679, 1.0
  %v2681 = vrcp.pop %v2680
  %v2682 = vmul.f32 1.0, %v2681
  %2683 = vmatprep.subr.mxu0 0.0
  %2684 = vmatpush1.msra.mxu0 %v64
  %2685 = vmatprep.subr.mxu0 0.0
  %2686 = vmatpush1.msra.mxu0 %v63
  %2687 = vmatprep.subr.mxu0 0.0
  %2688 = vmatpush1.msra.mxu0 %v62
  %2689 = vmatprep.subr.mxu0 0.0
  %2690 = vmatpush1.msra.mxu0 %v61
  %2691 = vmatprep.subr.mxu0 0.0
  %2692 = vmatpush1.msra.mxu0 %v60
  %2693 = vmatprep.subr.mxu0 0.0
  %2694 = vmatpush1.msra.mxu0 %v59
  %2695 = vmatprep.subr.mxu0 0.0
  %2696 = vmatpush1.msra.mxu0 %v58
  %2697 = vmatprep.subr.mxu0 0.0
  %2698 = vmatpush1.msra.mxu0 %v57
  %2699 = vmatprep.subr.mxu0 0.0
  %2700 = vmatpush1.msra.mxu0 %v56
  %2701 = vmatprep.subr.mxu0 0.0
  %2702 = vmatpush1.msra.mxu0 %v55
  %2703 = vmatprep.subr.mxu0 0.0
  %2704 = vmatpush1.msra.mxu0 %v54
  %2705 = vmatprep.subr.mxu0 0.0
  %2706 = vmatpush1.msra.mxu0 %v53
  %2707 = vmatprep.subr.mxu0 0.0
  %2708 = vmatpush1.msra.mxu0 %v52
  %2709 = vmatprep.subr.mxu0 0.0
  %2710 = vmatpush1.msra.mxu0 %v51
  %2711 = vmatprep.subr.mxu0 0.0
  %2712 = vmatpush1.msra.mxu0 %v50
  %2713 = vmatprep.subr.mxu0 0.0
  %2714 = vmatpush1.msra.mxu0 %v49
  %2715 = vmatprep.subr.mxu0 0.0
  %2716 = vmatpush2.msra.mxu0 0.0
  %2717 = vmatprep.subr.mxu0 0.0
  %2718 = vmatpush2.msra.mxu0 0.0
  %2719 = vmatprep.subr.mxu0 0.0
  %2720 = vmatpush2.msra.mxu0 0.0
  %2721 = vmatprep.subr.mxu0 0.0
  %2722 = vmatpush2.msra.mxu0 0.0
  %2723 = vmatprep.subr.mxu0 0.0
  %2724 = vmatpush2.msra.mxu0 0.0
  %2725 = vmatprep.subr.mxu0 0.0
  %2726 = vmatpush2.msra.mxu0 0.0
  %2727 = vmatprep.subr.mxu0 0.0
  %2728 = vmatpush2.msra.mxu0 0.0
  %2729 = vmatprep.subr.mxu0 0.0
  %2730 = vmatpush2.msra.mxu0 0.0
  %2731 = vmatprep.subr.mxu0 0.0
  %2732 = vmatpush2.msra.mxu0 0.0
  %2733 = vmatprep.subr.mxu0 0.0
  %2734 = vmatpush2.msra.mxu0 0.0
  %2735 = vmatprep.subr.mxu0 0.0
  %2736 = vmatpush2.msra.mxu0 0.0
  %2737 = vmatprep.subr.mxu0 0.0
  %2738 = vmatpush2.msra.mxu0 0.0
  %2739 = vmatprep.subr.mxu0 0.0
  %2740 = vmatpush2.msra.mxu0 0.0
  %2741 = vmatprep.subr.mxu0 0.0
  %2742 = vmatpush2.msra.mxu0 0.0
  %2743 = vmatprep.subr.mxu0 0.0
  %2744 = vmatpush2.msra.mxu0 0.0
  %2745 = vmatprep.subr.mxu0 0.0
  %2746 = vmatpush2.msra.mxu0 0.0
  %2747 = vmatprep.mubr.f32.mxu0 0.0
  %2748 = vmatmul.mubr.f32.gmra.mxu0 %v2370
  %v2749 = vpop.f32.mrf.mxu0
  %v2750 = vadd.f32 0.0, %v2749
  %v2751 = vpop.f32.mrf.mxu0
  %2752 = vdwg.mxu0
  %v2753 = vmul.f32 %v2682, %v2750
  %v2755 = vsel %vm109, %v2531, 0
  %2757 = vmatprep.subr.mxu0 0.0
  %2758 = vmatpush1.msra.mxu0 0.0
  %2759 = vmatprep.subr.mxu0 0.0
  %2760 = vmatpush1.msra.mxu0 0.0
  %2761 = vmatprep.subr.mxu0 0.0
  %2762 = vmatpush1.msra.mxu0 0.0
  %2763 = vmatprep.subr.mxu0 0.0
  %2764 = vmatpush1.msra.mxu0 0.0
  %2765 = vmatprep.subr.mxu0 0.0
  %2766 = vmatpush1.msra.mxu0 0.0
  %2767 = vmatprep.subr.mxu0 0.0
  %2768 = vmatpush1.msra.mxu0 0.0
  %2769 = vmatprep.subr.mxu0 0.0
  %2770 = vmatpush1.msra.mxu0 0.0
  %2771 = vmatprep.subr.mxu0 0.0
  %2772 = vmatpush1.msra.mxu0 0.0
  %2773 = vmatprep.subr.mxu0 0.0
  %2774 = vmatpush1.msra.mxu0 0.0
  %2775 = vmatprep.subr.mxu0 0.0
  %2776 = vmatpush1.msra.mxu0 0.0
  %2777 = vmatprep.subr.mxu0 0.0
  %2778 = vmatpush1.msra.mxu0 0.0
  %2779 = vmatprep.subr.mxu0 0.0
  %2780 = vmatpush1.msra.mxu0 0.0
  %2781 = vmatprep.subr.mxu0 0.0
  %2782 = vmatpush1.msra.mxu0 %v68
  %2783 = vmatprep.subr.mxu0 0.0
  %2784 = vmatpush1.msra.mxu0 %v67
  %2785 = vmatprep.subr.mxu0 0.0
  %2786 = vmatpush1.msra.mxu0 %v66
  %2787 = vmatprep.subr.mxu0 0.0
  %2788 = vmatpush1.msra.mxu0 %v65
  %2789 = vmatprep.subr.mxu0 0.0
  %2790 = vmatpush2.msra.mxu0 0.0
  %2791 = vmatprep.subr.mxu0 0.0
  %2792 = vmatpush2.msra.mxu0 0.0
  %2793 = vmatprep.subr.mxu0 0.0
  %2794 = vmatpush2.msra.mxu0 0.0
  %2795 = vmatprep.subr.mxu0 0.0
  %2796 = vmatpush2.msra.mxu0 0.0
  %2797 = vmatprep.subr.mxu0 0.0
  %2798 = vmatpush2.msra.mxu0 0.0
  %2799 = vmatprep.subr.mxu0 0.0
  %2800 = vmatpush2.msra.mxu0 0.0
  %2801 = vmatprep.subr.mxu0 0.0
  %2802 = vmatpush2.msra.mxu0 0.0
  %2803 = vmatprep.subr.mxu0 0.0
  %2804 = vmatpush2.msra.mxu0 0.0
  %2805 = vmatprep.subr.mxu0 0.0
  %2806 = vmatpush2.msra.mxu0 0.0
  %2807 = vmatprep.subr.mxu0 0.0
  %2808 = vmatpush2.msra.mxu0 0.0
  %2809 = vmatprep.subr.mxu0 0.0
  %2810 = vmatpush2.msra.mxu0 0.0
  %2811 = vmatprep.subr.mxu0 0.0
  %2812 = vmatpush2.msra.mxu0 0.0
  %2813 = vmatprep.subr.mxu0 0.0
  %2814 = vmatpush2.msra.mxu0 0.0
  %2815 = vmatprep.subr.mxu0 0.0
  %2816 = vmatpush2.msra.mxu0 0.0
  %2817 = vmatprep.subr.mxu0 0.0
  %2818 = vmatpush2.msra.mxu0 0.0
  %2819 = vmatprep.subr.mxu0 0.0
  %2820 = vmatpush2.msra.mxu0 0.0
  %2821 = vmatprep.mubr.f32.mxu0 0.0
  %2822 = vmatmul.mubr.f32.gmra.mxu0 %v2755
  %v2823 = vpop.f32.mrf.mxu0
  %v2824 = vadd.f32 %v2753, %v2823
  %v2825 = vpop.f32.mrf.mxu0
  %2826 = vdwg.mxu0
  %v2827 = vadd.f32 %v2824, %v89
  %v2828 = vtanh.pop %v2827
  %v2829 = vmul.f32 %v2682, %v2356
  %v2830 = vsub.f32 1.0, %v2682
  %2832 = vrot.lane.b32.xlu0 %v2828, 32
  %v2833 = vpop.permute.xlu0 %2832
  %v2835 = vmul.f32 %v2830, %v2833
  %v2836 = vadd.f32 %v2829, %v2835
  %2838 = vrot.lane.b32.xlu0 %v2836, 96
  %v2839 = vpop.permute.xlu0 %2838
  %2841 = vrot.lane.b32.xlu0 %v2836, 32
  %v2842 = vpop.permute.xlu0 %2841
  %2844 = vrot.lane.b32.xlu0 %v2836, 64
  %v2845 = vpop.permute.xlu0 %2844
  %v2847 = vsel %vm109, %v2839, %v2836
  %v2848 = vsel %vm278, %v2847, %v2842
  %v2849 = vsel %vm280, %v2848, %v2845
  %v2850 = vmul.f32 %v2849, %v47
  %2851 = vmatprep.subr.mxu0 0.0
  %2852 = vmatpush1.msra.mxu0 0.0
  %2853 = vmatprep.subr.mxu0 0.0
  %2854 = vmatpush1.msra.mxu0 0.0
  %2855 = vmatprep.subr.mxu0 0.0
  %2856 = vmatpush1.msra.mxu0 0.0
  %2857 = vmatprep.subr.mxu0 0.0
  %2858 = vmatpush1.msra.mxu0 0.0
  %2859 = vmatprep.subr.mxu0 0.0
  %2860 = vmatpush1.msra.mxu0 0.0
  %2861 = vmatprep.subr.mxu0 0.0
  %2862 = vmatpush1.msra.mxu0 0.0
  %2863 = vmatprep.subr.mxu0 0.0
  %2864 = vmatpush1.msra.mxu0 0.0
  %2865 = vmatprep.subr.mxu0 0.0
  %2866 = vmatpush1.msra.mxu0 0.0
  %2867 = vmatprep.subr.mxu0 0.0
  %2868 = vmatpush1.msra.mxu0 0.0
  %2869 = vmatprep.subr.mxu0 0.0
  %2870 = vmatpush1.msra.mxu0 0.0
  %2871 = vmatprep.subr.mxu0 0.0
  %2872 = vmatpush1.msra.mxu0 0.0
  %2873 = vmatprep.subr.mxu0 0.0
  %2874 = vmatpush1.msra.mxu0 0.0
  %2875 = vmatprep.subr.mxu0 0.0
  %2876 = vmatpush1.msra.mxu0 %v88
  %2877 = vmatprep.subr.mxu0 0.0
  %2878 = vmatpush1.msra.mxu0 %v87
  %2879 = vmatprep.subr.mxu0 0.0
  %2880 = vmatpush1.msra.mxu0 %v86
  %2881 = vmatprep.subr.mxu0 0.0
  %2882 = vmatpush1.msra.mxu0 %v85
  %2883 = vmatprep.subr.mxu0 0.0
  %2884 = vmatpush2.msra.mxu0 0.0
  %2885 = vmatprep.subr.mxu0 0.0
  %2886 = vmatpush2.msra.mxu0 0.0
  %2887 = vmatprep.subr.mxu0 0.0
  %2888 = vmatpush2.msra.mxu0 0.0
  %2889 = vmatprep.subr.mxu0 0.0
  %2890 = vmatpush2.msra.mxu0 0.0
  %2891 = vmatprep.subr.mxu0 0.0
  %2892 = vmatpush2.msra.mxu0 0.0
  %2893 = vmatprep.subr.mxu0 0.0
  %2894 = vmatpush2.msra.mxu0 0.0
  %2895 = vmatprep.subr.mxu0 0.0
  %2896 = vmatpush2.msra.mxu0 0.0
  %2897 = vmatprep.subr.mxu0 0.0
  %2898 = vmatpush2.msra.mxu0 0.0
  %2899 = vmatprep.subr.mxu0 0.0
  %2900 = vmatpush2.msra.mxu0 0.0
  %2901 = vmatprep.subr.mxu0 0.0
  %2902 = vmatpush2.msra.mxu0 0.0
  %2903 = vmatprep.subr.mxu0 0.0
  %2904 = vmatpush2.msra.mxu0 0.0
  %2905 = vmatprep.subr.mxu0 0.0
  %2906 = vmatpush2.msra.mxu0 0.0
  %2907 = vmatprep.subr.mxu0 0.0
  %2908 = vmatpush2.msra.mxu0 0.0
  %2909 = vmatprep.subr.mxu0 0.0
  %2910 = vmatpush2.msra.mxu0 0.0
  %2911 = vmatprep.subr.mxu0 0.0
  %2912 = vmatpush2.msra.mxu0 0.0
  %2913 = vmatprep.subr.mxu0 0.0
  %2914 = vmatpush2.msra.mxu0 0.0
  %2915 = vmatprep.mubr.f32.mxu0 0.0
  %2916 = vmatmul.mubr.f32.gmra.mxu0 %v2755
  %v2917 = vpop.f32.mrf.mxu0
  %v2918 = vadd.f32 0.0, %v2917
  %v2919 = vpop.f32.mrf.mxu0
  %2920 = vdwg.mxu0
  %2922 = vrot.lane.b32.xlu0 %v2918, 8
  %v2923 = vpop.permute.xlu0 %2922
  %v2925 = vsel %vm102, %v2517, %v2923
  %2926 = vmatprep.subr.mxu0 0.0
  %2927 = vmatpush1.msra.mxu0 %v84
  %2928 = vmatprep.subr.mxu0 0.0
  %2929 = vmatpush1.msra.mxu0 %v83
  %2930 = vmatprep.subr.mxu0 0.0
  %2931 = vmatpush1.msra.mxu0 %v82
  %2932 = vmatprep.subr.mxu0 0.0
  %2933 = vmatpush1.msra.mxu0 %v81
  %2934 = vmatprep.subr.mxu0 0.0
  %2935 = vmatpush1.msra.mxu0 %v80
  %2936 = vmatprep.subr.mxu0 0.0
  %2937 = vmatpush1.msra.mxu0 %v79
  %2938 = vmatprep.subr.mxu0 0.0
  %2939 = vmatpush1.msra.mxu0 %v78
  %2940 = vmatprep.subr.mxu0 0.0
  %2941 = vmatpush1.msra.mxu0 %v77
  %2942 = vmatprep.subr.mxu0 0.0
  %2943 = vmatpush1.msra.mxu0 %v76
  %2944 = vmatprep.subr.mxu0 0.0
  %2945 = vmatpush1.msra.mxu0 %v75
  %2946 = vmatprep.subr.mxu0 0.0
  %2947 = vmatpush1.msra.mxu0 %v74
  %2948 = vmatprep.subr.mxu0 0.0
  %2949 = vmatpush1.msra.mxu0 %v73
  %2950 = vmatprep.subr.mxu0 0.0
  %2951 = vmatpush1.msra.mxu0 %v72
  %2952 = vmatprep.subr.mxu0 0.0
  %2953 = vmatpush1.msra.mxu0 %v71
  %2954 = vmatprep.subr.mxu0 0.0
  %2955 = vmatpush1.msra.mxu0 %v70
  %2956 = vmatprep.subr.mxu0 0.0
  %2957 = vmatpush1.msra.mxu0 %v69
  %2958 = vmatprep.subr.mxu0 0.0
  %2959 = vmatpush2.msra.mxu0 0.0
  %2960 = vmatprep.subr.mxu0 0.0
  %2961 = vmatpush2.msra.mxu0 0.0
  %2962 = vmatprep.subr.mxu0 0.0
  %2963 = vmatpush2.msra.mxu0 0.0
  %2964 = vmatprep.subr.mxu0 0.0
  %2965 = vmatpush2.msra.mxu0 0.0
  %2966 = vmatprep.subr.mxu0 0.0
  %2967 = vmatpush2.msra.mxu0 0.0
  %2968 = vmatprep.subr.mxu0 0.0
  %2969 = vmatpush2.msra.mxu0 0.0
  %2970 = vmatprep.subr.mxu0 0.0
  %2971 = vmatpush2.msra.mxu0 0.0
  %2972 = vmatprep.subr.mxu0 0.0
  %2973 = vmatpush2.msra.mxu0 0.0
  %2974 = vmatprep.subr.mxu0 0.0
  %2975 = vmatpush2.msra.mxu0 0.0
  %2976 = vmatprep.subr.mxu0 0.0
  %2977 = vmatpush2.msra.mxu0 0.0
  %2978 = vmatprep.subr.mxu0 0.0
  %2979 = vmatpush2.msra.mxu0 0.0
  %2980 = vmatprep.subr.mxu0 0.0
  %2981 = vmatpush2.msra.mxu0 0.0
  %2982 = vmatprep.subr.mxu0 0.0
  %2983 = vmatpush2.msra.mxu0 0.0
  %2984 = vmatprep.subr.mxu0 0.0
  %2985 = vmatpush2.msra.mxu0 0.0
  %2986 = vmatprep.subr.mxu0 0.0
  %2987 = vmatpush2.msra.mxu0 0.0
  %2988 = vmatprep.subr.mxu0 0.0
  %2989 = vmatpush2.msra.mxu0 0.0
  %2990 = vmatprep.mubr.f32.mxu0 0.0
  %2991 = vmatmul.mubr.f32.gmra.mxu0 %v2850
  %v2992 = vpop.f32.mrf.mxu0
  %v2993 = vadd.f32 %v2925, %v2992
  %v2994 = vpop.f32.mrf.mxu0
  %2995 = vdwg.mxu0
  %s2996 = scalar_lea.vmem %s0, 24
  %v2997 = vld [vmem:[%s2996] sm:$0xf]
  %2999 = vrot.lane.b32.xlu0 %v2997, 8
  %v3000 = vpop.permute.xlu0 %2999
  %3002 = vrot.lane.b32.xlu0 %v2997, 16
  %v3003 = vpop.permute.xlu0 %3002
  %3005 = vrot.lane.b32.xlu0 %v2997, 24
  %v3006 = vpop.permute.xlu0 %3005
  %v3008 = vsel %vm102, %v2997, %v3000
  %v3009 = vsel %vm104, %v3008, %v3003
  %v3010 = vsel %vm106, %v3009, %v3006
  %v3011 = vmul.f32 %v3010, %v48
  %v3012 = vsel %vm109, %v2839, 0
  %3014 = vmatprep.subr.mxu0 0.0
  %3015 = vmatpush1.msra.mxu0 0.0
  %3016 = vmatprep.subr.mxu0 0.0
  %3017 = vmatpush1.msra.mxu0 0.0
  %3018 = vmatprep.subr.mxu0 0.0
  %3019 = vmatpush1.msra.mxu0 0.0
  %3020 = vmatprep.subr.mxu0 0.0
  %3021 = vmatpush1.msra.mxu0 0.0
  %3022 = vmatprep.subr.mxu0 0.0
  %3023 = vmatpush1.msra.mxu0 0.0
  %3024 = vmatprep.subr.mxu0 0.0
  %3025 = vmatpush1.msra.mxu0 0.0
  %3026 = vmatprep.subr.mxu0 0.0
  %3027 = vmatpush1.msra.mxu0 0.0
  %3028 = vmatprep.subr.mxu0 0.0
  %3029 = vmatpush1.msra.mxu0 0.0
  %3030 = vmatprep.subr.mxu0 0.0
  %3031 = vmatpush1.msra.mxu0 0.0
  %3032 = vmatprep.subr.mxu0 0.0
  %3033 = vmatpush1.msra.mxu0 0.0
  %3034 = vmatprep.subr.mxu0 0.0
  %3035 = vmatpush1.msra.mxu0 0.0
  %3036 = vmatprep.subr.mxu0 0.0
  %3037 = vmatpush1.msra.mxu0 0.0
  %3038 = vmatprep.subr.mxu0 0.0
  %3039 = vmatpush1.msra.mxu0 %v45
  %3040 = vmatprep.subr.mxu0 0.0
  %3041 = vmatpush1.msra.mxu0 %v44
  %3042 = vmatprep.subr.mxu0 0.0
  %3043 = vmatpush1.msra.mxu0 %v43
  %3044 = vmatprep.subr.mxu0 0.0
  %3045 = vmatpush1.msra.mxu0 %v42
  %3046 = vmatprep.subr.mxu0 0.0
  %3047 = vmatpush2.msra.mxu0 0.0
  %3048 = vmatprep.subr.mxu0 0.0
  %3049 = vmatpush2.msra.mxu0 0.0
  %3050 = vmatprep.subr.mxu0 0.0
  %3051 = vmatpush2.msra.mxu0 0.0
  %3052 = vmatprep.subr.mxu0 0.0
  %3053 = vmatpush2.msra.mxu0 0.0
  %3054 = vmatprep.subr.mxu0 0.0
  %3055 = vmatpush2.msra.mxu0 0.0
  %3056 = vmatprep.subr.mxu0 0.0
  %3057 = vmatpush2.msra.mxu0 0.0
  %3058 = vmatprep.subr.mxu0 0.0
  %3059 = vmatpush2.msra.mxu0 0.0
  %3060 = vmatprep.subr.mxu0 0.0
  %3061 = vmatpush2.msra.mxu0 0.0
  %3062 = vmatprep.subr.mxu0 0.0
  %3063 = vmatpush2.msra.mxu0 0.0
  %3064 = vmatprep.subr.mxu0 0.0
  %3065 = vmatpush2.msra.mxu0 0.0
  %3066 = vmatprep.subr.mxu0 0.0
  %3067 = vmatpush2.msra.mxu0 0.0
  %3068 = vmatprep.subr.mxu0 0.0
  %3069 = vmatpush2.msra.mxu0 0.0
  %3070 = vmatprep.subr.mxu0 0.0
  %3071 = vmatpush2.msra.mxu0 0.0
  %3072 = vmatprep.subr.mxu0 0.0
  %3073 = vmatpush2.msra.mxu0 0.0
  %3074 = vmatprep.subr.mxu0 0.0
  %3075 = vmatpush2.msra.mxu0 0.0
  %3076 = vmatprep.subr.mxu0 0.0
  %3077 = vmatpush2.msra.mxu0 0.0
  %3078 = vmatprep.mubr.f32.mxu0 0.0
  %3079 = vmatmul.mubr.f32.gmra.mxu0 %v3012
  %v3080 = vpop.f32.mrf.mxu0
  %v3081 = vadd.f32 0.0, %v3080
  %v3082 = vpop.f32.mrf.mxu0
  %3083 = vdwg.mxu0
  %v3084 = vsel %vm102, %v2997, 0
  %3086 = vmatprep.subr.mxu0 0.0
  %3087 = vmatpush1.msra.mxu0 0.0
  %3088 = vmatprep.subr.mxu0 0.0
  %3089 = vmatpush1.msra.mxu0 0.0
  %3090 = vmatprep.subr.mxu0 0.0
  %3091 = vmatpush1.msra.mxu0 0.0
  %3092 = vmatprep.subr.mxu0 0.0
  %3093 = vmatpush1.msra.mxu0 0.0
  %3094 = vmatprep.subr.mxu0 0.0
  %3095 = vmatpush1.msra.mxu0 0.0
  %3096 = vmatprep.subr.mxu0 0.0
  %3097 = vmatpush1.msra.mxu0 0.0
  %3098 = vmatprep.subr.mxu0 0.0
  %3099 = vmatpush1.msra.mxu0 0.0
  %3100 = vmatprep.subr.mxu0 0.0
  %3101 = vmatpush1.msra.mxu0 0.0
  %3102 = vmatprep.subr.mxu0 0.0
  %3103 = vmatpush1.msra.mxu0 0.0
  %3104 = vmatprep.subr.mxu0 0.0
  %3105 = vmatpush1.msra.mxu0 0.0
  %3106 = vmatprep.subr.mxu0 0.0
  %3107 = vmatpush1.msra.mxu0 0.0
  %3108 = vmatprep.subr.mxu0 0.0
  %3109 = vmatpush1.msra.mxu0 0.0
  %3110 = vmatprep.subr.mxu0 0.0
  %3111 = vmatpush1.msra.mxu0 0.0
  %3112 = vmatprep.subr.mxu0 0.0
  %3113 = vmatpush1.msra.mxu0 0.0
  %3114 = vmatprep.subr.mxu0 0.0
  %3115 = vmatpush1.msra.mxu0 0.0
  %3116 = vmatprep.subr.mxu0 0.0
  %3117 = vmatpush1.msra.mxu0 %v41
  %3118 = vmatprep.subr.mxu0 0.0
  %3119 = vmatpush2.msra.mxu0 0.0
  %3120 = vmatprep.subr.mxu0 0.0
  %3121 = vmatpush2.msra.mxu0 0.0
  %3122 = vmatprep.subr.mxu0 0.0
  %3123 = vmatpush2.msra.mxu0 0.0
  %3124 = vmatprep.subr.mxu0 0.0
  %3125 = vmatpush2.msra.mxu0 0.0
  %3126 = vmatprep.subr.mxu0 0.0
  %3127 = vmatpush2.msra.mxu0 0.0
  %3128 = vmatprep.subr.mxu0 0.0
  %3129 = vmatpush2.msra.mxu0 0.0
  %3130 = vmatprep.subr.mxu0 0.0
  %3131 = vmatpush2.msra.mxu0 0.0
  %3132 = vmatprep.subr.mxu0 0.0
  %3133 = vmatpush2.msra.mxu0 0.0
  %3134 = vmatprep.subr.mxu0 0.0
  %3135 = vmatpush2.msra.mxu0 0.0
  %3136 = vmatprep.subr.mxu0 0.0
  %3137 = vmatpush2.msra.mxu0 0.0
  %3138 = vmatprep.subr.mxu0 0.0
  %3139 = vmatpush2.msra.mxu0 0.0
  %3140 = vmatprep.subr.mxu0 0.0
  %3141 = vmatpush2.msra.mxu0 0.0
  %3142 = vmatprep.subr.mxu0 0.0
  %3143 = vmatpush2.msra.mxu0 0.0
  %3144 = vmatprep.subr.mxu0 0.0
  %3145 = vmatpush2.msra.mxu0 0.0
  %3146 = vmatprep.subr.mxu0 0.0
  %3147 = vmatpush2.msra.mxu0 0.0
  %3148 = vmatprep.subr.mxu0 0.0
  %3149 = vmatpush2.msra.mxu0 0.0
  %3150 = vmatprep.mubr.f32.mxu0 0.0
  %3151 = vmatmul.mubr.f32.gmra.mxu0 %v3084
  %v3152 = vpop.f32.mrf.mxu0
  %v3153 = vadd.f32 %v3081, %v3152
  %v3154 = vpop.f32.mrf.mxu0
  %3155 = vdwg.mxu0
  %v3156 = vadd.f32 %v3153, %v259
  %v3157 = vxor.u32 %v3156, 2147483648
  %v3158 = vmul.f32 %v3157, 1.442695
  %v3159 = vpow.pop %v3158
  %v3160 = vadd.f32 %v3159, 1.0
  %v3161 = vrcp.pop %v3160
  %v3162 = vmul.f32 1.0, %v3161
  %3163 = vmatprep.subr.mxu0 0.0
  %3164 = vmatpush1.msra.mxu0 %v64
  %3165 = vmatprep.subr.mxu0 0.0
  %3166 = vmatpush1.msra.mxu0 %v63
  %3167 = vmatprep.subr.mxu0 0.0
  %3168 = vmatpush1.msra.mxu0 %v62
  %3169 = vmatprep.subr.mxu0 0.0
  %3170 = vmatpush1.msra.mxu0 %v61
  %3171 = vmatprep.subr.mxu0 0.0
  %3172 = vmatpush1.msra.mxu0 %v60
  %3173 = vmatprep.subr.mxu0 0.0
  %3174 = vmatpush1.msra.mxu0 %v59
  %3175 = vmatprep.subr.mxu0 0.0
  %3176 = vmatpush1.msra.mxu0 %v58
  %3177 = vmatprep.subr.mxu0 0.0
  %3178 = vmatpush1.msra.mxu0 %v57
  %3179 = vmatprep.subr.mxu0 0.0
  %3180 = vmatpush1.msra.mxu0 %v56
  %3181 = vmatprep.subr.mxu0 0.0
  %3182 = vmatpush1.msra.mxu0 %v55
  %3183 = vmatprep.subr.mxu0 0.0
  %3184 = vmatpush1.msra.mxu0 %v54
  %3185 = vmatprep.subr.mxu0 0.0
  %3186 = vmatpush1.msra.mxu0 %v53
  %3187 = vmatprep.subr.mxu0 0.0
  %3188 = vmatpush1.msra.mxu0 %v52
  %3189 = vmatprep.subr.mxu0 0.0
  %3190 = vmatpush1.msra.mxu0 %v51
  %3191 = vmatprep.subr.mxu0 0.0
  %3192 = vmatpush1.msra.mxu0 %v50
  %3193 = vmatprep.subr.mxu0 0.0
  %3194 = vmatpush1.msra.mxu0 %v49
  %3195 = vmatprep.subr.mxu0 0.0
  %3196 = vmatpush2.msra.mxu0 0.0
  %3197 = vmatprep.subr.mxu0 0.0
  %3198 = vmatpush2.msra.mxu0 0.0
  %3199 = vmatprep.subr.mxu0 0.0
  %3200 = vmatpush2.msra.mxu0 0.0
  %3201 = vmatprep.subr.mxu0 0.0
  %3202 = vmatpush2.msra.mxu0 0.0
  %3203 = vmatprep.subr.mxu0 0.0
  %3204 = vmatpush2.msra.mxu0 0.0
  %3205 = vmatprep.subr.mxu0 0.0
  %3206 = vmatpush2.msra.mxu0 0.0
  %3207 = vmatprep.subr.mxu0 0.0
  %3208 = vmatpush2.msra.mxu0 0.0
  %3209 = vmatprep.subr.mxu0 0.0
  %3210 = vmatpush2.msra.mxu0 0.0
  %3211 = vmatprep.subr.mxu0 0.0
  %3212 = vmatpush2.msra.mxu0 0.0
  %3213 = vmatprep.subr.mxu0 0.0
  %3214 = vmatpush2.msra.mxu0 0.0
  %3215 = vmatprep.subr.mxu0 0.0
  %3216 = vmatpush2.msra.mxu0 0.0
  %3217 = vmatprep.subr.mxu0 0.0
  %3218 = vmatpush2.msra.mxu0 0.0
  %3219 = vmatprep.subr.mxu0 0.0
  %3220 = vmatpush2.msra.mxu0 0.0
  %3221 = vmatprep.subr.mxu0 0.0
  %3222 = vmatpush2.msra.mxu0 0.0
  %3223 = vmatprep.subr.mxu0 0.0
  %3224 = vmatpush2.msra.mxu0 0.0
  %3225 = vmatprep.subr.mxu0 0.0
  %3226 = vmatpush2.msra.mxu0 0.0
  %3227 = vmatprep.mubr.f32.mxu0 0.0
  %3228 = vmatmul.mubr.f32.gmra.mxu0 %v2850
  %v3229 = vpop.f32.mrf.mxu0
  %v3230 = vadd.f32 0.0, %v3229
  %v3231 = vpop.f32.mrf.mxu0
  %3232 = vdwg.mxu0
  %v3233 = vmul.f32 %v3162, %v3230
  %v3235 = vsel %vm109, %v3011, 0
  %3237 = vmatprep.subr.mxu0 0.0
  %3238 = vmatpush1.msra.mxu0 0.0
  %3239 = vmatprep.subr.mxu0 0.0
  %3240 = vmatpush1.msra.mxu0 0.0
  %3241 = vmatprep.subr.mxu0 0.0
  %3242 = vmatpush1.msra.mxu0 0.0
  %3243 = vmatprep.subr.mxu0 0.0
  %3244 = vmatpush1.msra.mxu0 0.0
  %3245 = vmatprep.subr.mxu0 0.0
  %3246 = vmatpush1.msra.mxu0 0.0
  %3247 = vmatprep.subr.mxu0 0.0
  %3248 = vmatpush1.msra.mxu0 0.0
  %3249 = vmatprep.subr.mxu0 0.0
  %3250 = vmatpush1.msra.mxu0 0.0
  %3251 = vmatprep.subr.mxu0 0.0
  %3252 = vmatpush1.msra.mxu0 0.0
  %3253 = vmatprep.subr.mxu0 0.0
  %3254 = vmatpush1.msra.mxu0 0.0
  %3255 = vmatprep.subr.mxu0 0.0
  %3256 = vmatpush1.msra.mxu0 0.0
  %3257 = vmatprep.subr.mxu0 0.0
  %3258 = vmatpush1.msra.mxu0 0.0
  %3259 = vmatprep.subr.mxu0 0.0
  %3260 = vmatpush1.msra.mxu0 0.0
  %3261 = vmatprep.subr.mxu0 0.0
  %3262 = vmatpush1.msra.mxu0 %v68
  %3263 = vmatprep.subr.mxu0 0.0
  %3264 = vmatpush1.msra.mxu0 %v67
  %3265 = vmatprep.subr.mxu0 0.0
  %3266 = vmatpush1.msra.mxu0 %v66
  %3267 = vmatprep.subr.mxu0 0.0
  %3268 = vmatpush1.msra.mxu0 %v65
  %3269 = vmatprep.subr.mxu0 0.0
  %3270 = vmatpush2.msra.mxu0 0.0
  %3271 = vmatprep.subr.mxu0 0.0
  %3272 = vmatpush2.msra.mxu0 0.0
  %3273 = vmatprep.subr.mxu0 0.0
  %3274 = vmatpush2.msra.mxu0 0.0
  %3275 = vmatprep.subr.mxu0 0.0
  %3276 = vmatpush2.msra.mxu0 0.0
  %3277 = vmatprep.subr.mxu0 0.0
  %3278 = vmatpush2.msra.mxu0 0.0
  %3279 = vmatprep.subr.mxu0 0.0
  %3280 = vmatpush2.msra.mxu0 0.0
  %3281 = vmatprep.subr.mxu0 0.0
  %3282 = vmatpush2.msra.mxu0 0.0
  %3283 = vmatprep.subr.mxu0 0.0
  %3284 = vmatpush2.msra.mxu0 0.0
  %3285 = vmatprep.subr.mxu0 0.0
  %3286 = vmatpush2.msra.mxu0 0.0
  %3287 = vmatprep.subr.mxu0 0.0
  %3288 = vmatpush2.msra.mxu0 0.0
  %3289 = vmatprep.subr.mxu0 0.0
  %3290 = vmatpush2.msra.mxu0 0.0
  %3291 = vmatprep.subr.mxu0 0.0
  %3292 = vmatpush2.msra.mxu0 0.0
  %3293 = vmatprep.subr.mxu0 0.0
  %3294 = vmatpush2.msra.mxu0 0.0
  %3295 = vmatprep.subr.mxu0 0.0
  %3296 = vmatpush2.msra.mxu0 0.0
  %3297 = vmatprep.subr.mxu0 0.0
  %3298 = vmatpush2.msra.mxu0 0.0
  %3299 = vmatprep.subr.mxu0 0.0
  %3300 = vmatpush2.msra.mxu0 0.0
  %3301 = vmatprep.mubr.f32.mxu0 0.0
  %3302 = vmatmul.mubr.f32.gmra.mxu0 %v3235
  %v3303 = vpop.f32.mrf.mxu0
  %v3304 = vadd.f32 %v3233, %v3303
  %v3305 = vpop.f32.mrf.mxu0
  %3306 = vdwg.mxu0
  %v3307 = vadd.f32 %v3304, %v89
  %v3308 = vtanh.pop %v3307
  %v3309 = vmul.f32 %v3162, %v2836
  %v3310 = vsub.f32 1.0, %v3162
  %3312 = vrot.lane.b32.xlu0 %v3308, 32
  %v3313 = vpop.permute.xlu0 %3312
  %v3315 = vmul.f32 %v3310, %v3313
  %v3316 = vadd.f32 %v3309, %v3315
  %3318 = vrot.lane.b32.xlu0 %v3316, 96
  %v3319 = vpop.permute.xlu0 %3318
  %3321 = vrot.lane.b32.xlu0 %v3316, 32
  %v3322 = vpop.permute.xlu0 %3321
  %3324 = vrot.lane.b32.xlu0 %v3316, 64
  %v3325 = vpop.permute.xlu0 %3324
  %v3327 = vsel %vm109, %v3319, %v3316
  %v3328 = vsel %vm278, %v3327, %v3322
  %v3329 = vsel %vm280, %v3328, %v3325
  %v3330 = vmul.f32 %v3329, %v47
  %3331 = vmatprep.subr.mxu0 0.0
  %3332 = vmatpush1.msra.mxu0 0.0
  %3333 = vmatprep.subr.mxu0 0.0
  %3334 = vmatpush1.msra.mxu0 0.0
  %3335 = vmatprep.subr.mxu0 0.0
  %3336 = vmatpush1.msra.mxu0 0.0
  %3337 = vmatprep.subr.mxu0 0.0
  %3338 = vmatpush1.msra.mxu0 0.0
  %3339 = vmatprep.subr.mxu0 0.0
  %3340 = vmatpush1.msra.mxu0 0.0
  %3341 = vmatprep.subr.mxu0 0.0
  %3342 = vmatpush1.msra.mxu0 0.0
  %3343 = vmatprep.subr.mxu0 0.0
  %3344 = vmatpush1.msra.mxu0 0.0
  %3345 = vmatprep.subr.mxu0 0.0
  %3346 = vmatpush1.msra.mxu0 0.0
  %3347 = vmatprep.subr.mxu0 0.0
  %3348 = vmatpush1.msra.mxu0 0.0
  %3349 = vmatprep.subr.mxu0 0.0
  %3350 = vmatpush1.msra.mxu0 0.0
  %3351 = vmatprep.subr.mxu0 0.0
  %3352 = vmatpush1.msra.mxu0 0.0
  %3353 = vmatprep.subr.mxu0 0.0
  %3354 = vmatpush1.msra.mxu0 0.0
  %3355 = vmatprep.subr.mxu0 0.0
  %3356 = vmatpush1.msra.mxu0 %v88
  %3357 = vmatprep.subr.mxu0 0.0
  %3358 = vmatpush1.msra.mxu0 %v87
  %3359 = vmatprep.subr.mxu0 0.0
  %3360 = vmatpush1.msra.mxu0 %v86
  %3361 = vmatprep.subr.mxu0 0.0
  %3362 = vmatpush1.msra.mxu0 %v85
  %3363 = vmatprep.subr.mxu0 0.0
  %3364 = vmatpush2.msra.mxu0 0.0
  %3365 = vmatprep.subr.mxu0 0.0
  %3366 = vmatpush2.msra.mxu0 0.0
  %3367 = vmatprep.subr.mxu0 0.0
  %3368 = vmatpush2.msra.mxu0 0.0
  %3369 = vmatprep.subr.mxu0 0.0
  %3370 = vmatpush2.msra.mxu0 0.0
  %3371 = vmatprep.subr.mxu0 0.0
  %3372 = vmatpush2.msra.mxu0 0.0
  %3373 = vmatprep.subr.mxu0 0.0
  %3374 = vmatpush2.msra.mxu0 0.0
  %3375 = vmatprep.subr.mxu0 0.0
  %3376 = vmatpush2.msra.mxu0 0.0
  %3377 = vmatprep.subr.mxu0 0.0
  %3378 = vmatpush2.msra.mxu0 0.0
  %3379 = vmatprep.subr.mxu0 0.0
  %3380 = vmatpush2.msra.mxu0 0.0
  %3381 = vmatprep.subr.mxu0 0.0
  %3382 = vmatpush2.msra.mxu0 0.0
  %3383 = vmatprep.subr.mxu0 0.0
  %3384 = vmatpush2.msra.mxu0 0.0
  %3385 = vmatprep.subr.mxu0 0.0
  %3386 = vmatpush2.msra.mxu0 0.0
  %3387 = vmatprep.subr.mxu0 0.0
  %3388 = vmatpush2.msra.mxu0 0.0
  %3389 = vmatprep.subr.mxu0 0.0
  %3390 = vmatpush2.msra.mxu0 0.0
  %3391 = vmatprep.subr.mxu0 0.0
  %3392 = vmatpush2.msra.mxu0 0.0
  %3393 = vmatprep.subr.mxu0 0.0
  %3394 = vmatpush2.msra.mxu0 0.0
  %3395 = vmatprep.mubr.f32.mxu0 0.0
  %3396 = vmatmul.mubr.f32.gmra.mxu0 %v3235
  %v3397 = vpop.f32.mrf.mxu0
  %v3398 = vadd.f32 0.0, %v3397
  %v3399 = vpop.f32.mrf.mxu0
  %3400 = vdwg.mxu0
  %3402 = vrot.lane.b32.xlu0 %v3398, 8
  %v3403 = vpop.permute.xlu0 %3402
  %v3405 = vsel %vm102, %v2997, %v3403
  %3406 = vmatprep.subr.mxu0 0.0
  %3407 = vmatpush1.msra.mxu0 %v84
  %3408 = vmatprep.subr.mxu0 0.0
  %3409 = vmatpush1.msra.mxu0 %v83
  %3410 = vmatprep.subr.mxu0 0.0
  %3411 = vmatpush1.msra.mxu0 %v82
  %3412 = vmatprep.subr.mxu0 0.0
  %3413 = vmatpush1.msra.mxu0 %v81
  %3414 = vmatprep.subr.mxu0 0.0
  %3415 = vmatpush1.msra.mxu0 %v80
  %3416 = vmatprep.subr.mxu0 0.0
  %3417 = vmatpush1.msra.mxu0 %v79
  %3418 = vmatprep.subr.mxu0 0.0
  %3419 = vmatpush1.msra.mxu0 %v78
  %3420 = vmatprep.subr.mxu0 0.0
  %3421 = vmatpush1.msra.mxu0 %v77
  %3422 = vmatprep.subr.mxu0 0.0
  %3423 = vmatpush1.msra.mxu0 %v76
  %3424 = vmatprep.subr.mxu0 0.0
  %3425 = vmatpush1.msra.mxu0 %v75
  %3426 = vmatprep.subr.mxu0 0.0
  %3427 = vmatpush1.msra.mxu0 %v74
  %3428 = vmatprep.subr.mxu0 0.0
  %3429 = vmatpush1.msra.mxu0 %v73
  %3430 = vmatprep.subr.mxu0 0.0
  %3431 = vmatpush1.msra.mxu0 %v72
  %3432 = vmatprep.subr.mxu0 0.0
  %3433 = vmatpush1.msra.mxu0 %v71
  %3434 = vmatprep.subr.mxu0 0.0
  %3435 = vmatpush1.msra.mxu0 %v70
  %3436 = vmatprep.subr.mxu0 0.0
  %3437 = vmatpush1.msra.mxu0 %v69
  %3438 = vmatprep.subr.mxu0 0.0
  %3439 = vmatpush2.msra.mxu0 0.0
  %3440 = vmatprep.subr.mxu0 0.0
  %3441 = vmatpush2.msra.mxu0 0.0
  %3442 = vmatprep.subr.mxu0 0.0
  %3443 = vmatpush2.msra.mxu0 0.0
  %3444 = vmatprep.subr.mxu0 0.0
  %3445 = vmatpush2.msra.mxu0 0.0
  %3446 = vmatprep.subr.mxu0 0.0
  %3447 = vmatpush2.msra.mxu0 0.0
  %3448 = vmatprep.subr.mxu0 0.0
  %3449 = vmatpush2.msra.mxu0 0.0
  %3450 = vmatprep.subr.mxu0 0.0
  %3451 = vmatpush2.msra.mxu0 0.0
  %3452 = vmatprep.subr.mxu0 0.0
  %3453 = vmatpush2.msra.mxu0 0.0
  %3454 = vmatprep.subr.mxu0 0.0
  %3455 = vmatpush2.msra.mxu0 0.0
  %3456 = vmatprep.subr.mxu0 0.0
  %3457 = vmatpush2.msra.mxu0 0.0
  %3458 = vmatprep.subr.mxu0 0.0
  %3459 = vmatpush2.msra.mxu0 0.0
  %3460 = vmatprep.subr.mxu0 0.0
  %3461 = vmatpush2.msra.mxu0 0.0
  %3462 = vmatprep.subr.mxu0 0.0
  %3463 = vmatpush2.msra.mxu0 0.0
  %3464 = vmatprep.subr.mxu0 0.0
  %3465 = vmatpush2.msra.mxu0 0.0
  %3466 = vmatprep.subr.mxu0 0.0
  %3467 = vmatpush2.msra.mxu0 0.0
  %3468 = vmatprep.subr.mxu0 0.0
  %3469 = vmatpush2.msra.mxu0 0.0
  %3470 = vmatprep.mubr.f32.mxu0 0.0
  %3471 = vmatmul.mubr.f32.gmra.mxu0 %v3330
  %v3472 = vpop.f32.mrf.mxu0
  %v3473 = vadd.f32 %v3405, %v3472
  %v3474 = vpop.f32.mrf.mxu0
  %3475 = vdwg.mxu0
  %s3476 = scalar_lea.vmem %s0, 28
  %v3477 = vld [vmem:[%s3476] sm:$0xf]
  %3479 = vrot.lane.b32.xlu0 %v3477, 8
  %v3480 = vpop.permute.xlu0 %3479
  %3482 = vrot.lane.b32.xlu0 %v3477, 16
  %v3483 = vpop.permute.xlu0 %3482
  %3485 = vrot.lane.b32.xlu0 %v3477, 24
  %v3486 = vpop.permute.xlu0 %3485
  %v3488 = vsel %vm102, %v3477, %v3480
  %v3489 = vsel %vm104, %v3488, %v3483
  %v3490 = vsel %vm106, %v3489, %v3486
  %v3491 = vmul.f32 %v3490, %v48
  %v3492 = vsel %vm109, %v3319, 0
  %3494 = vmatprep.subr.mxu0 0.0
  %3495 = vmatpush1.msra.mxu0 0.0
  %3496 = vmatprep.subr.mxu0 0.0
  %3497 = vmatpush1.msra.mxu0 0.0
  %3498 = vmatprep.subr.mxu0 0.0
  %3499 = vmatpush1.msra.mxu0 0.0
  %3500 = vmatprep.subr.mxu0 0.0
  %3501 = vmatpush1.msra.mxu0 0.0
  %3502 = vmatprep.subr.mxu0 0.0
  %3503 = vmatpush1.msra.mxu0 0.0
  %3504 = vmatprep.subr.mxu0 0.0
  %3505 = vmatpush1.msra.mxu0 0.0
  %3506 = vmatprep.subr.mxu0 0.0
  %3507 = vmatpush1.msra.mxu0 0.0
  %3508 = vmatprep.subr.mxu0 0.0
  %3509 = vmatpush1.msra.mxu0 0.0
  %3510 = vmatprep.subr.mxu0 0.0
  %3511 = vmatpush1.msra.mxu0 0.0
  %3512 = vmatprep.subr.mxu0 0.0
  %3513 = vmatpush1.msra.mxu0 0.0
  %3514 = vmatprep.subr.mxu0 0.0
  %3515 = vmatpush1.msra.mxu0 0.0
  %3516 = vmatprep.subr.mxu0 0.0
  %3517 = vmatpush1.msra.mxu0 0.0
  %3518 = vmatprep.subr.mxu0 0.0
  %3519 = vmatpush1.msra.mxu0 %v45
  %3520 = vmatprep.subr.mxu0 0.0
  %3521 = vmatpush1.msra.mxu0 %v44
  %3522 = vmatprep.subr.mxu0 0.0
  %3523 = vmatpush1.msra.mxu0 %v43
  %3524 = vmatprep.subr.mxu0 0.0
  %3525 = vmatpush1.msra.mxu0 %v42
  %3526 = vmatprep.subr.mxu0 0.0
  %3527 = vmatpush2.msra.mxu0 0.0
  %3528 = vmatprep.subr.mxu0 0.0
  %3529 = vmatpush2.msra.mxu0 0.0
  %3530 = vmatprep.subr.mxu0 0.0
  %3531 = vmatpush2.msra.mxu0 0.0
  %3532 = vmatprep.subr.mxu0 0.0
  %3533 = vmatpush2.msra.mxu0 0.0
  %3534 = vmatprep.subr.mxu0 0.0
  %3535 = vmatpush2.msra.mxu0 0.0
  %3536 = vmatprep.subr.mxu0 0.0
  %3537 = vmatpush2.msra.mxu0 0.0
  %3538 = vmatprep.subr.mxu0 0.0
  %3539 = vmatpush2.msra.mxu0 0.0
  %3540 = vmatprep.subr.mxu0 0.0
  %3541 = vmatpush2.msra.mxu0 0.0
  %3542 = vmatprep.subr.mxu0 0.0
  %3543 = vmatpush2.msra.mxu0 0.0
  %3544 = vmatprep.subr.mxu0 0.0
  %3545 = vmatpush2.msra.mxu0 0.0
  %3546 = vmatprep.subr.mxu0 0.0
  %3547 = vmatpush2.msra.mxu0 0.0
  %3548 = vmatprep.subr.mxu0 0.0
  %3549 = vmatpush2.msra.mxu0 0.0
  %3550 = vmatprep.subr.mxu0 0.0
  %3551 = vmatpush2.msra.mxu0 0.0
  %3552 = vmatprep.subr.mxu0 0.0
  %3553 = vmatpush2.msra.mxu0 0.0
  %3554 = vmatprep.subr.mxu0 0.0
  %3555 = vmatpush2.msra.mxu0 0.0
  %3556 = vmatprep.subr.mxu0 0.0
  %3557 = vmatpush2.msra.mxu0 0.0
  %3558 = vmatprep.mubr.f32.mxu0 0.0
  %3559 = vmatmul.mubr.f32.gmra.mxu0 %v3492
  %v3560 = vpop.f32.mrf.mxu0
  %v3561 = vadd.f32 0.0, %v3560
  %v3562 = vpop.f32.mrf.mxu0
  %3563 = vdwg.mxu0
  %v3564 = vsel %vm102, %v3477, 0
  %3566 = vmatprep.subr.mxu0 0.0
  %3567 = vmatpush1.msra.mxu0 0.0
  %3568 = vmatprep.subr.mxu0 0.0
  %3569 = vmatpush1.msra.mxu0 0.0
  %3570 = vmatprep.subr.mxu0 0.0
  %3571 = vmatpush1.msra.mxu0 0.0
  %3572 = vmatprep.subr.mxu0 0.0
  %3573 = vmatpush1.msra.mxu0 0.0
  %3574 = vmatprep.subr.mxu0 0.0
  %3575 = vmatpush1.msra.mxu0 0.0
  %3576 = vmatprep.subr.mxu0 0.0
  %3577 = vmatpush1.msra.mxu0 0.0
  %3578 = vmatprep.subr.mxu0 0.0
  %3579 = vmatpush1.msra.mxu0 0.0
  %3580 = vmatprep.subr.mxu0 0.0
  %3581 = vmatpush1.msra.mxu0 0.0
  %3582 = vmatprep.subr.mxu0 0.0
  %3583 = vmatpush1.msra.mxu0 0.0
  %3584 = vmatprep.subr.mxu0 0.0
  %3585 = vmatpush1.msra.mxu0 0.0
  %3586 = vmatprep.subr.mxu0 0.0
  %3587 = vmatpush1.msra.mxu0 0.0
  %3588 = vmatprep.subr.mxu0 0.0
  %3589 = vmatpush1.msra.mxu0 0.0
  %3590 = vmatprep.subr.mxu0 0.0
  %3591 = vmatpush1.msra.mxu0 0.0
  %3592 = vmatprep.subr.mxu0 0.0
  %3593 = vmatpush1.msra.mxu0 0.0
  %3594 = vmatprep.subr.mxu0 0.0
  %3595 = vmatpush1.msra.mxu0 0.0
  %3596 = vmatprep.subr.mxu0 0.0
  %3597 = vmatpush1.msra.mxu0 %v41
  %3598 = vmatprep.subr.mxu0 0.0
  %3599 = vmatpush2.msra.mxu0 0.0
  %3600 = vmatprep.subr.mxu0 0.0
  %3601 = vmatpush2.msra.mxu0 0.0
  %3602 = vmatprep.subr.mxu0 0.0
  %3603 = vmatpush2.msra.mxu0 0.0
  %3604 = vmatprep.subr.mxu0 0.0
  %3605 = vmatpush2.msra.mxu0 0.0
  %3606 = vmatprep.subr.mxu0 0.0
  %3607 = vmatpush2.msra.mxu0 0.0
  %3608 = vmatprep.subr.mxu0 0.0
  %3609 = vmatpush2.msra.mxu0 0.0
  %3610 = vmatprep.subr.mxu0 0.0
  %3611 = vmatpush2.msra.mxu0 0.0
  %3612 = vmatprep.subr.mxu0 0.0
  %3613 = vmatpush2.msra.mxu0 0.0
  %3614 = vmatprep.subr.mxu0 0.0
  %3615 = vmatpush2.msra.mxu0 0.0
  %3616 = vmatprep.subr.mxu0 0.0
  %3617 = vmatpush2.msra.mxu0 0.0
  %3618 = vmatprep.subr.mxu0 0.0
  %3619 = vmatpush2.msra.mxu0 0.0
  %3620 = vmatprep.subr.mxu0 0.0
  %3621 = vmatpush2.msra.mxu0 0.0
  %3622 = vmatprep.subr.mxu0 0.0
  %3623 = vmatpush2.msra.mxu0 0.0
  %3624 = vmatprep.subr.mxu0 0.0
  %3625 = vmatpush2.msra.mxu0 0.0
  %3626 = vmatprep.subr.mxu0 0.0
  %3627 = vmatpush2.msra.mxu0 0.0
  %3628 = vmatprep.subr.mxu0 0.0
  %3629 = vmatpush2.msra.mxu0 0.0
  %3630 = vmatprep.mubr.f32.mxu0 0.0
  %3631 = vmatmul.mubr.f32.gmra.mxu0 %v3564
  %v3632 = vpop.f32.mrf.mxu0
  %v3633 = vadd.f32 %v3561, %v3632
  %v3634 = vpop.f32.mrf.mxu0
  %3635 = vdwg.mxu0
  %v3636 = vadd.f32 %v3633, %v259
  %v3637 = vxor.u32 %v3636, 2147483648
  %v3638 = vmul.f32 %v3637, 1.442695
  %v3639 = vpow.pop %v3638
  %v3640 = vadd.f32 %v3639, 1.0
  %v3641 = vrcp.pop %v3640
  %v3642 = vmul.f32 1.0, %v3641
  %3643 = vmatprep.subr.mxu0 0.0
  %3644 = vmatpush1.msra.mxu0 %v64
  %3645 = vmatprep.subr.mxu0 0.0
  %3646 = vmatpush1.msra.mxu0 %v63
  %3647 = vmatprep.subr.mxu0 0.0
  %3648 = vmatpush1.msra.mxu0 %v62
  %3649 = vmatprep.subr.mxu0 0.0
  %3650 = vmatpush1.msra.mxu0 %v61
  %3651 = vmatprep.subr.mxu0 0.0
  %3652 = vmatpush1.msra.mxu0 %v60
  %3653 = vmatprep.subr.mxu0 0.0
  %3654 = vmatpush1.msra.mxu0 %v59
  %3655 = vmatprep.subr.mxu0 0.0
  %3656 = vmatpush1.msra.mxu0 %v58
  %3657 = vmatprep.subr.mxu0 0.0
  %3658 = vmatpush1.msra.mxu0 %v57
  %3659 = vmatprep.subr.mxu0 0.0
  %3660 = vmatpush1.msra.mxu0 %v56
  %3661 = vmatprep.subr.mxu0 0.0
  %3662 = vmatpush1.msra.mxu0 %v55
  %3663 = vmatprep.subr.mxu0 0.0
  %3664 = vmatpush1.msra.mxu0 %v54
  %3665 = vmatprep.subr.mxu0 0.0
  %3666 = vmatpush1.msra.mxu0 %v53
  %3667 = vmatprep.subr.mxu0 0.0
  %3668 = vmatpush1.msra.mxu0 %v52
  %3669 = vmatprep.subr.mxu0 0.0
  %3670 = vmatpush1.msra.mxu0 %v51
  %3671 = vmatprep.subr.mxu0 0.0
  %3672 = vmatpush1.msra.mxu0 %v50
  %3673 = vmatprep.subr.mxu0 0.0
  %3674 = vmatpush1.msra.mxu0 %v49
  %3675 = vmatprep.subr.mxu0 0.0
  %3676 = vmatpush2.msra.mxu0 0.0
  %3677 = vmatprep.subr.mxu0 0.0
  %3678 = vmatpush2.msra.mxu0 0.0
  %3679 = vmatprep.subr.mxu0 0.0
  %3680 = vmatpush2.msra.mxu0 0.0
  %3681 = vmatprep.subr.mxu0 0.0
  %3682 = vmatpush2.msra.mxu0 0.0
  %3683 = vmatprep.subr.mxu0 0.0
  %3684 = vmatpush2.msra.mxu0 0.0
  %3685 = vmatprep.subr.mxu0 0.0
  %3686 = vmatpush2.msra.mxu0 0.0
  %3687 = vmatprep.subr.mxu0 0.0
  %3688 = vmatpush2.msra.mxu0 0.0
  %3689 = vmatprep.subr.mxu0 0.0
  %3690 = vmatpush2.msra.mxu0 0.0
  %3691 = vmatprep.subr.mxu0 0.0
  %3692 = vmatpush2.msra.mxu0 0.0
  %3693 = vmatprep.subr.mxu0 0.0
  %3694 = vmatpush2.msra.mxu0 0.0
  %3695 = vmatprep.subr.mxu0 0.0
  %3696 = vmatpush2.msra.mxu0 0.0
  %3697 = vmatprep.subr.mxu0 0.0
  %3698 = vmatpush2.msra.mxu0 0.0
  %3699 = vmatprep.subr.mxu0 0.0
  %3700 = vmatpush2.msra.mxu0 0.0
  %3701 = vmatprep.subr.mxu0 0.0
  %3702 = vmatpush2.msra.mxu0 0.0
  %3703 = vmatprep.subr.mxu0 0.0
  %3704 = vmatpush2.msra.mxu0 0.0
  %3705 = vmatprep.subr.mxu0 0.0
  %3706 = vmatpush2.msra.mxu0 0.0
  %3707 = vmatprep.mubr.f32.mxu0 0.0
  %3708 = vmatmul.mubr.f32.gmra.mxu0 %v3330
  %v3709 = vpop.f32.mrf.mxu0
  %v3710 = vadd.f32 0.0, %v3709
  %v3711 = vpop.f32.mrf.mxu0
  %3712 = vdwg.mxu0
  %v3713 = vmul.f32 %v3642, %v3710
  %v3715 = vsel %vm109, %v3491, 0
  %3717 = vmatprep.subr.mxu0 0.0
  %3718 = vmatpush1.msra.mxu0 0.0
  %3719 = vmatprep.subr.mxu0 0.0
  %3720 = vmatpush1.msra.mxu0 0.0
  %3721 = vmatprep.subr.mxu0 0.0
  %3722 = vmatpush1.msra.mxu0 0.0
  %3723 = vmatprep.subr.mxu0 0.0
  %3724 = vmatpush1.msra.mxu0 0.0
  %3725 = vmatprep.subr.mxu0 0.0
  %3726 = vmatpush1.msra.mxu0 0.0
  %3727 = vmatprep.subr.mxu0 0.0
  %3728 = vmatpush1.msra.mxu0 0.0
  %3729 = vmatprep.subr.mxu0 0.0
  %3730 = vmatpush1.msra.mxu0 0.0
  %3731 = vmatprep.subr.mxu0 0.0
  %3732 = vmatpush1.msra.mxu0 0.0
  %3733 = vmatprep.subr.mxu0 0.0
  %3734 = vmatpush1.msra.mxu0 0.0
  %3735 = vmatprep.subr.mxu0 0.0
  %3736 = vmatpush1.msra.mxu0 0.0
  %3737 = vmatprep.subr.mxu0 0.0
  %3738 = vmatpush1.msra.mxu0 0.0
  %3739 = vmatprep.subr.mxu0 0.0
  %3740 = vmatpush1.msra.mxu0 0.0
  %3741 = vmatprep.subr.mxu0 0.0
  %3742 = vmatpush1.msra.mxu0 %v68
  %3743 = vmatprep.subr.mxu0 0.0
  %3744 = vmatpush1.msra.mxu0 %v67
  %3745 = vmatprep.subr.mxu0 0.0
  %3746 = vmatpush1.msra.mxu0 %v66
  %3747 = vmatprep.subr.mxu0 0.0
  %3748 = vmatpush1.msra.mxu0 %v65
  %3749 = vmatprep.subr.mxu0 0.0
  %3750 = vmatpush2.msra.mxu0 0.0
  %3751 = vmatprep.subr.mxu0 0.0
  %3752 = vmatpush2.msra.mxu0 0.0
  %3753 = vmatprep.subr.mxu0 0.0
  %3754 = vmatpush2.msra.mxu0 0.0
  %3755 = vmatprep.subr.mxu0 0.0
  %3756 = vmatpush2.msra.mxu0 0.0
  %3757 = vmatprep.subr.mxu0 0.0
  %3758 = vmatpush2.msra.mxu0 0.0
  %3759 = vmatprep.subr.mxu0 0.0
  %3760 = vmatpush2.msra.mxu0 0.0
  %3761 = vmatprep.subr.mxu0 0.0
  %3762 = vmatpush2.msra.mxu0 0.0
  %3763 = vmatprep.subr.mxu0 0.0
  %3764 = vmatpush2.msra.mxu0 0.0
  %3765 = vmatprep.subr.mxu0 0.0
  %3766 = vmatpush2.msra.mxu0 0.0
  %3767 = vmatprep.subr.mxu0 0.0
  %3768 = vmatpush2.msra.mxu0 0.0
  %3769 = vmatprep.subr.mxu0 0.0
  %3770 = vmatpush2.msra.mxu0 0.0
  %3771 = vmatprep.subr.mxu0 0.0
  %3772 = vmatpush2.msra.mxu0 0.0
  %3773 = vmatprep.subr.mxu0 0.0
  %3774 = vmatpush2.msra.mxu0 0.0
  %3775 = vmatprep.subr.mxu0 0.0
  %3776 = vmatpush2.msra.mxu0 0.0
  %3777 = vmatprep.subr.mxu0 0.0
  %3778 = vmatpush2.msra.mxu0 0.0
  %3779 = vmatprep.subr.mxu0 0.0
  %3780 = vmatpush2.msra.mxu0 0.0
  %3781 = vmatprep.mubr.f32.mxu0 0.0
  %3782 = vmatmul.mubr.f32.gmra.mxu0 %v3715
  %v3783 = vpop.f32.mrf.mxu0
  %v3784 = vadd.f32 %v3713, %v3783
  %v3785 = vpop.f32.mrf.mxu0
  %3786 = vdwg.mxu0
  %v3787 = vadd.f32 %v3784, %v89
  %v3788 = vtanh.pop %v3787
  %v3789 = vmul.f32 %v3642, %v3316
  %v3790 = vsub.f32 1.0, %v3642
  %3792 = vrot.lane.b32.xlu0 %v3788, 32
  %v3793 = vpop.permute.xlu0 %3792
  %v3795 = vmul.f32 %v3790, %v3793
  %v3796 = vadd.f32 %v3789, %v3795
  %3798 = vrot.lane.b32.xlu0 %v3796, 96
  %v3799 = vpop.permute.xlu0 %3798
  %3801 = vrot.lane.b32.xlu0 %v3796, 32
  %v3802 = vpop.permute.xlu0 %3801
  %3804 = vrot.lane.b32.xlu0 %v3796, 64
  %v3805 = vpop.permute.xlu0 %3804
  %v3807 = vsel %vm109, %v3799, %v3796
  %v3808 = vsel %vm278, %v3807, %v3802
  %v3809 = vsel %vm280, %v3808, %v3805
  %v3810 = vmul.f32 %v3809, %v47
  %3811 = vmatprep.subr.mxu0 0.0
  %3812 = vmatpush1.msra.mxu0 0.0
  %3813 = vmatprep.subr.mxu0 0.0
  %3814 = vmatpush1.msra.mxu0 0.0
  %3815 = vmatprep.subr.mxu0 0.0
  %3816 = vmatpush1.msra.mxu0 0.0
  %3817 = vmatprep.subr.mxu0 0.0
  %3818 = vmatpush1.msra.mxu0 0.0
  %3819 = vmatprep.subr.mxu0 0.0
  %3820 = vmatpush1.msra.mxu0 0.0
  %3821 = vmatprep.subr.mxu0 0.0
  %3822 = vmatpush1.msra.mxu0 0.0
  %3823 = vmatprep.subr.mxu0 0.0
  %3824 = vmatpush1.msra.mxu0 0.0
  %3825 = vmatprep.subr.mxu0 0.0
  %3826 = vmatpush1.msra.mxu0 0.0
  %3827 = vmatprep.subr.mxu0 0.0
  %3828 = vmatpush1.msra.mxu0 0.0
  %3829 = vmatprep.subr.mxu0 0.0
  %3830 = vmatpush1.msra.mxu0 0.0
  %3831 = vmatprep.subr.mxu0 0.0
  %3832 = vmatpush1.msra.mxu0 0.0
  %3833 = vmatprep.subr.mxu0 0.0
  %3834 = vmatpush1.msra.mxu0 0.0
  %3835 = vmatprep.subr.mxu0 0.0
  %3836 = vmatpush1.msra.mxu0 %v88
  %3837 = vmatprep.subr.mxu0 0.0
  %3838 = vmatpush1.msra.mxu0 %v87
  %3839 = vmatprep.subr.mxu0 0.0
  %3840 = vmatpush1.msra.mxu0 %v86
  %3841 = vmatprep.subr.mxu0 0.0
  %3842 = vmatpush1.msra.mxu0 %v85
  %3843 = vmatprep.subr.mxu0 0.0
  %3844 = vmatpush2.msra.mxu0 0.0
  %3845 = vmatprep.subr.mxu0 0.0
  %3846 = vmatpush2.msra.mxu0 0.0
  %3847 = vmatprep.subr.mxu0 0.0
  %3848 = vmatpush2.msra.mxu0 0.0
  %3849 = vmatprep.subr.mxu0 0.0
  %3850 = vmatpush2.msra.mxu0 0.0
  %3851 = vmatprep.subr.mxu0 0.0
  %3852 = vmatpush2.msra.mxu0 0.0
  %3853 = vmatprep.subr.mxu0 0.0
  %3854 = vmatpush2.msra.mxu0 0.0
  %3855 = vmatprep.subr.mxu0 0.0
  %3856 = vmatpush2.msra.mxu0 0.0
  %3857 = vmatprep.subr.mxu0 0.0
  %3858 = vmatpush2.msra.mxu0 0.0
  %3859 = vmatprep.subr.mxu0 0.0
  %3860 = vmatpush2.msra.mxu0 0.0
  %3861 = vmatprep.subr.mxu0 0.0
  %3862 = vmatpush2.msra.mxu0 0.0
  %3863 = vmatprep.subr.mxu0 0.0
  %3864 = vmatpush2.msra.mxu0 0.0
  %3865 = vmatprep.subr.mxu0 0.0
  %3866 = vmatpush2.msra.mxu0 0.0
  %3867 = vmatprep.subr.mxu0 0.0
  %3868 = vmatpush2.msra.mxu0 0.0
  %3869 = vmatprep.subr.mxu0 0.0
  %3870 = vmatpush2.msra.mxu0 0.0
  %3871 = vmatprep.subr.mxu0 0.0
  %3872 = vmatpush2.msra.mxu0 0.0
  %3873 = vmatprep.subr.mxu0 0.0
  %3874 = vmatpush2.msra.mxu0 0.0
  %3875 = vmatprep.mubr.f32.mxu0 0.0
  %3876 = vmatmul.mubr.f32.gmra.mxu0 %v3715
  %v3877 = vpop.f32.mrf.mxu0
  %v3878 = vadd.f32 0.0, %v3877
  %v3879 = vpop.f32.mrf.mxu0
  %3880 = vdwg.mxu0
  %3882 = vrot.lane.b32.xlu0 %v3878, 8
  %v3883 = vpop.permute.xlu0 %3882
  %v3885 = vsel %vm102, %v3477, %v3883
  %3886 = vmatprep.subr.mxu0 0.0
  %3887 = vmatpush1.msra.mxu0 %v84
  %3888 = vmatprep.subr.mxu0 0.0
  %3889 = vmatpush1.msra.mxu0 %v83
  %3890 = vmatprep.subr.mxu0 0.0
  %3891 = vmatpush1.msra.mxu0 %v82
  %3892 = vmatprep.subr.mxu0 0.0
  %3893 = vmatpush1.msra.mxu0 %v81
  %3894 = vmatprep.subr.mxu0 0.0
  %3895 = vmatpush1.msra.mxu0 %v80
  %3896 = vmatprep.subr.mxu0 0.0
  %3897 = vmatpush1.msra.mxu0 %v79
  %3898 = vmatprep.subr.mxu0 0.0
  %3899 = vmatpush1.msra.mxu0 %v78
  %3900 = vmatprep.subr.mxu0 0.0
  %3901 = vmatpush1.msra.mxu0 %v77
  %3902 = vmatprep.subr.mxu0 0.0
  %3903 = vmatpush1.msra.mxu0 %v76
  %3904 = vmatprep.subr.mxu0 0.0
  %3905 = vmatpush1.msra.mxu0 %v75
  %3906 = vmatprep.subr.mxu0 0.0
  %3907 = vmatpush1.msra.mxu0 %v74
  %3908 = vmatprep.subr.mxu0 0.0
  %3909 = vmatpush1.msra.mxu0 %v73
  %3910 = vmatprep.subr.mxu0 0.0
  %3911 = vmatpush1.msra.mxu0 %v72
  %3912 = vmatprep.subr.mxu0 0.0
  %3913 = vmatpush1.msra.mxu0 %v71
  %3914 = vmatprep.subr.mxu0 0.0
  %3915 = vmatpush1.msra.mxu0 %v70
  %3916 = vmatprep.subr.mxu0 0.0
  %3917 = vmatpush1.msra.mxu0 %v69
  %3918 = vmatprep.subr.mxu0 0.0
  %3919 = vmatpush2.msra.mxu0 0.0
  %3920 = vmatprep.subr.mxu0 0.0
  %3921 = vmatpush2.msra.mxu0 0.0
  %3922 = vmatprep.subr.mxu0 0.0
  %3923 = vmatpush2.msra.mxu0 0.0
  %3924 = vmatprep.subr.mxu0 0.0
  %3925 = vmatpush2.msra.mxu0 0.0
  %3926 = vmatprep.subr.mxu0 0.0
  %3927 = vmatpush2.msra.mxu0 0.0
  %3928 = vmatprep.subr.mxu0 0.0
  %3929 = vmatpush2.msra.mxu0 0.0
  %3930 = vmatprep.subr.mxu0 0.0
  %3931 = vmatpush2.msra.mxu0 0.0
  %3932 = vmatprep.subr.mxu0 0.0
  %3933 = vmatpush2.msra.mxu0 0.0
  %3934 = vmatprep.subr.mxu0 0.0
  %3935 = vmatpush2.msra.mxu0 0.0
  %3936 = vmatprep.subr.mxu0 0.0
  %3937 = vmatpush2.msra.mxu0 0.0
  %3938 = vmatprep.subr.mxu0 0.0
  %3939 = vmatpush2.msra.mxu0 0.0
  %3940 = vmatprep.subr.mxu0 0.0
  %3941 = vmatpush2.msra.mxu0 0.0
  %3942 = vmatprep.subr.mxu0 0.0
  %3943 = vmatpush2.msra.mxu0 0.0
  %3944 = vmatprep.subr.mxu0 0.0
  %3945 = vmatpush2.msra.mxu0 0.0
  %3946 = vmatprep.subr.mxu0 0.0
  %3947 = vmatpush2.msra.mxu0 0.0
  %3948 = vmatprep.subr.mxu0 0.0
  %3949 = vmatpush2.msra.mxu0 0.0
  %3950 = vmatprep.mubr.f32.mxu0 0.0
  %3951 = vmatmul.mubr.f32.gmra.mxu0 %v3810
  %v3952 = vpop.f32.mrf.mxu0
  %v3953 = vadd.f32 %v3885, %v3952
  %v3954 = vpop.f32.mrf.mxu0
  %3955 = vdwg.mxu0
  %3957 = vrot.lane.b32.xlu0 %v1073, 16
  %v3958 = vpop.permute.xlu0 %3957
  %3961 = vrot.lane.b32.xlu0 %v1553, 32
  %v3962 = vpop.permute.xlu0 %3961
  %3965 = vrot.lane.b32.xlu0 %v2033, 48
  %v3966 = vpop.permute.xlu0 %3965
  %3969 = vrot.lane.b32.xlu0 %v2513, 64
  %v3970 = vpop.permute.xlu0 %3969
  %3973 = vrot.lane.b32.xlu0 %v2993, 80
  %v3974 = vpop.permute.xlu0 %3973
  %3977 = vrot.lane.b32.xlu0 %v3473, 96
  %v3978 = vpop.permute.xlu0 %3977
  %3981 = vrot.lane.b32.xlu0 %v3953, 112
  %v3982 = vpop.permute.xlu0 %3981
  %v3984 = vsel %vm104, %v593, %v3958
  %v3985 = vsel %vm109, %v3984, %v3962
  %vm3986 = vcmask 392192
  %v3987 = vsel %vm3986, %v3985, %v3966
  %v3988 = vsel %vm278, %v3987, %v3970
  %vm3989 = vcmask 654336
  %v3990 = vsel %vm3989, %v3988, %v3974
  %v3991 = vsel %vm280, %v3990, %v3978
  %vm3992 = vcmask 916480
  %v3993 = vsel %vm3992, %v3991, %v3982
  %v3995 = vcombine.low %v3993, %v3799
  %vm3997 = vcmask 1043456
  %vm3998 = vcmask 261124
  %vm3999 = vmor %vm3998, %vm3997
  %4000 = vst.msk [vmem:[%s12] sm:$0xff] %vm3999, %v3995
  // Predicated region
  $region50: #{mtgru_forward.3} parent=0 // pred_check
    _
  $region51: #{mtgru_forward.3} parent=0 // pred_check_branch
    %4002 = sbr.rel (0) target = $region53
  $region52: #{mtgru_forward.3} parent=0 // pred_region
    _
  $region53: #{mtgru_forward.3} parent=0 // pred_fallthru
    _
  // Predicated region
  $region54: #{mtgru_forward.3} parent=0 // pred_check
    _
  $region55: #{mtgru_forward.3} parent=0 // pred_check_branch
    %4004 = sbr.rel (0) target = $region57
  $region56: #{mtgru_forward.3} parent=0 // pred_region
    _
  $region57: #{mtgru_forward.3} parent=0 // pred_fallthru
    _

</llo_original>
